<compile_context>
chip_gen: v6e
topology: v6e:2x2x1
jax: 0.10.0
libtpu: 0.0.40
codegen_flags: <defaults>
</compile_context>

<pallas_src>
import functools

import jax
import jax.numpy as jnp
import numpy as np
from jax import lax
from jax.experimental import pallas as pl
from jax.experimental.pallas import tpu as pltpu


# ------------------------------ shared helpers --------------------------------

def _dot(a, b):
    return jnp.dot(a, b, preferred_element_type=jnp.float32)


def _basis_cat(p_stack, X, K):
    """Concatenated diffusion basis, (M, (2K-1)*C).

    Term order (matches the packed weights): [X, out_1..out_{K-1}, in_1..in_{K-1}].
    p_stack is the block-diagonal [[P_out, 0], [0, P_in]] operator, so each
    Chebyshev order is a single (2M,2M)@(2M,C) matmul for both directions.
    Matches torch_geometric_temporal's DConv recursion exactly, including the
    quirk that the "- Tx_0" term is always X.
    """
    if K == 1:
        return X
    M = X.shape[0]
    xs = jnp.concatenate([X, X], axis=0)          # (2M, C): [X ; X]
    terms = []
    s = _dot(p_stack, xs)                         # order-1 terms, stacked
    terms.append(s)
    for _ in range(2, K):
        s = 2.0 * _dot(p_stack, s) - xs
        terms.append(s)
    outs = [t[:M] for t in terms]
    ins = [t[M:] for t in terms]
    return jnp.concatenate([X] + outs + ins, axis=-1)


# --------------------------- Pallas kernel: pass 1 -----------------------------
# Layer-1 input->gates projection, parallel over T (independent of hidden state).

def _xproj_kernel(K, x_ref, p_stack_ref, w_ref, b_ref, o_ref):
    X = x_ref[0]                                               # (M, F)
    basis = _basis_cat(p_stack_ref[...], X, K)                 # (M, (2K-1)*F)
    o_ref[0] = _dot(basis, w_ref[...]) + b_ref[...]            # (M, 3*Ch), bias folded


# --------------------------- Pallas kernel: pass 2 -----------------------------
# Full two-layer GRU recurrence over time + final Linear, single invocation.

def _recurrence_kernel(K, Ch,
                       xz1_ref, p_stack_ref,
                       w1h_zr_ref, w1h_c_ref,
                       w2x_ref, b2_ref, w2h_zr_ref, w2h_c_ref,
                       wlin_ref, blin_ref,
                       out_ref):
    T = xz1_ref.shape[0]
    M = xz1_ref.shape[1]
    p_stack = p_stack_ref[...]

    def gru(x_gates, h, wh_zr_ref, wh_c_ref):
        # x_gates: (M, 3*Ch) input->gate contribution, bias already included,
        # gate order [z | r | c] on the lane axis.
        bh = _basis_cat(p_stack, h, K)                          # (M, (2K-1)*Ch)
        zr = jax.nn.sigmoid(x_gates[:, :2 * Ch] + _dot(bh, wh_zr_ref[...]))
        z = zr[:, :Ch]
        r = zr[:, Ch:]
        bhr = _basis_cat(p_stack, h * r, K)
        c = jnp.tanh(x_gates[:, 2 * Ch:] + _dot(bhr, wh_c_ref[...]))
        return z * h + (1.0 - z) * c

    def step(t, carry):
        h1, h2 = carry
        # Layer 1: input contribution was precomputed (pass 1).
        h1 = jnp.maximum(gru(xz1_ref[t], h1, w1h_zr_ref, w1h_c_ref), 0.0)
        # Layer 2: input is h1, so its fused input->gate projection stays in-loop.
        xg2 = _dot(_basis_cat(p_stack, h1, K), w2x_ref[...]) + b2_ref[...]
        h2 = jnp.maximum(gru(xg2, h2, w2h_zr_ref, w2h_c_ref), 0.0)
        return h1, h2

    h0 = jnp.zeros((M, Ch), jnp.float32)                        # DCRNN._set_hidden_state
    h1, h2 = lax.fori_loop(0, T, step, (h0, h0), unroll=True)
    out_ref[...] = _dot(h2, wlin_ref[...]) + blin_ref[...]


# ------------------------------- JAX wrapper -----------------------------------

def dcrnn_forward(x, edge_index, edge_weight, fused_params, *, K, hidden):
    """x: (B, N, F, T) f32; edge_index: (2, E) int32; edge_weight: (E,) f32."""
    B, N, F_, T = x.shape
    M = B * N
    Ch = hidden
    nb = 2 * K - 1

    # Glue: dense weighted random-walk diffusion operators, packed block-diagonally
    # so both directions advance with one matmul per Chebyshev order.
    # TODO(synk): for realistic sizes use block-diagonal (B, N, N) batched operators
    # instead of one dense (M, M) matrix.
    A = jnp.zeros((M, M), jnp.float32).at[edge_index[0], edge_index[1]].add(edge_weight)
    deg_out = A.sum(axis=1)
    deg_in = A.sum(axis=0)
    p_out = A.T / deg_out[None, :]
    p_in = A.T / deg_in[:, None]
    zM = jnp.zeros((M, M), jnp.float32)
    p_stack = jnp.concatenate(
        [jnp.concatenate([p_out, zM], axis=1),
         jnp.concatenate([zM, p_in], axis=1)], axis=0)          # (2M, 2M)

    # Glue: time-major layout (T, M, F).
    xt = jnp.transpose(x, (3, 0, 1, 2)).reshape(T, M, F_)

    (w1x_f, b1_f, w1h_zr, w1h_c,
     w2x_f, b2_f, w2h_zr, w2h_c, wlin, blin) = fused_params

    # ---- Pass 1: layer-1 input->gates projection for all timesteps (parallel) ----
    xz1 = pl.pallas_call(
        functools.partial(_xproj_kernel, K),
        out_shape=jax.ShapeDtypeStruct((T, M, 3 * Ch), jnp.float32),
        grid=(T,),
        in_specs=[
            pl.BlockSpec((1, M, F_), lambda t: (t, 0, 0)),
            pl.BlockSpec((2 * M, 2 * M), lambda t: (0, 0)),
            pl.BlockSpec((nb * F_, 3 * Ch), lambda t: (0, 0)),
            pl.BlockSpec((1, 3 * Ch), lambda t: (0, 0)),
        ],
        out_specs=pl.BlockSpec((1, M, 3 * Ch), lambda t: (t, 0, 0)),
        compiler_params=pltpu.CompilerParams(
            dimension_semantics=("parallel",)),                 # independent over T
    )(xt, p_stack, w1x_f, b1_f)

    # ---- Pass 2: sequential GRU recurrence (everything resident in VMEM) ---------
    vmem_spec = pl.BlockSpec(memory_space=pltpu.MemorySpace.VMEM)
    out = pl.pallas_call(
        functools.partial(_recurrence_kernel, K, Ch),
        out_shape=jax.ShapeDtypeStruct((M, 12), jnp.float32),
        in_specs=[vmem_spec] * 10,
        out_specs=vmem_spec,
    )(xz1, p_stack, w1h_zr, w1h_c, w2x_f, b2_f, w2h_zr, w2h_c, wlin, blin)

    return out.reshape(B, N, 12)


# ------------------------- params (deterministic) ------------------------------

def init_raw_params(key, F_, Ch, K):
    ks = jax.random.split(key, 10)

    def w(k, cin):
        return jax.random.normal(k, (2, K, cin, Ch), jnp.float32) * 0.1

    W1 = [w(ks[i], F_ + Ch) for i in range(3)]           # gates z, r, c of layer 1
    W2 = [w(ks[3 + i], Ch + Ch) for i in range(3)]       # gates z, r, c of layer 2
    b1 = jax.random.normal(ks[6], (3, Ch), jnp.float32) * 0.1
    b2 = jax.random.normal(ks[7], (3, Ch), jnp.float32) * 0.1
    wlin = jax.random.normal(ks[8], (Ch, 12), jnp.float32) * 0.1
    blin = jax.random.normal(ks[9], (1, 12), jnp.float32) * 0.1
    return W1, b1, W2, b2, wlin, blin


def pack_params_fused(W1, b1, W2, b2, wlin, blin, F_, Ch, K):
    """Repack raw per-gate DConv weights into fully fused kernel layouts.

    * The (direction, k) axes become 2K-1 basis terms in the order
      [X (out_0 + in_0 folded), out_1..out_{K-1}, in_1..in_{K-1}], matching
      _basis_cat, and are flattened onto the contraction axis so each gate group
      is one matmul.
    * Gates are concatenated on the output-channel axis: [z | r | c] (or [z | r]).
    """
    def fold_dirs(W):                      # (2, K, Cin, Ch) -> (2K-1, Cin, Ch)
        w = W.reshape(2 * K, W.shape[2], W.shape[3])
        w0 = (w[0] + w[K])[None]
        return jnp.concatenate([w0, w[1:K], w[K + 1:]], axis=0)

    def x_part(W, fin):                    # -> ((2K-1)*fin, Ch)
        return fold_dirs(W[:, :, :fin, :]).reshape((2 * K - 1) * fin, Ch)

    def h_part(W, fin):                    # -> ((2K-1)*Ch, Ch)
        return fold_dirs(W[:, :, fin:, :]).reshape((2 * K - 1) * Ch, Ch)

    w1x_f = jnp.concatenate([x_part(W, F_) for W in W1], axis=-1)        # ((2K-1)F, 3Ch)
    w1h_zr = jnp.concatenate([h_part(W, F_) for W in W1[:2]], axis=-1)   # ((2K-1)Ch, 2Ch)
    w1h_c = h_part(W1[2], F_)                                            # ((2K-1)Ch, Ch)
    w2x_f = jnp.concatenate([x_part(W, Ch) for W in W2], axis=-1)        # ((2K-1)Ch, 3Ch)
    w2h_zr = jnp.concatenate([h_part(W, Ch) for W in W2[:2]], axis=-1)   # ((2K-1)Ch, 2Ch)
    w2h_c = h_part(W2[2], Ch)                                            # ((2K-1)Ch, Ch)
    b1_f = b1.reshape(1, 3 * Ch)
    b2_f = b2.reshape(1, 3 * Ch)
    return (w1x_f, b1_f, w1h_zr, w1h_c, w2x_f, b2_f, w2h_zr, w2h_c, wlin, blin)


# ---------------------------- pure-JAX reference -------------------------------

def reference_forward(x, edge_index, edge_weight, W1, b1, W2, b2, wlin, blin,
                      *, K, hidden):
    B, N, F_, T = x.shape
    M = B * N
    A = jnp.zeros((M, M), jnp.float32).at[edge_index[0], edge_index[1]].add(edge_weight)
    p_out = A.T / A.sum(axis=1)[None, :]
    p_in = A.T / A.sum(axis=0)[:, None]

    def dconv(Xc, W, b):
        Tx0, Tx1 = Xc, Xc
        H = Xc @ W[0, 0] + Xc @ W[1, 0]
        if K > 1:
            T1o, T1i = p_out @ Xc, p_in @ Xc
            H = H + T1o @ W[0, 1] + T1i @ W[1, 1]
            for k in range(2, K):
                T2o = 2.0 * (p_out @ T1o) - Tx0
                T2i = 2.0 * (p_in @ T1i) - Tx0
                H = H + T2o @ W[0, k] + T2i @ W[1, k]
                Tx0 = Tx1
                T1o, T1i = T2o, T2i
        return H + b

    def cell(X, H, Ws, bs):
        XH = jnp.concatenate([X, H], axis=1)
        z = jax.nn.sigmoid(dconv(XH, Ws[0], bs[0]))
        r = jax.nn.sigmoid(dconv(XH, Ws[1], bs[1]))
        XHr = jnp.concatenate([X, H * r], axis=1)
        h_t = jnp.tanh(dconv(XHr, Ws[2], bs[2]))
        return z * H + (1.0 - z) * h_t

    h1 = jnp.zeros((M, hidden), jnp.float32)
    h2 = jnp.zeros((M, hidden), jnp.float32)
    for t in range(T):
        xt = x[:, :, :, t].reshape(M, F_)
        h1 = jnp.maximum(cell(xt, h1, W1, b1), 0.0)
        h2 = jnp.maximum(cell(h1, h2, W2, b2), 0.0)
    out = h2 @ wlin + blin
    return out.reshape(B, N, 12)


# ------------------------------------ main --------------------------------------

if __name__ == "__main__":
    B, N, F_, T = 2, 8, 4, 6          # batch, nodes/graph, num_features, timesteps
    Ch, K = 32, 3                     # hidden_channels, filter_size
    M = B * N

    key = jax.random.PRNGKey(0)
    k_x, k_w, k_e = jax.random.split(key, 3)

    x = jax.random.normal(k_x, (B, N, F_, T), jnp.float32)

    # Block-diagonal bidirectional ring graph over the B*N flattened nodes
    # (every node has in- and out-degree >= 1, so degrees are invertible).
    src, dst = [], []
    for b in range(B):
        base = b * N
        for i in range(N):
            src += [base + i, base + (i + 1) % N]
            dst += [base + (i + 1) % N, base + i]
    edge_index = jnp.array([src, dst], dtype=jnp.int32)
    edge_weight = jax.random.uniform(k_e, (edge_index.shape[1],),
                                     minval=0.5, maxval=1.5, dtype=jnp.float32)

    W1, b1, W2, b2, wlin, blin = init_raw_params(k_w, F_, Ch, K)
    fused = pack_params_fused(W1, b1, W2, b2, wlin, blin, F_, Ch, K)

    fwd = jax.jit(dcrnn_forward, static_argnames=("K", "hidden"))
    out = fwd(x, edge_index, edge_weight, fused, K=K, hidden=Ch)
    out = jax.block_until_ready(out)
    assert out.shape == (B, N, 12)

    ref = reference_forward(x, edge_index, edge_weight,
                            [jnp.asarray(w) for w in W1], b1[:, None, :],
                            [jnp.asarray(w) for w in W2], b2[:, None, :],
                            wlin, blin, K=K, hidden=Ch)
    np.testing.assert_allclose(np.asarray(out), np.asarray(ref), rtol=1e-3, atol=1e-3)

    print("KERNEL_OK")
</pallas_src>

<mosaic_0001>
module attributes {stable_mosaic.version = 11 : i64} {
  func.func private @main(%arg0: i32) attributes {dimension_semantics = [#tpu.dimension_semantics<core_parallel>], iteration_bounds = array<i64: 2>, tpu.core_type = #tpu.core_type<sc_scalar_subcore>, window_params = []} {
    return
  }
}

module attributes {stable_mosaic.version = 11 : i64} {
  func.func private @main(%arg0: i32) attributes {dimension_semantics = [#tpu.dimension_semantics<core_parallel>], iteration_bounds = array<i64: 2>, tpu.core_type = #tpu.core_type<sc_scalar_subcore>, window_params = []} {
    return
  }
}

module attributes {stable_mosaic.version = 11 : i64} {
  func.func @_xproj_kernel(%arg0: i32, %arg1: memref<1x16x4xf32, #tpu.memory_space<vmem>>, %arg2: memref<32x32xf32, #tpu.memory_space<vmem>>, %arg3: memref<20x96xf32, #tpu.memory_space<vmem>>, %arg4: memref<1x96xf32, #tpu.memory_space<vmem>>, %arg5: memref<1x16x96xf32, #tpu.memory_space<vmem>>) attributes {dimension_semantics = [#tpu.dimension_semantics<parallel>], iteration_bounds = array<i64: 6>, scalar_prefetch = 0 : i64, scratch_operands = 0 : i64, tpu.core_type = #tpu.core_type<tc>, window_params = [{transform_indices = @transform_0, window_bounds = array<i64: 1, 16, 4>}, {pipeline_mode = #tpu.pipeline_mode<synchronous>, transform_indices = @transform_1, window_bounds = array<i64: 32, 32>}, {pipeline_mode = #tpu.pipeline_mode<synchronous>, transform_indices = @transform_2, window_bounds = array<i64: 20, 96>}, {pipeline_mode = #tpu.pipeline_mode<synchronous>, transform_indices = @transform_3, window_bounds = array<i64: 1, 96>}, {transform_indices = @transform_4, window_bounds = array<i64: 1, 16, 96>}]} {
    %c0 = arith.constant 0 : index
    %c0_0 = arith.constant 0 : index
    %c0_1 = arith.constant 0 : index
    %0 = vector.load %arg1[%c0, %c0_0, %c0_1] : memref<1x16x4xf32, #tpu.memory_space<vmem>>, vector<1x16x4xf32>
    %1 = vector.shape_cast %0 : vector<1x16x4xf32> to vector<16x4xf32>
    %c0_2 = arith.constant 0 : index
    %c0_3 = arith.constant 0 : index
    %2 = vector.load %arg2[%c0_2, %c0_3] : memref<32x32xf32, #tpu.memory_space<vmem>>, vector<32x32xf32>
    %3 = tpu.concatenate %1, %1 in 0 : vector<16x4xf32>, vector<16x4xf32> -> vector<32x4xf32>
    %cst = arith.constant dense<0.000000e+00> : vector<32x4xf32>
    %4 = tpu.matmul %2, %3, %cst {dimension_numbers = #tpu.dot_dimension_numbers<[1], [0], [0], [1], [0, 0, 1, 1], [], []>} : vector<32x32xf32>, vector<32x4xf32>, vector<32x4xf32> -> vector<32x4xf32>
    %cst_4 = arith.constant dense<0.000000e+00> : vector<32x4xf32>
    %5 = tpu.matmul %2, %4, %cst_4 {dimension_numbers = #tpu.dot_dimension_numbers<[1], [0], [0], [1], [0, 0, 1, 1], [], []>} : vector<32x32xf32>, vector<32x4xf32>, vector<32x4xf32> -> vector<32x4xf32>
    %cst_5 = arith.constant 2.000000e+00 : f32
    %6 = vector.broadcast %cst_5 : f32 to vector<32x4xf32>
    %7 = arith.mulf %6, %5 : vector<32x4xf32>
    %8 = arith.subf %7, %3 : vector<32x4xf32>
    %9 = vector.extract_strided_slice %4 {offsets = [0, 0], sizes = [16, 4], strides = [1, 1]} : vector<32x4xf32> to vector<16x4xf32>
    %10 = vector.extract_strided_slice %8 {offsets = [0, 0], sizes = [16, 4], strides = [1, 1]} : vector<32x4xf32> to vector<16x4xf32>
    %11 = vector.extract_strided_slice %4 {offsets = [16, 0], sizes = [16, 4], strides = [1, 1]} : vector<32x4xf32> to vector<16x4xf32>
    %12 = vector.extract_strided_slice %8 {offsets = [16, 0], sizes = [16, 4], strides = [1, 1]} : vector<32x4xf32> to vector<16x4xf32>
    %13 = tpu.concatenate %1, %9, %10, %11, %12 in 1 : vector<16x4xf32>, vector<16x4xf32>, vector<16x4xf32>, vector<16x4xf32>, vector<16x4xf32> -> vector<16x20xf32>
    %c0_6 = arith.constant 0 : index
    %c0_7 = arith.constant 0 : index
    %14 = vector.load %arg3[%c0_6, %c0_7] : memref<20x96xf32, #tpu.memory_space<vmem>>, vector<20x96xf32>
    %cst_8 = arith.constant dense<0.000000e+00> : vector<16x96xf32>
    %15 = tpu.matmul %13, %14, %cst_8 {dimension_numbers = #tpu.dot_dimension_numbers<[1], [0], [0], [1], [0, 0, 1, 1], [], []>} : vector<16x20xf32>, vector<20x96xf32>, vector<16x96xf32> -> vector<16x96xf32>
    %c0_9 = arith.constant 0 : index
    %c0_10 = arith.constant 0 : index
    %16 = vector.load %arg4[%c0_9, %c0_10] : memref<1x96xf32, #tpu.memory_space<vmem>>, vector<1x96xf32>
    %17 = vector.broadcast %16 : vector<1x96xf32> to vector<16x96xf32>
    %18 = arith.addf %15, %17 : vector<16x96xf32>
    %c0_11 = arith.constant 0 : index
    %c0_12 = arith.constant 0 : index
    %c0_13 = arith.constant 0 : index
    %19 = vector.load %arg5[%c0_11, %c0_12, %c0_13] : memref<1x16x96xf32, #tpu.memory_space<vmem>>, vector<1x16x96xf32>
    %20 = vector.shape_cast %19 : vector<1x16x96xf32> to vector<16x96xf32>
    %21 = vector.shape_cast %18 : vector<16x96xf32> to vector<1x16x96xf32>
    tpu.vector_store %arg5[%c0_11, %c0_12, %c0_13], %21 {strides = array<i32>} : memref<1x16x96xf32, #tpu.memory_space<vmem>>, vector<1x16x96xf32>,
    return
  }
  func.func @transform_0(%arg0: i32) -> (i32, i32, i32) {
    %c0_i32 = arith.constant 0 : i32
    %c0_i32_0 = arith.constant 0 : i32
    %c0_i32_1 = arith.constant 0 : i32
    return %arg0, %c0_i32, %c0_i32_0 : i32, i32, i32
  }
  func.func @transform_1(%arg0: i32) -> (i32, i32) {
    %c0_i32 = arith.constant 0 : i32
    %c0_i32_0 = arith.constant 0 : i32
    %c0_i32_1 = arith.constant 0 : i32
    return %c0_i32, %c0_i32_0 : i32, i32
  }
  func.func @transform_2(%arg0: i32) -> (i32, i32) {
    %c0_i32 = arith.constant 0 : i32
    %c0_i32_0 = arith.constant 0 : i32
    %c0_i32_1 = arith.constant 0 : i32
    return %c0_i32, %c0_i32_0 : i32, i32
  }
  func.func @transform_3(%arg0: i32) -> (i32, i32) {
    %c0_i32 = arith.constant 0 : i32
    %c0_i32_0 = arith.constant 0 : i32
    %c0_i32_1 = arith.constant 0 : i32
    return %c0_i32, %c0_i32_0 : i32, i32
  }
  func.func @transform_4(%arg0: i32) -> (i32, i32, i32) {
    %c0_i32 = arith.constant 0 : i32
    %c0_i32_0 = arith.constant 0 : i32
    %c0_i32_1 = arith.constant 0 : i32
    return %arg0, %c0_i32, %c0_i32_0 : i32, i32, i32
  }
}

module attributes {stable_mosaic.version = 11 : i64} {
  func.func @_recurrence_kernel(%arg0: memref<6x16x96xf32, #tpu.memory_space<vmem>>, %arg1: memref<32x32xf32, #tpu.memory_space<vmem>>, %arg2: memref<160x64xf32, #tpu.memory_space<vmem>>, %arg3: memref<160x32xf32, #tpu.memory_space<vmem>>, %arg4: memref<160x96xf32, #tpu.memory_space<vmem>>, %arg5: memref<1x96xf32, #tpu.memory_space<vmem>>, %arg6: memref<160x64xf32, #tpu.memory_space<vmem>>, %arg7: memref<160x32xf32, #tpu.memory_space<vmem>>, %arg8: memref<32x12xf32, #tpu.memory_space<vmem>>, %arg9: memref<1x12xf32, #tpu.memory_space<vmem>>, %arg10: memref<16x12xf32, #tpu.memory_space<vmem>>) attributes {dimension_semantics = [], scalar_prefetch = 0 : i64, scratch_operands = 0 : i64, tpu.core_type = #tpu.core_type<tc>} {
    %c0 = arith.constant 0 : index
    %c0_0 = arith.constant 0 : index
    %0 = vector.load %arg1[%c0, %c0_0] : memref<32x32xf32, #tpu.memory_space<vmem>>, vector<32x32xf32>
    %cst = arith.constant 0.000000e+00 : f32
    %1 = vector.broadcast %cst : f32 to vector<16x32xf32>
    %c0_i32 = arith.constant 0 : i32
    %2 = arith.index_cast %c0_i32 : i32 to index
    %c0_1 = arith.constant 0 : index
    %c0_2 = arith.constant 0 : index
    %3 = vector.load %arg0[%2, %c0_1, %c0_2] : memref<6x16x96xf32, #tpu.memory_space<vmem>>, vector<1x16x96xf32>
    %4 = vector.shape_cast %3 : vector<1x16x96xf32> to vector<16x96xf32>
    %5 = tpu.concatenate %1, %1 in 0 : vector<16x32xf32>, vector<16x32xf32> -> vector<32x32xf32>
    %cst_3 = arith.constant dense<0.000000e+00> : vector<32x32xf32>
    %6 = tpu.matmul %0, %5, %cst_3 {dimension_numbers = #tpu.dot_dimension_numbers<[1], [0], [0], [1], [0, 0, 1, 1], [], []>} : vector<32x32xf32>, vector<32x32xf32>, vector<32x32xf32> -> vector<32x32xf32>
    %cst_4 = arith.constant dense<0.000000e+00> : vector<32x32xf32>
    %7 = tpu.matmul %0, %6, %cst_4 {dimension_numbers = #tpu.dot_dimension_numbers<[1], [0], [0], [1], [0, 0, 1, 1], [], []>} : vector<32x32xf32>, vector<32x32xf32>, vector<32x32xf32> -> vector<32x32xf32>
    %cst_5 = arith.constant 2.000000e+00 : f32
    %8 = vector.broadcast %cst_5 : f32 to vector<32x32xf32>
    %9 = arith.mulf %8, %7 : vector<32x32xf32>
    %10 = arith.subf %9, %5 : vector<32x32xf32>
    %11 = vector.extract_strided_slice %6 {offsets = [0, 0], sizes = [16, 32], strides = [1, 1]} : vector<32x32xf32> to vector<16x32xf32>
    %12 = vector.extract_strided_slice %10 {offsets = [0, 0], sizes = [16, 32], strides = [1, 1]} : vector<32x32xf32> to vector<16x32xf32>
    %13 = vector.extract_strided_slice %6 {offsets = [16, 0], sizes = [16, 32], strides = [1, 1]} : vector<32x32xf32> to vector<16x32xf32>
    %14 = vector.extract_strided_slice %10 {offsets = [16, 0], sizes = [16, 32], strides = [1, 1]} : vector<32x32xf32> to vector<16x32xf32>
    %15 = tpu.concatenate %1, %11, %12, %13, %14 in 1 : vector<16x32xf32>, vector<16x32xf32>, vector<16x32xf32>, vector<16x32xf32>, vector<16x32xf32> -> vector<16x160xf32>
    %16 = vector.extract_strided_slice %4 {offsets = [0, 0], sizes = [16, 64], strides = [1, 1]} : vector<16x96xf32> to vector<16x64xf32>
    %c0_6 = arith.constant 0 : index
    %c0_7 = arith.constant 0 : index
    %17 = vector.load %arg2[%c0_6, %c0_7] : memref<160x64xf32, #tpu.memory_space<vmem>>, vector<160x64xf32>
    %cst_8 = arith.constant dense<0.000000e+00> : vector<16x64xf32>
    %18 = tpu.matmul %15, %17, %cst_8 {dimension_numbers = #tpu.dot_dimension_numbers<[1], [0], [0], [1], [0, 0, 1, 1], [], []>} : vector<16x160xf32>, vector<160x64xf32>, vector<16x64xf32> -> vector<16x64xf32>
    %19 = arith.addf %16, %18 : vector<16x64xf32>
    %20 = arith.negf %19 : vector<16x64xf32>
    %21 = math.exp %20 : vector<16x64xf32>
    %cst_9 = arith.constant 1.000000e+00 : f32
    %22 = vector.broadcast %cst_9 : f32 to vector<16x64xf32>
    %23 = arith.addf %22, %21 : vector<16x64xf32>
    %24 = arith.divf %22, %23 : vector<16x64xf32>
    %25 = vector.extract_strided_slice %24 {offsets = [0, 0], sizes = [16, 32], strides = [1, 1]} : vector<16x64xf32> to vector<16x32xf32>
    %26 = vector.extract_strided_slice %24 {offsets = [0, 32], sizes = [16, 32], strides = [1, 1]} : vector<16x64xf32> to vector<16x32xf32>
    %27 = arith.mulf %1, %26 : vector<16x32xf32>
    %28 = tpu.concatenate %27, %27 in 0 : vector<16x32xf32>, vector<16x32xf32> -> vector<32x32xf32>
    %cst_10 = arith.constant dense<0.000000e+00> : vector<32x32xf32>
    %29 = tpu.matmul %0, %28, %cst_10 {dimension_numbers = #tpu.dot_dimension_numbers<[1], [0], [0], [1], [0, 0, 1, 1], [], []>} : vector<32x32xf32>, vector<32x32xf32>, vector<32x32xf32> -> vector<32x32xf32>
    %cst_11 = arith.constant dense<0.000000e+00> : vector<32x32xf32>
    %30 = tpu.matmul %0, %29, %cst_11 {dimension_numbers = #tpu.dot_dimension_numbers<[1], [0], [0], [1], [0, 0, 1, 1], [], []>} : vector<32x32xf32>, vector<32x32xf32>, vector<32x32xf32> -> vector<32x32xf32>
    %cst_12 = arith.constant 2.000000e+00 : f32
    %31 = vector.broadcast %cst_12 : f32 to vector<32x32xf32>
    %32 = arith.mulf %31, %30 : vector<32x32xf32>
    %33 = arith.subf %32, %28 : vector<32x32xf32>
    %34 = vector.extract_strided_slice %29 {offsets = [0, 0], sizes = [16, 32], strides = [1, 1]} : vector<32x32xf32> to vector<16x32xf32>
    %35 = vector.extract_strided_slice %33 {offsets = [0, 0], sizes = [16, 32], strides = [1, 1]} : vector<32x32xf32> to vector<16x32xf32>
    %36 = vector.extract_strided_slice %29 {offsets = [16, 0], sizes = [16, 32], strides = [1, 1]} : vector<32x32xf32> to vector<16x32xf32>
    %37 = vector.extract_strided_slice %33 {offsets = [16, 0], sizes = [16, 32], strides = [1, 1]} : vector<32x32xf32> to vector<16x32xf32>
    %38 = tpu.concatenate %27, %34, %35, %36, %37 in 1 : vector<16x32xf32>, vector<16x32xf32>, vector<16x32xf32>, vector<16x32xf32>, vector<16x32xf32> -> vector<16x160xf32>
    %39 = vector.extract_strided_slice %4 {offsets = [0, 64], sizes = [16, 32], strides = [1, 1]} : vector<16x96xf32> to vector<16x32xf32>
    %c0_13 = arith.constant 0 : index
    %c0_14 = arith.constant 0 : index
    %40 = vector.load %arg3[%c0_13, %c0_14] : memref<160x32xf32, #tpu.memory_space<vmem>>, vector<160x32xf32>
    %cst_15 = arith.constant dense<0.000000e+00> : vector<16x32xf32>
    %41 = tpu.matmul %38, %40, %cst_15 {dimension_numbers = #tpu.dot_dimension_numbers<[1], [0], [0], [1], [0, 0, 1, 1], [], []>} : vector<16x160xf32>, vector<160x32xf32>, vector<16x32xf32> -> vector<16x32xf32>
    %42 = arith.addf %39, %41 : vector<16x32xf32>
    %43 = math.tanh %42 : vector<16x32xf32>
    %44 = arith.mulf %25, %1 : vector<16x32xf32>
    %cst_16 = arith.constant 1.000000e+00 : f32
    %45 = vector.broadcast %cst_16 : f32 to vector<16x32xf32>
    %46 = arith.subf %45, %25 : vector<16x32xf32>
    %47 = arith.mulf %46, %43 : vector<16x32xf32>
    %48 = arith.addf %44, %47 : vector<16x32xf32>
    %cst_17 = arith.constant 0.000000e+00 : f32
    %49 = vector.broadcast %cst_17 : f32 to vector<16x32xf32>
    %50 = arith.maximumf %48, %49 : vector<16x32xf32>
    %51 = tpu.concatenate %50, %50 in 0 : vector<16x32xf32>, vector<16x32xf32> -> vector<32x32xf32>
    %cst_18 = arith.constant dense<0.000000e+00> : vector<32x32xf32>
    %52 = tpu.matmul %0, %51, %cst_18 {dimension_numbers = #tpu.dot_dimension_numbers<[1], [0], [0], [1], [0, 0, 1, 1], [], []>} : vector<32x32xf32>, vector<32x32xf32>, vector<32x32xf32> -> vector<32x32xf32>
    %cst_19 = arith.constant dense<0.000000e+00> : vector<32x32xf32>
    %53 = tpu.matmul %0, %52, %cst_19 {dimension_numbers = #tpu.dot_dimension_numbers<[1], [0], [0], [1], [0, 0, 1, 1], [], []>} : vector<32x32xf32>, vector<32x32xf32>, vector<32x32xf32> -> vector<32x32xf32>
    %cst_20 = arith.constant 2.000000e+00 : f32
    %54 = vector.broadcast %cst_20 : f32 to vector<32x32xf32>
    %55 = arith.mulf %54, %53 : vector<32x32xf32>
    %56 = arith.subf %55, %51 : vector<32x32xf32>
    %57 = vector.extract_strided_slice %52 {offsets = [0, 0], sizes = [16, 32], strides = [1, 1]} : vector<32x32xf32> to vector<16x32xf32>
    %58 = vector.extract_strided_slice %56 {offsets = [0, 0], sizes = [16, 32], strides = [1, 1]} : vector<32x32xf32> to vector<16x32xf32>
    %59 = vector.extract_strided_slice %52 {offsets = [16, 0], sizes = [16, 32], strides = [1, 1]} : vector<32x32xf32> to vector<16x32xf32>
    %60 = vector.extract_strided_slice %56 {offsets = [16, 0], sizes = [16, 32], strides = [1, 1]} : vector<32x32xf32> to vector<16x32xf32>
    %61 = tpu.concatenate %50, %57, %58, %59, %60 in 1 : vector<16x32xf32>, vector<16x32xf32>, vector<16x32xf32>, vector<16x32xf32>, vector<16x32xf32> -> vector<16x160xf32>
    %c0_21 = arith.constant 0 : index
    %c0_22 = arith.constant 0 : index
    %62 = vector.load %arg4[%c0_21, %c0_22] : memref<160x96xf32, #tpu.memory_space<vmem>>, vector<160x96xf32>
    %cst_23 = arith.constant dense<0.000000e+00> : vector<16x96xf32>
    %63 = tpu.matmul %61, %62, %cst_23 {dimension_numbers = #tpu.dot_dimension_numbers<[1], [0], [0], [1], [0, 0, 1, 1], [], []>} : vector<16x160xf32>, vector<160x96xf32>, vector<16x96xf32> -> vector<16x96xf32>
    %c0_24 = arith.constant 0 : index
    %c0_25 = arith.constant 0 : index
    %64 = vector.load %arg5[%c0_24, %c0_25] : memref<1x96xf32, #tpu.memory_space<vmem>>, vector<1x96xf32>
    %65 = vector.broadcast %64 : vector<1x96xf32> to vector<16x96xf32>
    %66 = arith.addf %63, %65 : vector<16x96xf32>
    %67 = tpu.concatenate %1, %1 in 0 : vector<16x32xf32>, vector<16x32xf32> -> vector<32x32xf32>
    %cst_26 = arith.constant dense<0.000000e+00> : vector<32x32xf32>
    %68 = tpu.matmul %0, %67, %cst_26 {dimension_numbers = #tpu.dot_dimension_numbers<[1], [0], [0], [1], [0, 0, 1, 1], [], []>} : vector<32x32xf32>, vector<32x32xf32>, vector<32x32xf32> -> vector<32x32xf32>
    %cst_27 = arith.constant dense<0.000000e+00> : vector<32x32xf32>
    %69 = tpu.matmul %0, %68, %cst_27 {dimension_numbers = #tpu.dot_dimension_numbers<[1], [0], [0], [1], [0, 0, 1, 1], [], []>} : vector<32x32xf32>, vector<32x32xf32>, vector<32x32xf32> -> vector<32x32xf32>
    %cst_28 = arith.constant 2.000000e+00 : f32
    %70 = vector.broadcast %cst_28 : f32 to vector<32x32xf32>
    %71 = arith.mulf %70, %69 : vector<32x32xf32>
    %72 = arith.subf %71, %67 : vector<32x32xf32>
    %73 = vector.extract_strided_slice %68 {offsets = [0, 0], sizes = [16, 32], strides = [1, 1]} : vector<32x32xf32> to vector<16x32xf32>
    %74 = vector.extract_strided_slice %72 {offsets = [0, 0], sizes = [16, 32], strides = [1, 1]} : vector<32x32xf32> to vector<16x32xf32>
    %75 = vector.extract_strided_slice %68 {offsets = [16, 0], sizes = [16, 32], strides = [1, 1]} : vector<32x32xf32> to vector<16x32xf32>
    %76 = vector.extract_strided_slice %72 {offsets = [16, 0], sizes = [16, 32], strides = [1, 1]} : vector<32x32xf32> to vector<16x32xf32>
    %77 = tpu.concatenate %1, %73, %74, %75, %76 in 1 : vector<16x32xf32>, vector<16x32xf32>, vector<16x32xf32>, vector<16x32xf32>, vector<16x32xf32> -> vector<16x160xf32>
    %78 = vector.extract_strided_slice %66 {offsets = [0, 0], sizes = [16, 64], strides = [1, 1]} : vector<16x96xf32> to vector<16x64xf32>
    %c0_29 = arith.constant 0 : index
    %c0_30 = arith.constant 0 : index
    %79 = vector.load %arg6[%c0_29, %c0_30] : memref<160x64xf32, #tpu.memory_space<vmem>>, vector<160x64xf32>
    %cst_31 = arith.constant dense<0.000000e+00> : vector<16x64xf32>
    %80 = tpu.matmul %77, %79, %cst_31 {dimension_numbers = #tpu.dot_dimension_numbers<[1], [0], [0], [1], [0, 0, 1, 1], [], []>} : vector<16x160xf32>, vector<160x64xf32>, vector<16x64xf32> -> vector<16x64xf32>
    %81 = arith.addf %78, %80 : vector<16x64xf32>
    %82 = arith.negf %81 : vector<16x64xf32>
    %83 = math.exp %82 : vector<16x64xf32>
    %cst_32 = arith.constant 1.000000e+00 : f32
    %84 = vector.broadcast %cst_32 : f32 to vector<16x64xf32>
    %85 = arith.addf %84, %83 : vector<16x64xf32>
    %86 = arith.divf %84, %85 : vector<16x64xf32>
    %87 = vector.extract_strided_slice %86 {offsets = [0, 0], sizes = [16, 32], strides = [1, 1]} : vector<16x64xf32> to vector<16x32xf32>
    %88 = vector.extract_strided_slice %86 {offsets = [0, 32], sizes = [16, 32], strides = [1, 1]} : vector<16x64xf32> to vector<16x32xf32>
    %89 = arith.mulf %1, %88 : vector<16x32xf32>
    %90 = tpu.concatenate %89, %89 in 0 : vector<16x32xf32>, vector<16x32xf32> -> vector<32x32xf32>
    %cst_33 = arith.constant dense<0.000000e+00> : vector<32x32xf32>
    %91 = tpu.matmul %0, %90, %cst_33 {dimension_numbers = #tpu.dot_dimension_numbers<[1], [0], [0], [1], [0, 0, 1, 1], [], []>} : vector<32x32xf32>, vector<32x32xf32>, vector<32x32xf32> -> vector<32x32xf32>
    %cst_34 = arith.constant dense<0.000000e+00> : vector<32x32xf32>
    %92 = tpu.matmul %0, %91, %cst_34 {dimension_numbers = #tpu.dot_dimension_numbers<[1], [0], [0], [1], [0, 0, 1, 1], [], []>} : vector<32x32xf32>, vector<32x32xf32>, vector<32x32xf32> -> vector<32x32xf32>
    %cst_35 = arith.constant 2.000000e+00 : f32
    %93 = vector.broadcast %cst_35 : f32 to vector<32x32xf32>
    %94 = arith.mulf %93, %92 : vector<32x32xf32>
    %95 = arith.subf %94, %90 : vector<32x32xf32>
    %96 = vector.extract_strided_slice %91 {offsets = [0, 0], sizes = [16, 32], strides = [1, 1]} : vector<32x32xf32> to vector<16x32xf32>
    %97 = vector.extract_strided_slice %95 {offsets = [0, 0], sizes = [16, 32], strides = [1, 1]} : vector<32x32xf32> to vector<16x32xf32>
    %98 = vector.extract_strided_slice %91 {offsets = [16, 0], sizes = [16, 32], strides = [1, 1]} : vector<32x32xf32> to vector<16x32xf32>
    %99 = vector.extract_strided_slice %95 {offsets = [16, 0], sizes = [16, 32], strides = [1, 1]} : vector<32x32xf32> to vector<16x32xf32>
    %100 = tpu.concatenate %89, %96, %97, %98, %99 in 1 : vector<16x32xf32>, vector<16x32xf32>, vector<16x32xf32>, vector<16x32xf32>, vector<16x32xf32> -> vector<16x160xf32>
    %101 = vector.extract_strided_slice %66 {offsets = [0, 64], sizes = [16, 32], strides = [1, 1]} : vector<16x96xf32> to vector<16x32xf32>
    %c0_36 = arith.constant 0 : index
    %c0_37 = arith.constant 0 : index
    %102 = vector.load %arg7[%c0_36, %c0_37] : memref<160x32xf32, #tpu.memory_space<vmem>>, vector<160x32xf32>
    %cst_38 = arith.constant dense<0.000000e+00> : vector<16x32xf32>
    %103 = tpu.matmul %100, %102, %cst_38 {dimension_numbers = #tpu.dot_dimension_numbers<[1], [0], [0], [1], [0, 0, 1, 1], [], []>} : vector<16x160xf32>, vector<160x32xf32>, vector<16x32xf32> -> vector<16x32xf32>
    %104 = arith.addf %101, %103 : vector<16x32xf32>
    %105 = math.tanh %104 : vector<16x32xf32>
    %106 = arith.mulf %87, %1 : vector<16x32xf32>
    %cst_39 = arith.constant 1.000000e+00 : f32
    %107 = vector.broadcast %cst_39 : f32 to vector<16x32xf32>
    %108 = arith.subf %107, %87 : vector<16x32xf32>
    %109 = arith.mulf %108, %105 : vector<16x32xf32>
    %110 = arith.addf %106, %109 : vector<16x32xf32>
    %cst_40 = arith.constant 0.000000e+00 : f32
    %111 = vector.broadcast %cst_40 : f32 to vector<16x32xf32>
    %112 = arith.maximumf %110, %111 : vector<16x32xf32>
    %c1_i32 = arith.constant 1 : i32
    %113 = arith.index_cast %c1_i32 : i32 to index
    %c0_41 = arith.constant 0 : index
    %c0_42 = arith.constant 0 : index
    %114 = vector.load %arg0[%113, %c0_41, %c0_42] : memref<6x16x96xf32, #tpu.memory_space<vmem>>, vector<1x16x96xf32>
    %115 = vector.shape_cast %114 : vector<1x16x96xf32> to vector<16x96xf32>
    %116 = tpu.concatenate %50, %50 in 0 : vector<16x32xf32>, vector<16x32xf32> -> vector<32x32xf32>
    %cst_43 = arith.constant dense<0.000000e+00> : vector<32x32xf32>
    %117 = tpu.matmul %0, %116, %cst_43 {dimension_numbers = #tpu.dot_dimension_numbers<[1], [0], [0], [1], [0, 0, 1, 1], [], []>} : vector<32x32xf32>, vector<32x32xf32>, vector<32x32xf32> -> vector<32x32xf32>
    %cst_44 = arith.constant dense<0.000000e+00> : vector<32x32xf32>
    %118 = tpu.matmul %0, %117, %cst_44 {dimension_numbers = #tpu.dot_dimension_numbers<[1], [0], [0], [1], [0, 0, 1, 1], [], []>} : vector<32x32xf32>, vector<32x32xf32>, vector<32x32xf32> -> vector<32x32xf32>
    %cst_45 = arith.constant 2.000000e+00 : f32
    %119 = vector.broadcast %cst_45 : f32 to vector<32x32xf32>
    %120 = arith.mulf %119, %118 : vector<32x32xf32>
    %121 = arith.subf %120, %116 : vector<32x32xf32>
    %122 = vector.extract_strided_slice %117 {offsets = [0, 0], sizes = [16, 32], strides = [1, 1]} : vector<32x32xf32> to vector<16x32xf32>
    %123 = vector.extract_strided_slice %121 {offsets = [0, 0], sizes = [16, 32], strides = [1, 1]} : vector<32x32xf32> to vector<16x32xf32>
    %124 = vector.extract_strided_slice %117 {offsets = [16, 0], sizes = [16, 32], strides = [1, 1]} : vector<32x32xf32> to vector<16x32xf32>
    %125 = vector.extract_strided_slice %121 {offsets = [16, 0], sizes = [16, 32], strides = [1, 1]} : vector<32x32xf32> to vector<16x32xf32>
    %126 = tpu.concatenate %50, %122, %123, %124, %125 in 1 : vector<16x32xf32>, vector<16x32xf32>, vector<16x32xf32>, vector<16x32xf32>, vector<16x32xf32> -> vector<16x160xf32>
    %127 = vector.extract_strided_slice %115 {offsets = [0, 0], sizes = [16, 64], strides = [1, 1]} : vector<16x96xf32> to vector<16x64xf32>
    %c0_46 = arith.constant 0 : index
    %c0_47 = arith.constant 0 : index
    %128 = vector.load %arg2[%c0_46, %c0_47] : memref<160x64xf32, #tpu.memory_space<vmem>>, vector<160x64xf32>
    %cst_48 = arith.constant dense<0.000000e+00> : vector<16x64xf32>
    %129 = tpu.matmul %126, %128, %cst_48 {dimension_numbers = #tpu.dot_dimension_numbers<[1], [0], [0], [1], [0, 0, 1, 1], [], []>} : vector<16x160xf32>, vector<160x64xf32>, vector<16x64xf32> -> vector<16x64xf32>
    %130 = arith.addf %127, %129 : vector<16x64xf32>
    %131 = arith.negf %130 : vector<16x64xf32>
    %132 = math.exp %131 : vector<16x64xf32>
    %cst_49 = arith.constant 1.000000e+00 : f32
    %133 = vector.broadcast %cst_49 : f32 to vector<16x64xf32>
    %134 = arith.addf %133, %132 : vector<16x64xf32>
    %135 = arith.divf %133, %134 : vector<16x64xf32>
    %136 = vector.extract_strided_slice %135 {offsets = [0, 0], sizes = [16, 32], strides = [1, 1]} : vector<16x64xf32> to vector<16x32xf32>
    %137 = vector.extract_strided_slice %135 {offsets = [0, 32], sizes = [16, 32], strides = [1, 1]} : vector<16x64xf32> to vector<16x32xf32>
    %138 = arith.mulf %50, %137 : vector<16x32xf32>
    %139 = tpu.concatenate %138, %138 in 0 : vector<16x32xf32>, vector<16x32xf32> -> vector<32x32xf32>
    %cst_50 = arith.constant dense<0.000000e+00> : vector<32x32xf32>
    %140 = tpu.matmul %0, %139, %cst_50 {dimension_numbers = #tpu.dot_dimension_numbers<[1], [0], [0], [1], [0, 0, 1, 1], [], []>} : vector<32x32xf32>, vector<32x32xf32>, vector<32x32xf32> -> vector<32x32xf32>
    %cst_51 = arith.constant dense<0.000000e+00> : vector<32x32xf32>
    %141 = tpu.matmul %0, %140, %cst_51 {dimension_numbers = #tpu.dot_dimension_numbers<[1], [0], [0], [1], [0, 0, 1, 1], [], []>} : vector<32x32xf32>, vector<32x32xf32>, vector<32x32xf32> -> vector<32x32xf32>
    %cst_52 = arith.constant 2.000000e+00 : f32
    %142 = vector.broadcast %cst_52 : f32 to vector<32x32xf32>
    %143 = arith.mulf %142, %141 : vector<32x32xf32>
    %144 = arith.subf %143, %139 : vector<32x32xf32>
    %145 = vector.extract_strided_slice %140 {offsets = [0, 0], sizes = [16, 32], strides = [1, 1]} : vector<32x32xf32> to vector<16x32xf32>
    %146 = vector.extract_strided_slice %144 {offsets = [0, 0], sizes = [16, 32], strides = [1, 1]} : vector<32x32xf32> to vector<16x32xf32>
    %147 = vector.extract_strided_slice %140 {offsets = [16, 0], sizes = [16, 32], strides = [1, 1]} : vector<32x32xf32> to vector<16x32xf32>
    %148 = vector.extract_strided_slice %144 {offsets = [16, 0], sizes = [16, 32], strides = [1, 1]} : vector<32x32xf32> to vector<16x32xf32>
    %149 = tpu.concatenate %138, %145, %146, %147, %148 in 1 : vector<16x32xf32>, vector<16x32xf32>, vector<16x32xf32>, vector<16x32xf32>, vector<16x32xf32> -> vector<16x160xf32>
    %150 = vector.extract_strided_slice %115 {offsets = [0, 64], sizes = [16, 32], strides = [1, 1]} : vector<16x96xf32> to vector<16x32xf32>
    %c0_53 = arith.constant 0 : index
    %c0_54 = arith.constant 0 : index
    %151 = vector.load %arg3[%c0_53, %c0_54] : memref<160x32xf32, #tpu.memory_space<vmem>>, vector<160x32xf32>
    %cst_55 = arith.constant dense<0.000000e+00> : vector<16x32xf32>
    %152 = tpu.matmul %149, %151, %cst_55 {dimension_numbers = #tpu.dot_dimension_numbers<[1], [0], [0], [1], [0, 0, 1, 1], [], []>} : vector<16x160xf32>, vector<160x32xf32>, vector<16x32xf32> -> vector<16x32xf32>
    %153 = arith.addf %150, %152 : vector<16x32xf32>
    %154 = math.tanh %153 : vector<16x32xf32>
    %155 = arith.mulf %136, %50 : vector<16x32xf32>
    %cst_56 = arith.constant 1.000000e+00 : f32
    %156 = vector.broadcast %cst_56 : f32 to vector<16x32xf32>
    %157 = arith.subf %156, %136 : vector<16x32xf32>
    %158 = arith.mulf %157, %154 : vector<16x32xf32>
    %159 = arith.addf %155, %158 : vector<16x32xf32>
    %cst_57 = arith.constant 0.000000e+00 : f32
    %160 = vector.broadcast %cst_57 : f32 to vector<16x32xf32>
    %161 = arith.maximumf %159, %160 : vector<16x32xf32>
    %162 = tpu.concatenate %161, %161 in 0 : vector<16x32xf32>, vector<16x32xf32> -> vector<32x32xf32>
    %cst_58 = arith.constant dense<0.000000e+00> : vector<32x32xf32>
    %163 = tpu.matmul %0, %162, %cst_58 {dimension_numbers = #tpu.dot_dimension_numbers<[1], [0], [0], [1], [0, 0, 1, 1], [], []>} : vector<32x32xf32>, vector<32x32xf32>, vector<32x32xf32> -> vector<32x32xf32>
    %cst_59 = arith.constant dense<0.000000e+00> : vector<32x32xf32>
    %164 = tpu.matmul %0, %163, %cst_59 {dimension_numbers = #tpu.dot_dimension_numbers<[1], [0], [0], [1], [0, 0, 1, 1], [], []>} : vector<32x32xf32>, vector<32x32xf32>, vector<32x32xf32> -> vector<32x32xf32>
    %cst_60 = arith.constant 2.000000e+00 : f32
    %165 = vector.broadcast %cst_60 : f32 to vector<32x32xf32>
    %166 = arith.mulf %165, %164 : vector<32x32xf32>
    %167 = arith.subf %166, %162 : vector<32x32xf32>
    %168 = vector.extract_strided_slice %163 {offsets = [0, 0], sizes = [16, 32], strides = [1, 1]} : vector<32x32xf32> to vector<16x32xf32>
    %169 = vector.extract_strided_slice %167 {offsets = [0, 0], sizes = [16, 32], strides = [1, 1]} : vector<32x32xf32> to vector<16x32xf32>
    %170 = vector.extract_strided_slice %163 {offsets = [16, 0], sizes = [16, 32], strides = [1, 1]} : vector<32x32xf32> to vector<16x32xf32>
    %171 = vector.extract_strided_slice %167 {offsets = [16, 0], sizes = [16, 32], strides = [1, 1]} : vector<32x32xf32> to vector<16x32xf32>
    %172 = tpu.concatenate %161, %168, %169, %170, %171 in 1 : vector<16x32xf32>, vector<16x32xf32>, vector<16x32xf32>, vector<16x32xf32>, vector<16x32xf32> -> vector<16x160xf32>
    %c0_61 = arith.constant 0 : index
    %c0_62 = arith.constant 0 : index
    %173 = vector.load %arg4[%c0_61, %c0_62] : memref<160x96xf32, #tpu.memory_space<vmem>>, vector<160x96xf32>
    %cst_63 = arith.constant dense<0.000000e+00> : vector<16x96xf32>
    %174 = tpu.matmul %172, %173, %cst_63 {dimension_numbers = #tpu.dot_dimension_numbers<[1], [0], [0], [1], [0, 0, 1, 1], [], []>} : vector<16x160xf32>, vector<160x96xf32>, vector<16x96xf32> -> vector<16x96xf32>
    %c0_64 = arith.constant 0 : index
    %c0_65 = arith.constant 0 : index
    %175 = vector.load %arg5[%c0_64, %c0_65] : memref<1x96xf32, #tpu.memory_space<vmem>>, vector<1x96xf32>
    %176 = vector.broadcast %175 : vector<1x96xf32> to vector<16x96xf32>
    %177 = arith.addf %174, %176 : vector<16x96xf32>
    %178 = tpu.concatenate %112, %112 in 0 : vector<16x32xf32>, vector<16x32xf32> -> vector<32x32xf32>
    %cst_66 = arith.constant dense<0.000000e+00> : vector<32x32xf32>
    %179 = tpu.matmul %0, %178, %cst_66 {dimension_numbers = #tpu.dot_dimension_numbers<[1], [0], [0], [1], [0, 0, 1, 1], [], []>} : vector<32x32xf32>, vector<32x32xf32>, vector<32x32xf32> -> vector<32x32xf32>
    %cst_67 = arith.constant dense<0.000000e+00> : vector<32x32xf32>
    %180 = tpu.matmul %0, %179, %cst_67 {dimension_numbers = #tpu.dot_dimension_numbers<[1], [0], [0], [1], [0, 0, 1, 1], [], []>} : vector<32x32xf32>, vector<32x32xf32>, vector<32x32xf32> -> vector<32x32xf32>
    %cst_68 = arith.constant 2.000000e+00 : f32
    %181 = vector.broadcast %cst_68 : f32 to vector<32x32xf32>
    %182 = arith.mulf %181, %180 : vector<32x32xf32>
    %183 = arith.subf %182, %178 : vector<32x32xf32>
    %184 = vector.extract_strided_slice %179 {offsets = [0, 0], sizes = [16, 32], strides = [1, 1]} : vector<32x32xf32> to vector<16x32xf32>
    %185 = vector.extract_strided_slice %183 {offsets = [0, 0], sizes = [16, 32], strides = [1, 1]} : vector<32x32xf32> to vector<16x32xf32>
    %186 = vector.extract_strided_slice %179 {offsets = [16, 0], sizes = [16, 32], strides = [1, 1]} : vector<32x32xf32> to vector<16x32xf32>
    %187 = vector.extract_strided_slice %183 {offsets = [16, 0], sizes = [16, 32], strides = [1, 1]} : vector<32x32xf32> to vector<16x32xf32>
    %188 = tpu.concatenate %112, %184, %185, %186, %187 in 1 : vector<16x32xf32>, vector<16x32xf32>, vector<16x32xf32>, vector<16x32xf32>, vector<16x32xf32> -> vector<16x160xf32>
    %189 = vector.extract_strided_slice %177 {offsets = [0, 0], sizes = [16, 64], strides = [1, 1]} : vector<16x96xf32> to vector<16x64xf32>
    %c0_69 = arith.constant 0 : index
    %c0_70 = arith.constant 0 : index
    %190 = vector.load %arg6[%c0_69, %c0_70] : memref<160x64xf32, #tpu.memory_space<vmem>>, vector<160x64xf32>
    %cst_71 = arith.constant dense<0.000000e+00> : vector<16x64xf32>
    %191 = tpu.matmul %188, %190, %cst_71 {dimension_numbers = #tpu.dot_dimension_numbers<[1], [0], [0], [1], [0, 0, 1, 1], [], []>} : vector<16x160xf32>, vector<160x64xf32>, vector<16x64xf32> -> vector<16x64xf32>
    %192 = arith.addf %189, %191 : vector<16x64xf32>
    %193 = arith.negf %192 : vector<16x64xf32>
    %194 = math.exp %193 : vector<16x64xf32>
    %cst_72 = arith.constant 1.000000e+00 : f32
    %195 = vector.broadcast %cst_72 : f32 to vector<16x64xf32>
    %196 = arith.addf %195, %194 : vector<16x64xf32>
    %197 = arith.divf %195, %196 : vector<16x64xf32>
    %198 = vector.extract_strided_slice %197 {offsets = [0, 0], sizes = [16, 32], strides = [1, 1]} : vector<16x64xf32> to vector<16x32xf32>
    %199 = vector.extract_strided_slice %197 {offsets = [0, 32], sizes = [16, 32], strides = [1, 1]} : vector<16x64xf32> to vector<16x32xf32>
    %200 = arith.mulf %112, %199 : vector<16x32xf32>
    %201 = tpu.concatenate %200, %200 in 0 : vector<16x32xf32>, vector<16x32xf32> -> vector<32x32xf32>
    %cst_73 = arith.constant dense<0.000000e+00> : vector<32x32xf32>
    %202 = tpu.matmul %0, %201, %cst_73 {dimension_numbers = #tpu.dot_dimension_numbers<[1], [0], [0], [1], [0, 0, 1, 1], [], []>} : vector<32x32xf32>, vector<32x32xf32>, vector<32x32xf32> -> vector<32x32xf32>
    %cst_74 = arith.constant dense<0.000000e+00> : vector<32x32xf32>
    %203 = tpu.matmul %0, %202, %cst_74 {dimension_numbers = #tpu.dot_dimension_numbers<[1], [0], [0], [1], [0, 0, 1, 1], [], []>} : vector<32x32xf32>, vector<32x32xf32>, vector<32x32xf32> -> vector<32x32xf32>
    %cst_75 = arith.constant 2.000000e+00 : f32
    %204 = vector.broadcast %cst_75 : f32 to vector<32x32xf32>
    %205 = arith.mulf %204, %203 : vector<32x32xf32>
    %206 = arith.subf %205, %201 : vector<32x32xf32>
    %207 = vector.extract_strided_slice %202 {offsets = [0, 0], sizes = [16, 32], strides = [1, 1]} : vector<32x32xf32> to vector<16x32xf32>
    %208 = vector.extract_strided_slice %206 {offsets = [0, 0], sizes = [16, 32], strides = [1, 1]} : vector<32x32xf32> to vector<16x32xf32>
    %209 = vector.extract_strided_slice %202 {offsets = [16, 0], sizes = [16, 32], strides = [1, 1]} : vector<32x32xf32> to vector<16x32xf32>
    %210 = vector.extract_strided_slice %206 {offsets = [16, 0], sizes = [16, 32], strides = [1, 1]} : vector<32x32xf32> to vector<16x32xf32>
    %211 = tpu.concatenate %200, %207, %208, %209, %210 in 1 : vector<16x32xf32>, vector<16x32xf32>, vector<16x32xf32>, vector<16x32xf32>, vector<16x32xf32> -> vector<16x160xf32>
    %212 = vector.extract_strided_slice %177 {offsets = [0, 64], sizes = [16, 32], strides = [1, 1]} : vector<16x96xf32> to vector<16x32xf32>
    %c0_76 = arith.constant 0 : index
    %c0_77 = arith.constant 0 : index
    %213 = vector.load %arg7[%c0_76, %c0_77] : memref<160x32xf32, #tpu.memory_space<vmem>>, vector<160x32xf32>
    %cst_78 = arith.constant dense<0.000000e+00> : vector<16x32xf32>
    %214 = tpu.matmul %211, %213, %cst_78 {dimension_numbers = #tpu.dot_dimension_numbers<[1], [0], [0], [1], [0, 0, 1, 1], [], []>} : vector<16x160xf32>, vector<160x32xf32>, vector<16x32xf32> -> vector<16x32xf32>
    %215 = arith.addf %212, %214 : vector<16x32xf32>
    %216 = math.tanh %215 : vector<16x32xf32>
    %217 = arith.mulf %198, %112 : vector<16x32xf32>
    %cst_79 = arith.constant 1.000000e+00 : f32
    %218 = vector.broadcast %cst_79 : f32 to vector<16x32xf32>
    %219 = arith.subf %218, %198 : vector<16x32xf32>
    %220 = arith.mulf %219, %216 : vector<16x32xf32>
    %221 = arith.addf %217, %220 : vector<16x32xf32>
    %cst_80 = arith.constant 0.000000e+00 : f32
    %222 = vector.broadcast %cst_80 : f32 to vector<16x32xf32>
    %223 = arith.maximumf %221, %222 : vector<16x32xf32>
    %c2_i32 = arith.constant 2 : i32
    %224 = arith.index_cast %c2_i32 : i32 to index
    %c0_81 = arith.constant 0 : index
    %c0_82 = arith.constant 0 : index
    %225 = vector.load %arg0[%224, %c0_81, %c0_82] : memref<6x16x96xf32, #tpu.memory_space<vmem>>, vector<1x16x96xf32>
    %226 = vector.shape_cast %225 : vector<1x16x96xf32> to vector<16x96xf32>
    %227 = tpu.concatenate %161, %161 in 0 : vector<16x32xf32>, vector<16x32xf32> -> vector<32x32xf32>
    %cst_83 = arith.constant dense<0.000000e+00> : vector<32x32xf32>
    %228 = tpu.matmul %0, %227, %cst_83 {dimension_numbers = #tpu.dot_dimension_numbers<[1], [0], [0], [1], [0, 0, 1, 1], [], []>} : vector<32x32xf32>, vector<32x32xf32>, vector<32x32xf32> -> vector<32x32xf32>
    %cst_84 = arith.constant dense<0.000000e+00> : vector<32x32xf32>
    %229 = tpu.matmul %0, %228, %cst_84 {dimension_numbers = #tpu.dot_dimension_numbers<[1], [0], [0], [1], [0, 0, 1, 1], [], []>} : vector<32x32xf32>, vector<32x32xf32>, vector<32x32xf32> -> vector<32x32xf32>
    %cst_85 = arith.constant 2.000000e+00 : f32
    %230 = vector.broadcast %cst_85 : f32 to vector<32x32xf32>
    %231 = arith.mulf %230, %229 : vector<32x32xf32>
    %232 = arith.subf %231, %227 : vector<32x32xf32>
    %233 = vector.extract_strided_slice %228 {offsets = [0, 0], sizes = [16, 32], strides = [1, 1]} : vector<32x32xf32> to vector<16x32xf32>
    %234 = vector.extract_strided_slice %232 {offsets = [0, 0], sizes = [16, 32], strides = [1, 1]} : vector<32x32xf32> to vector<16x32xf32>
    %235 = vector.extract_strided_slice %228 {offsets = [16, 0], sizes = [16, 32], strides = [1, 1]} : vector<32x32xf32> to vector<16x32xf32>
    %236 = vector.extract_strided_slice %232 {offsets = [16, 0], sizes = [16, 32], strides = [1, 1]} : vector<32x32xf32> to vector<16x32xf32>
    %237 = tpu.concatenate %161, %233, %234, %235, %236 in 1 : vector<16x32xf32>, vector<16x32xf32>, vector<16x32xf32>, vector<16x32xf32>, vector<16x32xf32> -> vector<16x160xf32>
    %238 = vector.extract_strided_slice %226 {offsets = [0, 0], sizes = [16, 64], strides = [1, 1]} : vector<16x96xf32> to vector<16x64xf32>
    %c0_86 = arith.constant 0 : index
    %c0_87 = arith.constant 0 : index
    %239 = vector.load %arg2[%c0_86, %c0_87] : memref<160x64xf32, #tpu.memory_space<vmem>>, vector<160x64xf32>
    %cst_88 = arith.constant dense<0.000000e+00> : vector<16x64xf32>
    %240 = tpu.matmul %237, %239, %cst_88 {dimension_numbers = #tpu.dot_dimension_numbers<[1], [0], [0], [1], [0, 0, 1, 1], [], []>} : vector<16x160xf32>, vector<160x64xf32>, vector<16x64xf32> -> vector<16x64xf32>
    %241 = arith.addf %238, %240 : vector<16x64xf32>
    %242 = arith.negf %241 : vector<16x64xf32>
    %243 = math.exp %242 : vector<16x64xf32>
    %cst_89 = arith.constant 1.000000e+00 : f32
    %244 = vector.broadcast %cst_89 : f32 to vector<16x64xf32>
    %245 = arith.addf %244, %243 : vector<16x64xf32>
    %246 = arith.divf %244, %245 : vector<16x64xf32>
    %247 = vector.extract_strided_slice %246 {offsets = [0, 0], sizes = [16, 32], strides = [1, 1]} : vector<16x64xf32> to vector<16x32xf32>
    %248 = vector.extract_strided_slice %246 {offsets = [0, 32], sizes = [16, 32], strides = [1, 1]} : vector<16x64xf32> to vector<16x32xf32>
    %249 = arith.mulf %161, %248 : vector<16x32xf32>
    %250 = tpu.concatenate %249, %249 in 0 : vector<16x32xf32>, vector<16x32xf32> -> vector<32x32xf32>
    %cst_90 = arith.constant dense<0.000000e+00> : vector<32x32xf32>
    %251 = tpu.matmul %0, %250, %cst_90 {dimension_numbers = #tpu.dot_dimension_numbers<[1], [0], [0], [1], [0, 0, 1, 1], [], []>} : vector<32x32xf32>, vector<32x32xf32>, vector<32x32xf32> -> vector<32x32xf32>
    %cst_91 = arith.constant dense<0.000000e+00> : vector<32x32xf32>
    %252 = tpu.matmul %0, %251, %cst_91 {dimension_numbers = #tpu.dot_dimension_numbers<[1], [0], [0], [1], [0, 0, 1, 1], [], []>} : vector<32x32xf32>, vector<32x32xf32>, vector<32x32xf32> -> vector<32x32xf32>
    %cst_92 = arith.constant 2.000000e+00 : f32
    %253 = vector.broadcast %cst_92 : f32 to vector<32x32xf32>
    %254 = arith.mulf %253, %252 : vector<32x32xf32>
    %255 = arith.subf %254, %250 : vector<32x32xf32>
    %256 = vector.extract_strided_slice %251 {offsets = [0, 0], sizes = [16, 32], strides = [1, 1]} : vector<32x32xf32> to vector<16x32xf32>
    %257 = vector.extract_strided_slice %255 {offsets = [0, 0], sizes = [16, 32], strides = [1, 1]} : vector<32x32xf32> to vector<16x32xf32>
    %258 = vector.extract_strided_slice %251 {offsets = [16, 0], sizes = [16, 32], strides = [1, 1]} : vector<32x32xf32> to vector<16x32xf32>
    %259 = vector.extract_strided_slice %255 {offsets = [16, 0], sizes = [16, 32], strides = [1, 1]} : vector<32x32xf32> to vector<16x32xf32>
    %260 = tpu.concatenate %249, %256, %257, %258, %259 in 1 : vector<16x32xf32>, vector<16x32xf32>, vector<16x32xf32>, vector<16x32xf32>, vector<16x32xf32> -> vector<16x160xf32>
    %261 = vector.extract_strided_slice %226 {offsets = [0, 64], sizes = [16, 32], strides = [1, 1]} : vector<16x96xf32> to vector<16x32xf32>
    %c0_93 = arith.constant 0 : index
    %c0_94 = arith.constant 0 : index
    %262 = vector.load %arg3[%c0_93, %c0_94] : memref<160x32xf32, #tpu.memory_space<vmem>>, vector<160x32xf32>
    %cst_95 = arith.constant dense<0.000000e+00> : vector<16x32xf32>
    %263 = tpu.matmul %260, %262, %cst_95 {dimension_numbers = #tpu.dot_dimension_numbers<[1], [0], [0], [1], [0, 0, 1, 1], [], []>} : vector<16x160xf32>, vector<160x32xf32>, vector<16x32xf32> -> vector<16x32xf32>
    %264 = arith.addf %261, %263 : vector<16x32xf32>
    %265 = math.tanh %264 : vector<16x32xf32>
    %266 = arith.mulf %247, %161 : vector<16x32xf32>
    %cst_96 = arith.constant 1.000000e+00 : f32
    %267 = vector.broadcast %cst_96 : f32 to vector<16x32xf32>
    %268 = arith.subf %267, %247 : vector<16x32xf32>
    %269 = arith.mulf %268, %265 : vector<16x32xf32>
    %270 = arith.addf %266, %269 : vector<16x32xf32>
    %cst_97 = arith.constant 0.000000e+00 : f32
    %271 = vector.broadcast %cst_97 : f32 to vector<16x32xf32>
    %272 = arith.maximumf %270, %271 : vector<16x32xf32>
    %273 = tpu.concatenate %272, %272 in 0 : vector<16x32xf32>, vector<16x32xf32> -> vector<32x32xf32>
    %cst_98 = arith.constant dense<0.000000e+00> : vector<32x32xf32>
    %274 = tpu.matmul %0, %273, %cst_98 {dimension_numbers = #tpu.dot_dimension_numbers<[1], [0], [0], [1], [0, 0, 1, 1], [], []>} : vector<32x32xf32>, vector<32x32xf32>, vector<32x32xf32> -> vector<32x32xf32>
    %cst_99 = arith.constant dense<0.000000e+00> : vector<32x32xf32>
    %275 = tpu.matmul %0, %274, %cst_99 {dimension_numbers = #tpu.dot_dimension_numbers<[1], [0], [0], [1], [0, 0, 1, 1], [], []>} : vector<32x32xf32>, vector<32x32xf32>, vector<32x32xf32> -> vector<32x32xf32>
    %cst_100 = arith.constant 2.000000e+00 : f32
    %276 = vector.broadcast %cst_100 : f32 to vector<32x32xf32>
    %277 = arith.mulf %276, %275 : vector<32x32xf32>
    %278 = arith.subf %277, %273 : vector<32x32xf32>
    %279 = vector.extract_strided_slice %274 {offsets = [0, 0], sizes = [16, 32], strides = [1, 1]} : vector<32x32xf32> to vector<16x32xf32>
    %280 = vector.extract_strided_slice %278 {offsets = [0, 0], sizes = [16, 32], strides = [1, 1]} : vector<32x32xf32> to vector<16x32xf32>
    %281 = vector.extract_strided_slice %274 {offsets = [16, 0], sizes = [16, 32], strides = [1, 1]} : vector<32x32xf32> to vector<16x32xf32>
    %282 = vector.extract_strided_slice %278 {offsets = [16, 0], sizes = [16, 32], strides = [1, 1]} : vector<32x32xf32> to vector<16x32xf32>
    %283 = tpu.concatenate %272, %279, %280, %281, %282 in 1 : vector<16x32xf32>, vector<16x32xf32>, vector<16x32xf32>, vector<16x32xf32>, vector<16x32xf32> -> vector<16x160xf32>
    %c0_101 = arith.constant 0 : index
    %c0_102 = arith.constant 0 : index
    %284 = vector.load %arg4[%c0_101, %c0_102] : memref<160x96xf32, #tpu.memory_space<vmem>>, vector<160x96xf32>
    %cst_103 = arith.constant dense<0.000000e+00> : vector<16x96xf32>
    %285 = tpu.matmul %283, %284, %cst_103 {dimension_numbers = #tpu.dot_dimension_numbers<[1], [0], [0], [1], [0, 0, 1, 1], [], []>} : vector<16x160xf32>, vector<160x96xf32>, vector<16x96xf32> -> vector<16x96xf32>
    %c0_104 = arith.constant 0 : index
    %c0_105 = arith.constant 0 : index
    %286 = vector.load %arg5[%c0_104, %c0_105] : memref<1x96xf32, #tpu.memory_space<vmem>>, vector<1x96xf32>
    %287 = vector.broadcast %286 : vector<1x96xf32> to vector<16x96xf32>
    %288 = arith.addf %285, %287 : vector<16x96xf32>
    %289 = tpu.concatenate %223, %223 in 0 : vector<16x32xf32>, vector<16x32xf32> -> vector<32x32xf32>
    %cst_106 = arith.constant dense<0.000000e+00> : vector<32x32xf32>
    %290 = tpu.matmul %0, %289, %cst_106 {dimension_numbers = #tpu.dot_dimension_numbers<[1], [0], [0], [1], [0, 0, 1, 1], [], []>} : vector<32x32xf32>, vector<32x32xf32>, vector<32x32xf32> -> vector<32x32xf32>
    %cst_107 = arith.constant dense<0.000000e+00> : vector<32x32xf32>
    %291 = tpu.matmul %0, %290, %cst_107 {dimension_numbers = #tpu.dot_dimension_numbers<[1], [0], [0], [1], [0, 0, 1, 1], [], []>} : vector<32x32xf32>, vector<32x32xf32>, vector<32x32xf32> -> vector<32x32xf32>
    %cst_108 = arith.constant 2.000000e+00 : f32
    %292 = vector.broadcast %cst_108 : f32 to vector<32x32xf32>
    %293 = arith.mulf %292, %291 : vector<32x32xf32>
    %294 = arith.subf %293, %289 : vector<32x32xf32>
    %295 = vector.extract_strided_slice %290 {offsets = [0, 0], sizes = [16, 32], strides = [1, 1]} : vector<32x32xf32> to vector<16x32xf32>
    %296 = vector.extract_strided_slice %294 {offsets = [0, 0], sizes = [16, 32], strides = [1, 1]} : vector<32x32xf32> to vector<16x32xf32>
    %297 = vector.extract_strided_slice %290 {offsets = [16, 0], sizes = [16, 32], strides = [1, 1]} : vector<32x32xf32> to vector<16x32xf32>
    %298 = vector.extract_strided_slice %294 {offsets = [16, 0], sizes = [16, 32], strides = [1, 1]} : vector<32x32xf32> to vector<16x32xf32>
    %299 = tpu.concatenate %223, %295, %296, %297, %298 in 1 : vector<16x32xf32>, vector<16x32xf32>, vector<16x32xf32>, vector<16x32xf32>, vector<16x32xf32> -> vector<16x160xf32>
    %300 = vector.extract_strided_slice %288 {offsets = [0, 0], sizes = [16, 64], strides = [1, 1]} : vector<16x96xf32> to vector<16x64xf32>
    %c0_109 = arith.constant 0 : index
    %c0_110 = arith.constant 0 : index
    %301 = vector.load %arg6[%c0_109, %c0_110] : memref<160x64xf32, #tpu.memory_space<vmem>>, vector<160x64xf32>
    %cst_111 = arith.constant dense<0.000000e+00> : vector<16x64xf32>
    %302 = tpu.matmul %299, %301, %cst_111 {dimension_numbers = #tpu.dot_dimension_numbers<[1], [0], [0], [1], [0, 0, 1, 1], [], []>} : vector<16x160xf32>, vector<160x64xf32>, vector<16x64xf32> -> vector<16x64xf32>
    %303 = arith.addf %300, %302 : vector<16x64xf32>
    %304 = arith.negf %303 : vector<16x64xf32>
    %305 = math.exp %304 : vector<16x64xf32>
    %cst_112 = arith.constant 1.000000e+00 : f32
    %306 = vector.broadcast %cst_112 : f32 to vector<16x64xf32>
    %307 = arith.addf %306, %305 : vector<16x64xf32>
    %308 = arith.divf %306, %307 : vector<16x64xf32>
    %309 = vector.extract_strided_slice %308 {offsets = [0, 0], sizes = [16, 32], strides = [1, 1]} : vector<16x64xf32> to vector<16x32xf32>
    %310 = vector.extract_strided_slice %308 {offsets = [0, 32], sizes = [16, 32], strides = [1, 1]} : vector<16x64xf32> to vector<16x32xf32>
    %311 = arith.mulf %223, %310 : vector<16x32xf32>
    %312 = tpu.concatenate %311, %311 in 0 : vector<16x32xf32>, vector<16x32xf32> -> vector<32x32xf32>
    %cst_113 = arith.constant dense<0.000000e+00> : vector<32x32xf32>
    %313 = tpu.matmul %0, %312, %cst_113 {dimension_numbers = #tpu.dot_dimension_numbers<[1], [0], [0], [1], [0, 0, 1, 1], [], []>} : vector<32x32xf32>, vector<32x32xf32>, vector<32x32xf32> -> vector<32x32xf32>
    %cst_114 = arith.constant dense<0.000000e+00> : vector<32x32xf32>
    %314 = tpu.matmul %0, %313, %cst_114 {dimension_numbers = #tpu.dot_dimension_numbers<[1], [0], [0], [1], [0, 0, 1, 1], [], []>} : vector<32x32xf32>, vector<32x32xf32>, vector<32x32xf32> -> vector<32x32xf32>
    %cst_115 = arith.constant 2.000000e+00 : f32
    %315 = vector.broadcast %cst_115 : f32 to vector<32x32xf32>
    %316 = arith.mulf %315, %314 : vector<32x32xf32>
    %317 = arith.subf %316, %312 : vector<32x32xf32>
    %318 = vector.extract_strided_slice %313 {offsets = [0, 0], sizes = [16, 32], strides = [1, 1]} : vector<32x32xf32> to vector<16x32xf32>
    %319 = vector.extract_strided_slice %317 {offsets = [0, 0], sizes = [16, 32], strides = [1, 1]} : vector<32x32xf32> to vector<16x32xf32>
    %320 = vector.extract_strided_slice %313 {offsets = [16, 0], sizes = [16, 32], strides = [1, 1]} : vector<32x32xf32> to vector<16x32xf32>
    %321 = vector.extract_strided_slice %317 {offsets = [16, 0], sizes = [16, 32], strides = [1, 1]} : vector<32x32xf32> to vector<16x32xf32>
    %322 = tpu.concatenate %311, %318, %319, %320, %321 in 1 : vector<16x32xf32>, vector<16x32xf32>, vector<16x32xf32>, vector<16x32xf32>, vector<16x32xf32> -> vector<16x160xf32>
    %323 = vector.extract_strided_slice %288 {offsets = [0, 64], sizes = [16, 32], strides = [1, 1]} : vector<16x96xf32> to vector<16x32xf32>
    %c0_116 = arith.constant 0 : index
    %c0_117 = arith.constant 0 : index
    %324 = vector.load %arg7[%c0_116, %c0_117] : memref<160x32xf32, #tpu.memory_space<vmem>>, vector<160x32xf32>
    %cst_118 = arith.constant dense<0.000000e+00> : vector<16x32xf32>
    %325 = tpu.matmul %322, %324, %cst_118 {dimension_numbers = #tpu.dot_dimension_numbers<[1], [0], [0], [1], [0, 0, 1, 1], [], []>} : vector<16x160xf32>, vector<160x32xf32>, vector<16x32xf32> -> vector<16x32xf32>
    %326 = arith.addf %323, %325 : vector<16x32xf32>
    %327 = math.tanh %326 : vector<16x32xf32>
    %328 = arith.mulf %309, %223 : vector<16x32xf32>
    %cst_119 = arith.constant 1.000000e+00 : f32
    %329 = vector.broadcast %cst_119 : f32 to vector<16x32xf32>
    %330 = arith.subf %329, %309 : vector<16x32xf32>
    %331 = arith.mulf %330, %327 : vector<16x32xf32>
    %332 = arith.addf %328, %331 : vector<16x32xf32>
    %cst_120 = arith.constant 0.000000e+00 : f32
    %333 = vector.broadcast %cst_120 : f32 to vector<16x32xf32>
    %334 = arith.maximumf %332, %333 : vector<16x32xf32>
    %c3_i32 = arith.constant 3 : i32
    %335 = arith.index_cast %c3_i32 : i32 to index
    %c0_121 = arith.constant 0 : index
    %c0_122 = arith.constant 0 : index
    %336 = vector.load %arg0[%335, %c0_121, %c0_122] : memref<6x16x96xf32, #tpu.memory_space<vmem>>, vector<1x16x96xf32>
    %337 = vector.shape_cast %336 : vector<1x16x96xf32> to vector<16x96xf32>
    %338 = tpu.concatenate %272, %272 in 0 : vector<16x32xf32>, vector<16x32xf32> -> vector<32x32xf32>
    %cst_123 = arith.constant dense<0.000000e+00> : vector<32x32xf32>
    %339 = tpu.matmul %0, %338, %cst_123 {dimension_numbers = #tpu.dot_dimension_numbers<[1], [0], [0], [1], [0, 0, 1, 1], [], []>} : vector<32x32xf32>, vector<32x32xf32>, vector<32x32xf32> -> vector<32x32xf32>
    %cst_124 = arith.constant dense<0.000000e+00> : vector<32x32xf32>
    %340 = tpu.matmul %0, %339, %cst_124 {dimension_numbers = #tpu.dot_dimension_numbers<[1], [0], [0], [1], [0, 0, 1, 1], [], []>} : vector<32x32xf32>, vector<32x32xf32>, vector<32x32xf32> -> vector<32x32xf32>
    %cst_125 = arith.constant 2.000000e+00 : f32
    %341 = vector.broadcast %cst_125 : f32 to vector<32x32xf32>
    %342 = arith.mulf %341, %340 : vector<32x32xf32>
    %343 = arith.subf %342, %338 : vector<32x32xf32>
    %344 = vector.extract_strided_slice %339 {offsets = [0, 0], sizes = [16, 32], strides = [1, 1]} : vector<32x32xf32> to vector<16x32xf32>
    %345 = vector.extract_strided_slice %343 {offsets = [0, 0], sizes = [16, 32], strides = [1, 1]} : vector<32x32xf32> to vector<16x32xf32>
    %346 = vector.extract_strided_slice %339 {offsets = [16, 0], sizes = [16, 32], strides = [1, 1]} : vector<32x32xf32> to vector<16x32xf32>
    %347 = vector.extract_strided_slice %343 {offsets = [16, 0], sizes = [16, 32], strides = [1, 1]} : vector<32x32xf32> to vector<16x32xf32>
    %348 = tpu.concatenate %272, %344, %345, %346, %347 in 1 : vector<16x32xf32>, vector<16x32xf32>, vector<16x32xf32>, vector<16x32xf32>, vector<16x32xf32> -> vector<16x160xf32>
    %349 = vector.extract_strided_slice %337 {offsets = [0, 0], sizes = [16, 64], strides = [1, 1]} : vector<16x96xf32> to vector<16x64xf32>
    %c0_126 = arith.constant 0 : index
    %c0_127 = arith.constant 0 : index
    %350 = vector.load %arg2[%c0_126, %c0_127] : memref<160x64xf32, #tpu.memory_space<vmem>>, vector<160x64xf32>
    %cst_128 = arith.constant dense<0.000000e+00> : vector<16x64xf32>
    %351 = tpu.matmul %348, %350, %cst_128 {dimension_numbers = #tpu.dot_dimension_numbers<[1], [0], [0], [1], [0, 0, 1, 1], [], []>} : vector<16x160xf32>, vector<160x64xf32>, vector<16x64xf32> -> vector<16x64xf32>
    %352 = arith.addf %349, %351 : vector<16x64xf32>
    %353 = arith.negf %352 : vector<16x64xf32>
    %354 = math.exp %353 : vector<16x64xf32>
    %cst_129 = arith.constant 1.000000e+00 : f32
    %355 = vector.broadcast %cst_129 : f32 to vector<16x64xf32>
    %356 = arith.addf %355, %354 : vector<16x64xf32>
    %357 = arith.divf %355, %356 : vector<16x64xf32>
    %358 = vector.extract_strided_slice %357 {offsets = [0, 0], sizes = [16, 32], strides = [1, 1]} : vector<16x64xf32> to vector<16x32xf32>
    %359 = vector.extract_strided_slice %357 {offsets = [0, 32], sizes = [16, 32], strides = [1, 1]} : vector<16x64xf32> to vector<16x32xf32>
    %360 = arith.mulf %272, %359 : vector<16x32xf32>
    %361 = tpu.concatenate %360, %360 in 0 : vector<16x32xf32>, vector<16x32xf32> -> vector<32x32xf32>
    %cst_130 = arith.constant dense<0.000000e+00> : vector<32x32xf32>
    %362 = tpu.matmul %0, %361, %cst_130 {dimension_numbers = #tpu.dot_dimension_numbers<[1], [0], [0], [1], [0, 0, 1, 1], [], []>} : vector<32x32xf32>, vector<32x32xf32>, vector<32x32xf32> -> vector<32x32xf32>
    %cst_131 = arith.constant dense<0.000000e+00> : vector<32x32xf32>
    %363 = tpu.matmul %0, %362, %cst_131 {dimension_numbers = #tpu.dot_dimension_numbers<[1], [0], [0], [1], [0, 0, 1, 1], [], []>} : vector<32x32xf32>, vector<32x32xf32>, vector<32x32xf32> -> vector<32x32xf32>
    %cst_132 = arith.constant 2.000000e+00 : f32
    %364 = vector.broadcast %cst_132 : f32 to vector<32x32xf32>
    %365 = arith.mulf %364, %363 : vector<32x32xf32>
    %366 = arith.subf %365, %361 : vector<32x32xf32>
    %367 = vector.extract_strided_slice %362 {offsets = [0, 0], sizes = [16, 32], strides = [1, 1]} : vector<32x32xf32> to vector<16x32xf32>
    %368 = vector.extract_strided_slice %366 {offsets = [0, 0], sizes = [16, 32], strides = [1, 1]} : vector<32x32xf32> to vector<16x32xf32>
    %369 = vector.extract_strided_slice %362 {offsets = [16, 0], sizes = [16, 32], strides = [1, 1]} : vector<32x32xf32> to vector<16x32xf32>
    %370 = vector.extract_strided_slice %366 {offsets = [16, 0], sizes = [16, 32], strides = [1, 1]} : vector<32x32xf32> to vector<16x32xf32>
    %371 = tpu.concatenate %360, %367, %368, %369, %370 in 1 : vector<16x32xf32>, vector<16x32xf32>, vector<16x32xf32>, vector<16x32xf32>, vector<16x32xf32> -> vector<16x160xf32>
    %372 = vector.extract_strided_slice %337 {offsets = [0, 64], sizes = [16, 32], strides = [1, 1]} : vector<16x96xf32> to vector<16x32xf32>
    %c0_133 = arith.constant 0 : index
    %c0_134 = arith.constant 0 : index
    %373 = vector.load %arg3[%c0_133, %c0_134] : memref<160x32xf32, #tpu.memory_space<vmem>>, vector<160x32xf32>
    %cst_135 = arith.constant dense<0.000000e+00> : vector<16x32xf32>
    %374 = tpu.matmul %371, %373, %cst_135 {dimension_numbers = #tpu.dot_dimension_numbers<[1], [0], [0], [1], [0, 0, 1, 1], [], []>} : vector<16x160xf32>, vector<160x32xf32>, vector<16x32xf32> -> vector<16x32xf32>
    %375 = arith.addf %372, %374 : vector<16x32xf32>
    %376 = math.tanh %375 : vector<16x32xf32>
    %377 = arith.mulf %358, %272 : vector<16x32xf32>
    %cst_136 = arith.constant 1.000000e+00 : f32
    %378 = vector.broadcast %cst_136 : f32 to vector<16x32xf32>
    %379 = arith.subf %378, %358 : vector<16x32xf32>
    %380 = arith.mulf %379, %376 : vector<16x32xf32>
    %381 = arith.addf %377, %380 : vector<16x32xf32>
    %cst_137 = arith.constant 0.000000e+00 : f32
    %382 = vector.broadcast %cst_137 : f32 to vector<16x32xf32>
    %383 = arith.maximumf %381, %382 : vector<16x32xf32>
    %384 = tpu.concatenate %383, %383 in 0 : vector<16x32xf32>, vector<16x32xf32> -> vector<32x32xf32>
    %cst_138 = arith.constant dense<0.000000e+00> : vector<32x32xf32>
    %385 = tpu.matmul %0, %384, %cst_138 {dimension_numbers = #tpu.dot_dimension_numbers<[1], [0], [0], [1], [0, 0, 1, 1], [], []>} : vector<32x32xf32>, vector<32x32xf32>, vector<32x32xf32> -> vector<32x32xf32>
    %cst_139 = arith.constant dense<0.000000e+00> : vector<32x32xf32>
    %386 = tpu.matmul %0, %385, %cst_139 {dimension_numbers = #tpu.dot_dimension_numbers<[1], [0], [0], [1], [0, 0, 1, 1], [], []>} : vector<32x32xf32>, vector<32x32xf32>, vector<32x32xf32> -> vector<32x32xf32>
    %cst_140 = arith.constant 2.000000e+00 : f32
    %387 = vector.broadcast %cst_140 : f32 to vector<32x32xf32>
    %388 = arith.mulf %387, %386 : vector<32x32xf32>
    %389 = arith.subf %388, %384 : vector<32x32xf32>
    %390 = vector.extract_strided_slice %385 {offsets = [0, 0], sizes = [16, 32], strides = [1, 1]} : vector<32x32xf32> to vector<16x32xf32>
    %391 = vector.extract_strided_slice %389 {offsets = [0, 0], sizes = [16, 32], strides = [1, 1]} : vector<32x32xf32> to vector<16x32xf32>
    %392 = vector.extract_strided_slice %385 {offsets = [16, 0], sizes = [16, 32], strides = [1, 1]} : vector<32x32xf32> to vector<16x32xf32>
    %393 = vector.extract_strided_slice %389 {offsets = [16, 0], sizes = [16, 32], strides = [1, 1]} : vector<32x32xf32> to vector<16x32xf32>
    %394 = tpu.concatenate %383, %390, %391, %392, %393 in 1 : vector<16x32xf32>, vector<16x32xf32>, vector<16x32xf32>, vector<16x32xf32>, vector<16x32xf32> -> vector<16x160xf32>
    %c0_141 = arith.constant 0 : index
    %c0_142 = arith.constant 0 : index
    %395 = vector.load %arg4[%c0_141, %c0_142] : memref<160x96xf32, #tpu.memory_space<vmem>>, vector<160x96xf32>
    %cst_143 = arith.constant dense<0.000000e+00> : vector<16x96xf32>
    %396 = tpu.matmul %394, %395, %cst_143 {dimension_numbers = #tpu.dot_dimension_numbers<[1], [0], [0], [1], [0, 0, 1, 1], [], []>} : vector<16x160xf32>, vector<160x96xf32>, vector<16x96xf32> -> vector<16x96xf32>
    %c0_144 = arith.constant 0 : index
    %c0_145 = arith.constant 0 : index
    %397 = vector.load %arg5[%c0_144, %c0_145] : memref<1x96xf32, #tpu.memory_space<vmem>>, vector<1x96xf32>
    %398 = vector.broadcast %397 : vector<1x96xf32> to vector<16x96xf32>
    %399 = arith.addf %396, %398 : vector<16x96xf32>
    %400 = tpu.concatenate %334, %334 in 0 : vector<16x32xf32>, vector<16x32xf32> -> vector<32x32xf32>
    %cst_146 = arith.constant dense<0.000000e+00> : vector<32x32xf32>
    %401 = tpu.matmul %0, %400, %cst_146 {dimension_numbers = #tpu.dot_dimension_numbers<[1], [0], [0], [1], [0, 0, 1, 1], [], []>} : vector<32x32xf32>, vector<32x32xf32>, vector<32x32xf32> -> vector<32x32xf32>
    %cst_147 = arith.constant dense<0.000000e+00> : vector<32x32xf32>
    %402 = tpu.matmul %0, %401, %cst_147 {dimension_numbers = #tpu.dot_dimension_numbers<[1], [0], [0], [1], [0, 0, 1, 1], [], []>} : vector<32x32xf32>, vector<32x32xf32>, vector<32x32xf32> -> vector<32x32xf32>
    %cst_148 = arith.constant 2.000000e+00 : f32
    %403 = vector.broadcast %cst_148 : f32 to vector<32x32xf32>
    %404 = arith.mulf %403, %402 : vector<32x32xf32>
    %405 = arith.subf %404, %400 : vector<32x32xf32>
    %406 = vector.extract_strided_slice %401 {offsets = [0, 0], sizes = [16, 32], strides = [1, 1]} : vector<32x32xf32> to vector<16x32xf32>
    %407 = vector.extract_strided_slice %405 {offsets = [0, 0], sizes = [16, 32], strides = [1, 1]} : vector<32x32xf32> to vector<16x32xf32>
    %408 = vector.extract_strided_slice %401 {offsets = [16, 0], sizes = [16, 32], strides = [1, 1]} : vector<32x32xf32> to vector<16x32xf32>
    %409 = vector.extract_strided_slice %405 {offsets = [16, 0], sizes = [16, 32], strides = [1, 1]} : vector<32x32xf32> to vector<16x32xf32>
    %410 = tpu.concatenate %334, %406, %407, %408, %409 in 1 : vector<16x32xf32>, vector<16x32xf32>, vector<16x32xf32>, vector<16x32xf32>, vector<16x32xf32> -> vector<16x160xf32>
    %411 = vector.extract_strided_slice %399 {offsets = [0, 0], sizes = [16, 64], strides = [1, 1]} : vector<16x96xf32> to vector<16x64xf32>
    %c0_149 = arith.constant 0 : index
    %c0_150 = arith.constant 0 : index
    %412 = vector.load %arg6[%c0_149, %c0_150] : memref<160x64xf32, #tpu.memory_space<vmem>>, vector<160x64xf32>
    %cst_151 = arith.constant dense<0.000000e+00> : vector<16x64xf32>
    %413 = tpu.matmul %410, %412, %cst_151 {dimension_numbers = #tpu.dot_dimension_numbers<[1], [0], [0], [1], [0, 0, 1, 1], [], []>} : vector<16x160xf32>, vector<160x64xf32>, vector<16x64xf32> -> vector<16x64xf32>
    %414 = arith.addf %411, %413 : vector<16x64xf32>
    %415 = arith.negf %414 : vector<16x64xf32>
    %416 = math.exp %415 : vector<16x64xf32>
    %cst_152 = arith.constant 1.000000e+00 : f32
    %417 = vector.broadcast %cst_152 : f32 to vector<16x64xf32>
    %418 = arith.addf %417, %416 : vector<16x64xf32>
    %419 = arith.divf %417, %418 : vector<16x64xf32>
    %420 = vector.extract_strided_slice %419 {offsets = [0, 0], sizes = [16, 32], strides = [1, 1]} : vector<16x64xf32> to vector<16x32xf32>
    %421 = vector.extract_strided_slice %419 {offsets = [0, 32], sizes = [16, 32], strides = [1, 1]} : vector<16x64xf32> to vector<16x32xf32>
    %422 = arith.mulf %334, %421 : vector<16x32xf32>
    %423 = tpu.concatenate %422, %422 in 0 : vector<16x32xf32>, vector<16x32xf32> -> vector<32x32xf32>
    %cst_153 = arith.constant dense<0.000000e+00> : vector<32x32xf32>
    %424 = tpu.matmul %0, %423, %cst_153 {dimension_numbers = #tpu.dot_dimension_numbers<[1], [0], [0], [1], [0, 0, 1, 1], [], []>} : vector<32x32xf32>, vector<32x32xf32>, vector<32x32xf32> -> vector<32x32xf32>
    %cst_154 = arith.constant dense<0.000000e+00> : vector<32x32xf32>
    %425 = tpu.matmul %0, %424, %cst_154 {dimension_numbers = #tpu.dot_dimension_numbers<[1], [0], [0], [1], [0, 0, 1, 1], [], []>} : vector<32x32xf32>, vector<32x32xf32>, vector<32x32xf32> -> vector<32x32xf32>
    %cst_155 = arith.constant 2.000000e+00 : f32
    %426 = vector.broadcast %cst_155 : f32 to vector<32x32xf32>
    %427 = arith.mulf %426, %425 : vector<32x32xf32>
    %428 = arith.subf %427, %423 : vector<32x32xf32>
    %429 = vector.extract_strided_slice %424 {offsets = [0, 0], sizes = [16, 32], strides = [1, 1]} : vector<32x32xf32> to vector<16x32xf32>
    %430 = vector.extract_strided_slice %428 {offsets = [0, 0], sizes = [16, 32], strides = [1, 1]} : vector<32x32xf32> to vector<16x32xf32>
    %431 = vector.extract_strided_slice %424 {offsets = [16, 0], sizes = [16, 32], strides = [1, 1]} : vector<32x32xf32> to vector<16x32xf32>
    %432 = vector.extract_strided_slice %428 {offsets = [16, 0], sizes = [16, 32], strides = [1, 1]} : vector<32x32xf32> to vector<16x32xf32>
    %433 = tpu.concatenate %422, %429, %430, %431, %432 in 1 : vector<16x32xf32>, vector<16x32xf32>, vector<16x32xf32>, vector<16x32xf32>, vector<16x32xf32> -> vector<16x160xf32>
    %434 = vector.extract_strided_slice %399 {offsets = [0, 64], sizes = [16, 32], strides = [1, 1]} : vector<16x96xf32> to vector<16x32xf32>
    %c0_156 = arith.constant 0 : index
    %c0_157 = arith.constant 0 : index
    %435 = vector.load %arg7[%c0_156, %c0_157] : memref<160x32xf32, #tpu.memory_space<vmem>>, vector<160x32xf32>
    %cst_158 = arith.constant dense<0.000000e+00> : vector<16x32xf32>
    %436 = tpu.matmul %433, %435, %cst_158 {dimension_numbers = #tpu.dot_dimension_numbers<[1], [0], [0], [1], [0, 0, 1, 1], [], []>} : vector<16x160xf32>, vector<160x32xf32>, vector<16x32xf32> -> vector<16x32xf32>
    %437 = arith.addf %434, %436 : vector<16x32xf32>
    %438 = math.tanh %437 : vector<16x32xf32>
    %439 = arith.mulf %420, %334 : vector<16x32xf32>
    %cst_159 = arith.constant 1.000000e+00 : f32
    %440 = vector.broadcast %cst_159 : f32 to vector<16x32xf32>
    %441 = arith.subf %440, %420 : vector<16x32xf32>
    %442 = arith.mulf %441, %438 : vector<16x32xf32>
    %443 = arith.addf %439, %442 : vector<16x32xf32>
    %cst_160 = arith.constant 0.000000e+00 : f32
    %444 = vector.broadcast %cst_160 : f32 to vector<16x32xf32>
    %445 = arith.maximumf %443, %444 : vector<16x32xf32>
    %c4_i32 = arith.constant 4 : i32
    %446 = arith.index_cast %c4_i32 : i32 to index
    %c0_161 = arith.constant 0 : index
    %c0_162 = arith.constant 0 : index
    %447 = vector.load %arg0[%446, %c0_161, %c0_162] : memref<6x16x96xf32, #tpu.memory_space<vmem>>, vector<1x16x96xf32>
    %448 = vector.shape_cast %447 : vector<1x16x96xf32> to vector<16x96xf32>
    %449 = tpu.concatenate %383, %383 in 0 : vector<16x32xf32>, vector<16x32xf32> -> vector<32x32xf32>
    %cst_163 = arith.constant dense<0.000000e+00> : vector<32x32xf32>
    %450 = tpu.matmul %0, %449, %cst_163 {dimension_numbers = #tpu.dot_dimension_numbers<[1], [0], [0], [1], [0, 0, 1, 1], [], []>} : vector<32x32xf32>, vector<32x32xf32>, vector<32x32xf32> -> vector<32x32xf32>
    %cst_164 = arith.constant dense<0.000000e+00> : vector<32x32xf32>
    %451 = tpu.matmul %0, %450, %cst_164 {dimension_numbers = #tpu.dot_dimension_numbers<[1], [0], [0], [1], [0, 0, 1, 1], [], []>} : vector<32x32xf32>, vector<32x32xf32>, vector<32x32xf32> -> vector<32x32xf32>
    %cst_165 = arith.constant 2.000000e+00 : f32
    %452 = vector.broadcast %cst_165 : f32 to vector<32x32xf32>
    %453 = arith.mulf %452, %451 : vector<32x32xf32>
    %454 = arith.subf %453, %449 : vector<32x32xf32>
    %455 = vector.extract_strided_slice %450 {offsets = [0, 0], sizes = [16, 32], strides = [1, 1]} : vector<32x32xf32> to vector<16x32xf32>
    %456 = vector.extract_strided_slice %454 {offsets = [0, 0], sizes = [16, 32], strides = [1, 1]} : vector<32x32xf32> to vector<16x32xf32>
    %457 = vector.extract_strided_slice %450 {offsets = [16, 0], sizes = [16, 32], strides = [1, 1]} : vector<32x32xf32> to vector<16x32xf32>
    %458 = vector.extract_strided_slice %454 {offsets = [16, 0], sizes = [16, 32], strides = [1, 1]} : vector<32x32xf32> to vector<16x32xf32>
    %459 = tpu.concatenate %383, %455, %456, %457, %458 in 1 : vector<16x32xf32>, vector<16x32xf32>, vector<16x32xf32>, vector<16x32xf32>, vector<16x32xf32> -> vector<16x160xf32>
    %460 = vector.extract_strided_slice %448 {offsets = [0, 0], sizes = [16, 64], strides = [1, 1]} : vector<16x96xf32> to vector<16x64xf32>
    %c0_166 = arith.constant 0 : index
    %c0_167 = arith.constant 0 : index
    %461 = vector.load %arg2[%c0_166, %c0_167] : memref<160x64xf32, #tpu.memory_space<vmem>>, vector<160x64xf32>
    %cst_168 = arith.constant dense<0.000000e+00> : vector<16x64xf32>
    %462 = tpu.matmul %459, %461, %cst_168 {dimension_numbers = #tpu.dot_dimension_numbers<[1], [0], [0], [1], [0, 0, 1, 1], [], []>} : vector<16x160xf32>, vector<160x64xf32>, vector<16x64xf32> -> vector<16x64xf32>
    %463 = arith.addf %460, %462 : vector<16x64xf32>
    %464 = arith.negf %463 : vector<16x64xf32>
    %465 = math.exp %464 : vector<16x64xf32>
    %cst_169 = arith.constant 1.000000e+00 : f32
    %466 = vector.broadcast %cst_169 : f32 to vector<16x64xf32>
    %467 = arith.addf %466, %465 : vector<16x64xf32>
    %468 = arith.divf %466, %467 : vector<16x64xf32>
    %469 = vector.extract_strided_slice %468 {offsets = [0, 0], sizes = [16, 32], strides = [1, 1]} : vector<16x64xf32> to vector<16x32xf32>
    %470 = vector.extract_strided_slice %468 {offsets = [0, 32], sizes = [16, 32], strides = [1, 1]} : vector<16x64xf32> to vector<16x32xf32>
    %471 = arith.mulf %383, %470 : vector<16x32xf32>
    %472 = tpu.concatenate %471, %471 in 0 : vector<16x32xf32>, vector<16x32xf32> -> vector<32x32xf32>
    %cst_170 = arith.constant dense<0.000000e+00> : vector<32x32xf32>
    %473 = tpu.matmul %0, %472, %cst_170 {dimension_numbers = #tpu.dot_dimension_numbers<[1], [0], [0], [1], [0, 0, 1, 1], [], []>} : vector<32x32xf32>, vector<32x32xf32>, vector<32x32xf32> -> vector<32x32xf32>
    %cst_171 = arith.constant dense<0.000000e+00> : vector<32x32xf32>
    %474 = tpu.matmul %0, %473, %cst_171 {dimension_numbers = #tpu.dot_dimension_numbers<[1], [0], [0], [1], [0, 0, 1, 1], [], []>} : vector<32x32xf32>, vector<32x32xf32>, vector<32x32xf32> -> vector<32x32xf32>
    %cst_172 = arith.constant 2.000000e+00 : f32
    %475 = vector.broadcast %cst_172 : f32 to vector<32x32xf32>
    %476 = arith.mulf %475, %474 : vector<32x32xf32>
    %477 = arith.subf %476, %472 : vector<32x32xf32>
    %478 = vector.extract_strided_slice %473 {offsets = [0, 0], sizes = [16, 32], strides = [1, 1]} : vector<32x32xf32> to vector<16x32xf32>
    %479 = vector.extract_strided_slice %477 {offsets = [0, 0], sizes = [16, 32], strides = [1, 1]} : vector<32x32xf32> to vector<16x32xf32>
    %480 = vector.extract_strided_slice %473 {offsets = [16, 0], sizes = [16, 32], strides = [1, 1]} : vector<32x32xf32> to vector<16x32xf32>
    %481 = vector.extract_strided_slice %477 {offsets = [16, 0], sizes = [16, 32], strides = [1, 1]} : vector<32x32xf32> to vector<16x32xf32>
    %482 = tpu.concatenate %471, %478, %479, %480, %481 in 1 : vector<16x32xf32>, vector<16x32xf32>, vector<16x32xf32>, vector<16x32xf32>, vector<16x32xf32> -> vector<16x160xf32>
    %483 = vector.extract_strided_slice %448 {offsets = [0, 64], sizes = [16, 32], strides = [1, 1]} : vector<16x96xf32> to vector<16x32xf32>
    %c0_173 = arith.constant 0 : index
    %c0_174 = arith.constant 0 : index
    %484 = vector.load %arg3[%c0_173, %c0_174] : memref<160x32xf32, #tpu.memory_space<vmem>>, vector<160x32xf32>
    %cst_175 = arith.constant dense<0.000000e+00> : vector<16x32xf32>
    %485 = tpu.matmul %482, %484, %cst_175 {dimension_numbers = #tpu.dot_dimension_numbers<[1], [0], [0], [1], [0, 0, 1, 1], [], []>} : vector<16x160xf32>, vector<160x32xf32>, vector<16x32xf32> -> vector<16x32xf32>
    %486 = arith.addf %483, %485 : vector<16x32xf32>
    %487 = math.tanh %486 : vector<16x32xf32>
    %488 = arith.mulf %469, %383 : vector<16x32xf32>
    %cst_176 = arith.constant 1.000000e+00 : f32
    %489 = vector.broadcast %cst_176 : f32 to vector<16x32xf32>
    %490 = arith.subf %489, %469 : vector<16x32xf32>
    %491 = arith.mulf %490, %487 : vector<16x32xf32>
    %492 = arith.addf %488, %491 : vector<16x32xf32>
    %cst_177 = arith.constant 0.000000e+00 : f32
    %493 = vector.broadcast %cst_177 : f32 to vector<16x32xf32>
    %494 = arith.maximumf %492, %493 : vector<16x32xf32>
    %495 = tpu.concatenate %494, %494 in 0 : vector<16x32xf32>, vector<16x32xf32> -> vector<32x32xf32>
    %cst_178 = arith.constant dense<0.000000e+00> : vector<32x32xf32>
    %496 = tpu.matmul %0, %495, %cst_178 {dimension_numbers = #tpu.dot_dimension_numbers<[1], [0], [0], [1], [0, 0, 1, 1], [], []>} : vector<32x32xf32>, vector<32x32xf32>, vector<32x32xf32> -> vector<32x32xf32>
    %cst_179 = arith.constant dense<0.000000e+00> : vector<32x32xf32>
    %497 = tpu.matmul %0, %496, %cst_179 {dimension_numbers = #tpu.dot_dimension_numbers<[1], [0], [0], [1], [0, 0, 1, 1], [], []>} : vector<32x32xf32>, vector<32x32xf32>, vector<32x32xf32> -> vector<32x32xf32>
    %cst_180 = arith.constant 2.000000e+00 : f32
    %498 = vector.broadcast %cst_180 : f32 to vector<32x32xf32>
    %499 = arith.mulf %498, %497 : vector<32x32xf32>
    %500 = arith.subf %499, %495 : vector<32x32xf32>
    %501 = vector.extract_strided_slice %496 {offsets = [0, 0], sizes = [16, 32], strides = [1, 1]} : vector<32x32xf32> to vector<16x32xf32>
    %502 = vector.extract_strided_slice %500 {offsets = [0, 0], sizes = [16, 32], strides = [1, 1]} : vector<32x32xf32> to vector<16x32xf32>
    %503 = vector.extract_strided_slice %496 {offsets = [16, 0], sizes = [16, 32], strides = [1, 1]} : vector<32x32xf32> to vector<16x32xf32>
    %504 = vector.extract_strided_slice %500 {offsets = [16, 0], sizes = [16, 32], strides = [1, 1]} : vector<32x32xf32> to vector<16x32xf32>
    %505 = tpu.concatenate %494, %501, %502, %503, %504 in 1 : vector<16x32xf32>, vector<16x32xf32>, vector<16x32xf32>, vector<16x32xf32>, vector<16x32xf32> -> vector<16x160xf32>
    %c0_181 = arith.constant 0 : index
    %c0_182 = arith.constant 0 : index
    %506 = vector.load %arg4[%c0_181, %c0_182] : memref<160x96xf32, #tpu.memory_space<vmem>>, vector<160x96xf32>
    %cst_183 = arith.constant dense<0.000000e+00> : vector<16x96xf32>
    %507 = tpu.matmul %505, %506, %cst_183 {dimension_numbers = #tpu.dot_dimension_numbers<[1], [0], [0], [1], [0, 0, 1, 1], [], []>} : vector<16x160xf32>, vector<160x96xf32>, vector<16x96xf32> -> vector<16x96xf32>
    %c0_184 = arith.constant 0 : index
    %c0_185 = arith.constant 0 : index
    %508 = vector.load %arg5[%c0_184, %c0_185] : memref<1x96xf32, #tpu.memory_space<vmem>>, vector<1x96xf32>
    %509 = vector.broadcast %508 : vector<1x96xf32> to vector<16x96xf32>
    %510 = arith.addf %507, %509 : vector<16x96xf32>
    %511 = tpu.concatenate %445, %445 in 0 : vector<16x32xf32>, vector<16x32xf32> -> vector<32x32xf32>
    %cst_186 = arith.constant dense<0.000000e+00> : vector<32x32xf32>
    %512 = tpu.matmul %0, %511, %cst_186 {dimension_numbers = #tpu.dot_dimension_numbers<[1], [0], [0], [1], [0, 0, 1, 1], [], []>} : vector<32x32xf32>, vector<32x32xf32>, vector<32x32xf32> -> vector<32x32xf32>
    %cst_187 = arith.constant dense<0.000000e+00> : vector<32x32xf32>
    %513 = tpu.matmul %0, %512, %cst_187 {dimension_numbers = #tpu.dot_dimension_numbers<[1], [0], [0], [1], [0, 0, 1, 1], [], []>} : vector<32x32xf32>, vector<32x32xf32>, vector<32x32xf32> -> vector<32x32xf32>
    %cst_188 = arith.constant 2.000000e+00 : f32
    %514 = vector.broadcast %cst_188 : f32 to vector<32x32xf32>
    %515 = arith.mulf %514, %513 : vector<32x32xf32>
    %516 = arith.subf %515, %511 : vector<32x32xf32>
    %517 = vector.extract_strided_slice %512 {offsets = [0, 0], sizes = [16, 32], strides = [1, 1]} : vector<32x32xf32> to vector<16x32xf32>
    %518 = vector.extract_strided_slice %516 {offsets = [0, 0], sizes = [16, 32], strides = [1, 1]} : vector<32x32xf32> to vector<16x32xf32>
    %519 = vector.extract_strided_slice %512 {offsets = [16, 0], sizes = [16, 32], strides = [1, 1]} : vector<32x32xf32> to vector<16x32xf32>
    %520 = vector.extract_strided_slice %516 {offsets = [16, 0], sizes = [16, 32], strides = [1, 1]} : vector<32x32xf32> to vector<16x32xf32>
    %521 = tpu.concatenate %445, %517, %518, %519, %520 in 1 : vector<16x32xf32>, vector<16x32xf32>, vector<16x32xf32>, vector<16x32xf32>, vector<16x32xf32> -> vector<16x160xf32>
    %522 = vector.extract_strided_slice %510 {offsets = [0, 0], sizes = [16, 64], strides = [1, 1]} : vector<16x96xf32> to vector<16x64xf32>
    %c0_189 = arith.constant 0 : index
    %c0_190 = arith.constant 0 : index
    %523 = vector.load %arg6[%c0_189, %c0_190] : memref<160x64xf32, #tpu.memory_space<vmem>>, vector<160x64xf32>
    %cst_191 = arith.constant dense<0.000000e+00> : vector<16x64xf32>
    %524 = tpu.matmul %521, %523, %cst_191 {dimension_numbers = #tpu.dot_dimension_numbers<[1], [0], [0], [1], [0, 0, 1, 1], [], []>} : vector<16x160xf32>, vector<160x64xf32>, vector<16x64xf32> -> vector<16x64xf32>
    %525 = arith.addf %522, %524 : vector<16x64xf32>
    %526 = arith.negf %525 : vector<16x64xf32>
    %527 = math.exp %526 : vector<16x64xf32>
    %cst_192 = arith.constant 1.000000e+00 : f32
    %528 = vector.broadcast %cst_192 : f32 to vector<16x64xf32>
    %529 = arith.addf %528, %527 : vector<16x64xf32>
    %530 = arith.divf %528, %529 : vector<16x64xf32>
    %531 = vector.extract_strided_slice %530 {offsets = [0, 0], sizes = [16, 32], strides = [1, 1]} : vector<16x64xf32> to vector<16x32xf32>
    %532 = vector.extract_strided_slice %530 {offsets = [0, 32], sizes = [16, 32], strides = [1, 1]} : vector<16x64xf32> to vector<16x32xf32>
    %533 = arith.mulf %445, %532 : vector<16x32xf32>
    %534 = tpu.concatenate %533, %533 in 0 : vector<16x32xf32>, vector<16x32xf32> -> vector<32x32xf32>
    %cst_193 = arith.constant dense<0.000000e+00> : vector<32x32xf32>
    %535 = tpu.matmul %0, %534, %cst_193 {dimension_numbers = #tpu.dot_dimension_numbers<[1], [0], [0], [1], [0, 0, 1, 1], [], []>} : vector<32x32xf32>, vector<32x32xf32>, vector<32x32xf32> -> vector<32x32xf32>
    %cst_194 = arith.constant dense<0.000000e+00> : vector<32x32xf32>
    %536 = tpu.matmul %0, %535, %cst_194 {dimension_numbers = #tpu.dot_dimension_numbers<[1], [0], [0], [1], [0, 0, 1, 1], [], []>} : vector<32x32xf32>, vector<32x32xf32>, vector<32x32xf32> -> vector<32x32xf32>
    %cst_195 = arith.constant 2.000000e+00 : f32
    %537 = vector.broadcast %cst_195 : f32 to vector<32x32xf32>
    %538 = arith.mulf %537, %536 : vector<32x32xf32>
    %539 = arith.subf %538, %534 : vector<32x32xf32>
    %540 = vector.extract_strided_slice %535 {offsets = [0, 0], sizes = [16, 32], strides = [1, 1]} : vector<32x32xf32> to vector<16x32xf32>
    %541 = vector.extract_strided_slice %539 {offsets = [0, 0], sizes = [16, 32], strides = [1, 1]} : vector<32x32xf32> to vector<16x32xf32>
    %542 = vector.extract_strided_slice %535 {offsets = [16, 0], sizes = [16, 32], strides = [1, 1]} : vector<32x32xf32> to vector<16x32xf32>
    %543 = vector.extract_strided_slice %539 {offsets = [16, 0], sizes = [16, 32], strides = [1, 1]} : vector<32x32xf32> to vector<16x32xf32>
    %544 = tpu.concatenate %533, %540, %541, %542, %543 in 1 : vector<16x32xf32>, vector<16x32xf32>, vector<16x32xf32>, vector<16x32xf32>, vector<16x32xf32> -> vector<16x160xf32>
    %545 = vector.extract_strided_slice %510 {offsets = [0, 64], sizes = [16, 32], strides = [1, 1]} : vector<16x96xf32> to vector<16x32xf32>
    %c0_196 = arith.constant 0 : index
    %c0_197 = arith.constant 0 : index
    %546 = vector.load %arg7[%c0_196, %c0_197] : memref<160x32xf32, #tpu.memory_space<vmem>>, vector<160x32xf32>
    %cst_198 = arith.constant dense<0.000000e+00> : vector<16x32xf32>
    %547 = tpu.matmul %544, %546, %cst_198 {dimension_numbers = #tpu.dot_dimension_numbers<[1], [0], [0], [1], [0, 0, 1, 1], [], []>} : vector<16x160xf32>, vector<160x32xf32>, vector<16x32xf32> -> vector<16x32xf32>
    %548 = arith.addf %545, %547 : vector<16x32xf32>
    %549 = math.tanh %548 : vector<16x32xf32>
    %550 = arith.mulf %531, %445 : vector<16x32xf32>
    %cst_199 = arith.constant 1.000000e+00 : f32
    %551 = vector.broadcast %cst_199 : f32 to vector<16x32xf32>
    %552 = arith.subf %551, %531 : vector<16x32xf32>
    %553 = arith.mulf %552, %549 : vector<16x32xf32>
    %554 = arith.addf %550, %553 : vector<16x32xf32>
    %cst_200 = arith.constant 0.000000e+00 : f32
    %555 = vector.broadcast %cst_200 : f32 to vector<16x32xf32>
    %556 = arith.maximumf %554, %555 : vector<16x32xf32>
    %c5_i32 = arith.constant 5 : i32
    %557 = arith.index_cast %c5_i32 : i32 to index
    %c0_201 = arith.constant 0 : index
    %c0_202 = arith.constant 0 : index
    %558 = vector.load %arg0[%557, %c0_201, %c0_202] : memref<6x16x96xf32, #tpu.memory_space<vmem>>, vector<1x16x96xf32>
    %559 = vector.shape_cast %558 : vector<1x16x96xf32> to vector<16x96xf32>
    %560 = tpu.concatenate %494, %494 in 0 : vector<16x32xf32>, vector<16x32xf32> -> vector<32x32xf32>
    %cst_203 = arith.constant dense<0.000000e+00> : vector<32x32xf32>
    %561 = tpu.matmul %0, %560, %cst_203 {dimension_numbers = #tpu.dot_dimension_numbers<[1], [0], [0], [1], [0, 0, 1, 1], [], []>} : vector<32x32xf32>, vector<32x32xf32>, vector<32x32xf32> -> vector<32x32xf32>
    %cst_204 = arith.constant dense<0.000000e+00> : vector<32x32xf32>
    %562 = tpu.matmul %0, %561, %cst_204 {dimension_numbers = #tpu.dot_dimension_numbers<[1], [0], [0], [1], [0, 0, 1, 1], [], []>} : vector<32x32xf32>, vector<32x32xf32>, vector<32x32xf32> -> vector<32x32xf32>
    %cst_205 = arith.constant 2.000000e+00 : f32
    %563 = vector.broadcast %cst_205 : f32 to vector<32x32xf32>
    %564 = arith.mulf %563, %562 : vector<32x32xf32>
    %565 = arith.subf %564, %560 : vector<32x32xf32>
    %566 = vector.extract_strided_slice %561 {offsets = [0, 0], sizes = [16, 32], strides = [1, 1]} : vector<32x32xf32> to vector<16x32xf32>
    %567 = vector.extract_strided_slice %565 {offsets = [0, 0], sizes = [16, 32], strides = [1, 1]} : vector<32x32xf32> to vector<16x32xf32>
    %568 = vector.extract_strided_slice %561 {offsets = [16, 0], sizes = [16, 32], strides = [1, 1]} : vector<32x32xf32> to vector<16x32xf32>
    %569 = vector.extract_strided_slice %565 {offsets = [16, 0], sizes = [16, 32], strides = [1, 1]} : vector<32x32xf32> to vector<16x32xf32>
    %570 = tpu.concatenate %494, %566, %567, %568, %569 in 1 : vector<16x32xf32>, vector<16x32xf32>, vector<16x32xf32>, vector<16x32xf32>, vector<16x32xf32> -> vector<16x160xf32>
    %571 = vector.extract_strided_slice %559 {offsets = [0, 0], sizes = [16, 64], strides = [1, 1]} : vector<16x96xf32> to vector<16x64xf32>
    %c0_206 = arith.constant 0 : index
    %c0_207 = arith.constant 0 : index
    %572 = vector.load %arg2[%c0_206, %c0_207] : memref<160x64xf32, #tpu.memory_space<vmem>>, vector<160x64xf32>
    %cst_208 = arith.constant dense<0.000000e+00> : vector<16x64xf32>
    %573 = tpu.matmul %570, %572, %cst_208 {dimension_numbers = #tpu.dot_dimension_numbers<[1], [0], [0], [1], [0, 0, 1, 1], [], []>} : vector<16x160xf32>, vector<160x64xf32>, vector<16x64xf32> -> vector<16x64xf32>
    %574 = arith.addf %571, %573 : vector<16x64xf32>
    %575 = arith.negf %574 : vector<16x64xf32>
    %576 = math.exp %575 : vector<16x64xf32>
    %cst_209 = arith.constant 1.000000e+00 : f32
    %577 = vector.broadcast %cst_209 : f32 to vector<16x64xf32>
    %578 = arith.addf %577, %576 : vector<16x64xf32>
    %579 = arith.divf %577, %578 : vector<16x64xf32>
    %580 = vector.extract_strided_slice %579 {offsets = [0, 0], sizes = [16, 32], strides = [1, 1]} : vector<16x64xf32> to vector<16x32xf32>
    %581 = vector.extract_strided_slice %579 {offsets = [0, 32], sizes = [16, 32], strides = [1, 1]} : vector<16x64xf32> to vector<16x32xf32>
    %582 = arith.mulf %494, %581 : vector<16x32xf32>
    %583 = tpu.concatenate %582, %582 in 0 : vector<16x32xf32>, vector<16x32xf32> -> vector<32x32xf32>
    %cst_210 = arith.constant dense<0.000000e+00> : vector<32x32xf32>
    %584 = tpu.matmul %0, %583, %cst_210 {dimension_numbers = #tpu.dot_dimension_numbers<[1], [0], [0], [1], [0, 0, 1, 1], [], []>} : vector<32x32xf32>, vector<32x32xf32>, vector<32x32xf32> -> vector<32x32xf32>
    %cst_211 = arith.constant dense<0.000000e+00> : vector<32x32xf32>
    %585 = tpu.matmul %0, %584, %cst_211 {dimension_numbers = #tpu.dot_dimension_numbers<[1], [0], [0], [1], [0, 0, 1, 1], [], []>} : vector<32x32xf32>, vector<32x32xf32>, vector<32x32xf32> -> vector<32x32xf32>
    %cst_212 = arith.constant 2.000000e+00 : f32
    %586 = vector.broadcast %cst_212 : f32 to vector<32x32xf32>
    %587 = arith.mulf %586, %585 : vector<32x32xf32>
    %588 = arith.subf %587, %583 : vector<32x32xf32>
    %589 = vector.extract_strided_slice %584 {offsets = [0, 0], sizes = [16, 32], strides = [1, 1]} : vector<32x32xf32> to vector<16x32xf32>
    %590 = vector.extract_strided_slice %588 {offsets = [0, 0], sizes = [16, 32], strides = [1, 1]} : vector<32x32xf32> to vector<16x32xf32>
    %591 = vector.extract_strided_slice %584 {offsets = [16, 0], sizes = [16, 32], strides = [1, 1]} : vector<32x32xf32> to vector<16x32xf32>
    %592 = vector.extract_strided_slice %588 {offsets = [16, 0], sizes = [16, 32], strides = [1, 1]} : vector<32x32xf32> to vector<16x32xf32>
    %593 = tpu.concatenate %582, %589, %590, %591, %592 in 1 : vector<16x32xf32>, vector<16x32xf32>, vector<16x32xf32>, vector<16x32xf32>, vector<16x32xf32> -> vector<16x160xf32>
    %594 = vector.extract_strided_slice %559 {offsets = [0, 64], sizes = [16, 32], strides = [1, 1]} : vector<16x96xf32> to vector<16x32xf32>
    %c0_213 = arith.constant 0 : index
    %c0_214 = arith.constant 0 : index
    %595 = vector.load %arg3[%c0_213, %c0_214] : memref<160x32xf32, #tpu.memory_space<vmem>>, vector<160x32xf32>
    %cst_215 = arith.constant dense<0.000000e+00> : vector<16x32xf32>
    %596 = tpu.matmul %593, %595, %cst_215 {dimension_numbers = #tpu.dot_dimension_numbers<[1], [0], [0], [1], [0, 0, 1, 1], [], []>} : vector<16x160xf32>, vector<160x32xf32>, vector<16x32xf32> -> vector<16x32xf32>
    %597 = arith.addf %594, %596 : vector<16x32xf32>
    %598 = math.tanh %597 : vector<16x32xf32>
    %599 = arith.mulf %580, %494 : vector<16x32xf32>
    %cst_216 = arith.constant 1.000000e+00 : f32
    %600 = vector.broadcast %cst_216 : f32 to vector<16x32xf32>
    %601 = arith.subf %600, %580 : vector<16x32xf32>
    %602 = arith.mulf %601, %598 : vector<16x32xf32>
    %603 = arith.addf %599, %602 : vector<16x32xf32>
    %cst_217 = arith.constant 0.000000e+00 : f32
    %604 = vector.broadcast %cst_217 : f32 to vector<16x32xf32>
    %605 = arith.maximumf %603, %604 : vector<16x32xf32>
    %606 = tpu.concatenate %605, %605 in 0 : vector<16x32xf32>, vector<16x32xf32> -> vector<32x32xf32>
    %cst_218 = arith.constant dense<0.000000e+00> : vector<32x32xf32>
    %607 = tpu.matmul %0, %606, %cst_218 {dimension_numbers = #tpu.dot_dimension_numbers<[1], [0], [0], [1], [0, 0, 1, 1], [], []>} : vector<32x32xf32>, vector<32x32xf32>, vector<32x32xf32> -> vector<32x32xf32>
    %cst_219 = arith.constant dense<0.000000e+00> : vector<32x32xf32>
    %608 = tpu.matmul %0, %607, %cst_219 {dimension_numbers = #tpu.dot_dimension_numbers<[1], [0], [0], [1], [0, 0, 1, 1], [], []>} : vector<32x32xf32>, vector<32x32xf32>, vector<32x32xf32> -> vector<32x32xf32>
    %cst_220 = arith.constant 2.000000e+00 : f32
    %609 = vector.broadcast %cst_220 : f32 to vector<32x32xf32>
    %610 = arith.mulf %609, %608 : vector<32x32xf32>
    %611 = arith.subf %610, %606 : vector<32x32xf32>
    %612 = vector.extract_strided_slice %607 {offsets = [0, 0], sizes = [16, 32], strides = [1, 1]} : vector<32x32xf32> to vector<16x32xf32>
    %613 = vector.extract_strided_slice %611 {offsets = [0, 0], sizes = [16, 32], strides = [1, 1]} : vector<32x32xf32> to vector<16x32xf32>
    %614 = vector.extract_strided_slice %607 {offsets = [16, 0], sizes = [16, 32], strides = [1, 1]} : vector<32x32xf32> to vector<16x32xf32>
    %615 = vector.extract_strided_slice %611 {offsets = [16, 0], sizes = [16, 32], strides = [1, 1]} : vector<32x32xf32> to vector<16x32xf32>
    %616 = tpu.concatenate %605, %612, %613, %614, %615 in 1 : vector<16x32xf32>, vector<16x32xf32>, vector<16x32xf32>, vector<16x32xf32>, vector<16x32xf32> -> vector<16x160xf32>
    %c0_221 = arith.constant 0 : index
    %c0_222 = arith.constant 0 : index
    %617 = vector.load %arg4[%c0_221, %c0_222] : memref<160x96xf32, #tpu.memory_space<vmem>>, vector<160x96xf32>
    %cst_223 = arith.constant dense<0.000000e+00> : vector<16x96xf32>
    %618 = tpu.matmul %616, %617, %cst_223 {dimension_numbers = #tpu.dot_dimension_numbers<[1], [0], [0], [1], [0, 0, 1, 1], [], []>} : vector<16x160xf32>, vector<160x96xf32>, vector<16x96xf32> -> vector<16x96xf32>
    %c0_224 = arith.constant 0 : index
    %c0_225 = arith.constant 0 : index
    %619 = vector.load %arg5[%c0_224, %c0_225] : memref<1x96xf32, #tpu.memory_space<vmem>>, vector<1x96xf32>
    %620 = vector.broadcast %619 : vector<1x96xf32> to vector<16x96xf32>
    %621 = arith.addf %618, %620 : vector<16x96xf32>
    %622 = tpu.concatenate %556, %556 in 0 : vector<16x32xf32>, vector<16x32xf32> -> vector<32x32xf32>
    %cst_226 = arith.constant dense<0.000000e+00> : vector<32x32xf32>
    %623 = tpu.matmul %0, %622, %cst_226 {dimension_numbers = #tpu.dot_dimension_numbers<[1], [0], [0], [1], [0, 0, 1, 1], [], []>} : vector<32x32xf32>, vector<32x32xf32>, vector<32x32xf32> -> vector<32x32xf32>
    %cst_227 = arith.constant dense<0.000000e+00> : vector<32x32xf32>
    %624 = tpu.matmul %0, %623, %cst_227 {dimension_numbers = #tpu.dot_dimension_numbers<[1], [0], [0], [1], [0, 0, 1, 1], [], []>} : vector<32x32xf32>, vector<32x32xf32>, vector<32x32xf32> -> vector<32x32xf32>
    %cst_228 = arith.constant 2.000000e+00 : f32
    %625 = vector.broadcast %cst_228 : f32 to vector<32x32xf32>
    %626 = arith.mulf %625, %624 : vector<32x32xf32>
    %627 = arith.subf %626, %622 : vector<32x32xf32>
    %628 = vector.extract_strided_slice %623 {offsets = [0, 0], sizes = [16, 32], strides = [1, 1]} : vector<32x32xf32> to vector<16x32xf32>
    %629 = vector.extract_strided_slice %627 {offsets = [0, 0], sizes = [16, 32], strides = [1, 1]} : vector<32x32xf32> to vector<16x32xf32>
    %630 = vector.extract_strided_slice %623 {offsets = [16, 0], sizes = [16, 32], strides = [1, 1]} : vector<32x32xf32> to vector<16x32xf32>
    %631 = vector.extract_strided_slice %627 {offsets = [16, 0], sizes = [16, 32], strides = [1, 1]} : vector<32x32xf32> to vector<16x32xf32>
    %632 = tpu.concatenate %556, %628, %629, %630, %631 in 1 : vector<16x32xf32>, vector<16x32xf32>, vector<16x32xf32>, vector<16x32xf32>, vector<16x32xf32> -> vector<16x160xf32>
    %633 = vector.extract_strided_slice %621 {offsets = [0, 0], sizes = [16, 64], strides = [1, 1]} : vector<16x96xf32> to vector<16x64xf32>
    %c0_229 = arith.constant 0 : index
    %c0_230 = arith.constant 0 : index
    %634 = vector.load %arg6[%c0_229, %c0_230] : memref<160x64xf32, #tpu.memory_space<vmem>>, vector<160x64xf32>
    %cst_231 = arith.constant dense<0.000000e+00> : vector<16x64xf32>
    %635 = tpu.matmul %632, %634, %cst_231 {dimension_numbers = #tpu.dot_dimension_numbers<[1], [0], [0], [1], [0, 0, 1, 1], [], []>} : vector<16x160xf32>, vector<160x64xf32>, vector<16x64xf32> -> vector<16x64xf32>
    %636 = arith.addf %633, %635 : vector<16x64xf32>
    %637 = arith.negf %636 : vector<16x64xf32>
    %638 = math.exp %637 : vector<16x64xf32>
    %cst_232 = arith.constant 1.000000e+00 : f32
    %639 = vector.broadcast %cst_232 : f32 to vector<16x64xf32>
    %640 = arith.addf %639, %638 : vector<16x64xf32>
    %641 = arith.divf %639, %640 : vector<16x64xf32>
    %642 = vector.extract_strided_slice %641 {offsets = [0, 0], sizes = [16, 32], strides = [1, 1]} : vector<16x64xf32> to vector<16x32xf32>
    %643 = vector.extract_strided_slice %641 {offsets = [0, 32], sizes = [16, 32], strides = [1, 1]} : vector<16x64xf32> to vector<16x32xf32>
    %644 = arith.mulf %556, %643 : vector<16x32xf32>
    %645 = tpu.concatenate %644, %644 in 0 : vector<16x32xf32>, vector<16x32xf32> -> vector<32x32xf32>
    %cst_233 = arith.constant dense<0.000000e+00> : vector<32x32xf32>
    %646 = tpu.matmul %0, %645, %cst_233 {dimension_numbers = #tpu.dot_dimension_numbers<[1], [0], [0], [1], [0, 0, 1, 1], [], []>} : vector<32x32xf32>, vector<32x32xf32>, vector<32x32xf32> -> vector<32x32xf32>
    %cst_234 = arith.constant dense<0.000000e+00> : vector<32x32xf32>
    %647 = tpu.matmul %0, %646, %cst_234 {dimension_numbers = #tpu.dot_dimension_numbers<[1], [0], [0], [1], [0, 0, 1, 1], [], []>} : vector<32x32xf32>, vector<32x32xf32>, vector<32x32xf32> -> vector<32x32xf32>
    %cst_235 = arith.constant 2.000000e+00 : f32
    %648 = vector.broadcast %cst_235 : f32 to vector<32x32xf32>
    %649 = arith.mulf %648, %647 : vector<32x32xf32>
    %650 = arith.subf %649, %645 : vector<32x32xf32>
    %651 = vector.extract_strided_slice %646 {offsets = [0, 0], sizes = [16, 32], strides = [1, 1]} : vector<32x32xf32> to vector<16x32xf32>
    %652 = vector.extract_strided_slice %650 {offsets = [0, 0], sizes = [16, 32], strides = [1, 1]} : vector<32x32xf32> to vector<16x32xf32>
    %653 = vector.extract_strided_slice %646 {offsets = [16, 0], sizes = [16, 32], strides = [1, 1]} : vector<32x32xf32> to vector<16x32xf32>
    %654 = vector.extract_strided_slice %650 {offsets = [16, 0], sizes = [16, 32], strides = [1, 1]} : vector<32x32xf32> to vector<16x32xf32>
    %655 = tpu.concatenate %644, %651, %652, %653, %654 in 1 : vector<16x32xf32>, vector<16x32xf32>, vector<16x32xf32>, vector<16x32xf32>, vector<16x32xf32> -> vector<16x160xf32>
    %656 = vector.extract_strided_slice %621 {offsets = [0, 64], sizes = [16, 32], strides = [1, 1]} : vector<16x96xf32> to vector<16x32xf32>
    %c0_236 = arith.constant 0 : index
    %c0_237 = arith.constant 0 : index
    %657 = vector.load %arg7[%c0_236, %c0_237] : memref<160x32xf32, #tpu.memory_space<vmem>>, vector<160x32xf32>
    %cst_238 = arith.constant dense<0.000000e+00> : vector<16x32xf32>
    %658 = tpu.matmul %655, %657, %cst_238 {dimension_numbers = #tpu.dot_dimension_numbers<[1], [0], [0], [1], [0, 0, 1, 1], [], []>} : vector<16x160xf32>, vector<160x32xf32>, vector<16x32xf32> -> vector<16x32xf32>
    %659 = arith.addf %656, %658 : vector<16x32xf32>
    %660 = math.tanh %659 : vector<16x32xf32>
    %661 = arith.mulf %642, %556 : vector<16x32xf32>
    %cst_239 = arith.constant 1.000000e+00 : f32
    %662 = vector.broadcast %cst_239 : f32 to vector<16x32xf32>
    %663 = arith.subf %662, %642 : vector<16x32xf32>
    %664 = arith.mulf %663, %660 : vector<16x32xf32>
    %665 = arith.addf %661, %664 : vector<16x32xf32>
    %cst_240 = arith.constant 0.000000e+00 : f32
    %666 = vector.broadcast %cst_240 : f32 to vector<16x32xf32>
    %667 = arith.maximumf %665, %666 : vector<16x32xf32>
    %c6_i32 = arith.constant 6 : i32
    %c0_241 = arith.constant 0 : index
    %c0_242 = arith.constant 0 : index
    %668 = vector.load %arg8[%c0_241, %c0_242] : memref<32x12xf32, #tpu.memory_space<vmem>>, vector<32x12xf32>
    %cst_243 = arith.constant dense<0.000000e+00> : vector<16x12xf32>
    %669 = tpu.matmul %667, %668, %cst_243 {dimension_numbers = #tpu.dot_dimension_numbers<[1], [0], [0], [1], [0, 0, 1, 1], [], []>} : vector<16x32xf32>, vector<32x12xf32>, vector<16x12xf32> -> vector<16x12xf32>
    %c0_244 = arith.constant 0 : index
    %c0_245 = arith.constant 0 : index
    %670 = vector.load %arg9[%c0_244, %c0_245] : memref<1x12xf32, #tpu.memory_space<vmem>>, vector<1x12xf32>
    %671 = vector.broadcast %670 : vector<1x12xf32> to vector<16x12xf32>
    %672 = arith.addf %669, %671 : vector<16x12xf32>
    %c0_246 = arith.constant 0 : index
    %c0_247 = arith.constant 0 : index
    %673 = vector.load %arg10[%c0_246, %c0_247] : memref<16x12xf32, #tpu.memory_space<vmem>>, vector<16x12xf32>
    tpu.vector_store %arg10[%c0_246, %c0_247], %672 {strides = array<i32>} : memref<16x12xf32, #tpu.memory_space<vmem>>, vector<16x12xf32>,
    return
  }
}

</mosaic_0001>

<llo_original>
// kernel: dcrnn_forward.2
$region0: #{dcrnn_forward.2}
  #allocation0 [shape = 'u32[]', space=smem, size = 0x4, offset = 0x4, fixed_abs, tag = 'smem constant byte address 0x4 - core index']
  #allocation1 [shape = 'u32[144,128]{1,0:T(1,128)}', space=vmem, size = 0x12000, scoped, tag = 'internal scratch']
  %s0 = inlined_call_operand.vmem [shape: f32[6,16,4], index: 0, kind: input, shape index: {}]
  %s1 = inlined_call_operand.vmem [shape: f32[32,32], index: 1, kind: input, shape index: {}]
  %s2 = inlined_call_operand.vmem [shape: f32[20,96], index: 2, kind: input, shape index: {}]
  %s3 = inlined_call_operand.vmem [shape: f32[1,96], index: 3, kind: input, shape index: {}]
  %s4 = inlined_call_operand.vmem [shape: f32[6,16,96], index: 4, kind: output, shape index: {}]
  %s5 = sld [smem:[#allocation0]]
  $region49: #{dcrnn_forward.2} parent=0
    _
  %s7 = ssub.s32 1, %s5
  %s8 = scalar_select 0, %s7, %s5
  loop: start=0, step=1, limit=8
  $region2: #{dcrnn_forward.2} parent=0 // loop_pre_header
    _
  $region3: #{dcrnn_forward.2} parent=0 // loop_header
    %s10 = sphi 0, %s14
    %p11 = scmp.ge.s32.totalorder %s10, 8
    %s20 = sphi 0, %s22
    %s23 = sphi 0, %s20
    %s24 = sphi 0, %s23
    %s40 = sphi 0, %s24
    %s44 = sphi 0, %s44
    %s46 = sphi 0, %s44
    %s47 = sphi 0, %s46
    %s61 = sphi 0, %s47
    %s65 = sphi 0, %s65
    %s67 = sphi 0, %s65
    %s68 = sphi 0, %s67
    %s82 = sphi 0, %s68
    %s86 = sphi 0, %s86
    %s88 = sphi 0, %s86
    %s89 = sphi 0, %s88
    %s103 = sphi 0, %s89
    %s109 = sphi 0, %s111
    %s112 = sphi 0, %s109
    %s113 = sphi 0, %s112
    %s129 = sphi 0, %s113
  $region4: #{dcrnn_forward.2} parent=0 // loop_header_branch
    %13 = sbr.rel (%p11) target = $region8
  $region5: #{dcrnn_forward.2} parent=0 // loop_body
    %s15 = ssub.s32 %s10, 1
    %s16 = ssub.s32 %s10, 2
    %s17 = sadd.s32 %s10, 1
    %s18 = ssub.s32 %s10, %s17
    %p19 = scmp.eq.s32.totalorder %s18, 0
    %s21 = sadd.s32 %s20, 1
    %s22 = scalar_select %p19, %s20, %s21
    %p25 = pneg %p19
    %p26 = scmp.eq.s32.totalorder %s10, 5
    %p27 = por %p25, %p26
    %p28 = scmp.ne.s32.totalorder %s20, %s23
    %p29 = scmp.eq.s32.totalorder %s10, 0
    %p30 = por %p28, %p29
    %p31 = scmp.ne.s32.totalorder %s20, %s23
    %p32 = scmp.eq.s32.totalorder %s15, 5
    %p33 = por %p31, %p32
    %p34 = scmp.ne.s32.totalorder %s23, %s24
    %p35 = scmp.eq.s32.totalorder %s15, 0
    %p36 = por %p34, %p35
    %p37 = scmp.ne.s32.totalorder %s23, %s24
    %p38 = scmp.eq.s32.totalorder %s16, 5
    %p39 = por %p37, %p38
    %p41 = scmp.ne.s32.totalorder %s24, %s40
    %p42 = scmp.eq.s32.totalorder %s16, 0
    %p43 = por %p41, %p42
    %s45 = sadd.s32 %s44, 1
    %p48 = scmp.eq.s32.totalorder %s10, 5
    %p49 = scmp.ne.s32.totalorder %s44, %s46
    %p50 = scmp.eq.s32.totalorder %s10, 0
    %p51 = por %p49, %p50
    %p52 = scmp.ne.s32.totalorder %s44, %s46
    %p53 = scmp.eq.s32.totalorder %s15, 5
    %p54 = por %p52, %p53
    %p55 = scmp.ne.s32.totalorder %s46, %s47
    %p56 = scmp.eq.s32.totalorder %s15, 0
    %p57 = por %p55, %p56
    %p58 = scmp.ne.s32.totalorder %s46, %s47
    %p59 = scmp.eq.s32.totalorder %s16, 5
    %p60 = por %p58, %p59
    %p62 = scmp.ne.s32.totalorder %s47, %s61
    %p63 = scmp.eq.s32.totalorder %s16, 0
    %p64 = por %p62, %p63
    %s66 = sadd.s32 %s65, 1
    %p69 = scmp.eq.s32.totalorder %s10, 5
    %p70 = scmp.ne.s32.totalorder %s65, %s67
    %p71 = scmp.eq.s32.totalorder %s10, 0
    %p72 = por %p70, %p71
    %p73 = scmp.ne.s32.totalorder %s65, %s67
    %p74 = scmp.eq.s32.totalorder %s15, 5
    %p75 = por %p73, %p74
    %p76 = scmp.ne.s32.totalorder %s67, %s68
    %p77 = scmp.eq.s32.totalorder %s15, 0
    %p78 = por %p76, %p77
    %p79 = scmp.ne.s32.totalorder %s67, %s68
    %p80 = scmp.eq.s32.totalorder %s16, 5
    %p81 = por %p79, %p80
    %p83 = scmp.ne.s32.totalorder %s68, %s82
    %p84 = scmp.eq.s32.totalorder %s16, 0
    %p85 = por %p83, %p84
    %s87 = sadd.s32 %s86, 1
    %p90 = scmp.eq.s32.totalorder %s10, 5
    %p91 = scmp.ne.s32.totalorder %s86, %s88
    %p92 = scmp.eq.s32.totalorder %s10, 0
    %p93 = por %p91, %p92
    %p94 = scmp.ne.s32.totalorder %s86, %s88
    %p95 = scmp.eq.s32.totalorder %s15, 5
    %p96 = por %p94, %p95
    %p97 = scmp.ne.s32.totalorder %s88, %s89
    %p98 = scmp.eq.s32.totalorder %s15, 0
    %p99 = por %p97, %p98
    %p100 = scmp.ne.s32.totalorder %s88, %s89
    %p101 = scmp.eq.s32.totalorder %s16, 5
    %p102 = por %p100, %p101
    %p104 = scmp.ne.s32.totalorder %s89, %s103
    %p105 = scmp.eq.s32.totalorder %s16, 0
    %p106 = por %p104, %p105
    %s107 = ssub.s32 %s10, %s17
    %p108 = scmp.eq.s32.totalorder %s107, 0
    %s110 = sadd.s32 %s109, 1
    %s111 = scalar_select %p108, %s109, %s110
    %p114 = pneg %p108
    %p115 = scmp.eq.s32.totalorder %s10, 5
    %p116 = por %p114, %p115
    %p117 = scmp.ne.s32.totalorder %s109, %s112
    %p118 = scmp.eq.s32.totalorder %s10, 0
    %p119 = por %p117, %p118
    %p120 = scmp.ne.s32.totalorder %s109, %s112
    %p121 = scmp.eq.s32.totalorder %s15, 5
    %p122 = por %p120, %p121
    %p123 = scmp.ne.s32.totalorder %s112, %s113
    %p124 = scmp.eq.s32.totalorder %s15, 0
    %p125 = por %p123, %p124
    %p126 = scmp.ne.s32.totalorder %s112, %s113
    %p127 = scmp.eq.s32.totalorder %s16, 5
    %p128 = por %p126, %p127
    %p130 = scmp.ne.s32.totalorder %s113, %s129
    %p131 = scmp.eq.s32.totalorder %s16, 0
    %p132 = por %p130, %p131
    %p133 = scmp.le.s32.totalorder 1, %s10
    %p134 = scmp.lt.s32.totalorder %s10, 7
    %p135 = pnand %p133, %p134
    %p136 = pneg %p135
    // Predicated region
    $region9: #{dcrnn_forward.2} parent=5 // pred_check
      _
    $region10: #{dcrnn_forward.2} parent=5 // pred_check_branch
      %138 = sbr.rel (%p135) target = $region12
    $region11: #{dcrnn_forward.2} parent=5 // pred_region
      %s139 = ssub.s32 %s10, 1
      // Predicated region
      $region13: #{dcrnn_forward.2} parent=11 // pred_check
        %p140 = pneg %p57
      $region14: #{dcrnn_forward.2} parent=11 // pred_check_branch
        %142 = sbr.rel (%p140) target = $region16
      $region15: #{dcrnn_forward.2} parent=11 // pred_region
        _
      $region16: #{dcrnn_forward.2} parent=11 // pred_fallthru
        _
      // Predicated region
      $region17: #{dcrnn_forward.2} parent=11 // pred_check
        %p143 = pneg %p78
      $region18: #{dcrnn_forward.2} parent=11 // pred_check_branch
        %145 = sbr.rel (%p143) target = $region20
      $region19: #{dcrnn_forward.2} parent=11 // pred_region
        _
      $region20: #{dcrnn_forward.2} parent=11 // pred_fallthru
        _
      // Predicated region
      $region21: #{dcrnn_forward.2} parent=11 // pred_check
        %p146 = pneg %p99
      $region22: #{dcrnn_forward.2} parent=11 // pred_check_branch
        %148 = sbr.rel (%p146) target = $region24
      $region23: #{dcrnn_forward.2} parent=11 // pred_region
        _
      $region24: #{dcrnn_forward.2} parent=11 // pred_fallthru
        _
    $region12: #{dcrnn_forward.2} parent=5 // pred_fallthru
      _
    %p149 = scmp.lt.s32.totalorder %s10, 6
    // Predicated region
    $region25: #{dcrnn_forward.2} parent=5 // pred_check
      %p150 = pneg %p149
    $region26: #{dcrnn_forward.2} parent=5 // pred_check_branch
      %152 = sbr.rel (%p150) target = $region28
    $region27: #{dcrnn_forward.2} parent=5 // pred_region
      // Predicated region
      $region29: #{dcrnn_forward.2} parent=27 // pred_check
        %p153 = pneg %p30
      $region30: #{dcrnn_forward.2} parent=27 // pred_check_branch
        %155 = sbr.rel (%p153) target = $region32
      $region31: #{dcrnn_forward.2} parent=27 // pred_region
        %p156 = scmp.lt.s32.totalorder %s10, 5
        %s157 = scalar_select %p156, %s10, 5
        %s158 = smul.addr %s157, 2
        %s159 = smul.addr %s158, 8
        %s160 = scalar_lea.vmem %s0, %s159
      $region32: #{dcrnn_forward.2} parent=27 // pred_fallthru
        _
    $region28: #{dcrnn_forward.2} parent=5 // pred_fallthru
      _
    %p161 = scmp.le.s32.totalorder 1, %s10
    %p162 = scmp.lt.s32.totalorder %s10, 7
    %p163 = pnand %p161, %p162
    %p164 = pneg %p163
    // Predicated region
    $region33: #{dcrnn_forward.2} parent=5 // pred_check
      _
    $region34: #{dcrnn_forward.2} parent=5 // pred_check_branch
      %166 = sbr.rel (%p163) target = $region36
    $region35: #{dcrnn_forward.2} parent=5 // pred_region
      %s167 = ssub.s32 %s10, 1
      %p168 = scmp.lt.s32.totalorder %s15, 5
      %s169 = scalar_select %p168, %s15, 5
      %s170 = smul.addr %s169, 2
      %s171 = smul.addr %s170, 8
      %s172 = scalar_lea.vmem %s0, %s171
      %p173 = pneg %p36
      %p174 = pneg %p33
      %p175 = pneg %p57
      %p176 = pneg %p54
      %p177 = pneg %p78
      %p178 = pneg %p75
      %p179 = pneg %p99
      %p180 = pneg %p96
      %p181 = pneg %p125
      %p182 = pneg %p122
      %p183 = scmp.lt.s32.totalorder %s15, 5
      %s184 = scalar_select %p183, %s15, 5
      %s185 = smul.addr %s184, 2
      %s186 = smul.addr %s185, 8
      %s187 = scalar_lea.vmem %s4, %s186
      %p188 = scmp.lt.s32.totalorder %s15, 5
      %s189 = scalar_select %p188, %s15, 5
      %s190 = smul.addr %s189, 2
      %s191 = smul.addr %s190, 8
      %s192 = scalar_lea.vmem %s0, %s191
      %p193 = scmp.lt.s32.totalorder %s15, 5
      %s194 = scalar_select %p193, %s15, 5
      %s195 = smul.addr %s194, 2
      %s196 = smul.addr %s195, 8
      %s197 = scalar_lea.vmem %s4, %s196
      %v198 = vld [vmem:[%s192] sm:$0xff]
      %v199 = vld [vmem:[%s192 + $0x8] sm:$0xff]
      %v200 = vld [vmem:[%s1] sm:$0xff]
      %v201 = vld [vmem:[%s1 + $0x8] sm:$0xff]
      %v202 = vld [vmem:[%s1 + $0x10] sm:$0xff]
      %v203 = vld [vmem:[%s1 + $0x18] sm:$0xff]
      %vm204 = vcmask 261120
      %v206 = vsel %vm204, %v200, 0
      %v209 = vsel %vm204, %v201, 0
      %v212 = vsel %vm204, %v202, 0
      %v215 = vsel %vm204, %v203, 0
      %217 = vmatprep.subr.mxu0 0.0
      %218 = vmatpush1.msra.mxu0 0.0
      %219 = vmatprep.subr.mxu0 0.0
      %220 = vmatpush1.msra.mxu0 0.0
      %221 = vmatprep.subr.mxu0 0.0
      %222 = vmatpush1.msra.mxu0 0.0
      %223 = vmatprep.subr.mxu0 0.0
      %224 = vmatpush1.msra.mxu0 0.0
      %225 = vmatprep.subr.mxu0 0.0
      %226 = vmatpush1.msra.mxu0 0.0
      %227 = vmatprep.subr.mxu0 0.0
      %228 = vmatpush1.msra.mxu0 0.0
      %229 = vmatprep.subr.mxu0 0.0
      %230 = vmatpush1.msra.mxu0 0.0
      %231 = vmatprep.subr.mxu0 0.0
      %232 = vmatpush1.msra.mxu0 0.0
      %233 = vmatprep.subr.mxu0 0.0
      %234 = vmatpush1.msra.mxu0 0.0
      %235 = vmatprep.subr.mxu0 0.0
      %236 = vmatpush1.msra.mxu0 0.0
      %237 = vmatprep.subr.mxu0 0.0
      %238 = vmatpush1.msra.mxu0 0.0
      %239 = vmatprep.subr.mxu0 0.0
      %240 = vmatpush1.msra.mxu0 0.0
      %241 = vmatprep.subr.mxu0 0.0
      %242 = vmatpush1.msra.mxu0 %v199
      %243 = vmatprep.subr.mxu0 0.0
      %244 = vmatpush1.msra.mxu0 %v198
      %245 = vmatprep.subr.mxu0 0.0
      %246 = vmatpush1.msra.mxu0 %v199
      %247 = vmatprep.subr.mxu0 0.0
      %248 = vmatpush1.msra.mxu0 %v198
      %249 = vmatprep.subr.mxu0 0.0
      %250 = vmatpush2.msra.mxu0 0.0
      %251 = vmatprep.subr.mxu0 0.0
      %252 = vmatpush2.msra.mxu0 0.0
      %253 = vmatprep.subr.mxu0 0.0
      %254 = vmatpush2.msra.mxu0 0.0
      %255 = vmatprep.subr.mxu0 0.0
      %256 = vmatpush2.msra.mxu0 0.0
      %257 = vmatprep.subr.mxu0 0.0
      %258 = vmatpush2.msra.mxu0 0.0
      %259 = vmatprep.subr.mxu0 0.0
      %260 = vmatpush2.msra.mxu0 0.0
      %261 = vmatprep.subr.mxu0 0.0
      %262 = vmatpush2.msra.mxu0 0.0
      %263 = vmatprep.subr.mxu0 0.0
      %264 = vmatpush2.msra.mxu0 0.0
      %265 = vmatprep.subr.mxu0 0.0
      %266 = vmatpush2.msra.mxu0 0.0
      %267 = vmatprep.subr.mxu0 0.0
      %268 = vmatpush2.msra.mxu0 0.0
      %269 = vmatprep.subr.mxu0 0.0
      %270 = vmatpush2.msra.mxu0 0.0
      %271 = vmatprep.subr.mxu0 0.0
      %272 = vmatpush2.msra.mxu0 0.0
      %273 = vmatprep.subr.mxu0 0.0
      %274 = vmatpush2.msra.mxu0 0.0
      %275 = vmatprep.subr.mxu0 0.0
      %276 = vmatpush2.msra.mxu0 0.0
      %277 = vmatprep.subr.mxu0 0.0
      %278 = vmatpush2.msra.mxu0 0.0
      %279 = vmatprep.subr.mxu0 0.0
      %280 = vmatpush2.msra.mxu0 0.0
      %281 = vmatprep.mubr.f32.mxu0 0.0
      %282 = vmatmul.mubr.f32.gmra.mxu0 %v206
      %v283 = vpop.f32.mrf.mxu0
      %v284 = vadd.f32 0.0, %v283
      %v285 = vpop.f32.mrf.mxu0
      %286 = vmatprep.mubr.f32.mxu0 0.0
      %287 = vmatmul.mubr.f32.gmra.mxu0 %v209
      %v288 = vpop.f32.mrf.mxu0
      %v289 = vadd.f32 0.0, %v288
      %v290 = vpop.f32.mrf.mxu0
      %291 = vmatprep.mubr.f32.mxu0 0.0
      %292 = vmatmul.mubr.f32.gmra.mxu0 %v212
      %v293 = vpop.f32.mrf.mxu0
      %v294 = vadd.f32 0.0, %v293
      %v295 = vpop.f32.mrf.mxu0
      %296 = vmatprep.mubr.f32.mxu0 0.0
      %297 = vmatmul.mubr.f32.gmra.mxu0 %v215
      %v298 = vpop.f32.mrf.mxu0
      %v299 = vadd.f32 0.0, %v298
      %v300 = vpop.f32.mrf.mxu0
      %301 = vdwg.mxu0
      %302 = vmatprep.subr.mxu0 0.0
      %303 = vmatpush1.msra.mxu0 0.0
      %304 = vmatprep.subr.mxu0 0.0
      %305 = vmatpush1.msra.mxu0 0.0
      %306 = vmatprep.subr.mxu0 0.0
      %307 = vmatpush1.msra.mxu0 0.0
      %308 = vmatprep.subr.mxu0 0.0
      %309 = vmatpush1.msra.mxu0 0.0
      %310 = vmatprep.subr.mxu0 0.0
      %311 = vmatpush1.msra.mxu0 0.0
      %312 = vmatprep.subr.mxu0 0.0
      %313 = vmatpush1.msra.mxu0 0.0
      %314 = vmatprep.subr.mxu0 0.0
      %315 = vmatpush1.msra.mxu0 0.0
      %316 = vmatprep.subr.mxu0 0.0
      %317 = vmatpush1.msra.mxu0 0.0
      %318 = vmatprep.subr.mxu0 0.0
      %319 = vmatpush1.msra.mxu0 0.0
      %320 = vmatprep.subr.mxu0 0.0
      %321 = vmatpush1.msra.mxu0 0.0
      %322 = vmatprep.subr.mxu0 0.0
      %323 = vmatpush1.msra.mxu0 0.0
      %324 = vmatprep.subr.mxu0 0.0
      %325 = vmatpush1.msra.mxu0 0.0
      %326 = vmatprep.subr.mxu0 0.0
      %327 = vmatpush1.msra.mxu0 %v299
      %328 = vmatprep.subr.mxu0 0.0
      %329 = vmatpush1.msra.mxu0 %v294
      %330 = vmatprep.subr.mxu0 0.0
      %331 = vmatpush1.msra.mxu0 %v289
      %332 = vmatprep.subr.mxu0 0.0
      %333 = vmatpush1.msra.mxu0 %v284
      %334 = vmatprep.subr.mxu0 0.0
      %335 = vmatpush2.msra.mxu0 0.0
      %336 = vmatprep.subr.mxu0 0.0
      %337 = vmatpush2.msra.mxu0 0.0
      %338 = vmatprep.subr.mxu0 0.0
      %339 = vmatpush2.msra.mxu0 0.0
      %340 = vmatprep.subr.mxu0 0.0
      %341 = vmatpush2.msra.mxu0 0.0
      %342 = vmatprep.subr.mxu0 0.0
      %343 = vmatpush2.msra.mxu0 0.0
      %344 = vmatprep.subr.mxu0 0.0
      %345 = vmatpush2.msra.mxu0 0.0
      %346 = vmatprep.subr.mxu0 0.0
      %347 = vmatpush2.msra.mxu0 0.0
      %348 = vmatprep.subr.mxu0 0.0
      %349 = vmatpush2.msra.mxu0 0.0
      %350 = vmatprep.subr.mxu0 0.0
      %351 = vmatpush2.msra.mxu0 0.0
      %352 = vmatprep.subr.mxu0 0.0
      %353 = vmatpush2.msra.mxu0 0.0
      %354 = vmatprep.subr.mxu0 0.0
      %355 = vmatpush2.msra.mxu0 0.0
      %356 = vmatprep.subr.mxu0 0.0
      %357 = vmatpush2.msra.mxu0 0.0
      %358 = vmatprep.subr.mxu0 0.0
      %359 = vmatpush2.msra.mxu0 0.0
      %360 = vmatprep.subr.mxu0 0.0
      %361 = vmatpush2.msra.mxu0 0.0
      %362 = vmatprep.subr.mxu0 0.0
      %363 = vmatpush2.msra.mxu0 0.0
      %364 = vmatprep.subr.mxu0 0.0
      %365 = vmatpush2.msra.mxu0 0.0
      %366 = vmatprep.mubr.f32.mxu0 0.0
      %367 = vmatmul.mubr.f32.gmra.mxu0 %v206
      %v368 = vpop.f32.mrf.mxu0
      %v369 = vadd.f32 0.0, %v368
      %v370 = vpop.f32.mrf.mxu0
      %371 = vmatprep.mubr.f32.mxu0 0.0
      %372 = vmatmul.mubr.f32.gmra.mxu0 %v209
      %v373 = vpop.f32.mrf.mxu0
      %v374 = vadd.f32 0.0, %v373
      %v375 = vpop.f32.mrf.mxu0
      %376 = vmatprep.mubr.f32.mxu0 0.0
      %377 = vmatmul.mubr.f32.gmra.mxu0 %v212
      %v378 = vpop.f32.mrf.mxu0
      %v379 = vadd.f32 0.0, %v378
      %v380 = vpop.f32.mrf.mxu0
      %381 = vmatprep.mubr.f32.mxu0 0.0
      %382 = vmatmul.mubr.f32.gmra.mxu0 %v215
      %v383 = vpop.f32.mrf.mxu0
      %v384 = vadd.f32 0.0, %v383
      %v385 = vpop.f32.mrf.mxu0
      %386 = vdwg.mxu0
      %v387 = vmul.f32 %v369, 2.0
      %v388 = vmul.f32 %v374, 2.0
      %v389 = vmul.f32 %v379, 2.0
      %v390 = vmul.f32 %v384, 2.0
      %v391 = vsub.f32 %v387, %v198
      %v392 = vsub.f32 %v388, %v199
      %v393 = vsub.f32 %v389, %v198
      %v394 = vsub.f32 %v390, %v199
      %397 = vrot.lane.b32.xlu0 %v284, 4
      %v398 = vpop.permute.xlu0 %397
      %399 = vrot.lane.b32.xlu0 %v289, 4
      %v400 = vpop.permute.xlu0 %399
      %405 = vrot.lane.b32.xlu0 %v391, 8
      %v406 = vpop.permute.xlu0 %405
      %407 = vrot.lane.b32.xlu0 %v392, 8
      %v408 = vpop.permute.xlu0 %407
      %413 = vrot.lane.b32.xlu0 %v294, 12
      %v414 = vpop.permute.xlu0 %413
      %415 = vrot.lane.b32.xlu0 %v299, 12
      %v416 = vpop.permute.xlu0 %415
      %421 = vrot.lane.b32.xlu0 %v393, 16
      %v422 = vpop.permute.xlu0 %421
      %423 = vrot.lane.b32.xlu0 %v394, 16
      %v424 = vpop.permute.xlu0 %423
      %vm427 = vcmask 31744
      %v428 = vsel %vm427, %v198, %v398
      %v429 = vsel %vm427, %v199, %v400
      %vm430 = vcmask 64512
      %v431 = vsel %vm430, %v428, %v406
      %v432 = vsel %vm430, %v429, %v408
      %vm433 = vcmask 97280
      %v434 = vsel %vm433, %v431, %v414
      %v435 = vsel %vm433, %v432, %v416
      %vm436 = vcmask 130048
      %v437 = vsel %vm436, %v434, %v422
      %v438 = vsel %vm436, %v435, %v424
      %v439 = vld [vmem:[%s2] sm:$0xff]
      %v440 = vld [vmem:[%s2 + $0x8] sm:$0xff]
      %v441 = vld [vmem:[%s2 + $0x10] sm:$0xf]
      %v442 = vld [vmem:[%s3] sm:$0x1]
      %v444 = vlaneseq
      %v445 = vshrl.u32 %v444, 7
      %v446 = vsub.s32 0, %v445
      %v447 = vrot.slane %v442, %v446
      %vm449 = vcmask 162816
      %v451 = vsel %vm449, %v437, 0
      %v454 = vsel %vm449, %v438, 0
      %vm456 = vcmask 1043456
      %v458 = vsel %vm456, %v441, 0
      %460 = vmatprep.subr.mxu0 0.0
      %461 = vmatpush1.msra.mxu0 0.0
      %462 = vmatprep.subr.mxu0 0.0
      %463 = vmatpush1.msra.mxu0 0.0
      %464 = vmatprep.subr.mxu0 0.0
      %465 = vmatpush1.msra.mxu0 0.0
      %466 = vmatprep.subr.mxu0 0.0
      %467 = vmatpush1.msra.mxu0 0.0
      %468 = vmatprep.subr.mxu0 0.0
      %469 = vmatpush1.msra.mxu0 0.0
      %470 = vmatprep.subr.mxu0 0.0
      %471 = vmatpush1.msra.mxu0 0.0
      %472 = vmatprep.subr.mxu0 0.0
      %473 = vmatpush1.msra.mxu0 0.0
      %474 = vmatprep.subr.mxu0 0.0
      %475 = vmatpush1.msra.mxu0 0.0
      %476 = vmatprep.subr.mxu0 0.0
      %477 = vmatpush1.msra.mxu0 0.0
      %478 = vmatprep.subr.mxu0 0.0
      %479 = vmatpush1.msra.mxu0 0.0
      %480 = vmatprep.subr.mxu0 0.0
      %481 = vmatpush1.msra.mxu0 0.0
      %482 = vmatprep.subr.mxu0 0.0
      %483 = vmatpush1.msra.mxu0 0.0
      %484 = vmatprep.subr.mxu0 0.0
      %485 = vmatpush1.msra.mxu0 0.0
      %486 = vmatprep.subr.mxu0 0.0
      %487 = vmatpush1.msra.mxu0 %v458
      %488 = vmatprep.subr.mxu0 0.0
      %489 = vmatpush1.msra.mxu0 %v440
      %490 = vmatprep.subr.mxu0 0.0
      %491 = vmatpush1.msra.mxu0 %v439
      %492 = vmatprep.subr.mxu0 0.0
      %493 = vmatpush2.msra.mxu0 0.0
      %494 = vmatprep.subr.mxu0 0.0
      %495 = vmatpush2.msra.mxu0 0.0
      %496 = vmatprep.subr.mxu0 0.0
      %497 = vmatpush2.msra.mxu0 0.0
      %498 = vmatprep.subr.mxu0 0.0
      %499 = vmatpush2.msra.mxu0 0.0
      %500 = vmatprep.subr.mxu0 0.0
      %501 = vmatpush2.msra.mxu0 0.0
      %502 = vmatprep.subr.mxu0 0.0
      %503 = vmatpush2.msra.mxu0 0.0
      %504 = vmatprep.subr.mxu0 0.0
      %505 = vmatpush2.msra.mxu0 0.0
      %506 = vmatprep.subr.mxu0 0.0
      %507 = vmatpush2.msra.mxu0 0.0
      %508 = vmatprep.subr.mxu0 0.0
      %509 = vmatpush2.msra.mxu0 0.0
      %510 = vmatprep.subr.mxu0 0.0
      %511 = vmatpush2.msra.mxu0 0.0
      %512 = vmatprep.subr.mxu0 0.0
      %513 = vmatpush2.msra.mxu0 0.0
      %514 = vmatprep.subr.mxu0 0.0
      %515 = vmatpush2.msra.mxu0 0.0
      %516 = vmatprep.subr.mxu0 0.0
      %517 = vmatpush2.msra.mxu0 0.0
      %518 = vmatprep.subr.mxu0 0.0
      %519 = vmatpush2.msra.mxu0 0.0
      %520 = vmatprep.subr.mxu0 0.0
      %521 = vmatpush2.msra.mxu0 0.0
      %522 = vmatprep.subr.mxu0 0.0
      %523 = vmatpush2.msra.mxu0 0.0
      %524 = vmatprep.mubr.f32.mxu0 0.0
      %525 = vmatmul.mubr.f32.gmra.mxu0 %v451
      %v526 = vpop.f32.mrf.mxu0
      %v527 = vadd.f32 %v447, %v526
      %v528 = vpop.f32.mrf.mxu0
      %529 = vmatprep.mubr.f32.mxu0 0.0
      %530 = vmatmul.mubr.f32.gmra.mxu0 %v454
      %v531 = vpop.f32.mrf.mxu0
      %v532 = vadd.f32 %v447, %v531
      %v533 = vpop.f32.mrf.mxu0
      %534 = vdwg.mxu0
      %vm535 = vcmask 785408
      %536 = vst.msk [vmem:[%s197] sm:$0xff] %vm535, %v527
      %537 = vst.msk [vmem:[%s197 + $0x8] sm:$0xff] %vm535, %v532
      %p538 = scmp.lt.s32.totalorder %s15, 5
      %s539 = scalar_select %p538, %s15, 5
      %s540 = smul.addr %s539, 2
      %s541 = smul.addr %s540, 8
      %s542 = scalar_lea.vmem %s4, %s541
      // Predicated region
      $region37: #{dcrnn_forward.2} parent=35 // pred_check
        %p543 = pneg %p122
      $region38: #{dcrnn_forward.2} parent=35 // pred_check_branch
        %545 = sbr.rel (%p543) target = $region40
      $region39: #{dcrnn_forward.2} parent=35 // pred_region
        _
      $region40: #{dcrnn_forward.2} parent=35 // pred_fallthru
        _
    $region36: #{dcrnn_forward.2} parent=5 // pred_fallthru
      _
    %p546 = scmp.le.s32.totalorder 2, %s10
    // Predicated region
    $region41: #{dcrnn_forward.2} parent=5 // pred_check
      %p547 = pneg %p546
    $region42: #{dcrnn_forward.2} parent=5 // pred_check_branch
      %549 = sbr.rel (%p547) target = $region44
    $region43: #{dcrnn_forward.2} parent=5 // pred_region
      %s550 = ssub.s32 %s10, 2
      // Predicated region
      $region45: #{dcrnn_forward.2} parent=43 // pred_check
        %p551 = pneg %p128
      $region46: #{dcrnn_forward.2} parent=43 // pred_check_branch
        %553 = sbr.rel (%p551) target = $region48
      $region47: #{dcrnn_forward.2} parent=43 // pred_region
        %p554 = scmp.lt.s32.totalorder %s16, 5
        %s555 = scalar_select %p554, %s16, 5
        %s556 = smul.addr %s555, 2
        %s557 = smul.addr %s556, 8
        %s558 = scalar_lea.vmem %s4, %s557
      $region48: #{dcrnn_forward.2} parent=43 // pred_fallthru
        _
    $region44: #{dcrnn_forward.2} parent=5 // pred_fallthru
      _
  $region6: #{dcrnn_forward.2} parent=0 // loop_footer
    %s14 = sadd.s32 1, %s10
  $region7: #{dcrnn_forward.2} parent=0 // loop_footer_branch
    %9 = sbr.rel target = $region3
  $region8: #{dcrnn_forward.2} parent=0 // loop_exit
    _

// kernel: dcrnn_forward.3
$region0: #{dcrnn_forward.3}
  #allocation0 [shape = 'u32[]', space=smem, size = 0x4, offset = 0x4, fixed_abs, tag = 'smem constant byte address 0x4 - core index']
  #allocation1 [shape = 'u32[144,128]{1,0:T(1,128)}', space=vmem, size = 0x12000, scoped, tag = 'internal scratch']
  %s0 = inlined_call_operand.vmem [shape: f32[6,16,96], index: 0, kind: input, shape index: {}]
  %s1 = inlined_call_operand.vmem [shape: f32[32,32], index: 1, kind: input, shape index: {}]
  %s2 = inlined_call_operand.vmem [shape: f32[160,64], index: 2, kind: input, shape index: {}]
  %s3 = inlined_call_operand.vmem [shape: f32[160,32], index: 3, kind: input, shape index: {}]
  %s4 = inlined_call_operand.vmem [shape: f32[160,96], index: 4, kind: input, shape index: {}]
  %s5 = inlined_call_operand.vmem [shape: f32[1,96], index: 5, kind: input, shape index: {}]
  %s6 = inlined_call_operand.vmem [shape: f32[160,64], index: 6, kind: input, shape index: {}]
  %s7 = inlined_call_operand.vmem [shape: f32[160,32], index: 7, kind: input, shape index: {}]
  %s8 = inlined_call_operand.vmem [shape: f32[32,12], index: 8, kind: input, shape index: {}]
  %s9 = inlined_call_operand.vmem [shape: f32[1,12], index: 9, kind: input, shape index: {}]
  %s10 = inlined_call_operand.hbm [shape: f32[16,12], index: 10, kind: output, shape index: {}]
  %s11 = sld [smem:[#allocation0]]
  $region50: #{dcrnn_forward.3} parent=0
    _
  %s13 = ssub.s32 1, %s11
  %s14 = scalar_select 0, %s13, %s11
  $region1: #{dcrnn_forward.3} parent=0
    #allocation2 [shape = 'u8[8192]{0}', space=vmem, size = 0x2000, scoped, tag = 'output window, operand 0, single buffered']
    #allocation3 [shape = 's32[1]{0}', space=sflag, size = 0x4, scoped, tag = 'scoped memory for dcrnn_forward.3']
    %15 = vsyncpa [#allocation3], 0
    // Predicated region
    $region2: #{dcrnn_forward.3} parent=1 // pred_check
      _
    $region3: #{dcrnn_forward.3} parent=1 // pred_check_branch
      %17 = sbr.rel (0) target = $region5
    $region4: #{dcrnn_forward.3} parent=1 // pred_region
      _
    $region5: #{dcrnn_forward.3} parent=1 // pred_fallthru
      _
    // Predicated region
    $region6: #{dcrnn_forward.3} parent=1 // pred_check
      _
    $region7: #{dcrnn_forward.3} parent=1 // pred_check_branch
      %19 = sbr.rel (0) target = $region9
    $region8: #{dcrnn_forward.3} parent=1 // pred_region
      _
    $region9: #{dcrnn_forward.3} parent=1 // pred_fallthru
      _
    // Predicated region
    $region10: #{dcrnn_forward.3} parent=1 // pred_check
      _
    $region11: #{dcrnn_forward.3} parent=1 // pred_check_branch
      %21 = sbr.rel (0) target = $region13
    $region12: #{dcrnn_forward.3} parent=1 // pred_region
      _
    $region13: #{dcrnn_forward.3} parent=1 // pred_fallthru
      _
    // Predicated region
    $region14: #{dcrnn_forward.3} parent=1 // pred_check
      _
    $region15: #{dcrnn_forward.3} parent=1 // pred_check_branch
      %23 = sbr.rel (0) target = $region17
    $region16: #{dcrnn_forward.3} parent=1 // pred_region
      _
    $region17: #{dcrnn_forward.3} parent=1 // pred_fallthru
      _
    // Predicated region
    $region18: #{dcrnn_forward.3} parent=1 // pred_check
      _
    $region19: #{dcrnn_forward.3} parent=1 // pred_check_branch
      %25 = sbr.rel (0) target = $region21
    $region20: #{dcrnn_forward.3} parent=1 // pred_region
      _
    $region21: #{dcrnn_forward.3} parent=1 // pred_fallthru
      _
    // Predicated region
    $region22: #{dcrnn_forward.3} parent=1 // pred_check
      _
    $region23: #{dcrnn_forward.3} parent=1 // pred_check_branch
      %27 = sbr.rel (0) target = $region25
    $region24: #{dcrnn_forward.3} parent=1 // pred_region
      _
    $region25: #{dcrnn_forward.3} parent=1 // pred_fallthru
      _
    // Predicated region
    $region26: #{dcrnn_forward.3} parent=1 // pred_check
      _
    $region27: #{dcrnn_forward.3} parent=1 // pred_check_branch
      %29 = sbr.rel (0) target = $region29
    $region28: #{dcrnn_forward.3} parent=1 // pred_region
      _
    $region29: #{dcrnn_forward.3} parent=1 // pred_fallthru
      _
    // Predicated region
    $region30: #{dcrnn_forward.3} parent=1 // pred_check
      _
    $region31: #{dcrnn_forward.3} parent=1 // pred_check_branch
      %31 = sbr.rel (0) target = $region33
    $region32: #{dcrnn_forward.3} parent=1 // pred_region
      _
    $region33: #{dcrnn_forward.3} parent=1 // pred_fallthru
      _
    // Predicated region
    $region34: #{dcrnn_forward.3} parent=1 // pred_check
      _
    $region35: #{dcrnn_forward.3} parent=1 // pred_check_branch
      %33 = sbr.rel (0) target = $region37
    $region36: #{dcrnn_forward.3} parent=1 // pred_region
      _
    $region37: #{dcrnn_forward.3} parent=1 // pred_fallthru
      _
    // Predicated region
    $region38: #{dcrnn_forward.3} parent=1 // pred_check
      _
    $region39: #{dcrnn_forward.3} parent=1 // pred_check_branch
      %35 = sbr.rel (0) target = $region41
    $region40: #{dcrnn_forward.3} parent=1 // pred_region
      _
    $region41: #{dcrnn_forward.3} parent=1 // pred_fallthru
      _
    %v36 = vld [vmem:[%s1] sm:$0xff]
    %v37 = vld [vmem:[%s1 + $0x8] sm:$0xff]
    %v38 = vld [vmem:[%s1 + $0x10] sm:$0xff]
    %v39 = vld [vmem:[%s1 + $0x18] sm:$0xff]
    %v40 = vld [vmem:[%s0] sm:$0xff]
    %v41 = vld [vmem:[%s0 + $0x8] sm:$0xff]
    %vm42 = vcmask 261120
    %v44 = vsel %vm42, %v36, 0
    %v47 = vsel %vm42, %v37, 0
    %v50 = vsel %vm42, %v38, 0
    %v53 = vsel %vm42, %v39, 0
    %55 = vmatprep.subr.mxu0 0.0
    %56 = vmatpush1.msra.mxu0 0.0
    %57 = vmatprep.subr.mxu0 0.0
    %58 = vmatpush1.msra.mxu0 0.0
    %59 = vmatprep.subr.mxu0 0.0
    %60 = vmatpush1.msra.mxu0 0.0
    %61 = vmatprep.subr.mxu0 0.0
    %62 = vmatpush1.msra.mxu0 0.0
    %63 = vmatprep.subr.mxu0 0.0
    %64 = vmatpush1.msra.mxu0 0.0
    %65 = vmatprep.subr.mxu0 0.0
    %66 = vmatpush1.msra.mxu0 0.0
    %67 = vmatprep.subr.mxu0 0.0
    %68 = vmatpush1.msra.mxu0 0.0
    %69 = vmatprep.subr.mxu0 0.0
    %70 = vmatpush1.msra.mxu0 0.0
    %71 = vmatprep.subr.mxu0 0.0
    %72 = vmatpush1.msra.mxu0 0.0
    %73 = vmatprep.subr.mxu0 0.0
    %74 = vmatpush1.msra.mxu0 0.0
    %75 = vmatprep.subr.mxu0 0.0
    %76 = vmatpush1.msra.mxu0 0.0
    %77 = vmatprep.subr.mxu0 0.0
    %78 = vmatpush1.msra.mxu0 0.0
    %79 = vmatprep.subr.mxu0 0.0
    %80 = vmatpush1.msra.mxu0 0.0
    %81 = vmatprep.subr.mxu0 0.0
    %82 = vmatpush1.msra.mxu0 0.0
    %83 = vmatprep.subr.mxu0 0.0
    %84 = vmatpush1.msra.mxu0 0.0
    %85 = vmatprep.subr.mxu0 0.0
    %86 = vmatpush1.msra.mxu0 0.0
    %87 = vmatprep.subr.mxu0 0.0
    %88 = vmatpush2.msra.mxu0 0.0
    %89 = vmatprep.subr.mxu0 0.0
    %90 = vmatpush2.msra.mxu0 0.0
    %91 = vmatprep.subr.mxu0 0.0
    %92 = vmatpush2.msra.mxu0 0.0
    %93 = vmatprep.subr.mxu0 0.0
    %94 = vmatpush2.msra.mxu0 0.0
    %95 = vmatprep.subr.mxu0 0.0
    %96 = vmatpush2.msra.mxu0 0.0
    %97 = vmatprep.subr.mxu0 0.0
    %98 = vmatpush2.msra.mxu0 0.0
    %99 = vmatprep.subr.mxu0 0.0
    %100 = vmatpush2.msra.mxu0 0.0
    %101 = vmatprep.subr.mxu0 0.0
    %102 = vmatpush2.msra.mxu0 0.0
    %103 = vmatprep.subr.mxu0 0.0
    %104 = vmatpush2.msra.mxu0 0.0
    %105 = vmatprep.subr.mxu0 0.0
    %106 = vmatpush2.msra.mxu0 0.0
    %107 = vmatprep.subr.mxu0 0.0
    %108 = vmatpush2.msra.mxu0 0.0
    %109 = vmatprep.subr.mxu0 0.0
    %110 = vmatpush2.msra.mxu0 0.0
    %111 = vmatprep.subr.mxu0 0.0
    %112 = vmatpush2.msra.mxu0 0.0
    %113 = vmatprep.subr.mxu0 0.0
    %114 = vmatpush2.msra.mxu0 0.0
    %115 = vmatprep.subr.mxu0 0.0
    %116 = vmatpush2.msra.mxu0 0.0
    %117 = vmatprep.subr.mxu0 0.0
    %118 = vmatpush2.msra.mxu0 0.0
    %119 = vmatprep.mubr.f32.mxu0 0.0
    %120 = vmatmul.mubr.f32.gmra.mxu0 %v44
    %v121 = vpop.f32.mrf.mxu0
    %v122 = vadd.f32 0.0, %v121
    %v123 = vpop.f32.mrf.mxu0
    %124 = vmatprep.mubr.f32.mxu0 0.0
    %125 = vmatmul.mubr.f32.gmra.mxu0 %v47
    %v126 = vpop.f32.mrf.mxu0
    %v127 = vadd.f32 0.0, %v126
    %v128 = vpop.f32.mrf.mxu0
    %129 = vmatprep.mubr.f32.mxu0 0.0
    %130 = vmatmul.mubr.f32.gmra.mxu0 %v50
    %v131 = vpop.f32.mrf.mxu0
    %v132 = vadd.f32 0.0, %v131
    %v133 = vpop.f32.mrf.mxu0
    %134 = vmatprep.mubr.f32.mxu0 0.0
    %135 = vmatmul.mubr.f32.gmra.mxu0 %v53
    %v136 = vpop.f32.mrf.mxu0
    %v137 = vadd.f32 0.0, %v136
    %v138 = vpop.f32.mrf.mxu0
    %139 = vdwg.mxu0
    %140 = vmatprep.subr.mxu0 0.0
    %141 = vmatpush1.msra.mxu0 0.0
    %142 = vmatprep.subr.mxu0 0.0
    %143 = vmatpush1.msra.mxu0 0.0
    %144 = vmatprep.subr.mxu0 0.0
    %145 = vmatpush1.msra.mxu0 0.0
    %146 = vmatprep.subr.mxu0 0.0
    %147 = vmatpush1.msra.mxu0 0.0
    %148 = vmatprep.subr.mxu0 0.0
    %149 = vmatpush1.msra.mxu0 0.0
    %150 = vmatprep.subr.mxu0 0.0
    %151 = vmatpush1.msra.mxu0 0.0
    %152 = vmatprep.subr.mxu0 0.0
    %153 = vmatpush1.msra.mxu0 0.0
    %154 = vmatprep.subr.mxu0 0.0
    %155 = vmatpush1.msra.mxu0 0.0
    %156 = vmatprep.subr.mxu0 0.0
    %157 = vmatpush1.msra.mxu0 0.0
    %158 = vmatprep.subr.mxu0 0.0
    %159 = vmatpush1.msra.mxu0 0.0
    %160 = vmatprep.subr.mxu0 0.0
    %161 = vmatpush1.msra.mxu0 0.0
    %162 = vmatprep.subr.mxu0 0.0
    %163 = vmatpush1.msra.mxu0 0.0
    %164 = vmatprep.subr.mxu0 0.0
    %165 = vmatpush1.msra.mxu0 %v137
    %166 = vmatprep.subr.mxu0 0.0
    %167 = vmatpush1.msra.mxu0 %v132
    %168 = vmatprep.subr.mxu0 0.0
    %169 = vmatpush1.msra.mxu0 %v127
    %170 = vmatprep.subr.mxu0 0.0
    %171 = vmatpush1.msra.mxu0 %v122
    %172 = vmatprep.subr.mxu0 0.0
    %173 = vmatpush2.msra.mxu0 0.0
    %174 = vmatprep.subr.mxu0 0.0
    %175 = vmatpush2.msra.mxu0 0.0
    %176 = vmatprep.subr.mxu0 0.0
    %177 = vmatpush2.msra.mxu0 0.0
    %178 = vmatprep.subr.mxu0 0.0
    %179 = vmatpush2.msra.mxu0 0.0
    %180 = vmatprep.subr.mxu0 0.0
    %181 = vmatpush2.msra.mxu0 0.0
    %182 = vmatprep.subr.mxu0 0.0
    %183 = vmatpush2.msra.mxu0 0.0
    %184 = vmatprep.subr.mxu0 0.0
    %185 = vmatpush2.msra.mxu0 0.0
    %186 = vmatprep.subr.mxu0 0.0
    %187 = vmatpush2.msra.mxu0 0.0
    %188 = vmatprep.subr.mxu0 0.0
    %189 = vmatpush2.msra.mxu0 0.0
    %190 = vmatprep.subr.mxu0 0.0
    %191 = vmatpush2.msra.mxu0 0.0
    %192 = vmatprep.subr.mxu0 0.0
    %193 = vmatpush2.msra.mxu0 0.0
    %194 = vmatprep.subr.mxu0 0.0
    %195 = vmatpush2.msra.mxu0 0.0
    %196 = vmatprep.subr.mxu0 0.0
    %197 = vmatpush2.msra.mxu0 0.0
    %198 = vmatprep.subr.mxu0 0.0
    %199 = vmatpush2.msra.mxu0 0.0
    %200 = vmatprep.subr.mxu0 0.0
    %201 = vmatpush2.msra.mxu0 0.0
    %202 = vmatprep.subr.mxu0 0.0
    %203 = vmatpush2.msra.mxu0 0.0
    %204 = vmatprep.mubr.f32.mxu0 0.0
    %205 = vmatmul.mubr.f32.gmra.mxu0 %v44
    %v206 = vpop.f32.mrf.mxu0
    %v207 = vadd.f32 0.0, %v206
    %v208 = vpop.f32.mrf.mxu0
    %209 = vmatprep.mubr.f32.mxu0 0.0
    %210 = vmatmul.mubr.f32.gmra.mxu0 %v47
    %v211 = vpop.f32.mrf.mxu0
    %v212 = vadd.f32 0.0, %v211
    %v213 = vpop.f32.mrf.mxu0
    %214 = vmatprep.mubr.f32.mxu0 0.0
    %215 = vmatmul.mubr.f32.gmra.mxu0 %v50
    %v216 = vpop.f32.mrf.mxu0
    %v217 = vadd.f32 0.0, %v216
    %v218 = vpop.f32.mrf.mxu0
    %219 = vmatprep.mubr.f32.mxu0 0.0
    %220 = vmatmul.mubr.f32.gmra.mxu0 %v53
    %v221 = vpop.f32.mrf.mxu0
    %v222 = vadd.f32 0.0, %v221
    %v223 = vpop.f32.mrf.mxu0
    %224 = vdwg.mxu0
    %v225 = vmul.f32 %v207, 2.0
    %v226 = vmul.f32 %v212, 2.0
    %v227 = vmul.f32 %v217, 2.0
    %v228 = vmul.f32 %v222, 2.0
    %231 = vrot.lane.b32.xlu0 %v122, 32
    %v232 = vpop.permute.xlu0 %231
    %233 = vrot.lane.b32.xlu0 %v127, 32
    %v234 = vpop.permute.xlu0 %233
    %239 = vrot.lane.b32.xlu0 %v225, 64
    %v240 = vpop.permute.xlu0 %239
    %241 = vrot.lane.b32.xlu0 %v226, 64
    %v242 = vpop.permute.xlu0 %241
    %247 = vrot.lane.b32.xlu0 %v132, 96
    %v248 = vpop.permute.xlu0 %247
    %249 = vrot.lane.b32.xlu0 %v137, 96
    %v250 = vpop.permute.xlu0 %249
    %v253 = vsel %vm42, 0.0, %v232
    %v254 = vsel %vm42, 0.0, %v234
    %vm255 = vcmask 523264
    %v256 = vsel %vm255, %v253, %v240
    %v257 = vsel %vm255, %v254, %v242
    %vm258 = vcmask 785408
    %v259 = vsel %vm258, %v256, %v248
    %v260 = vsel %vm258, %v257, %v250
    %v261 = vld [vmem:[%s2] sm:$0xff]
    %v262 = vld [vmem:[%s2 + $0x8] sm:$0xff]
    %v263 = vld [vmem:[%s2 + $0x10] sm:$0xff]
    %v264 = vld [vmem:[%s2 + $0x18] sm:$0xff]
    %v265 = vld [vmem:[%s2 + $0x20] sm:$0xff]
    %v266 = vld [vmem:[%s2 + $0x28] sm:$0xff]
    %v267 = vld [vmem:[%s2 + $0x30] sm:$0xff]
    %v268 = vld [vmem:[%s2 + $0x38] sm:$0xff]
    %v269 = vld [vmem:[%s2 + $0x40] sm:$0xff]
    %v270 = vld [vmem:[%s2 + $0x48] sm:$0xff]
    %v271 = vld [vmem:[%s2 + $0x50] sm:$0xff]
    %v272 = vld [vmem:[%s2 + $0x58] sm:$0xff]
    %v273 = vld [vmem:[%s2 + $0x60] sm:$0xff]
    %v274 = vld [vmem:[%s2 + $0x68] sm:$0xff]
    %v275 = vld [vmem:[%s2 + $0x70] sm:$0xff]
    %v276 = vld [vmem:[%s2 + $0x78] sm:$0xff]
    %v277 = vld [vmem:[%s2 + $0x80] sm:$0xff]
    %v278 = vld [vmem:[%s2 + $0x88] sm:$0xff]
    %v279 = vld [vmem:[%s2 + $0x90] sm:$0xff]
    %v280 = vld [vmem:[%s2 + $0x98] sm:$0xff]
    %v282 = vsel %vm42, %v227, 0
    %v285 = vsel %vm42, %v228, 0
    %287 = vmatprep.subr.mxu0 0.0
    %288 = vmatpush1.msra.mxu0 %v276
    %289 = vmatprep.subr.mxu0 0.0
    %290 = vmatpush1.msra.mxu0 %v275
    %291 = vmatprep.subr.mxu0 0.0
    %292 = vmatpush1.msra.mxu0 %v274
    %293 = vmatprep.subr.mxu0 0.0
    %294 = vmatpush1.msra.mxu0 %v273
    %295 = vmatprep.subr.mxu0 0.0
    %296 = vmatpush1.msra.mxu0 %v272
    %297 = vmatprep.subr.mxu0 0.0
    %298 = vmatpush1.msra.mxu0 %v271
    %299 = vmatprep.subr.mxu0 0.0
    %300 = vmatpush1.msra.mxu0 %v270
    %301 = vmatprep.subr.mxu0 0.0
    %302 = vmatpush1.msra.mxu0 %v269
    %303 = vmatprep.subr.mxu0 0.0
    %304 = vmatpush1.msra.mxu0 %v268
    %305 = vmatprep.subr.mxu0 0.0
    %306 = vmatpush1.msra.mxu0 %v267
    %307 = vmatprep.subr.mxu0 0.0
    %308 = vmatpush1.msra.mxu0 %v266
    %309 = vmatprep.subr.mxu0 0.0
    %310 = vmatpush1.msra.mxu0 %v265
    %311 = vmatprep.subr.mxu0 0.0
    %312 = vmatpush1.msra.mxu0 %v264
    %313 = vmatprep.subr.mxu0 0.0
    %314 = vmatpush1.msra.mxu0 %v263
    %315 = vmatprep.subr.mxu0 0.0
    %316 = vmatpush1.msra.mxu0 %v262
    %317 = vmatprep.subr.mxu0 0.0
    %318 = vmatpush1.msra.mxu0 %v261
    %319 = vmatprep.subr.mxu0 0.0
    %320 = vmatpush2.msra.mxu0 0.0
    %321 = vmatprep.subr.mxu0 0.0
    %322 = vmatpush2.msra.mxu0 0.0
    %323 = vmatprep.subr.mxu0 0.0
    %324 = vmatpush2.msra.mxu0 0.0
    %325 = vmatprep.subr.mxu0 0.0
    %326 = vmatpush2.msra.mxu0 0.0
    %327 = vmatprep.subr.mxu0 0.0
    %328 = vmatpush2.msra.mxu0 0.0
    %329 = vmatprep.subr.mxu0 0.0
    %330 = vmatpush2.msra.mxu0 0.0
    %331 = vmatprep.subr.mxu0 0.0
    %332 = vmatpush2.msra.mxu0 0.0
    %333 = vmatprep.subr.mxu0 0.0
    %334 = vmatpush2.msra.mxu0 0.0
    %335 = vmatprep.subr.mxu0 0.0
    %336 = vmatpush2.msra.mxu0 0.0
    %337 = vmatprep.subr.mxu0 0.0
    %338 = vmatpush2.msra.mxu0 0.0
    %339 = vmatprep.subr.mxu0 0.0
    %340 = vmatpush2.msra.mxu0 0.0
    %341 = vmatprep.subr.mxu0 0.0
    %342 = vmatpush2.msra.mxu0 0.0
    %343 = vmatprep.subr.mxu0 0.0
    %344 = vmatpush2.msra.mxu0 %v280
    %345 = vmatprep.subr.mxu0 0.0
    %346 = vmatpush2.msra.mxu0 %v279
    %347 = vmatprep.subr.mxu0 0.0
    %348 = vmatpush2.msra.mxu0 %v278
    %349 = vmatprep.subr.mxu0 0.0
    %350 = vmatpush2.msra.mxu0 %v277
    %351 = vmatprep.mubr.f32.mxu0 %v282
    %352 = vmatmul.mubr.f32.gmra.mxu0 %v259
    %v353 = vpop.f32.mrf.mxu0
    %v354 = vadd.f32 0.0, %v353
    %v355 = vpop.f32.mrf.mxu0
    %356 = vmatprep.mubr.f32.mxu0 %v285
    %357 = vmatmul.mubr.f32.gmra.mxu0 %v260
    %v358 = vpop.f32.mrf.mxu0
    %v359 = vadd.f32 0.0, %v358
    %v360 = vpop.f32.mrf.mxu0
    %361 = vdwg.mxu0
    %v362 = vadd.f32 %v40, %v354
    %v363 = vadd.f32 %v41, %v359
    %v364 = vxor.u32 %v362, 2147483648
    %v365 = vxor.u32 %v363, 2147483648
    %v366 = vmul.f32 %v364, 1.442695
    %v367 = vpow.pop %v366
    %v368 = vmul.f32 %v365, 1.442695
    %v369 = vpow.pop %v368
    %v370 = vadd.f32 %v367, 1.0
    %v371 = vadd.f32 %v369, 1.0
    %v372 = vrcp.pop %v370
    %v373 = vmul.f32 1.0, %v372
    %v374 = vrcp.pop %v371
    %v375 = vmul.f32 1.0, %v374
    %v376 = vmul.f32 %v373, 0.0
    %v377 = vmul.f32 %v375, 0.0
    %380 = vrot.lane.b32.xlu0 %v376, 96
    %v381 = vpop.permute.xlu0 %380
    %382 = vrot.lane.b32.xlu0 %v377, 96
    %v383 = vpop.permute.xlu0 %382
    %386 = vmatprep.subr.mxu0 0.0
    %387 = vmatpush1.msra.mxu0 0.0
    %388 = vmatprep.subr.mxu0 0.0
    %389 = vmatpush1.msra.mxu0 0.0
    %390 = vmatprep.subr.mxu0 0.0
    %391 = vmatpush1.msra.mxu0 0.0
    %392 = vmatprep.subr.mxu0 0.0
    %393 = vmatpush1.msra.mxu0 0.0
    %394 = vmatprep.subr.mxu0 0.0
    %395 = vmatpush1.msra.mxu0 0.0
    %396 = vmatprep.subr.mxu0 0.0
    %397 = vmatpush1.msra.mxu0 0.0
    %398 = vmatprep.subr.mxu0 0.0
    %399 = vmatpush1.msra.mxu0 0.0
    %400 = vmatprep.subr.mxu0 0.0
    %401 = vmatpush1.msra.mxu0 0.0
    %402 = vmatprep.subr.mxu0 0.0
    %403 = vmatpush1.msra.mxu0 0.0
    %404 = vmatprep.subr.mxu0 0.0
    %405 = vmatpush1.msra.mxu0 0.0
    %406 = vmatprep.subr.mxu0 0.0
    %407 = vmatpush1.msra.mxu0 0.0
    %408 = vmatprep.subr.mxu0 0.0
    %409 = vmatpush1.msra.mxu0 0.0
    %410 = vmatprep.subr.mxu0 0.0
    %411 = vmatpush1.msra.mxu0 %v383
    %412 = vmatprep.subr.mxu0 0.0
    %413 = vmatpush1.msra.mxu0 %v381
    %414 = vmatprep.subr.mxu0 0.0
    %415 = vmatpush1.msra.mxu0 %v383
    %416 = vmatprep.subr.mxu0 0.0
    %417 = vmatpush1.msra.mxu0 %v381
    %418 = vmatprep.subr.mxu0 0.0
    %419 = vmatpush2.msra.mxu0 0.0
    %420 = vmatprep.subr.mxu0 0.0
    %421 = vmatpush2.msra.mxu0 0.0
    %422 = vmatprep.subr.mxu0 0.0
    %423 = vmatpush2.msra.mxu0 0.0
    %424 = vmatprep.subr.mxu0 0.0
    %425 = vmatpush2.msra.mxu0 0.0
    %426 = vmatprep.subr.mxu0 0.0
    %427 = vmatpush2.msra.mxu0 0.0
    %428 = vmatprep.subr.mxu0 0.0
    %429 = vmatpush2.msra.mxu0 0.0
    %430 = vmatprep.subr.mxu0 0.0
    %431 = vmatpush2.msra.mxu0 0.0
    %432 = vmatprep.subr.mxu0 0.0
    %433 = vmatpush2.msra.mxu0 0.0
    %434 = vmatprep.subr.mxu0 0.0
    %435 = vmatpush2.msra.mxu0 0.0
    %436 = vmatprep.subr.mxu0 0.0
    %437 = vmatpush2.msra.mxu0 0.0
    %438 = vmatprep.subr.mxu0 0.0
    %439 = vmatpush2.msra.mxu0 0.0
    %440 = vmatprep.subr.mxu0 0.0
    %441 = vmatpush2.msra.mxu0 0.0
    %442 = vmatprep.subr.mxu0 0.0
    %443 = vmatpush2.msra.mxu0 0.0
    %444 = vmatprep.subr.mxu0 0.0
    %445 = vmatpush2.msra.mxu0 0.0
    %446 = vmatprep.subr.mxu0 0.0
    %447 = vmatpush2.msra.mxu0 0.0
    %448 = vmatprep.subr.mxu0 0.0
    %449 = vmatpush2.msra.mxu0 0.0
    %450 = vmatprep.mubr.f32.mxu0 0.0
    %451 = vmatmul.mubr.f32.gmra.mxu0 %v44
    %v452 = vpop.f32.mrf.mxu0
    %v453 = vadd.f32 0.0, %v452
    %v454 = vpop.f32.mrf.mxu0
    %455 = vmatprep.mubr.f32.mxu0 0.0
    %456 = vmatmul.mubr.f32.gmra.mxu0 %v47
    %v457 = vpop.f32.mrf.mxu0
    %v458 = vadd.f32 0.0, %v457
    %v459 = vpop.f32.mrf.mxu0
    %460 = vmatprep.mubr.f32.mxu0 0.0
    %461 = vmatmul.mubr.f32.gmra.mxu0 %v50
    %v462 = vpop.f32.mrf.mxu0
    %v463 = vadd.f32 0.0, %v462
    %v464 = vpop.f32.mrf.mxu0
    %465 = vmatprep.mubr.f32.mxu0 0.0
    %466 = vmatmul.mubr.f32.gmra.mxu0 %v53
    %v467 = vpop.f32.mrf.mxu0
    %v468 = vadd.f32 0.0, %v467
    %v469 = vpop.f32.mrf.mxu0
    %470 = vdwg.mxu0
    %471 = vmatprep.subr.mxu0 0.0
    %472 = vmatpush1.msra.mxu0 0.0
    %473 = vmatprep.subr.mxu0 0.0
    %474 = vmatpush1.msra.mxu0 0.0
    %475 = vmatprep.subr.mxu0 0.0
    %476 = vmatpush1.msra.mxu0 0.0
    %477 = vmatprep.subr.mxu0 0.0
    %478 = vmatpush1.msra.mxu0 0.0
    %479 = vmatprep.subr.mxu0 0.0
    %480 = vmatpush1.msra.mxu0 0.0
    %481 = vmatprep.subr.mxu0 0.0
    %482 = vmatpush1.msra.mxu0 0.0
    %483 = vmatprep.subr.mxu0 0.0
    %484 = vmatpush1.msra.mxu0 0.0
    %485 = vmatprep.subr.mxu0 0.0
    %486 = vmatpush1.msra.mxu0 0.0
    %487 = vmatprep.subr.mxu0 0.0
    %488 = vmatpush1.msra.mxu0 0.0
    %489 = vmatprep.subr.mxu0 0.0
    %490 = vmatpush1.msra.mxu0 0.0
    %491 = vmatprep.subr.mxu0 0.0
    %492 = vmatpush1.msra.mxu0 0.0
    %493 = vmatprep.subr.mxu0 0.0
    %494 = vmatpush1.msra.mxu0 0.0
    %495 = vmatprep.subr.mxu0 0.0
    %496 = vmatpush1.msra.mxu0 %v468
    %497 = vmatprep.subr.mxu0 0.0
    %498 = vmatpush1.msra.mxu0 %v463
    %499 = vmatprep.subr.mxu0 0.0
    %500 = vmatpush1.msra.mxu0 %v458
    %501 = vmatprep.subr.mxu0 0.0
    %502 = vmatpush1.msra.mxu0 %v453
    %503 = vmatprep.subr.mxu0 0.0
    %504 = vmatpush2.msra.mxu0 0.0
    %505 = vmatprep.subr.mxu0 0.0
    %506 = vmatpush2.msra.mxu0 0.0
    %507 = vmatprep.subr.mxu0 0.0
    %508 = vmatpush2.msra.mxu0 0.0
    %509 = vmatprep.subr.mxu0 0.0
    %510 = vmatpush2.msra.mxu0 0.0
    %511 = vmatprep.subr.mxu0 0.0
    %512 = vmatpush2.msra.mxu0 0.0
    %513 = vmatprep.subr.mxu0 0.0
    %514 = vmatpush2.msra.mxu0 0.0
    %515 = vmatprep.subr.mxu0 0.0
    %516 = vmatpush2.msra.mxu0 0.0
    %517 = vmatprep.subr.mxu0 0.0
    %518 = vmatpush2.msra.mxu0 0.0
    %519 = vmatprep.subr.mxu0 0.0
    %520 = vmatpush2.msra.mxu0 0.0
    %521 = vmatprep.subr.mxu0 0.0
    %522 = vmatpush2.msra.mxu0 0.0
    %523 = vmatprep.subr.mxu0 0.0
    %524 = vmatpush2.msra.mxu0 0.0
    %525 = vmatprep.subr.mxu0 0.0
    %526 = vmatpush2.msra.mxu0 0.0
    %527 = vmatprep.subr.mxu0 0.0
    %528 = vmatpush2.msra.mxu0 0.0
    %529 = vmatprep.subr.mxu0 0.0
    %530 = vmatpush2.msra.mxu0 0.0
    %531 = vmatprep.subr.mxu0 0.0
    %532 = vmatpush2.msra.mxu0 0.0
    %533 = vmatprep.subr.mxu0 0.0
    %534 = vmatpush2.msra.mxu0 0.0
    %535 = vmatprep.mubr.f32.mxu0 0.0
    %536 = vmatmul.mubr.f32.gmra.mxu0 %v44
    %v537 = vpop.f32.mrf.mxu0
    %v538 = vadd.f32 0.0, %v537
    %v539 = vpop.f32.mrf.mxu0
    %540 = vmatprep.mubr.f32.mxu0 0.0
    %541 = vmatmul.mubr.f32.gmra.mxu0 %v47
    %v542 = vpop.f32.mrf.mxu0
    %v543 = vadd.f32 0.0, %v542
    %v544 = vpop.f32.mrf.mxu0
    %545 = vmatprep.mubr.f32.mxu0 0.0
    %546 = vmatmul.mubr.f32.gmra.mxu0 %v50
    %v547 = vpop.f32.mrf.mxu0
    %v548 = vadd.f32 0.0, %v547
    %v549 = vpop.f32.mrf.mxu0
    %550 = vmatprep.mubr.f32.mxu0 0.0
    %551 = vmatmul.mubr.f32.gmra.mxu0 %v53
    %v552 = vpop.f32.mrf.mxu0
    %v553 = vadd.f32 0.0, %v552
    %v554 = vpop.f32.mrf.mxu0
    %555 = vdwg.mxu0
    %v556 = vmul.f32 %v538, 2.0
    %v557 = vmul.f32 %v543, 2.0
    %v558 = vmul.f32 %v548, 2.0
    %v559 = vmul.f32 %v553, 2.0
    %v560 = vsub.f32 %v556, %v381
    %v561 = vsub.f32 %v557, %v383
    %v562 = vsub.f32 %v558, %v381
    %v563 = vsub.f32 %v559, %v383
    %566 = vrot.lane.b32.xlu0 %v453, 32
    %v567 = vpop.permute.xlu0 %566
    %568 = vrot.lane.b32.xlu0 %v458, 32
    %v569 = vpop.permute.xlu0 %568
    %574 = vrot.lane.b32.xlu0 %v560, 64
    %v575 = vpop.permute.xlu0 %574
    %576 = vrot.lane.b32.xlu0 %v561, 64
    %v577 = vpop.permute.xlu0 %576
    %582 = vrot.lane.b32.xlu0 %v463, 96
    %v583 = vpop.permute.xlu0 %582
    %584 = vrot.lane.b32.xlu0 %v468, 96
    %v585 = vpop.permute.xlu0 %584
    %v588 = vsel %vm42, %v381, %v567
    %v589 = vsel %vm42, %v383, %v569
    %v590 = vsel %vm255, %v588, %v575
    %v591 = vsel %vm255, %v589, %v577
    %v592 = vsel %vm258, %v590, %v583
    %v593 = vsel %vm258, %v591, %v585
    %v594 = vld [vmem:[%s3] sm:$0xff]
    %v595 = vld [vmem:[%s3 + $0x8] sm:$0xff]
    %v596 = vld [vmem:[%s3 + $0x10] sm:$0xff]
    %v597 = vld [vmem:[%s3 + $0x18] sm:$0xff]
    %v598 = vld [vmem:[%s3 + $0x20] sm:$0xff]
    %v599 = vld [vmem:[%s3 + $0x28] sm:$0xff]
    %v600 = vld [vmem:[%s3 + $0x30] sm:$0xff]
    %v601 = vld [vmem:[%s3 + $0x38] sm:$0xff]
    %v602 = vld [vmem:[%s3 + $0x40] sm:$0xff]
    %v603 = vld [vmem:[%s3 + $0x48] sm:$0xff]
    %v604 = vld [vmem:[%s3 + $0x50] sm:$0xff]
    %v605 = vld [vmem:[%s3 + $0x58] sm:$0xff]
    %v606 = vld [vmem:[%s3 + $0x60] sm:$0xff]
    %v607 = vld [vmem:[%s3 + $0x68] sm:$0xff]
    %v608 = vld [vmem:[%s3 + $0x70] sm:$0xff]
    %v609 = vld [vmem:[%s3 + $0x78] sm:$0xff]
    %v610 = vld [vmem:[%s3 + $0x80] sm:$0xff]
    %v611 = vld [vmem:[%s3 + $0x88] sm:$0xff]
    %v612 = vld [vmem:[%s3 + $0x90] sm:$0xff]
    %v613 = vld [vmem:[%s3 + $0x98] sm:$0xff]
    %v615 = vsel %vm42, %v562, 0
    %v618 = vsel %vm42, %v563, 0
    %620 = vmatprep.subr.mxu0 0.0
    %621 = vmatpush1.msra.mxu0 %v609
    %622 = vmatprep.subr.mxu0 0.0
    %623 = vmatpush1.msra.mxu0 %v608
    %624 = vmatprep.subr.mxu0 0.0
    %625 = vmatpush1.msra.mxu0 %v607
    %626 = vmatprep.subr.mxu0 0.0
    %627 = vmatpush1.msra.mxu0 %v606
    %628 = vmatprep.subr.mxu0 0.0
    %629 = vmatpush1.msra.mxu0 %v605
    %630 = vmatprep.subr.mxu0 0.0
    %631 = vmatpush1.msra.mxu0 %v604
    %632 = vmatprep.subr.mxu0 0.0
    %633 = vmatpush1.msra.mxu0 %v603
    %634 = vmatprep.subr.mxu0 0.0
    %635 = vmatpush1.msra.mxu0 %v602
    %636 = vmatprep.subr.mxu0 0.0
    %637 = vmatpush1.msra.mxu0 %v601
    %638 = vmatprep.subr.mxu0 0.0
    %639 = vmatpush1.msra.mxu0 %v600
    %640 = vmatprep.subr.mxu0 0.0
    %641 = vmatpush1.msra.mxu0 %v599
    %642 = vmatprep.subr.mxu0 0.0
    %643 = vmatpush1.msra.mxu0 %v598
    %644 = vmatprep.subr.mxu0 0.0
    %645 = vmatpush1.msra.mxu0 %v597
    %646 = vmatprep.subr.mxu0 0.0
    %647 = vmatpush1.msra.mxu0 %v596
    %648 = vmatprep.subr.mxu0 0.0
    %649 = vmatpush1.msra.mxu0 %v595
    %650 = vmatprep.subr.mxu0 0.0
    %651 = vmatpush1.msra.mxu0 %v594
    %652 = vmatprep.subr.mxu0 0.0
    %653 = vmatpush2.msra.mxu0 0.0
    %654 = vmatprep.subr.mxu0 0.0
    %655 = vmatpush2.msra.mxu0 0.0
    %656 = vmatprep.subr.mxu0 0.0
    %657 = vmatpush2.msra.mxu0 0.0
    %658 = vmatprep.subr.mxu0 0.0
    %659 = vmatpush2.msra.mxu0 0.0
    %660 = vmatprep.subr.mxu0 0.0
    %661 = vmatpush2.msra.mxu0 0.0
    %662 = vmatprep.subr.mxu0 0.0
    %663 = vmatpush2.msra.mxu0 0.0
    %664 = vmatprep.subr.mxu0 0.0
    %665 = vmatpush2.msra.mxu0 0.0
    %666 = vmatprep.subr.mxu0 0.0
    %667 = vmatpush2.msra.mxu0 0.0
    %668 = vmatprep.subr.mxu0 0.0
    %669 = vmatpush2.msra.mxu0 0.0
    %670 = vmatprep.subr.mxu0 0.0
    %671 = vmatpush2.msra.mxu0 0.0
    %672 = vmatprep.subr.mxu0 0.0
    %673 = vmatpush2.msra.mxu0 0.0
    %674 = vmatprep.subr.mxu0 0.0
    %675 = vmatpush2.msra.mxu0 0.0
    %676 = vmatprep.subr.mxu0 0.0
    %677 = vmatpush2.msra.mxu0 %v613
    %678 = vmatprep.subr.mxu0 0.0
    %679 = vmatpush2.msra.mxu0 %v612
    %680 = vmatprep.subr.mxu0 0.0
    %681 = vmatpush2.msra.mxu0 %v611
    %682 = vmatprep.subr.mxu0 0.0
    %683 = vmatpush2.msra.mxu0 %v610
    %684 = vmatprep.mubr.f32.mxu0 %v615
    %685 = vmatmul.mubr.f32.gmra.mxu0 %v592
    %v686 = vpop.f32.mrf.mxu0
    %v687 = vadd.f32 0.0, %v686
    %v688 = vpop.f32.mrf.mxu0
    %689 = vmatprep.mubr.f32.mxu0 %v618
    %690 = vmatmul.mubr.f32.gmra.mxu0 %v593
    %v691 = vpop.f32.mrf.mxu0
    %v692 = vadd.f32 0.0, %v691
    %v693 = vpop.f32.mrf.mxu0
    %694 = vdwg.mxu0
    %697 = vrot.lane.b32.xlu0 %v687, 64
    %v698 = vpop.permute.xlu0 %697
    %699 = vrot.lane.b32.xlu0 %v692, 64
    %v700 = vpop.permute.xlu0 %699
    %v703 = vadd.f32 %v40, %v698
    %v704 = vadd.f32 %v41, %v700
    %v705 = vtanh.pop %v703
    %v706 = vtanh.pop %v704
    %v707 = vsub.f32 1.0, %v373
    %v708 = vsub.f32 1.0, %v375
    %711 = vrot.lane.b32.xlu0 %v705, 64
    %v712 = vpop.permute.xlu0 %711
    %713 = vrot.lane.b32.xlu0 %v706, 64
    %v714 = vpop.permute.xlu0 %713
    %v717 = vmul.f32 %v707, %v712
    %v718 = vmul.f32 %v708, %v714
    %v719 = vadd.f32 %v376, %v717
    %v720 = vadd.f32 %v377, %v718
    %v721 = vmax.f32 %v719, 0.0
    %v722 = vmax.f32 %v720, 0.0
    %723 = vmatprep.subr.mxu0 0.0
    %724 = vmatpush1.msra.mxu0 0.0
    %725 = vmatprep.subr.mxu0 0.0
    %726 = vmatpush1.msra.mxu0 0.0
    %727 = vmatprep.subr.mxu0 0.0
    %728 = vmatpush1.msra.mxu0 0.0
    %729 = vmatprep.subr.mxu0 0.0
    %730 = vmatpush1.msra.mxu0 0.0
    %731 = vmatprep.subr.mxu0 0.0
    %732 = vmatpush1.msra.mxu0 0.0
    %733 = vmatprep.subr.mxu0 0.0
    %734 = vmatpush1.msra.mxu0 0.0
    %735 = vmatprep.subr.mxu0 0.0
    %736 = vmatpush1.msra.mxu0 0.0
    %737 = vmatprep.subr.mxu0 0.0
    %738 = vmatpush1.msra.mxu0 0.0
    %739 = vmatprep.subr.mxu0 0.0
    %740 = vmatpush1.msra.mxu0 0.0
    %741 = vmatprep.subr.mxu0 0.0
    %742 = vmatpush1.msra.mxu0 0.0
    %743 = vmatprep.subr.mxu0 0.0
    %744 = vmatpush1.msra.mxu0 0.0
    %745 = vmatprep.subr.mxu0 0.0
    %746 = vmatpush1.msra.mxu0 0.0
    %747 = vmatprep.subr.mxu0 0.0
    %748 = vmatpush1.msra.mxu0 %v722
    %749 = vmatprep.subr.mxu0 0.0
    %750 = vmatpush1.msra.mxu0 %v721
    %751 = vmatprep.subr.mxu0 0.0
    %752 = vmatpush1.msra.mxu0 %v722
    %753 = vmatprep.subr.mxu0 0.0
    %754 = vmatpush1.msra.mxu0 %v721
    %755 = vmatprep.subr.mxu0 0.0
    %756 = vmatpush2.msra.mxu0 0.0
    %757 = vmatprep.subr.mxu0 0.0
    %758 = vmatpush2.msra.mxu0 0.0
    %759 = vmatprep.subr.mxu0 0.0
    %760 = vmatpush2.msra.mxu0 0.0
    %761 = vmatprep.subr.mxu0 0.0
    %762 = vmatpush2.msra.mxu0 0.0
    %763 = vmatprep.subr.mxu0 0.0
    %764 = vmatpush2.msra.mxu0 0.0
    %765 = vmatprep.subr.mxu0 0.0
    %766 = vmatpush2.msra.mxu0 0.0
    %767 = vmatprep.subr.mxu0 0.0
    %768 = vmatpush2.msra.mxu0 0.0
    %769 = vmatprep.subr.mxu0 0.0
    %770 = vmatpush2.msra.mxu0 0.0
    %771 = vmatprep.subr.mxu0 0.0
    %772 = vmatpush2.msra.mxu0 0.0
    %773 = vmatprep.subr.mxu0 0.0
    %774 = vmatpush2.msra.mxu0 0.0
    %775 = vmatprep.subr.mxu0 0.0
    %776 = vmatpush2.msra.mxu0 0.0
    %777 = vmatprep.subr.mxu0 0.0
    %778 = vmatpush2.msra.mxu0 0.0
    %779 = vmatprep.subr.mxu0 0.0
    %780 = vmatpush2.msra.mxu0 0.0
    %781 = vmatprep.subr.mxu0 0.0
    %782 = vmatpush2.msra.mxu0 0.0
    %783 = vmatprep.subr.mxu0 0.0
    %784 = vmatpush2.msra.mxu0 0.0
    %785 = vmatprep.subr.mxu0 0.0
    %786 = vmatpush2.msra.mxu0 0.0
    %787 = vmatprep.mubr.f32.mxu0 0.0
    %788 = vmatmul.mubr.f32.gmra.mxu0 %v44
    %v789 = vpop.f32.mrf.mxu0
    %v790 = vadd.f32 0.0, %v789
    %v791 = vpop.f32.mrf.mxu0
    %792 = vmatprep.mubr.f32.mxu0 0.0
    %793 = vmatmul.mubr.f32.gmra.mxu0 %v47
    %v794 = vpop.f32.mrf.mxu0
    %v795 = vadd.f32 0.0, %v794
    %v796 = vpop.f32.mrf.mxu0
    %797 = vmatprep.mubr.f32.mxu0 0.0
    %798 = vmatmul.mubr.f32.gmra.mxu0 %v50
    %v799 = vpop.f32.mrf.mxu0
    %v800 = vadd.f32 0.0, %v799
    %v801 = vpop.f32.mrf.mxu0
    %802 = vmatprep.mubr.f32.mxu0 0.0
    %803 = vmatmul.mubr.f32.gmra.mxu0 %v53
    %v804 = vpop.f32.mrf.mxu0
    %v805 = vadd.f32 0.0, %v804
    %v806 = vpop.f32.mrf.mxu0
    %807 = vdwg.mxu0
    %808 = vmatprep.subr.mxu0 0.0
    %809 = vmatpush1.msra.mxu0 0.0
    %810 = vmatprep.subr.mxu0 0.0
    %811 = vmatpush1.msra.mxu0 0.0
    %812 = vmatprep.subr.mxu0 0.0
    %813 = vmatpush1.msra.mxu0 0.0
    %814 = vmatprep.subr.mxu0 0.0
    %815 = vmatpush1.msra.mxu0 0.0
    %816 = vmatprep.subr.mxu0 0.0
    %817 = vmatpush1.msra.mxu0 0.0
    %818 = vmatprep.subr.mxu0 0.0
    %819 = vmatpush1.msra.mxu0 0.0
    %820 = vmatprep.subr.mxu0 0.0
    %821 = vmatpush1.msra.mxu0 0.0
    %822 = vmatprep.subr.mxu0 0.0
    %823 = vmatpush1.msra.mxu0 0.0
    %824 = vmatprep.subr.mxu0 0.0
    %825 = vmatpush1.msra.mxu0 0.0
    %826 = vmatprep.subr.mxu0 0.0
    %827 = vmatpush1.msra.mxu0 0.0
    %828 = vmatprep.subr.mxu0 0.0
    %829 = vmatpush1.msra.mxu0 0.0
    %830 = vmatprep.subr.mxu0 0.0
    %831 = vmatpush1.msra.mxu0 0.0
    %832 = vmatprep.subr.mxu0 0.0
    %833 = vmatpush1.msra.mxu0 %v805
    %834 = vmatprep.subr.mxu0 0.0
    %835 = vmatpush1.msra.mxu0 %v800
    %836 = vmatprep.subr.mxu0 0.0
    %837 = vmatpush1.msra.mxu0 %v795
    %838 = vmatprep.subr.mxu0 0.0
    %839 = vmatpush1.msra.mxu0 %v790
    %840 = vmatprep.subr.mxu0 0.0
    %841 = vmatpush2.msra.mxu0 0.0
    %842 = vmatprep.subr.mxu0 0.0
    %843 = vmatpush2.msra.mxu0 0.0
    %844 = vmatprep.subr.mxu0 0.0
    %845 = vmatpush2.msra.mxu0 0.0
    %846 = vmatprep.subr.mxu0 0.0
    %847 = vmatpush2.msra.mxu0 0.0
    %848 = vmatprep.subr.mxu0 0.0
    %849 = vmatpush2.msra.mxu0 0.0
    %850 = vmatprep.subr.mxu0 0.0
    %851 = vmatpush2.msra.mxu0 0.0
    %852 = vmatprep.subr.mxu0 0.0
    %853 = vmatpush2.msra.mxu0 0.0
    %854 = vmatprep.subr.mxu0 0.0
    %855 = vmatpush2.msra.mxu0 0.0
    %856 = vmatprep.subr.mxu0 0.0
    %857 = vmatpush2.msra.mxu0 0.0
    %858 = vmatprep.subr.mxu0 0.0
    %859 = vmatpush2.msra.mxu0 0.0
    %860 = vmatprep.subr.mxu0 0.0
    %861 = vmatpush2.msra.mxu0 0.0
    %862 = vmatprep.subr.mxu0 0.0
    %863 = vmatpush2.msra.mxu0 0.0
    %864 = vmatprep.subr.mxu0 0.0
    %865 = vmatpush2.msra.mxu0 0.0
    %866 = vmatprep.subr.mxu0 0.0
    %867 = vmatpush2.msra.mxu0 0.0
    %868 = vmatprep.subr.mxu0 0.0
    %869 = vmatpush2.msra.mxu0 0.0
    %870 = vmatprep.subr.mxu0 0.0
    %871 = vmatpush2.msra.mxu0 0.0
    %872 = vmatprep.mubr.f32.mxu0 0.0
    %873 = vmatmul.mubr.f32.gmra.mxu0 %v44
    %v874 = vpop.f32.mrf.mxu0
    %v875 = vadd.f32 0.0, %v874
    %v876 = vpop.f32.mrf.mxu0
    %877 = vmatprep.mubr.f32.mxu0 0.0
    %878 = vmatmul.mubr.f32.gmra.mxu0 %v47
    %v879 = vpop.f32.mrf.mxu0
    %v880 = vadd.f32 0.0, %v879
    %v881 = vpop.f32.mrf.mxu0
    %882 = vmatprep.mubr.f32.mxu0 0.0
    %883 = vmatmul.mubr.f32.gmra.mxu0 %v50
    %v884 = vpop.f32.mrf.mxu0
    %v885 = vadd.f32 0.0, %v884
    %v886 = vpop.f32.mrf.mxu0
    %887 = vmatprep.mubr.f32.mxu0 0.0
    %888 = vmatmul.mubr.f32.gmra.mxu0 %v53
    %v889 = vpop.f32.mrf.mxu0
    %v890 = vadd.f32 0.0, %v889
    %v891 = vpop.f32.mrf.mxu0
    %892 = vdwg.mxu0
    %v893 = vmul.f32 %v875, 2.0
    %v894 = vmul.f32 %v880, 2.0
    %v895 = vmul.f32 %v885, 2.0
    %v896 = vmul.f32 %v890, 2.0
    %v897 = vsub.f32 %v893, %v721
    %v898 = vsub.f32 %v894, %v722
    %v899 = vsub.f32 %v895, %v721
    %v900 = vsub.f32 %v896, %v722
    %903 = vrot.lane.b32.xlu0 %v790, 32
    %v904 = vpop.permute.xlu0 %903
    %905 = vrot.lane.b32.xlu0 %v795, 32
    %v906 = vpop.permute.xlu0 %905
    %911 = vrot.lane.b32.xlu0 %v897, 64
    %v912 = vpop.permute.xlu0 %911
    %913 = vrot.lane.b32.xlu0 %v898, 64
    %v914 = vpop.permute.xlu0 %913
    %919 = vrot.lane.b32.xlu0 %v800, 96
    %v920 = vpop.permute.xlu0 %919
    %921 = vrot.lane.b32.xlu0 %v805, 96
    %v922 = vpop.permute.xlu0 %921
    %v925 = vsel %vm42, %v721, %v904
    %v926 = vsel %vm42, %v722, %v906
    %v927 = vsel %vm255, %v925, %v912
    %v928 = vsel %vm255, %v926, %v914
    %v929 = vsel %vm258, %v927, %v920
    %v930 = vsel %vm258, %v928, %v922
    %v931 = vld [vmem:[%s4] sm:$0xff]
    %v932 = vld [vmem:[%s4 + $0x8] sm:$0xff]
    %v933 = vld [vmem:[%s4 + $0x10] sm:$0xff]
    %v934 = vld [vmem:[%s4 + $0x18] sm:$0xff]
    %v935 = vld [vmem:[%s4 + $0x20] sm:$0xff]
    %v936 = vld [vmem:[%s4 + $0x28] sm:$0xff]
    %v937 = vld [vmem:[%s4 + $0x30] sm:$0xff]
    %v938 = vld [vmem:[%s4 + $0x38] sm:$0xff]
    %v939 = vld [vmem:[%s4 + $0x40] sm:$0xff]
    %v940 = vld [vmem:[%s4 + $0x48] sm:$0xff]
    %v941 = vld [vmem:[%s4 + $0x50] sm:$0xff]
    %v942 = vld [vmem:[%s4 + $0x58] sm:$0xff]
    %v943 = vld [vmem:[%s4 + $0x60] sm:$0xff]
    %v944 = vld [vmem:[%s4 + $0x68] sm:$0xff]
    %v945 = vld [vmem:[%s4 + $0x70] sm:$0xff]
    %v946 = vld [vmem:[%s4 + $0x78] sm:$0xff]
    %v947 = vld [vmem:[%s4 + $0x80] sm:$0xff]
    %v948 = vld [vmem:[%s4 + $0x88] sm:$0xff]
    %v949 = vld [vmem:[%s4 + $0x90] sm:$0xff]
    %v950 = vld [vmem:[%s4 + $0x98] sm:$0xff]
    %v951 = vld [vmem:[%s5] sm:$0x1]
    %v953 = vlaneseq
    %v954 = vshrl.u32 %v953, 7
    %v955 = vsub.s32 0, %v954
    %v956 = vrot.slane %v951, %v955
    %v959 = vsel %vm42, %v899, 0
    %v962 = vsel %vm42, %v900, 0
    %964 = vmatprep.subr.mxu0 0.0
    %965 = vmatpush1.msra.mxu0 %v946
    %966 = vmatprep.subr.mxu0 0.0
    %967 = vmatpush1.msra.mxu0 %v945
    %968 = vmatprep.subr.mxu0 0.0
    %969 = vmatpush1.msra.mxu0 %v944
    %970 = vmatprep.subr.mxu0 0.0
    %971 = vmatpush1.msra.mxu0 %v943
    %972 = vmatprep.subr.mxu0 0.0
    %973 = vmatpush1.msra.mxu0 %v942
    %974 = vmatprep.subr.mxu0 0.0
    %975 = vmatpush1.msra.mxu0 %v941
    %976 = vmatprep.subr.mxu0 0.0
    %977 = vmatpush1.msra.mxu0 %v940
    %978 = vmatprep.subr.mxu0 0.0
    %979 = vmatpush1.msra.mxu0 %v939
    %980 = vmatprep.subr.mxu0 0.0
    %981 = vmatpush1.msra.mxu0 %v938
    %982 = vmatprep.subr.mxu0 0.0
    %983 = vmatpush1.msra.mxu0 %v937
    %984 = vmatprep.subr.mxu0 0.0
    %985 = vmatpush1.msra.mxu0 %v936
    %986 = vmatprep.subr.mxu0 0.0
    %987 = vmatpush1.msra.mxu0 %v935
    %988 = vmatprep.subr.mxu0 0.0
    %989 = vmatpush1.msra.mxu0 %v934
    %990 = vmatprep.subr.mxu0 0.0
    %991 = vmatpush1.msra.mxu0 %v933
    %992 = vmatprep.subr.mxu0 0.0
    %993 = vmatpush1.msra.mxu0 %v932
    %994 = vmatprep.subr.mxu0 0.0
    %995 = vmatpush1.msra.mxu0 %v931
    %996 = vmatprep.subr.mxu0 0.0
    %997 = vmatpush2.msra.mxu0 0.0
    %998 = vmatprep.subr.mxu0 0.0
    %999 = vmatpush2.msra.mxu0 0.0
    %1000 = vmatprep.subr.mxu0 0.0
    %1001 = vmatpush2.msra.mxu0 0.0
    %1002 = vmatprep.subr.mxu0 0.0
    %1003 = vmatpush2.msra.mxu0 0.0
    %1004 = vmatprep.subr.mxu0 0.0
    %1005 = vmatpush2.msra.mxu0 0.0
    %1006 = vmatprep.subr.mxu0 0.0
    %1007 = vmatpush2.msra.mxu0 0.0
    %1008 = vmatprep.subr.mxu0 0.0
    %1009 = vmatpush2.msra.mxu0 0.0
    %1010 = vmatprep.subr.mxu0 0.0
    %1011 = vmatpush2.msra.mxu0 0.0
    %1012 = vmatprep.subr.mxu0 0.0
    %1013 = vmatpush2.msra.mxu0 0.0
    %1014 = vmatprep.subr.mxu0 0.0
    %1015 = vmatpush2.msra.mxu0 0.0
    %1016 = vmatprep.subr.mxu0 0.0
    %1017 = vmatpush2.msra.mxu0 0.0
    %1018 = vmatprep.subr.mxu0 0.0
    %1019 = vmatpush2.msra.mxu0 0.0
    %1020 = vmatprep.subr.mxu0 0.0
    %1021 = vmatpush2.msra.mxu0 %v950
    %1022 = vmatprep.subr.mxu0 0.0
    %1023 = vmatpush2.msra.mxu0 %v949
    %1024 = vmatprep.subr.mxu0 0.0
    %1025 = vmatpush2.msra.mxu0 %v948
    %1026 = vmatprep.subr.mxu0 0.0
    %1027 = vmatpush2.msra.mxu0 %v947
    %1028 = vmatprep.mubr.f32.mxu0 %v959
    %1029 = vmatmul.mubr.f32.gmra.mxu0 %v929
    %v1030 = vpop.f32.mrf.mxu0
    %v1031 = vadd.f32 %v956, %v1030
    %v1032 = vpop.f32.mrf.mxu0
    %1033 = vmatprep.mubr.f32.mxu0 %v962
    %1034 = vmatmul.mubr.f32.gmra.mxu0 %v930
    %v1035 = vpop.f32.mrf.mxu0
    %v1036 = vadd.f32 %v956, %v1035
    %v1037 = vpop.f32.mrf.mxu0
    %1038 = vdwg.mxu0
    %v1039 = vld [vmem:[%s6] sm:$0xff]
    %v1040 = vld [vmem:[%s6 + $0x8] sm:$0xff]
    %v1041 = vld [vmem:[%s6 + $0x10] sm:$0xff]
    %v1042 = vld [vmem:[%s6 + $0x18] sm:$0xff]
    %v1043 = vld [vmem:[%s6 + $0x20] sm:$0xff]
    %v1044 = vld [vmem:[%s6 + $0x28] sm:$0xff]
    %v1045 = vld [vmem:[%s6 + $0x30] sm:$0xff]
    %v1046 = vld [vmem:[%s6 + $0x38] sm:$0xff]
    %v1047 = vld [vmem:[%s6 + $0x40] sm:$0xff]
    %v1048 = vld [vmem:[%s6 + $0x48] sm:$0xff]
    %v1049 = vld [vmem:[%s6 + $0x50] sm:$0xff]
    %v1050 = vld [vmem:[%s6 + $0x58] sm:$0xff]
    %v1051 = vld [vmem:[%s6 + $0x60] sm:$0xff]
    %v1052 = vld [vmem:[%s6 + $0x68] sm:$0xff]
    %v1053 = vld [vmem:[%s6 + $0x70] sm:$0xff]
    %v1054 = vld [vmem:[%s6 + $0x78] sm:$0xff]
    %v1055 = vld [vmem:[%s6 + $0x80] sm:$0xff]
    %v1056 = vld [vmem:[%s6 + $0x88] sm:$0xff]
    %v1057 = vld [vmem:[%s6 + $0x90] sm:$0xff]
    %v1058 = vld [vmem:[%s6 + $0x98] sm:$0xff]
    %1059 = vmatprep.subr.mxu0 0.0
    %1060 = vmatpush1.msra.mxu0 %v1054
    %1061 = vmatprep.subr.mxu0 0.0
    %1062 = vmatpush1.msra.mxu0 %v1053
    %1063 = vmatprep.subr.mxu0 0.0
    %1064 = vmatpush1.msra.mxu0 %v1052
    %1065 = vmatprep.subr.mxu0 0.0
    %1066 = vmatpush1.msra.mxu0 %v1051
    %1067 = vmatprep.subr.mxu0 0.0
    %1068 = vmatpush1.msra.mxu0 %v1050
    %1069 = vmatprep.subr.mxu0 0.0
    %1070 = vmatpush1.msra.mxu0 %v1049
    %1071 = vmatprep.subr.mxu0 0.0
    %1072 = vmatpush1.msra.mxu0 %v1048
    %1073 = vmatprep.subr.mxu0 0.0
    %1074 = vmatpush1.msra.mxu0 %v1047
    %1075 = vmatprep.subr.mxu0 0.0
    %1076 = vmatpush1.msra.mxu0 %v1046
    %1077 = vmatprep.subr.mxu0 0.0
    %1078 = vmatpush1.msra.mxu0 %v1045
    %1079 = vmatprep.subr.mxu0 0.0
    %1080 = vmatpush1.msra.mxu0 %v1044
    %1081 = vmatprep.subr.mxu0 0.0
    %1082 = vmatpush1.msra.mxu0 %v1043
    %1083 = vmatprep.subr.mxu0 0.0
    %1084 = vmatpush1.msra.mxu0 %v1042
    %1085 = vmatprep.subr.mxu0 0.0
    %1086 = vmatpush1.msra.mxu0 %v1041
    %1087 = vmatprep.subr.mxu0 0.0
    %1088 = vmatpush1.msra.mxu0 %v1040
    %1089 = vmatprep.subr.mxu0 0.0
    %1090 = vmatpush1.msra.mxu0 %v1039
    %1091 = vmatprep.subr.mxu0 0.0
    %1092 = vmatpush2.msra.mxu0 0.0
    %1093 = vmatprep.subr.mxu0 0.0
    %1094 = vmatpush2.msra.mxu0 0.0
    %1095 = vmatprep.subr.mxu0 0.0
    %1096 = vmatpush2.msra.mxu0 0.0
    %1097 = vmatprep.subr.mxu0 0.0
    %1098 = vmatpush2.msra.mxu0 0.0
    %1099 = vmatprep.subr.mxu0 0.0
    %1100 = vmatpush2.msra.mxu0 0.0
    %1101 = vmatprep.subr.mxu0 0.0
    %1102 = vmatpush2.msra.mxu0 0.0
    %1103 = vmatprep.subr.mxu0 0.0
    %1104 = vmatpush2.msra.mxu0 0.0
    %1105 = vmatprep.subr.mxu0 0.0
    %1106 = vmatpush2.msra.mxu0 0.0
    %1107 = vmatprep.subr.mxu0 0.0
    %1108 = vmatpush2.msra.mxu0 0.0
    %1109 = vmatprep.subr.mxu0 0.0
    %1110 = vmatpush2.msra.mxu0 0.0
    %1111 = vmatprep.subr.mxu0 0.0
    %1112 = vmatpush2.msra.mxu0 0.0
    %1113 = vmatprep.subr.mxu0 0.0
    %1114 = vmatpush2.msra.mxu0 0.0
    %1115 = vmatprep.subr.mxu0 0.0
    %1116 = vmatpush2.msra.mxu0 %v1058
    %1117 = vmatprep.subr.mxu0 0.0
    %1118 = vmatpush2.msra.mxu0 %v1057
    %1119 = vmatprep.subr.mxu0 0.0
    %1120 = vmatpush2.msra.mxu0 %v1056
    %1121 = vmatprep.subr.mxu0 0.0
    %1122 = vmatpush2.msra.mxu0 %v1055
    %1123 = vmatprep.mubr.f32.mxu0 %v282
    %1124 = vmatmul.mubr.f32.gmra.mxu0 %v259
    %v1125 = vpop.f32.mrf.mxu0
    %v1126 = vadd.f32 0.0, %v1125
    %v1127 = vpop.f32.mrf.mxu0
    %1128 = vmatprep.mubr.f32.mxu0 %v285
    %1129 = vmatmul.mubr.f32.gmra.mxu0 %v260
    %v1130 = vpop.f32.mrf.mxu0
    %v1131 = vadd.f32 0.0, %v1130
    %v1132 = vpop.f32.mrf.mxu0
    %1133 = vdwg.mxu0
    %v1134 = vadd.f32 %v1031, %v1126
    %v1135 = vadd.f32 %v1036, %v1131
    %v1136 = vxor.u32 %v1134, 2147483648
    %v1137 = vxor.u32 %v1135, 2147483648
    %v1138 = vmul.f32 %v1136, 1.442695
    %v1139 = vpow.pop %v1138
    %v1140 = vmul.f32 %v1137, 1.442695
    %v1141 = vpow.pop %v1140
    %v1142 = vadd.f32 %v1139, 1.0
    %v1143 = vadd.f32 %v1141, 1.0
    %v1144 = vrcp.pop %v1142
    %v1145 = vmul.f32 1.0, %v1144
    %v1146 = vrcp.pop %v1143
    %v1147 = vmul.f32 1.0, %v1146
    %v1148 = vmul.f32 %v1145, 0.0
    %v1149 = vmul.f32 %v1147, 0.0
    %1152 = vrot.lane.b32.xlu0 %v1148, 96
    %v1153 = vpop.permute.xlu0 %1152
    %1154 = vrot.lane.b32.xlu0 %v1149, 96
    %v1155 = vpop.permute.xlu0 %1154
    %1158 = vmatprep.subr.mxu0 0.0
    %1159 = vmatpush1.msra.mxu0 0.0
    %1160 = vmatprep.subr.mxu0 0.0
    %1161 = vmatpush1.msra.mxu0 0.0
    %1162 = vmatprep.subr.mxu0 0.0
    %1163 = vmatpush1.msra.mxu0 0.0
    %1164 = vmatprep.subr.mxu0 0.0
    %1165 = vmatpush1.msra.mxu0 0.0
    %1166 = vmatprep.subr.mxu0 0.0
    %1167 = vmatpush1.msra.mxu0 0.0
    %1168 = vmatprep.subr.mxu0 0.0
    %1169 = vmatpush1.msra.mxu0 0.0
    %1170 = vmatprep.subr.mxu0 0.0
    %1171 = vmatpush1.msra.mxu0 0.0
    %1172 = vmatprep.subr.mxu0 0.0
    %1173 = vmatpush1.msra.mxu0 0.0
    %1174 = vmatprep.subr.mxu0 0.0
    %1175 = vmatpush1.msra.mxu0 0.0
    %1176 = vmatprep.subr.mxu0 0.0
    %1177 = vmatpush1.msra.mxu0 0.0
    %1178 = vmatprep.subr.mxu0 0.0
    %1179 = vmatpush1.msra.mxu0 0.0
    %1180 = vmatprep.subr.mxu0 0.0
    %1181 = vmatpush1.msra.mxu0 0.0
    %1182 = vmatprep.subr.mxu0 0.0
    %1183 = vmatpush1.msra.mxu0 %v1155
    %1184 = vmatprep.subr.mxu0 0.0
    %1185 = vmatpush1.msra.mxu0 %v1153
    %1186 = vmatprep.subr.mxu0 0.0
    %1187 = vmatpush1.msra.mxu0 %v1155
    %1188 = vmatprep.subr.mxu0 0.0
    %1189 = vmatpush1.msra.mxu0 %v1153
    %1190 = vmatprep.subr.mxu0 0.0
    %1191 = vmatpush2.msra.mxu0 0.0
    %1192 = vmatprep.subr.mxu0 0.0
    %1193 = vmatpush2.msra.mxu0 0.0
    %1194 = vmatprep.subr.mxu0 0.0
    %1195 = vmatpush2.msra.mxu0 0.0
    %1196 = vmatprep.subr.mxu0 0.0
    %1197 = vmatpush2.msra.mxu0 0.0
    %1198 = vmatprep.subr.mxu0 0.0
    %1199 = vmatpush2.msra.mxu0 0.0
    %1200 = vmatprep.subr.mxu0 0.0
    %1201 = vmatpush2.msra.mxu0 0.0
    %1202 = vmatprep.subr.mxu0 0.0
    %1203 = vmatpush2.msra.mxu0 0.0
    %1204 = vmatprep.subr.mxu0 0.0
    %1205 = vmatpush2.msra.mxu0 0.0
    %1206 = vmatprep.subr.mxu0 0.0
    %1207 = vmatpush2.msra.mxu0 0.0
    %1208 = vmatprep.subr.mxu0 0.0
    %1209 = vmatpush2.msra.mxu0 0.0
    %1210 = vmatprep.subr.mxu0 0.0
    %1211 = vmatpush2.msra.mxu0 0.0
    %1212 = vmatprep.subr.mxu0 0.0
    %1213 = vmatpush2.msra.mxu0 0.0
    %1214 = vmatprep.subr.mxu0 0.0
    %1215 = vmatpush2.msra.mxu0 0.0
    %1216 = vmatprep.subr.mxu0 0.0
    %1217 = vmatpush2.msra.mxu0 0.0
    %1218 = vmatprep.subr.mxu0 0.0
    %1219 = vmatpush2.msra.mxu0 0.0
    %1220 = vmatprep.subr.mxu0 0.0
    %1221 = vmatpush2.msra.mxu0 0.0
    %1222 = vmatprep.mubr.f32.mxu0 0.0
    %1223 = vmatmul.mubr.f32.gmra.mxu0 %v44
    %v1224 = vpop.f32.mrf.mxu0
    %v1225 = vadd.f32 0.0, %v1224
    %v1226 = vpop.f32.mrf.mxu0
    %1227 = vmatprep.mubr.f32.mxu0 0.0
    %1228 = vmatmul.mubr.f32.gmra.mxu0 %v47
    %v1229 = vpop.f32.mrf.mxu0
    %v1230 = vadd.f32 0.0, %v1229
    %v1231 = vpop.f32.mrf.mxu0
    %1232 = vmatprep.mubr.f32.mxu0 0.0
    %1233 = vmatmul.mubr.f32.gmra.mxu0 %v50
    %v1234 = vpop.f32.mrf.mxu0
    %v1235 = vadd.f32 0.0, %v1234
    %v1236 = vpop.f32.mrf.mxu0
    %1237 = vmatprep.mubr.f32.mxu0 0.0
    %1238 = vmatmul.mubr.f32.gmra.mxu0 %v53
    %v1239 = vpop.f32.mrf.mxu0
    %v1240 = vadd.f32 0.0, %v1239
    %v1241 = vpop.f32.mrf.mxu0
    %1242 = vdwg.mxu0
    %1243 = vmatprep.subr.mxu0 0.0
    %1244 = vmatpush1.msra.mxu0 0.0
    %1245 = vmatprep.subr.mxu0 0.0
    %1246 = vmatpush1.msra.mxu0 0.0
    %1247 = vmatprep.subr.mxu0 0.0
    %1248 = vmatpush1.msra.mxu0 0.0
    %1249 = vmatprep.subr.mxu0 0.0
    %1250 = vmatpush1.msra.mxu0 0.0
    %1251 = vmatprep.subr.mxu0 0.0
    %1252 = vmatpush1.msra.mxu0 0.0
    %1253 = vmatprep.subr.mxu0 0.0
    %1254 = vmatpush1.msra.mxu0 0.0
    %1255 = vmatprep.subr.mxu0 0.0
    %1256 = vmatpush1.msra.mxu0 0.0
    %1257 = vmatprep.subr.mxu0 0.0
    %1258 = vmatpush1.msra.mxu0 0.0
    %1259 = vmatprep.subr.mxu0 0.0
    %1260 = vmatpush1.msra.mxu0 0.0
    %1261 = vmatprep.subr.mxu0 0.0
    %1262 = vmatpush1.msra.mxu0 0.0
    %1263 = vmatprep.subr.mxu0 0.0
    %1264 = vmatpush1.msra.mxu0 0.0
    %1265 = vmatprep.subr.mxu0 0.0
    %1266 = vmatpush1.msra.mxu0 0.0
    %1267 = vmatprep.subr.mxu0 0.0
    %1268 = vmatpush1.msra.mxu0 %v1240
    %1269 = vmatprep.subr.mxu0 0.0
    %1270 = vmatpush1.msra.mxu0 %v1235
    %1271 = vmatprep.subr.mxu0 0.0
    %1272 = vmatpush1.msra.mxu0 %v1230
    %1273 = vmatprep.subr.mxu0 0.0
    %1274 = vmatpush1.msra.mxu0 %v1225
    %1275 = vmatprep.subr.mxu0 0.0
    %1276 = vmatpush2.msra.mxu0 0.0
    %1277 = vmatprep.subr.mxu0 0.0
    %1278 = vmatpush2.msra.mxu0 0.0
    %1279 = vmatprep.subr.mxu0 0.0
    %1280 = vmatpush2.msra.mxu0 0.0
    %1281 = vmatprep.subr.mxu0 0.0
    %1282 = vmatpush2.msra.mxu0 0.0
    %1283 = vmatprep.subr.mxu0 0.0
    %1284 = vmatpush2.msra.mxu0 0.0
    %1285 = vmatprep.subr.mxu0 0.0
    %1286 = vmatpush2.msra.mxu0 0.0
    %1287 = vmatprep.subr.mxu0 0.0
    %1288 = vmatpush2.msra.mxu0 0.0
    %1289 = vmatprep.subr.mxu0 0.0
    %1290 = vmatpush2.msra.mxu0 0.0
    %1291 = vmatprep.subr.mxu0 0.0
    %1292 = vmatpush2.msra.mxu0 0.0
    %1293 = vmatprep.subr.mxu0 0.0
    %1294 = vmatpush2.msra.mxu0 0.0
    %1295 = vmatprep.subr.mxu0 0.0
    %1296 = vmatpush2.msra.mxu0 0.0
    %1297 = vmatprep.subr.mxu0 0.0
    %1298 = vmatpush2.msra.mxu0 0.0
    %1299 = vmatprep.subr.mxu0 0.0
    %1300 = vmatpush2.msra.mxu0 0.0
    %1301 = vmatprep.subr.mxu0 0.0
    %1302 = vmatpush2.msra.mxu0 0.0
    %1303 = vmatprep.subr.mxu0 0.0
    %1304 = vmatpush2.msra.mxu0 0.0
    %1305 = vmatprep.subr.mxu0 0.0
    %1306 = vmatpush2.msra.mxu0 0.0
    %1307 = vmatprep.mubr.f32.mxu0 0.0
    %1308 = vmatmul.mubr.f32.gmra.mxu0 %v44
    %v1309 = vpop.f32.mrf.mxu0
    %v1310 = vadd.f32 0.0, %v1309
    %v1311 = vpop.f32.mrf.mxu0
    %1312 = vmatprep.mubr.f32.mxu0 0.0
    %1313 = vmatmul.mubr.f32.gmra.mxu0 %v47
    %v1314 = vpop.f32.mrf.mxu0
    %v1315 = vadd.f32 0.0, %v1314
    %v1316 = vpop.f32.mrf.mxu0
    %1317 = vmatprep.mubr.f32.mxu0 0.0
    %1318 = vmatmul.mubr.f32.gmra.mxu0 %v50
    %v1319 = vpop.f32.mrf.mxu0
    %v1320 = vadd.f32 0.0, %v1319
    %v1321 = vpop.f32.mrf.mxu0
    %1322 = vmatprep.mubr.f32.mxu0 0.0
    %1323 = vmatmul.mubr.f32.gmra.mxu0 %v53
    %v1324 = vpop.f32.mrf.mxu0
    %v1325 = vadd.f32 0.0, %v1324
    %v1326 = vpop.f32.mrf.mxu0
    %1327 = vdwg.mxu0
    %v1328 = vmul.f32 %v1310, 2.0
    %v1329 = vmul.f32 %v1315, 2.0
    %v1330 = vmul.f32 %v1320, 2.0
    %v1331 = vmul.f32 %v1325, 2.0
    %v1332 = vsub.f32 %v1328, %v1153
    %v1333 = vsub.f32 %v1329, %v1155
    %v1334 = vsub.f32 %v1330, %v1153
    %v1335 = vsub.f32 %v1331, %v1155
    %1338 = vrot.lane.b32.xlu0 %v1225, 32
    %v1339 = vpop.permute.xlu0 %1338
    %1340 = vrot.lane.b32.xlu0 %v1230, 32
    %v1341 = vpop.permute.xlu0 %1340
    %1346 = vrot.lane.b32.xlu0 %v1332, 64
    %v1347 = vpop.permute.xlu0 %1346
    %1348 = vrot.lane.b32.xlu0 %v1333, 64
    %v1349 = vpop.permute.xlu0 %1348
    %1354 = vrot.lane.b32.xlu0 %v1235, 96
    %v1355 = vpop.permute.xlu0 %1354
    %1356 = vrot.lane.b32.xlu0 %v1240, 96
    %v1357 = vpop.permute.xlu0 %1356
    %v1360 = vsel %vm42, %v1153, %v1339
    %v1361 = vsel %vm42, %v1155, %v1341
    %v1362 = vsel %vm255, %v1360, %v1347
    %v1363 = vsel %vm255, %v1361, %v1349
    %v1364 = vsel %vm258, %v1362, %v1355
    %v1365 = vsel %vm258, %v1363, %v1357
    %v1366 = vld [vmem:[%s7] sm:$0xff]
    %v1367 = vld [vmem:[%s7 + $0x8] sm:$0xff]
    %v1368 = vld [vmem:[%s7 + $0x10] sm:$0xff]
    %v1369 = vld [vmem:[%s7 + $0x18] sm:$0xff]
    %v1370 = vld [vmem:[%s7 + $0x20] sm:$0xff]
    %v1371 = vld [vmem:[%s7 + $0x28] sm:$0xff]
    %v1372 = vld [vmem:[%s7 + $0x30] sm:$0xff]
    %v1373 = vld [vmem:[%s7 + $0x38] sm:$0xff]
    %v1374 = vld [vmem:[%s7 + $0x40] sm:$0xff]
    %v1375 = vld [vmem:[%s7 + $0x48] sm:$0xff]
    %v1376 = vld [vmem:[%s7 + $0x50] sm:$0xff]
    %v1377 = vld [vmem:[%s7 + $0x58] sm:$0xff]
    %v1378 = vld [vmem:[%s7 + $0x60] sm:$0xff]
    %v1379 = vld [vmem:[%s7 + $0x68] sm:$0xff]
    %v1380 = vld [vmem:[%s7 + $0x70] sm:$0xff]
    %v1381 = vld [vmem:[%s7 + $0x78] sm:$0xff]
    %v1382 = vld [vmem:[%s7 + $0x80] sm:$0xff]
    %v1383 = vld [vmem:[%s7 + $0x88] sm:$0xff]
    %v1384 = vld [vmem:[%s7 + $0x90] sm:$0xff]
    %v1385 = vld [vmem:[%s7 + $0x98] sm:$0xff]
    %v1387 = vsel %vm42, %v1334, 0
    %v1390 = vsel %vm42, %v1335, 0
    %1392 = vmatprep.subr.mxu0 0.0
    %1393 = vmatpush1.msra.mxu0 %v1381
    %1394 = vmatprep.subr.mxu0 0.0
    %1395 = vmatpush1.msra.mxu0 %v1380
    %1396 = vmatprep.subr.mxu0 0.0
    %1397 = vmatpush1.msra.mxu0 %v1379
    %1398 = vmatprep.subr.mxu0 0.0
    %1399 = vmatpush1.msra.mxu0 %v1378
    %1400 = vmatprep.subr.mxu0 0.0
    %1401 = vmatpush1.msra.mxu0 %v1377
    %1402 = vmatprep.subr.mxu0 0.0
    %1403 = vmatpush1.msra.mxu0 %v1376
    %1404 = vmatprep.subr.mxu0 0.0
    %1405 = vmatpush1.msra.mxu0 %v1375
    %1406 = vmatprep.subr.mxu0 0.0
    %1407 = vmatpush1.msra.mxu0 %v1374
    %1408 = vmatprep.subr.mxu0 0.0
    %1409 = vmatpush1.msra.mxu0 %v1373
    %1410 = vmatprep.subr.mxu0 0.0
    %1411 = vmatpush1.msra.mxu0 %v1372
    %1412 = vmatprep.subr.mxu0 0.0
    %1413 = vmatpush1.msra.mxu0 %v1371
    %1414 = vmatprep.subr.mxu0 0.0
    %1415 = vmatpush1.msra.mxu0 %v1370
    %1416 = vmatprep.subr.mxu0 0.0
    %1417 = vmatpush1.msra.mxu0 %v1369
    %1418 = vmatprep.subr.mxu0 0.0
    %1419 = vmatpush1.msra.mxu0 %v1368
    %1420 = vmatprep.subr.mxu0 0.0
    %1421 = vmatpush1.msra.mxu0 %v1367
    %1422 = vmatprep.subr.mxu0 0.0
    %1423 = vmatpush1.msra.mxu0 %v1366
    %1424 = vmatprep.subr.mxu0 0.0
    %1425 = vmatpush2.msra.mxu0 0.0
    %1426 = vmatprep.subr.mxu0 0.0
    %1427 = vmatpush2.msra.mxu0 0.0
    %1428 = vmatprep.subr.mxu0 0.0
    %1429 = vmatpush2.msra.mxu0 0.0
    %1430 = vmatprep.subr.mxu0 0.0
    %1431 = vmatpush2.msra.mxu0 0.0
    %1432 = vmatprep.subr.mxu0 0.0
    %1433 = vmatpush2.msra.mxu0 0.0
    %1434 = vmatprep.subr.mxu0 0.0
    %1435 = vmatpush2.msra.mxu0 0.0
    %1436 = vmatprep.subr.mxu0 0.0
    %1437 = vmatpush2.msra.mxu0 0.0
    %1438 = vmatprep.subr.mxu0 0.0
    %1439 = vmatpush2.msra.mxu0 0.0
    %1440 = vmatprep.subr.mxu0 0.0
    %1441 = vmatpush2.msra.mxu0 0.0
    %1442 = vmatprep.subr.mxu0 0.0
    %1443 = vmatpush2.msra.mxu0 0.0
    %1444 = vmatprep.subr.mxu0 0.0
    %1445 = vmatpush2.msra.mxu0 0.0
    %1446 = vmatprep.subr.mxu0 0.0
    %1447 = vmatpush2.msra.mxu0 0.0
    %1448 = vmatprep.subr.mxu0 0.0
    %1449 = vmatpush2.msra.mxu0 %v1385
    %1450 = vmatprep.subr.mxu0 0.0
    %1451 = vmatpush2.msra.mxu0 %v1384
    %1452 = vmatprep.subr.mxu0 0.0
    %1453 = vmatpush2.msra.mxu0 %v1383
    %1454 = vmatprep.subr.mxu0 0.0
    %1455 = vmatpush2.msra.mxu0 %v1382
    %1456 = vmatprep.mubr.f32.mxu0 %v1387
    %1457 = vmatmul.mubr.f32.gmra.mxu0 %v1364
    %v1458 = vpop.f32.mrf.mxu0
    %v1459 = vadd.f32 0.0, %v1458
    %v1460 = vpop.f32.mrf.mxu0
    %1461 = vmatprep.mubr.f32.mxu0 %v1390
    %1462 = vmatmul.mubr.f32.gmra.mxu0 %v1365
    %v1463 = vpop.f32.mrf.mxu0
    %v1464 = vadd.f32 0.0, %v1463
    %v1465 = vpop.f32.mrf.mxu0
    %1466 = vdwg.mxu0
    %1469 = vrot.lane.b32.xlu0 %v1459, 64
    %v1470 = vpop.permute.xlu0 %1469
    %1471 = vrot.lane.b32.xlu0 %v1464, 64
    %v1472 = vpop.permute.xlu0 %1471
    %v1475 = vadd.f32 %v1031, %v1470
    %v1476 = vadd.f32 %v1036, %v1472
    %v1477 = vtanh.pop %v1475
    %v1478 = vtanh.pop %v1476
    %v1479 = vsub.f32 1.0, %v1145
    %v1480 = vsub.f32 1.0, %v1147
    %1483 = vrot.lane.b32.xlu0 %v1477, 64
    %v1484 = vpop.permute.xlu0 %1483
    %1485 = vrot.lane.b32.xlu0 %v1478, 64
    %v1486 = vpop.permute.xlu0 %1485
    %v1489 = vmul.f32 %v1479, %v1484
    %v1490 = vmul.f32 %v1480, %v1486
    %v1491 = vadd.f32 %v1148, %v1489
    %v1492 = vadd.f32 %v1149, %v1490
    %v1493 = vmax.f32 %v1491, 0.0
    %v1494 = vmax.f32 %v1492, 0.0
    %s1495 = scalar_lea.vmem %s0, 16
    %v1496 = vld [vmem:[%s1495] sm:$0xff]
    %v1497 = vld [vmem:[%s1495 + $0x8] sm:$0xff]
    %1498 = vmatprep.subr.mxu0 0.0
    %1499 = vmatpush1.msra.mxu0 %v276
    %1500 = vmatprep.subr.mxu0 0.0
    %1501 = vmatpush1.msra.mxu0 %v275
    %1502 = vmatprep.subr.mxu0 0.0
    %1503 = vmatpush1.msra.mxu0 %v274
    %1504 = vmatprep.subr.mxu0 0.0
    %1505 = vmatpush1.msra.mxu0 %v273
    %1506 = vmatprep.subr.mxu0 0.0
    %1507 = vmatpush1.msra.mxu0 %v272
    %1508 = vmatprep.subr.mxu0 0.0
    %1509 = vmatpush1.msra.mxu0 %v271
    %1510 = vmatprep.subr.mxu0 0.0
    %1511 = vmatpush1.msra.mxu0 %v270
    %1512 = vmatprep.subr.mxu0 0.0
    %1513 = vmatpush1.msra.mxu0 %v269
    %1514 = vmatprep.subr.mxu0 0.0
    %1515 = vmatpush1.msra.mxu0 %v268
    %1516 = vmatprep.subr.mxu0 0.0
    %1517 = vmatpush1.msra.mxu0 %v267
    %1518 = vmatprep.subr.mxu0 0.0
    %1519 = vmatpush1.msra.mxu0 %v266
    %1520 = vmatprep.subr.mxu0 0.0
    %1521 = vmatpush1.msra.mxu0 %v265
    %1522 = vmatprep.subr.mxu0 0.0
    %1523 = vmatpush1.msra.mxu0 %v264
    %1524 = vmatprep.subr.mxu0 0.0
    %1525 = vmatpush1.msra.mxu0 %v263
    %1526 = vmatprep.subr.mxu0 0.0
    %1527 = vmatpush1.msra.mxu0 %v262
    %1528 = vmatprep.subr.mxu0 0.0
    %1529 = vmatpush1.msra.mxu0 %v261
    %1530 = vmatprep.subr.mxu0 0.0
    %1531 = vmatpush2.msra.mxu0 0.0
    %1532 = vmatprep.subr.mxu0 0.0
    %1533 = vmatpush2.msra.mxu0 0.0
    %1534 = vmatprep.subr.mxu0 0.0
    %1535 = vmatpush2.msra.mxu0 0.0
    %1536 = vmatprep.subr.mxu0 0.0
    %1537 = vmatpush2.msra.mxu0 0.0
    %1538 = vmatprep.subr.mxu0 0.0
    %1539 = vmatpush2.msra.mxu0 0.0
    %1540 = vmatprep.subr.mxu0 0.0
    %1541 = vmatpush2.msra.mxu0 0.0
    %1542 = vmatprep.subr.mxu0 0.0
    %1543 = vmatpush2.msra.mxu0 0.0
    %1544 = vmatprep.subr.mxu0 0.0
    %1545 = vmatpush2.msra.mxu0 0.0
    %1546 = vmatprep.subr.mxu0 0.0
    %1547 = vmatpush2.msra.mxu0 0.0
    %1548 = vmatprep.subr.mxu0 0.0
    %1549 = vmatpush2.msra.mxu0 0.0
    %1550 = vmatprep.subr.mxu0 0.0
    %1551 = vmatpush2.msra.mxu0 0.0
    %1552 = vmatprep.subr.mxu0 0.0
    %1553 = vmatpush2.msra.mxu0 0.0
    %1554 = vmatprep.subr.mxu0 0.0
    %1555 = vmatpush2.msra.mxu0 %v280
    %1556 = vmatprep.subr.mxu0 0.0
    %1557 = vmatpush2.msra.mxu0 %v279
    %1558 = vmatprep.subr.mxu0 0.0
    %1559 = vmatpush2.msra.mxu0 %v278
    %1560 = vmatprep.subr.mxu0 0.0
    %1561 = vmatpush2.msra.mxu0 %v277
    %1562 = vmatprep.mubr.f32.mxu0 %v959
    %1563 = vmatmul.mubr.f32.gmra.mxu0 %v929
    %v1564 = vpop.f32.mrf.mxu0
    %v1565 = vadd.f32 0.0, %v1564
    %v1566 = vpop.f32.mrf.mxu0
    %1567 = vmatprep.mubr.f32.mxu0 %v962
    %1568 = vmatmul.mubr.f32.gmra.mxu0 %v930
    %v1569 = vpop.f32.mrf.mxu0
    %v1570 = vadd.f32 0.0, %v1569
    %v1571 = vpop.f32.mrf.mxu0
    %1572 = vdwg.mxu0
    %v1573 = vadd.f32 %v1496, %v1565
    %v1574 = vadd.f32 %v1497, %v1570
    %v1575 = vxor.u32 %v1573, 2147483648
    %v1576 = vxor.u32 %v1574, 2147483648
    %v1577 = vmul.f32 %v1575, 1.442695
    %v1578 = vpow.pop %v1577
    %v1579 = vmul.f32 %v1576, 1.442695
    %v1580 = vpow.pop %v1579
    %v1581 = vadd.f32 %v1578, 1.0
    %v1582 = vadd.f32 %v1580, 1.0
    %v1583 = vrcp.pop %v1581
    %v1584 = vmul.f32 1.0, %v1583
    %v1585 = vrcp.pop %v1582
    %v1586 = vmul.f32 1.0, %v1585
    %1589 = vrot.lane.b32.xlu0 %v1584, 96
    %v1590 = vpop.permute.xlu0 %1589
    %1591 = vrot.lane.b32.xlu0 %v1586, 96
    %v1592 = vpop.permute.xlu0 %1591
    %v1595 = vmul.f32 %v721, %v1590
    %v1596 = vmul.f32 %v722, %v1592
    %1597 = vmatprep.subr.mxu0 0.0
    %1598 = vmatpush1.msra.mxu0 0.0
    %1599 = vmatprep.subr.mxu0 0.0
    %1600 = vmatpush1.msra.mxu0 0.0
    %1601 = vmatprep.subr.mxu0 0.0
    %1602 = vmatpush1.msra.mxu0 0.0
    %1603 = vmatprep.subr.mxu0 0.0
    %1604 = vmatpush1.msra.mxu0 0.0
    %1605 = vmatprep.subr.mxu0 0.0
    %1606 = vmatpush1.msra.mxu0 0.0
    %1607 = vmatprep.subr.mxu0 0.0
    %1608 = vmatpush1.msra.mxu0 0.0
    %1609 = vmatprep.subr.mxu0 0.0
    %1610 = vmatpush1.msra.mxu0 0.0
    %1611 = vmatprep.subr.mxu0 0.0
    %1612 = vmatpush1.msra.mxu0 0.0
    %1613 = vmatprep.subr.mxu0 0.0
    %1614 = vmatpush1.msra.mxu0 0.0
    %1615 = vmatprep.subr.mxu0 0.0
    %1616 = vmatpush1.msra.mxu0 0.0
    %1617 = vmatprep.subr.mxu0 0.0
    %1618 = vmatpush1.msra.mxu0 0.0
    %1619 = vmatprep.subr.mxu0 0.0
    %1620 = vmatpush1.msra.mxu0 0.0
    %1621 = vmatprep.subr.mxu0 0.0
    %1622 = vmatpush1.msra.mxu0 %v1596
    %1623 = vmatprep.subr.mxu0 0.0
    %1624 = vmatpush1.msra.mxu0 %v1595
    %1625 = vmatprep.subr.mxu0 0.0
    %1626 = vmatpush1.msra.mxu0 %v1596
    %1627 = vmatprep.subr.mxu0 0.0
    %1628 = vmatpush1.msra.mxu0 %v1595
    %1629 = vmatprep.subr.mxu0 0.0
    %1630 = vmatpush2.msra.mxu0 0.0
    %1631 = vmatprep.subr.mxu0 0.0
    %1632 = vmatpush2.msra.mxu0 0.0
    %1633 = vmatprep.subr.mxu0 0.0
    %1634 = vmatpush2.msra.mxu0 0.0
    %1635 = vmatprep.subr.mxu0 0.0
    %1636 = vmatpush2.msra.mxu0 0.0
    %1637 = vmatprep.subr.mxu0 0.0
    %1638 = vmatpush2.msra.mxu0 0.0
    %1639 = vmatprep.subr.mxu0 0.0
    %1640 = vmatpush2.msra.mxu0 0.0
    %1641 = vmatprep.subr.mxu0 0.0
    %1642 = vmatpush2.msra.mxu0 0.0
    %1643 = vmatprep.subr.mxu0 0.0
    %1644 = vmatpush2.msra.mxu0 0.0
    %1645 = vmatprep.subr.mxu0 0.0
    %1646 = vmatpush2.msra.mxu0 0.0
    %1647 = vmatprep.subr.mxu0 0.0
    %1648 = vmatpush2.msra.mxu0 0.0
    %1649 = vmatprep.subr.mxu0 0.0
    %1650 = vmatpush2.msra.mxu0 0.0
    %1651 = vmatprep.subr.mxu0 0.0
    %1652 = vmatpush2.msra.mxu0 0.0
    %1653 = vmatprep.subr.mxu0 0.0
    %1654 = vmatpush2.msra.mxu0 0.0
    %1655 = vmatprep.subr.mxu0 0.0
    %1656 = vmatpush2.msra.mxu0 0.0
    %1657 = vmatprep.subr.mxu0 0.0
    %1658 = vmatpush2.msra.mxu0 0.0
    %1659 = vmatprep.subr.mxu0 0.0
    %1660 = vmatpush2.msra.mxu0 0.0
    %1661 = vmatprep.mubr.f32.mxu0 0.0
    %1662 = vmatmul.mubr.f32.gmra.mxu0 %v44
    %v1663 = vpop.f32.mrf.mxu0
    %v1664 = vadd.f32 0.0, %v1663
    %v1665 = vpop.f32.mrf.mxu0
    %1666 = vmatprep.mubr.f32.mxu0 0.0
    %1667 = vmatmul.mubr.f32.gmra.mxu0 %v47
    %v1668 = vpop.f32.mrf.mxu0
    %v1669 = vadd.f32 0.0, %v1668
    %v1670 = vpop.f32.mrf.mxu0
    %1671 = vmatprep.mubr.f32.mxu0 0.0
    %1672 = vmatmul.mubr.f32.gmra.mxu0 %v50
    %v1673 = vpop.f32.mrf.mxu0
    %v1674 = vadd.f32 0.0, %v1673
    %v1675 = vpop.f32.mrf.mxu0
    %1676 = vmatprep.mubr.f32.mxu0 0.0
    %1677 = vmatmul.mubr.f32.gmra.mxu0 %v53
    %v1678 = vpop.f32.mrf.mxu0
    %v1679 = vadd.f32 0.0, %v1678
    %v1680 = vpop.f32.mrf.mxu0
    %1681 = vdwg.mxu0
    %1682 = vmatprep.subr.mxu0 0.0
    %1683 = vmatpush1.msra.mxu0 0.0
    %1684 = vmatprep.subr.mxu0 0.0
    %1685 = vmatpush1.msra.mxu0 0.0
    %1686 = vmatprep.subr.mxu0 0.0
    %1687 = vmatpush1.msra.mxu0 0.0
    %1688 = vmatprep.subr.mxu0 0.0
    %1689 = vmatpush1.msra.mxu0 0.0
    %1690 = vmatprep.subr.mxu0 0.0
    %1691 = vmatpush1.msra.mxu0 0.0
    %1692 = vmatprep.subr.mxu0 0.0
    %1693 = vmatpush1.msra.mxu0 0.0
    %1694 = vmatprep.subr.mxu0 0.0
    %1695 = vmatpush1.msra.mxu0 0.0
    %1696 = vmatprep.subr.mxu0 0.0
    %1697 = vmatpush1.msra.mxu0 0.0
    %1698 = vmatprep.subr.mxu0 0.0
    %1699 = vmatpush1.msra.mxu0 0.0
    %1700 = vmatprep.subr.mxu0 0.0
    %1701 = vmatpush1.msra.mxu0 0.0
    %1702 = vmatprep.subr.mxu0 0.0
    %1703 = vmatpush1.msra.mxu0 0.0
    %1704 = vmatprep.subr.mxu0 0.0
    %1705 = vmatpush1.msra.mxu0 0.0
    %1706 = vmatprep.subr.mxu0 0.0
    %1707 = vmatpush1.msra.mxu0 %v1679
    %1708 = vmatprep.subr.mxu0 0.0
    %1709 = vmatpush1.msra.mxu0 %v1674
    %1710 = vmatprep.subr.mxu0 0.0
    %1711 = vmatpush1.msra.mxu0 %v1669
    %1712 = vmatprep.subr.mxu0 0.0
    %1713 = vmatpush1.msra.mxu0 %v1664
    %1714 = vmatprep.subr.mxu0 0.0
    %1715 = vmatpush2.msra.mxu0 0.0
    %1716 = vmatprep.subr.mxu0 0.0
    %1717 = vmatpush2.msra.mxu0 0.0
    %1718 = vmatprep.subr.mxu0 0.0
    %1719 = vmatpush2.msra.mxu0 0.0
    %1720 = vmatprep.subr.mxu0 0.0
    %1721 = vmatpush2.msra.mxu0 0.0
    %1722 = vmatprep.subr.mxu0 0.0
    %1723 = vmatpush2.msra.mxu0 0.0
    %1724 = vmatprep.subr.mxu0 0.0
    %1725 = vmatpush2.msra.mxu0 0.0
    %1726 = vmatprep.subr.mxu0 0.0
    %1727 = vmatpush2.msra.mxu0 0.0
    %1728 = vmatprep.subr.mxu0 0.0
    %1729 = vmatpush2.msra.mxu0 0.0
    %1730 = vmatprep.subr.mxu0 0.0
    %1731 = vmatpush2.msra.mxu0 0.0
    %1732 = vmatprep.subr.mxu0 0.0
    %1733 = vmatpush2.msra.mxu0 0.0
    %1734 = vmatprep.subr.mxu0 0.0
    %1735 = vmatpush2.msra.mxu0 0.0
    %1736 = vmatprep.subr.mxu0 0.0
    %1737 = vmatpush2.msra.mxu0 0.0
    %1738 = vmatprep.subr.mxu0 0.0
    %1739 = vmatpush2.msra.mxu0 0.0
    %1740 = vmatprep.subr.mxu0 0.0
    %1741 = vmatpush2.msra.mxu0 0.0
    %1742 = vmatprep.subr.mxu0 0.0
    %1743 = vmatpush2.msra.mxu0 0.0
    %1744 = vmatprep.subr.mxu0 0.0
    %1745 = vmatpush2.msra.mxu0 0.0
    %1746 = vmatprep.mubr.f32.mxu0 0.0
    %1747 = vmatmul.mubr.f32.gmra.mxu0 %v44
    %v1748 = vpop.f32.mrf.mxu0
    %v1749 = vadd.f32 0.0, %v1748
    %v1750 = vpop.f32.mrf.mxu0
    %1751 = vmatprep.mubr.f32.mxu0 0.0
    %1752 = vmatmul.mubr.f32.gmra.mxu0 %v47
    %v1753 = vpop.f32.mrf.mxu0
    %v1754 = vadd.f32 0.0, %v1753
    %v1755 = vpop.f32.mrf.mxu0
    %1756 = vmatprep.mubr.f32.mxu0 0.0
    %1757 = vmatmul.mubr.f32.gmra.mxu0 %v50
    %v1758 = vpop.f32.mrf.mxu0
    %v1759 = vadd.f32 0.0, %v1758
    %v1760 = vpop.f32.mrf.mxu0
    %1761 = vmatprep.mubr.f32.mxu0 0.0
    %1762 = vmatmul.mubr.f32.gmra.mxu0 %v53
    %v1763 = vpop.f32.mrf.mxu0
    %v1764 = vadd.f32 0.0, %v1763
    %v1765 = vpop.f32.mrf.mxu0
    %1766 = vdwg.mxu0
    %v1767 = vmul.f32 %v1749, 2.0
    %v1768 = vmul.f32 %v1754, 2.0
    %v1769 = vmul.f32 %v1759, 2.0
    %v1770 = vmul.f32 %v1764, 2.0
    %v1771 = vsub.f32 %v1767, %v1595
    %v1772 = vsub.f32 %v1768, %v1596
    %v1773 = vsub.f32 %v1769, %v1595
    %v1774 = vsub.f32 %v1770, %v1596
    %1777 = vrot.lane.b32.xlu0 %v1664, 32
    %v1778 = vpop.permute.xlu0 %1777
    %1779 = vrot.lane.b32.xlu0 %v1669, 32
    %v1780 = vpop.permute.xlu0 %1779
    %1785 = vrot.lane.b32.xlu0 %v1771, 64
    %v1786 = vpop.permute.xlu0 %1785
    %1787 = vrot.lane.b32.xlu0 %v1772, 64
    %v1788 = vpop.permute.xlu0 %1787
    %1793 = vrot.lane.b32.xlu0 %v1674, 96
    %v1794 = vpop.permute.xlu0 %1793
    %1795 = vrot.lane.b32.xlu0 %v1679, 96
    %v1796 = vpop.permute.xlu0 %1795
    %v1799 = vsel %vm42, %v1595, %v1778
    %v1800 = vsel %vm42, %v1596, %v1780
    %v1801 = vsel %vm255, %v1799, %v1786
    %v1802 = vsel %vm255, %v1800, %v1788
    %v1803 = vsel %vm258, %v1801, %v1794
    %v1804 = vsel %vm258, %v1802, %v1796
    %v1806 = vsel %vm42, %v1773, 0
    %v1809 = vsel %vm42, %v1774, 0
    %1811 = vmatprep.subr.mxu0 0.0
    %1812 = vmatpush1.msra.mxu0 %v609
    %1813 = vmatprep.subr.mxu0 0.0
    %1814 = vmatpush1.msra.mxu0 %v608
    %1815 = vmatprep.subr.mxu0 0.0
    %1816 = vmatpush1.msra.mxu0 %v607
    %1817 = vmatprep.subr.mxu0 0.0
    %1818 = vmatpush1.msra.mxu0 %v606
    %1819 = vmatprep.subr.mxu0 0.0
    %1820 = vmatpush1.msra.mxu0 %v605
    %1821 = vmatprep.subr.mxu0 0.0
    %1822 = vmatpush1.msra.mxu0 %v604
    %1823 = vmatprep.subr.mxu0 0.0
    %1824 = vmatpush1.msra.mxu0 %v603
    %1825 = vmatprep.subr.mxu0 0.0
    %1826 = vmatpush1.msra.mxu0 %v602
    %1827 = vmatprep.subr.mxu0 0.0
    %1828 = vmatpush1.msra.mxu0 %v601
    %1829 = vmatprep.subr.mxu0 0.0
    %1830 = vmatpush1.msra.mxu0 %v600
    %1831 = vmatprep.subr.mxu0 0.0
    %1832 = vmatpush1.msra.mxu0 %v599
    %1833 = vmatprep.subr.mxu0 0.0
    %1834 = vmatpush1.msra.mxu0 %v598
    %1835 = vmatprep.subr.mxu0 0.0
    %1836 = vmatpush1.msra.mxu0 %v597
    %1837 = vmatprep.subr.mxu0 0.0
    %1838 = vmatpush1.msra.mxu0 %v596
    %1839 = vmatprep.subr.mxu0 0.0
    %1840 = vmatpush1.msra.mxu0 %v595
    %1841 = vmatprep.subr.mxu0 0.0
    %1842 = vmatpush1.msra.mxu0 %v594
    %1843 = vmatprep.subr.mxu0 0.0
    %1844 = vmatpush2.msra.mxu0 0.0
    %1845 = vmatprep.subr.mxu0 0.0
    %1846 = vmatpush2.msra.mxu0 0.0
    %1847 = vmatprep.subr.mxu0 0.0
    %1848 = vmatpush2.msra.mxu0 0.0
    %1849 = vmatprep.subr.mxu0 0.0
    %1850 = vmatpush2.msra.mxu0 0.0
    %1851 = vmatprep.subr.mxu0 0.0
    %1852 = vmatpush2.msra.mxu0 0.0
    %1853 = vmatprep.subr.mxu0 0.0
    %1854 = vmatpush2.msra.mxu0 0.0
    %1855 = vmatprep.subr.mxu0 0.0
    %1856 = vmatpush2.msra.mxu0 0.0
    %1857 = vmatprep.subr.mxu0 0.0
    %1858 = vmatpush2.msra.mxu0 0.0
    %1859 = vmatprep.subr.mxu0 0.0
    %1860 = vmatpush2.msra.mxu0 0.0
    %1861 = vmatprep.subr.mxu0 0.0
    %1862 = vmatpush2.msra.mxu0 0.0
    %1863 = vmatprep.subr.mxu0 0.0
    %1864 = vmatpush2.msra.mxu0 0.0
    %1865 = vmatprep.subr.mxu0 0.0
    %1866 = vmatpush2.msra.mxu0 0.0
    %1867 = vmatprep.subr.mxu0 0.0
    %1868 = vmatpush2.msra.mxu0 %v613
    %1869 = vmatprep.subr.mxu0 0.0
    %1870 = vmatpush2.msra.mxu0 %v612
    %1871 = vmatprep.subr.mxu0 0.0
    %1872 = vmatpush2.msra.mxu0 %v611
    %1873 = vmatprep.subr.mxu0 0.0
    %1874 = vmatpush2.msra.mxu0 %v610
    %1875 = vmatprep.mubr.f32.mxu0 %v1806
    %1876 = vmatmul.mubr.f32.gmra.mxu0 %v1803
    %v1877 = vpop.f32.mrf.mxu0
    %v1878 = vadd.f32 0.0, %v1877
    %v1879 = vpop.f32.mrf.mxu0
    %1880 = vmatprep.mubr.f32.mxu0 %v1809
    %1881 = vmatmul.mubr.f32.gmra.mxu0 %v1804
    %v1882 = vpop.f32.mrf.mxu0
    %v1883 = vadd.f32 0.0, %v1882
    %v1884 = vpop.f32.mrf.mxu0
    %1885 = vdwg.mxu0
    %1888 = vrot.lane.b32.xlu0 %v1878, 64
    %v1889 = vpop.permute.xlu0 %1888
    %1890 = vrot.lane.b32.xlu0 %v1883, 64
    %v1891 = vpop.permute.xlu0 %1890
    %v1894 = vadd.f32 %v1496, %v1889
    %v1895 = vadd.f32 %v1497, %v1891
    %v1896 = vtanh.pop %v1894
    %v1897 = vtanh.pop %v1895
    %v1898 = vmul.f32 %v1584, %v721
    %v1899 = vmul.f32 %v1586, %v722
    %v1900 = vsub.f32 1.0, %v1584
    %v1901 = vsub.f32 1.0, %v1586
    %1904 = vrot.lane.b32.xlu0 %v1896, 64
    %v1905 = vpop.permute.xlu0 %1904
    %1906 = vrot.lane.b32.xlu0 %v1897, 64
    %v1907 = vpop.permute.xlu0 %1906
    %v1910 = vmul.f32 %v1900, %v1905
    %v1911 = vmul.f32 %v1901, %v1907
    %v1912 = vadd.f32 %v1898, %v1910
    %v1913 = vadd.f32 %v1899, %v1911
    %v1914 = vmax.f32 %v1912, 0.0
    %v1915 = vmax.f32 %v1913, 0.0
    %1916 = vmatprep.subr.mxu0 0.0
    %1917 = vmatpush1.msra.mxu0 0.0
    %1918 = vmatprep.subr.mxu0 0.0
    %1919 = vmatpush1.msra.mxu0 0.0
    %1920 = vmatprep.subr.mxu0 0.0
    %1921 = vmatpush1.msra.mxu0 0.0
    %1922 = vmatprep.subr.mxu0 0.0
    %1923 = vmatpush1.msra.mxu0 0.0
    %1924 = vmatprep.subr.mxu0 0.0
    %1925 = vmatpush1.msra.mxu0 0.0
    %1926 = vmatprep.subr.mxu0 0.0
    %1927 = vmatpush1.msra.mxu0 0.0
    %1928 = vmatprep.subr.mxu0 0.0
    %1929 = vmatpush1.msra.mxu0 0.0
    %1930 = vmatprep.subr.mxu0 0.0
    %1931 = vmatpush1.msra.mxu0 0.0
    %1932 = vmatprep.subr.mxu0 0.0
    %1933 = vmatpush1.msra.mxu0 0.0
    %1934 = vmatprep.subr.mxu0 0.0
    %1935 = vmatpush1.msra.mxu0 0.0
    %1936 = vmatprep.subr.mxu0 0.0
    %1937 = vmatpush1.msra.mxu0 0.0
    %1938 = vmatprep.subr.mxu0 0.0
    %1939 = vmatpush1.msra.mxu0 0.0
    %1940 = vmatprep.subr.mxu0 0.0
    %1941 = vmatpush1.msra.mxu0 %v1915
    %1942 = vmatprep.subr.mxu0 0.0
    %1943 = vmatpush1.msra.mxu0 %v1914
    %1944 = vmatprep.subr.mxu0 0.0
    %1945 = vmatpush1.msra.mxu0 %v1915
    %1946 = vmatprep.subr.mxu0 0.0
    %1947 = vmatpush1.msra.mxu0 %v1914
    %1948 = vmatprep.subr.mxu0 0.0
    %1949 = vmatpush2.msra.mxu0 0.0
    %1950 = vmatprep.subr.mxu0 0.0
    %1951 = vmatpush2.msra.mxu0 0.0
    %1952 = vmatprep.subr.mxu0 0.0
    %1953 = vmatpush2.msra.mxu0 0.0
    %1954 = vmatprep.subr.mxu0 0.0
    %1955 = vmatpush2.msra.mxu0 0.0
    %1956 = vmatprep.subr.mxu0 0.0
    %1957 = vmatpush2.msra.mxu0 0.0
    %1958 = vmatprep.subr.mxu0 0.0
    %1959 = vmatpush2.msra.mxu0 0.0
    %1960 = vmatprep.subr.mxu0 0.0
    %1961 = vmatpush2.msra.mxu0 0.0
    %1962 = vmatprep.subr.mxu0 0.0
    %1963 = vmatpush2.msra.mxu0 0.0
    %1964 = vmatprep.subr.mxu0 0.0
    %1965 = vmatpush2.msra.mxu0 0.0
    %1966 = vmatprep.subr.mxu0 0.0
    %1967 = vmatpush2.msra.mxu0 0.0
    %1968 = vmatprep.subr.mxu0 0.0
    %1969 = vmatpush2.msra.mxu0 0.0
    %1970 = vmatprep.subr.mxu0 0.0
    %1971 = vmatpush2.msra.mxu0 0.0
    %1972 = vmatprep.subr.mxu0 0.0
    %1973 = vmatpush2.msra.mxu0 0.0
    %1974 = vmatprep.subr.mxu0 0.0
    %1975 = vmatpush2.msra.mxu0 0.0
    %1976 = vmatprep.subr.mxu0 0.0
    %1977 = vmatpush2.msra.mxu0 0.0
    %1978 = vmatprep.subr.mxu0 0.0
    %1979 = vmatpush2.msra.mxu0 0.0
    %1980 = vmatprep.mubr.f32.mxu0 0.0
    %1981 = vmatmul.mubr.f32.gmra.mxu0 %v44
    %v1982 = vpop.f32.mrf.mxu0
    %v1983 = vadd.f32 0.0, %v1982
    %v1984 = vpop.f32.mrf.mxu0
    %1985 = vmatprep.mubr.f32.mxu0 0.0
    %1986 = vmatmul.mubr.f32.gmra.mxu0 %v47
    %v1987 = vpop.f32.mrf.mxu0
    %v1988 = vadd.f32 0.0, %v1987
    %v1989 = vpop.f32.mrf.mxu0
    %1990 = vmatprep.mubr.f32.mxu0 0.0
    %1991 = vmatmul.mubr.f32.gmra.mxu0 %v50
    %v1992 = vpop.f32.mrf.mxu0
    %v1993 = vadd.f32 0.0, %v1992
    %v1994 = vpop.f32.mrf.mxu0
    %1995 = vmatprep.mubr.f32.mxu0 0.0
    %1996 = vmatmul.mubr.f32.gmra.mxu0 %v53
    %v1997 = vpop.f32.mrf.mxu0
    %v1998 = vadd.f32 0.0, %v1997
    %v1999 = vpop.f32.mrf.mxu0
    %2000 = vdwg.mxu0
    %2001 = vmatprep.subr.mxu0 0.0
    %2002 = vmatpush1.msra.mxu0 0.0
    %2003 = vmatprep.subr.mxu0 0.0
    %2004 = vmatpush1.msra.mxu0 0.0
    %2005 = vmatprep.subr.mxu0 0.0
    %2006 = vmatpush1.msra.mxu0 0.0
    %2007 = vmatprep.subr.mxu0 0.0
    %2008 = vmatpush1.msra.mxu0 0.0
    %2009 = vmatprep.subr.mxu0 0.0
    %2010 = vmatpush1.msra.mxu0 0.0
    %2011 = vmatprep.subr.mxu0 0.0
    %2012 = vmatpush1.msra.mxu0 0.0
    %2013 = vmatprep.subr.mxu0 0.0
    %2014 = vmatpush1.msra.mxu0 0.0
    %2015 = vmatprep.subr.mxu0 0.0
    %2016 = vmatpush1.msra.mxu0 0.0
    %2017 = vmatprep.subr.mxu0 0.0
    %2018 = vmatpush1.msra.mxu0 0.0
    %2019 = vmatprep.subr.mxu0 0.0
    %2020 = vmatpush1.msra.mxu0 0.0
    %2021 = vmatprep.subr.mxu0 0.0
    %2022 = vmatpush1.msra.mxu0 0.0
    %2023 = vmatprep.subr.mxu0 0.0
    %2024 = vmatpush1.msra.mxu0 0.0
    %2025 = vmatprep.subr.mxu0 0.0
    %2026 = vmatpush1.msra.mxu0 %v1998
    %2027 = vmatprep.subr.mxu0 0.0
    %2028 = vmatpush1.msra.mxu0 %v1993
    %2029 = vmatprep.subr.mxu0 0.0
    %2030 = vmatpush1.msra.mxu0 %v1988
    %2031 = vmatprep.subr.mxu0 0.0
    %2032 = vmatpush1.msra.mxu0 %v1983
    %2033 = vmatprep.subr.mxu0 0.0
    %2034 = vmatpush2.msra.mxu0 0.0
    %2035 = vmatprep.subr.mxu0 0.0
    %2036 = vmatpush2.msra.mxu0 0.0
    %2037 = vmatprep.subr.mxu0 0.0
    %2038 = vmatpush2.msra.mxu0 0.0
    %2039 = vmatprep.subr.mxu0 0.0
    %2040 = vmatpush2.msra.mxu0 0.0
    %2041 = vmatprep.subr.mxu0 0.0
    %2042 = vmatpush2.msra.mxu0 0.0
    %2043 = vmatprep.subr.mxu0 0.0
    %2044 = vmatpush2.msra.mxu0 0.0
    %2045 = vmatprep.subr.mxu0 0.0
    %2046 = vmatpush2.msra.mxu0 0.0
    %2047 = vmatprep.subr.mxu0 0.0
    %2048 = vmatpush2.msra.mxu0 0.0
    %2049 = vmatprep.subr.mxu0 0.0
    %2050 = vmatpush2.msra.mxu0 0.0
    %2051 = vmatprep.subr.mxu0 0.0
    %2052 = vmatpush2.msra.mxu0 0.0
    %2053 = vmatprep.subr.mxu0 0.0
    %2054 = vmatpush2.msra.mxu0 0.0
    %2055 = vmatprep.subr.mxu0 0.0
    %2056 = vmatpush2.msra.mxu0 0.0
    %2057 = vmatprep.subr.mxu0 0.0
    %2058 = vmatpush2.msra.mxu0 0.0
    %2059 = vmatprep.subr.mxu0 0.0
    %2060 = vmatpush2.msra.mxu0 0.0
    %2061 = vmatprep.subr.mxu0 0.0
    %2062 = vmatpush2.msra.mxu0 0.0
    %2063 = vmatprep.subr.mxu0 0.0
    %2064 = vmatpush2.msra.mxu0 0.0
    %2065 = vmatprep.mubr.f32.mxu0 0.0
    %2066 = vmatmul.mubr.f32.gmra.mxu0 %v44
    %v2067 = vpop.f32.mrf.mxu0
    %v2068 = vadd.f32 0.0, %v2067
    %v2069 = vpop.f32.mrf.mxu0
    %2070 = vmatprep.mubr.f32.mxu0 0.0
    %2071 = vmatmul.mubr.f32.gmra.mxu0 %v47
    %v2072 = vpop.f32.mrf.mxu0
    %v2073 = vadd.f32 0.0, %v2072
    %v2074 = vpop.f32.mrf.mxu0
    %2075 = vmatprep.mubr.f32.mxu0 0.0
    %2076 = vmatmul.mubr.f32.gmra.mxu0 %v50
    %v2077 = vpop.f32.mrf.mxu0
    %v2078 = vadd.f32 0.0, %v2077
    %v2079 = vpop.f32.mrf.mxu0
    %2080 = vmatprep.mubr.f32.mxu0 0.0
    %2081 = vmatmul.mubr.f32.gmra.mxu0 %v53
    %v2082 = vpop.f32.mrf.mxu0
    %v2083 = vadd.f32 0.0, %v2082
    %v2084 = vpop.f32.mrf.mxu0
    %2085 = vdwg.mxu0
    %v2086 = vmul.f32 %v2068, 2.0
    %v2087 = vmul.f32 %v2073, 2.0
    %v2088 = vmul.f32 %v2078, 2.0
    %v2089 = vmul.f32 %v2083, 2.0
    %v2090 = vsub.f32 %v2086, %v1914
    %v2091 = vsub.f32 %v2087, %v1915
    %v2092 = vsub.f32 %v2088, %v1914
    %v2093 = vsub.f32 %v2089, %v1915
    %2096 = vrot.lane.b32.xlu0 %v1983, 32
    %v2097 = vpop.permute.xlu0 %2096
    %2098 = vrot.lane.b32.xlu0 %v1988, 32
    %v2099 = vpop.permute.xlu0 %2098
    %2104 = vrot.lane.b32.xlu0 %v2090, 64
    %v2105 = vpop.permute.xlu0 %2104
    %2106 = vrot.lane.b32.xlu0 %v2091, 64
    %v2107 = vpop.permute.xlu0 %2106
    %2112 = vrot.lane.b32.xlu0 %v1993, 96
    %v2113 = vpop.permute.xlu0 %2112
    %2114 = vrot.lane.b32.xlu0 %v1998, 96
    %v2115 = vpop.permute.xlu0 %2114
    %v2118 = vsel %vm42, %v1914, %v2097
    %v2119 = vsel %vm42, %v1915, %v2099
    %v2120 = vsel %vm255, %v2118, %v2105
    %v2121 = vsel %vm255, %v2119, %v2107
    %v2122 = vsel %vm258, %v2120, %v2113
    %v2123 = vsel %vm258, %v2121, %v2115
    %v2125 = vsel %vm42, %v2092, 0
    %v2128 = vsel %vm42, %v2093, 0
    %2130 = vmatprep.subr.mxu0 0.0
    %2131 = vmatpush1.msra.mxu0 %v946
    %2132 = vmatprep.subr.mxu0 0.0
    %2133 = vmatpush1.msra.mxu0 %v945
    %2134 = vmatprep.subr.mxu0 0.0
    %2135 = vmatpush1.msra.mxu0 %v944
    %2136 = vmatprep.subr.mxu0 0.0
    %2137 = vmatpush1.msra.mxu0 %v943
    %2138 = vmatprep.subr.mxu0 0.0
    %2139 = vmatpush1.msra.mxu0 %v942
    %2140 = vmatprep.subr.mxu0 0.0
    %2141 = vmatpush1.msra.mxu0 %v941
    %2142 = vmatprep.subr.mxu0 0.0
    %2143 = vmatpush1.msra.mxu0 %v940
    %2144 = vmatprep.subr.mxu0 0.0
    %2145 = vmatpush1.msra.mxu0 %v939
    %2146 = vmatprep.subr.mxu0 0.0
    %2147 = vmatpush1.msra.mxu0 %v938
    %2148 = vmatprep.subr.mxu0 0.0
    %2149 = vmatpush1.msra.mxu0 %v937
    %2150 = vmatprep.subr.mxu0 0.0
    %2151 = vmatpush1.msra.mxu0 %v936
    %2152 = vmatprep.subr.mxu0 0.0
    %2153 = vmatpush1.msra.mxu0 %v935
    %2154 = vmatprep.subr.mxu0 0.0
    %2155 = vmatpush1.msra.mxu0 %v934
    %2156 = vmatprep.subr.mxu0 0.0
    %2157 = vmatpush1.msra.mxu0 %v933
    %2158 = vmatprep.subr.mxu0 0.0
    %2159 = vmatpush1.msra.mxu0 %v932
    %2160 = vmatprep.subr.mxu0 0.0
    %2161 = vmatpush1.msra.mxu0 %v931
    %2162 = vmatprep.subr.mxu0 0.0
    %2163 = vmatpush2.msra.mxu0 0.0
    %2164 = vmatprep.subr.mxu0 0.0
    %2165 = vmatpush2.msra.mxu0 0.0
    %2166 = vmatprep.subr.mxu0 0.0
    %2167 = vmatpush2.msra.mxu0 0.0
    %2168 = vmatprep.subr.mxu0 0.0
    %2169 = vmatpush2.msra.mxu0 0.0
    %2170 = vmatprep.subr.mxu0 0.0
    %2171 = vmatpush2.msra.mxu0 0.0
    %2172 = vmatprep.subr.mxu0 0.0
    %2173 = vmatpush2.msra.mxu0 0.0
    %2174 = vmatprep.subr.mxu0 0.0
    %2175 = vmatpush2.msra.mxu0 0.0
    %2176 = vmatprep.subr.mxu0 0.0
    %2177 = vmatpush2.msra.mxu0 0.0
    %2178 = vmatprep.subr.mxu0 0.0
    %2179 = vmatpush2.msra.mxu0 0.0
    %2180 = vmatprep.subr.mxu0 0.0
    %2181 = vmatpush2.msra.mxu0 0.0
    %2182 = vmatprep.subr.mxu0 0.0
    %2183 = vmatpush2.msra.mxu0 0.0
    %2184 = vmatprep.subr.mxu0 0.0
    %2185 = vmatpush2.msra.mxu0 0.0
    %2186 = vmatprep.subr.mxu0 0.0
    %2187 = vmatpush2.msra.mxu0 %v950
    %2188 = vmatprep.subr.mxu0 0.0
    %2189 = vmatpush2.msra.mxu0 %v949
    %2190 = vmatprep.subr.mxu0 0.0
    %2191 = vmatpush2.msra.mxu0 %v948
    %2192 = vmatprep.subr.mxu0 0.0
    %2193 = vmatpush2.msra.mxu0 %v947
    %2194 = vmatprep.mubr.f32.mxu0 %v2125
    %2195 = vmatmul.mubr.f32.gmra.mxu0 %v2122
    %v2196 = vpop.f32.mrf.mxu0
    %v2197 = vadd.f32 %v956, %v2196
    %v2198 = vpop.f32.mrf.mxu0
    %2199 = vmatprep.mubr.f32.mxu0 %v2128
    %2200 = vmatmul.mubr.f32.gmra.mxu0 %v2123
    %v2201 = vpop.f32.mrf.mxu0
    %v2202 = vadd.f32 %v956, %v2201
    %v2203 = vpop.f32.mrf.mxu0
    %2204 = vdwg.mxu0
    %2205 = vmatprep.subr.mxu0 0.0
    %2206 = vmatpush1.msra.mxu0 0.0
    %2207 = vmatprep.subr.mxu0 0.0
    %2208 = vmatpush1.msra.mxu0 0.0
    %2209 = vmatprep.subr.mxu0 0.0
    %2210 = vmatpush1.msra.mxu0 0.0
    %2211 = vmatprep.subr.mxu0 0.0
    %2212 = vmatpush1.msra.mxu0 0.0
    %2213 = vmatprep.subr.mxu0 0.0
    %2214 = vmatpush1.msra.mxu0 0.0
    %2215 = vmatprep.subr.mxu0 0.0
    %2216 = vmatpush1.msra.mxu0 0.0
    %2217 = vmatprep.subr.mxu0 0.0
    %2218 = vmatpush1.msra.mxu0 0.0
    %2219 = vmatprep.subr.mxu0 0.0
    %2220 = vmatpush1.msra.mxu0 0.0
    %2221 = vmatprep.subr.mxu0 0.0
    %2222 = vmatpush1.msra.mxu0 0.0
    %2223 = vmatprep.subr.mxu0 0.0
    %2224 = vmatpush1.msra.mxu0 0.0
    %2225 = vmatprep.subr.mxu0 0.0
    %2226 = vmatpush1.msra.mxu0 0.0
    %2227 = vmatprep.subr.mxu0 0.0
    %2228 = vmatpush1.msra.mxu0 0.0
    %2229 = vmatprep.subr.mxu0 0.0
    %2230 = vmatpush1.msra.mxu0 %v1494
    %2231 = vmatprep.subr.mxu0 0.0
    %2232 = vmatpush1.msra.mxu0 %v1493
    %2233 = vmatprep.subr.mxu0 0.0
    %2234 = vmatpush1.msra.mxu0 %v1494
    %2235 = vmatprep.subr.mxu0 0.0
    %2236 = vmatpush1.msra.mxu0 %v1493
    %2237 = vmatprep.subr.mxu0 0.0
    %2238 = vmatpush2.msra.mxu0 0.0
    %2239 = vmatprep.subr.mxu0 0.0
    %2240 = vmatpush2.msra.mxu0 0.0
    %2241 = vmatprep.subr.mxu0 0.0
    %2242 = vmatpush2.msra.mxu0 0.0
    %2243 = vmatprep.subr.mxu0 0.0
    %2244 = vmatpush2.msra.mxu0 0.0
    %2245 = vmatprep.subr.mxu0 0.0
    %2246 = vmatpush2.msra.mxu0 0.0
    %2247 = vmatprep.subr.mxu0 0.0
    %2248 = vmatpush2.msra.mxu0 0.0
    %2249 = vmatprep.subr.mxu0 0.0
    %2250 = vmatpush2.msra.mxu0 0.0
    %2251 = vmatprep.subr.mxu0 0.0
    %2252 = vmatpush2.msra.mxu0 0.0
    %2253 = vmatprep.subr.mxu0 0.0
    %2254 = vmatpush2.msra.mxu0 0.0
    %2255 = vmatprep.subr.mxu0 0.0
    %2256 = vmatpush2.msra.mxu0 0.0
    %2257 = vmatprep.subr.mxu0 0.0
    %2258 = vmatpush2.msra.mxu0 0.0
    %2259 = vmatprep.subr.mxu0 0.0
    %2260 = vmatpush2.msra.mxu0 0.0
    %2261 = vmatprep.subr.mxu0 0.0
    %2262 = vmatpush2.msra.mxu0 0.0
    %2263 = vmatprep.subr.mxu0 0.0
    %2264 = vmatpush2.msra.mxu0 0.0
    %2265 = vmatprep.subr.mxu0 0.0
    %2266 = vmatpush2.msra.mxu0 0.0
    %2267 = vmatprep.subr.mxu0 0.0
    %2268 = vmatpush2.msra.mxu0 0.0
    %2269 = vmatprep.mubr.f32.mxu0 0.0
    %2270 = vmatmul.mubr.f32.gmra.mxu0 %v44
    %v2271 = vpop.f32.mrf.mxu0
    %v2272 = vadd.f32 0.0, %v2271
    %v2273 = vpop.f32.mrf.mxu0
    %2274 = vmatprep.mubr.f32.mxu0 0.0
    %2275 = vmatmul.mubr.f32.gmra.mxu0 %v47
    %v2276 = vpop.f32.mrf.mxu0
    %v2277 = vadd.f32 0.0, %v2276
    %v2278 = vpop.f32.mrf.mxu0
    %2279 = vmatprep.mubr.f32.mxu0 0.0
    %2280 = vmatmul.mubr.f32.gmra.mxu0 %v50
    %v2281 = vpop.f32.mrf.mxu0
    %v2282 = vadd.f32 0.0, %v2281
    %v2283 = vpop.f32.mrf.mxu0
    %2284 = vmatprep.mubr.f32.mxu0 0.0
    %2285 = vmatmul.mubr.f32.gmra.mxu0 %v53
    %v2286 = vpop.f32.mrf.mxu0
    %v2287 = vadd.f32 0.0, %v2286
    %v2288 = vpop.f32.mrf.mxu0
    %2289 = vdwg.mxu0
    %2290 = vmatprep.subr.mxu0 0.0
    %2291 = vmatpush1.msra.mxu0 0.0
    %2292 = vmatprep.subr.mxu0 0.0
    %2293 = vmatpush1.msra.mxu0 0.0
    %2294 = vmatprep.subr.mxu0 0.0
    %2295 = vmatpush1.msra.mxu0 0.0
    %2296 = vmatprep.subr.mxu0 0.0
    %2297 = vmatpush1.msra.mxu0 0.0
    %2298 = vmatprep.subr.mxu0 0.0
    %2299 = vmatpush1.msra.mxu0 0.0
    %2300 = vmatprep.subr.mxu0 0.0
    %2301 = vmatpush1.msra.mxu0 0.0
    %2302 = vmatprep.subr.mxu0 0.0
    %2303 = vmatpush1.msra.mxu0 0.0
    %2304 = vmatprep.subr.mxu0 0.0
    %2305 = vmatpush1.msra.mxu0 0.0
    %2306 = vmatprep.subr.mxu0 0.0
    %2307 = vmatpush1.msra.mxu0 0.0
    %2308 = vmatprep.subr.mxu0 0.0
    %2309 = vmatpush1.msra.mxu0 0.0
    %2310 = vmatprep.subr.mxu0 0.0
    %2311 = vmatpush1.msra.mxu0 0.0
    %2312 = vmatprep.subr.mxu0 0.0
    %2313 = vmatpush1.msra.mxu0 0.0
    %2314 = vmatprep.subr.mxu0 0.0
    %2315 = vmatpush1.msra.mxu0 %v2287
    %2316 = vmatprep.subr.mxu0 0.0
    %2317 = vmatpush1.msra.mxu0 %v2282
    %2318 = vmatprep.subr.mxu0 0.0
    %2319 = vmatpush1.msra.mxu0 %v2277
    %2320 = vmatprep.subr.mxu0 0.0
    %2321 = vmatpush1.msra.mxu0 %v2272
    %2322 = vmatprep.subr.mxu0 0.0
    %2323 = vmatpush2.msra.mxu0 0.0
    %2324 = vmatprep.subr.mxu0 0.0
    %2325 = vmatpush2.msra.mxu0 0.0
    %2326 = vmatprep.subr.mxu0 0.0
    %2327 = vmatpush2.msra.mxu0 0.0
    %2328 = vmatprep.subr.mxu0 0.0
    %2329 = vmatpush2.msra.mxu0 0.0
    %2330 = vmatprep.subr.mxu0 0.0
    %2331 = vmatpush2.msra.mxu0 0.0
    %2332 = vmatprep.subr.mxu0 0.0
    %2333 = vmatpush2.msra.mxu0 0.0
    %2334 = vmatprep.subr.mxu0 0.0
    %2335 = vmatpush2.msra.mxu0 0.0
    %2336 = vmatprep.subr.mxu0 0.0
    %2337 = vmatpush2.msra.mxu0 0.0
    %2338 = vmatprep.subr.mxu0 0.0
    %2339 = vmatpush2.msra.mxu0 0.0
    %2340 = vmatprep.subr.mxu0 0.0
    %2341 = vmatpush2.msra.mxu0 0.0
    %2342 = vmatprep.subr.mxu0 0.0
    %2343 = vmatpush2.msra.mxu0 0.0
    %2344 = vmatprep.subr.mxu0 0.0
    %2345 = vmatpush2.msra.mxu0 0.0
    %2346 = vmatprep.subr.mxu0 0.0
    %2347 = vmatpush2.msra.mxu0 0.0
    %2348 = vmatprep.subr.mxu0 0.0
    %2349 = vmatpush2.msra.mxu0 0.0
    %2350 = vmatprep.subr.mxu0 0.0
    %2351 = vmatpush2.msra.mxu0 0.0
    %2352 = vmatprep.subr.mxu0 0.0
    %2353 = vmatpush2.msra.mxu0 0.0
    %2354 = vmatprep.mubr.f32.mxu0 0.0
    %2355 = vmatmul.mubr.f32.gmra.mxu0 %v44
    %v2356 = vpop.f32.mrf.mxu0
    %v2357 = vadd.f32 0.0, %v2356
    %v2358 = vpop.f32.mrf.mxu0
    %2359 = vmatprep.mubr.f32.mxu0 0.0
    %2360 = vmatmul.mubr.f32.gmra.mxu0 %v47
    %v2361 = vpop.f32.mrf.mxu0
    %v2362 = vadd.f32 0.0, %v2361
    %v2363 = vpop.f32.mrf.mxu0
    %2364 = vmatprep.mubr.f32.mxu0 0.0
    %2365 = vmatmul.mubr.f32.gmra.mxu0 %v50
    %v2366 = vpop.f32.mrf.mxu0
    %v2367 = vadd.f32 0.0, %v2366
    %v2368 = vpop.f32.mrf.mxu0
    %2369 = vmatprep.mubr.f32.mxu0 0.0
    %2370 = vmatmul.mubr.f32.gmra.mxu0 %v53
    %v2371 = vpop.f32.mrf.mxu0
    %v2372 = vadd.f32 0.0, %v2371
    %v2373 = vpop.f32.mrf.mxu0
    %2374 = vdwg.mxu0
    %v2375 = vmul.f32 %v2357, 2.0
    %v2376 = vmul.f32 %v2362, 2.0
    %v2377 = vmul.f32 %v2367, 2.0
    %v2378 = vmul.f32 %v2372, 2.0
    %v2379 = vsub.f32 %v2375, %v1493
    %v2380 = vsub.f32 %v2376, %v1494
    %v2381 = vsub.f32 %v2377, %v1493
    %v2382 = vsub.f32 %v2378, %v1494
    %2385 = vrot.lane.b32.xlu0 %v2272, 32
    %v2386 = vpop.permute.xlu0 %2385
    %2387 = vrot.lane.b32.xlu0 %v2277, 32
    %v2388 = vpop.permute.xlu0 %2387
    %2393 = vrot.lane.b32.xlu0 %v2379, 64
    %v2394 = vpop.permute.xlu0 %2393
    %2395 = vrot.lane.b32.xlu0 %v2380, 64
    %v2396 = vpop.permute.xlu0 %2395
    %2401 = vrot.lane.b32.xlu0 %v2282, 96
    %v2402 = vpop.permute.xlu0 %2401
    %2403 = vrot.lane.b32.xlu0 %v2287, 96
    %v2404 = vpop.permute.xlu0 %2403
    %v2407 = vsel %vm42, %v1493, %v2386
    %v2408 = vsel %vm42, %v1494, %v2388
    %v2409 = vsel %vm255, %v2407, %v2394
    %v2410 = vsel %vm255, %v2408, %v2396
    %v2411 = vsel %vm258, %v2409, %v2402
    %v2412 = vsel %vm258, %v2410, %v2404
    %v2414 = vsel %vm42, %v2381, 0
    %v2417 = vsel %vm42, %v2382, 0
    %2419 = vmatprep.subr.mxu0 0.0
    %2420 = vmatpush1.msra.mxu0 %v1054
    %2421 = vmatprep.subr.mxu0 0.0
    %2422 = vmatpush1.msra.mxu0 %v1053
    %2423 = vmatprep.subr.mxu0 0.0
    %2424 = vmatpush1.msra.mxu0 %v1052
    %2425 = vmatprep.subr.mxu0 0.0
    %2426 = vmatpush1.msra.mxu0 %v1051
    %2427 = vmatprep.subr.mxu0 0.0
    %2428 = vmatpush1.msra.mxu0 %v1050
    %2429 = vmatprep.subr.mxu0 0.0
    %2430 = vmatpush1.msra.mxu0 %v1049
    %2431 = vmatprep.subr.mxu0 0.0
    %2432 = vmatpush1.msra.mxu0 %v1048
    %2433 = vmatprep.subr.mxu0 0.0
    %2434 = vmatpush1.msra.mxu0 %v1047
    %2435 = vmatprep.subr.mxu0 0.0
    %2436 = vmatpush1.msra.mxu0 %v1046
    %2437 = vmatprep.subr.mxu0 0.0
    %2438 = vmatpush1.msra.mxu0 %v1045
    %2439 = vmatprep.subr.mxu0 0.0
    %2440 = vmatpush1.msra.mxu0 %v1044
    %2441 = vmatprep.subr.mxu0 0.0
    %2442 = vmatpush1.msra.mxu0 %v1043
    %2443 = vmatprep.subr.mxu0 0.0
    %2444 = vmatpush1.msra.mxu0 %v1042
    %2445 = vmatprep.subr.mxu0 0.0
    %2446 = vmatpush1.msra.mxu0 %v1041
    %2447 = vmatprep.subr.mxu0 0.0
    %2448 = vmatpush1.msra.mxu0 %v1040
    %2449 = vmatprep.subr.mxu0 0.0
    %2450 = vmatpush1.msra.mxu0 %v1039
    %2451 = vmatprep.subr.mxu0 0.0
    %2452 = vmatpush2.msra.mxu0 0.0
    %2453 = vmatprep.subr.mxu0 0.0
    %2454 = vmatpush2.msra.mxu0 0.0
    %2455 = vmatprep.subr.mxu0 0.0
    %2456 = vmatpush2.msra.mxu0 0.0
    %2457 = vmatprep.subr.mxu0 0.0
    %2458 = vmatpush2.msra.mxu0 0.0
    %2459 = vmatprep.subr.mxu0 0.0
    %2460 = vmatpush2.msra.mxu0 0.0
    %2461 = vmatprep.subr.mxu0 0.0
    %2462 = vmatpush2.msra.mxu0 0.0
    %2463 = vmatprep.subr.mxu0 0.0
    %2464 = vmatpush2.msra.mxu0 0.0
    %2465 = vmatprep.subr.mxu0 0.0
    %2466 = vmatpush2.msra.mxu0 0.0
    %2467 = vmatprep.subr.mxu0 0.0
    %2468 = vmatpush2.msra.mxu0 0.0
    %2469 = vmatprep.subr.mxu0 0.0
    %2470 = vmatpush2.msra.mxu0 0.0
    %2471 = vmatprep.subr.mxu0 0.0
    %2472 = vmatpush2.msra.mxu0 0.0
    %2473 = vmatprep.subr.mxu0 0.0
    %2474 = vmatpush2.msra.mxu0 0.0
    %2475 = vmatprep.subr.mxu0 0.0
    %2476 = vmatpush2.msra.mxu0 %v1058
    %2477 = vmatprep.subr.mxu0 0.0
    %2478 = vmatpush2.msra.mxu0 %v1057
    %2479 = vmatprep.subr.mxu0 0.0
    %2480 = vmatpush2.msra.mxu0 %v1056
    %2481 = vmatprep.subr.mxu0 0.0
    %2482 = vmatpush2.msra.mxu0 %v1055
    %2483 = vmatprep.mubr.f32.mxu0 %v2414
    %2484 = vmatmul.mubr.f32.gmra.mxu0 %v2411
    %v2485 = vpop.f32.mrf.mxu0
    %v2486 = vadd.f32 0.0, %v2485
    %v2487 = vpop.f32.mrf.mxu0
    %2488 = vmatprep.mubr.f32.mxu0 %v2417
    %2489 = vmatmul.mubr.f32.gmra.mxu0 %v2412
    %v2490 = vpop.f32.mrf.mxu0
    %v2491 = vadd.f32 0.0, %v2490
    %v2492 = vpop.f32.mrf.mxu0
    %2493 = vdwg.mxu0
    %v2494 = vadd.f32 %v2197, %v2486
    %v2495 = vadd.f32 %v2202, %v2491
    %v2496 = vxor.u32 %v2494, 2147483648
    %v2497 = vxor.u32 %v2495, 2147483648
    %v2498 = vmul.f32 %v2496, 1.442695
    %v2499 = vpow.pop %v2498
    %v2500 = vmul.f32 %v2497, 1.442695
    %v2501 = vpow.pop %v2500
    %v2502 = vadd.f32 %v2499, 1.0
    %v2503 = vadd.f32 %v2501, 1.0
    %v2504 = vrcp.pop %v2502
    %v2505 = vmul.f32 1.0, %v2504
    %v2506 = vrcp.pop %v2503
    %v2507 = vmul.f32 1.0, %v2506
    %2510 = vrot.lane.b32.xlu0 %v2505, 96
    %v2511 = vpop.permute.xlu0 %2510
    %2512 = vrot.lane.b32.xlu0 %v2507, 96
    %v2513 = vpop.permute.xlu0 %2512
    %v2516 = vmul.f32 %v1493, %v2511
    %v2517 = vmul.f32 %v1494, %v2513
    %2518 = vmatprep.subr.mxu0 0.0
    %2519 = vmatpush1.msra.mxu0 0.0
    %2520 = vmatprep.subr.mxu0 0.0
    %2521 = vmatpush1.msra.mxu0 0.0
    %2522 = vmatprep.subr.mxu0 0.0
    %2523 = vmatpush1.msra.mxu0 0.0
    %2524 = vmatprep.subr.mxu0 0.0
    %2525 = vmatpush1.msra.mxu0 0.0
    %2526 = vmatprep.subr.mxu0 0.0
    %2527 = vmatpush1.msra.mxu0 0.0
    %2528 = vmatprep.subr.mxu0 0.0
    %2529 = vmatpush1.msra.mxu0 0.0
    %2530 = vmatprep.subr.mxu0 0.0
    %2531 = vmatpush1.msra.mxu0 0.0
    %2532 = vmatprep.subr.mxu0 0.0
    %2533 = vmatpush1.msra.mxu0 0.0
    %2534 = vmatprep.subr.mxu0 0.0
    %2535 = vmatpush1.msra.mxu0 0.0
    %2536 = vmatprep.subr.mxu0 0.0
    %2537 = vmatpush1.msra.mxu0 0.0
    %2538 = vmatprep.subr.mxu0 0.0
    %2539 = vmatpush1.msra.mxu0 0.0
    %2540 = vmatprep.subr.mxu0 0.0
    %2541 = vmatpush1.msra.mxu0 0.0
    %2542 = vmatprep.subr.mxu0 0.0
    %2543 = vmatpush1.msra.mxu0 %v2517
    %2544 = vmatprep.subr.mxu0 0.0
    %2545 = vmatpush1.msra.mxu0 %v2516
    %2546 = vmatprep.subr.mxu0 0.0
    %2547 = vmatpush1.msra.mxu0 %v2517
    %2548 = vmatprep.subr.mxu0 0.0
    %2549 = vmatpush1.msra.mxu0 %v2516
    %2550 = vmatprep.subr.mxu0 0.0
    %2551 = vmatpush2.msra.mxu0 0.0
    %2552 = vmatprep.subr.mxu0 0.0
    %2553 = vmatpush2.msra.mxu0 0.0
    %2554 = vmatprep.subr.mxu0 0.0
    %2555 = vmatpush2.msra.mxu0 0.0
    %2556 = vmatprep.subr.mxu0 0.0
    %2557 = vmatpush2.msra.mxu0 0.0
    %2558 = vmatprep.subr.mxu0 0.0
    %2559 = vmatpush2.msra.mxu0 0.0
    %2560 = vmatprep.subr.mxu0 0.0
    %2561 = vmatpush2.msra.mxu0 0.0
    %2562 = vmatprep.subr.mxu0 0.0
    %2563 = vmatpush2.msra.mxu0 0.0
    %2564 = vmatprep.subr.mxu0 0.0
    %2565 = vmatpush2.msra.mxu0 0.0
    %2566 = vmatprep.subr.mxu0 0.0
    %2567 = vmatpush2.msra.mxu0 0.0
    %2568 = vmatprep.subr.mxu0 0.0
    %2569 = vmatpush2.msra.mxu0 0.0
    %2570 = vmatprep.subr.mxu0 0.0
    %2571 = vmatpush2.msra.mxu0 0.0
    %2572 = vmatprep.subr.mxu0 0.0
    %2573 = vmatpush2.msra.mxu0 0.0
    %2574 = vmatprep.subr.mxu0 0.0
    %2575 = vmatpush2.msra.mxu0 0.0
    %2576 = vmatprep.subr.mxu0 0.0
    %2577 = vmatpush2.msra.mxu0 0.0
    %2578 = vmatprep.subr.mxu0 0.0
    %2579 = vmatpush2.msra.mxu0 0.0
    %2580 = vmatprep.subr.mxu0 0.0
    %2581 = vmatpush2.msra.mxu0 0.0
    %2582 = vmatprep.mubr.f32.mxu0 0.0
    %2583 = vmatmul.mubr.f32.gmra.mxu0 %v44
    %v2584 = vpop.f32.mrf.mxu0
    %v2585 = vadd.f32 0.0, %v2584
    %v2586 = vpop.f32.mrf.mxu0
    %2587 = vmatprep.mubr.f32.mxu0 0.0
    %2588 = vmatmul.mubr.f32.gmra.mxu0 %v47
    %v2589 = vpop.f32.mrf.mxu0
    %v2590 = vadd.f32 0.0, %v2589
    %v2591 = vpop.f32.mrf.mxu0
    %2592 = vmatprep.mubr.f32.mxu0 0.0
    %2593 = vmatmul.mubr.f32.gmra.mxu0 %v50
    %v2594 = vpop.f32.mrf.mxu0
    %v2595 = vadd.f32 0.0, %v2594
    %v2596 = vpop.f32.mrf.mxu0
    %2597 = vmatprep.mubr.f32.mxu0 0.0
    %2598 = vmatmul.mubr.f32.gmra.mxu0 %v53
    %v2599 = vpop.f32.mrf.mxu0
    %v2600 = vadd.f32 0.0, %v2599
    %v2601 = vpop.f32.mrf.mxu0
    %2602 = vdwg.mxu0
    %2603 = vmatprep.subr.mxu0 0.0
    %2604 = vmatpush1.msra.mxu0 0.0
    %2605 = vmatprep.subr.mxu0 0.0
    %2606 = vmatpush1.msra.mxu0 0.0
    %2607 = vmatprep.subr.mxu0 0.0
    %2608 = vmatpush1.msra.mxu0 0.0
    %2609 = vmatprep.subr.mxu0 0.0
    %2610 = vmatpush1.msra.mxu0 0.0
    %2611 = vmatprep.subr.mxu0 0.0
    %2612 = vmatpush1.msra.mxu0 0.0
    %2613 = vmatprep.subr.mxu0 0.0
    %2614 = vmatpush1.msra.mxu0 0.0
    %2615 = vmatprep.subr.mxu0 0.0
    %2616 = vmatpush1.msra.mxu0 0.0
    %2617 = vmatprep.subr.mxu0 0.0
    %2618 = vmatpush1.msra.mxu0 0.0
    %2619 = vmatprep.subr.mxu0 0.0
    %2620 = vmatpush1.msra.mxu0 0.0
    %2621 = vmatprep.subr.mxu0 0.0
    %2622 = vmatpush1.msra.mxu0 0.0
    %2623 = vmatprep.subr.mxu0 0.0
    %2624 = vmatpush1.msra.mxu0 0.0
    %2625 = vmatprep.subr.mxu0 0.0
    %2626 = vmatpush1.msra.mxu0 0.0
    %2627 = vmatprep.subr.mxu0 0.0
    %2628 = vmatpush1.msra.mxu0 %v2600
    %2629 = vmatprep.subr.mxu0 0.0
    %2630 = vmatpush1.msra.mxu0 %v2595
    %2631 = vmatprep.subr.mxu0 0.0
    %2632 = vmatpush1.msra.mxu0 %v2590
    %2633 = vmatprep.subr.mxu0 0.0
    %2634 = vmatpush1.msra.mxu0 %v2585
    %2635 = vmatprep.subr.mxu0 0.0
    %2636 = vmatpush2.msra.mxu0 0.0
    %2637 = vmatprep.subr.mxu0 0.0
    %2638 = vmatpush2.msra.mxu0 0.0
    %2639 = vmatprep.subr.mxu0 0.0
    %2640 = vmatpush2.msra.mxu0 0.0
    %2641 = vmatprep.subr.mxu0 0.0
    %2642 = vmatpush2.msra.mxu0 0.0
    %2643 = vmatprep.subr.mxu0 0.0
    %2644 = vmatpush2.msra.mxu0 0.0
    %2645 = vmatprep.subr.mxu0 0.0
    %2646 = vmatpush2.msra.mxu0 0.0
    %2647 = vmatprep.subr.mxu0 0.0
    %2648 = vmatpush2.msra.mxu0 0.0
    %2649 = vmatprep.subr.mxu0 0.0
    %2650 = vmatpush2.msra.mxu0 0.0
    %2651 = vmatprep.subr.mxu0 0.0
    %2652 = vmatpush2.msra.mxu0 0.0
    %2653 = vmatprep.subr.mxu0 0.0
    %2654 = vmatpush2.msra.mxu0 0.0
    %2655 = vmatprep.subr.mxu0 0.0
    %2656 = vmatpush2.msra.mxu0 0.0
    %2657 = vmatprep.subr.mxu0 0.0
    %2658 = vmatpush2.msra.mxu0 0.0
    %2659 = vmatprep.subr.mxu0 0.0
    %2660 = vmatpush2.msra.mxu0 0.0
    %2661 = vmatprep.subr.mxu0 0.0
    %2662 = vmatpush2.msra.mxu0 0.0
    %2663 = vmatprep.subr.mxu0 0.0
    %2664 = vmatpush2.msra.mxu0 0.0
    %2665 = vmatprep.subr.mxu0 0.0
    %2666 = vmatpush2.msra.mxu0 0.0
    %2667 = vmatprep.mubr.f32.mxu0 0.0
    %2668 = vmatmul.mubr.f32.gmra.mxu0 %v44
    %v2669 = vpop.f32.mrf.mxu0
    %v2670 = vadd.f32 0.0, %v2669
    %v2671 = vpop.f32.mrf.mxu0
    %2672 = vmatprep.mubr.f32.mxu0 0.0
    %2673 = vmatmul.mubr.f32.gmra.mxu0 %v47
    %v2674 = vpop.f32.mrf.mxu0
    %v2675 = vadd.f32 0.0, %v2674
    %v2676 = vpop.f32.mrf.mxu0
    %2677 = vmatprep.mubr.f32.mxu0 0.0
    %2678 = vmatmul.mubr.f32.gmra.mxu0 %v50
    %v2679 = vpop.f32.mrf.mxu0
    %v2680 = vadd.f32 0.0, %v2679
    %v2681 = vpop.f32.mrf.mxu0
    %2682 = vmatprep.mubr.f32.mxu0 0.0
    %2683 = vmatmul.mubr.f32.gmra.mxu0 %v53
    %v2684 = vpop.f32.mrf.mxu0
    %v2685 = vadd.f32 0.0, %v2684
    %v2686 = vpop.f32.mrf.mxu0
    %2687 = vdwg.mxu0
    %v2688 = vmul.f32 %v2670, 2.0
    %v2689 = vmul.f32 %v2675, 2.0
    %v2690 = vmul.f32 %v2680, 2.0
    %v2691 = vmul.f32 %v2685, 2.0
    %v2692 = vsub.f32 %v2688, %v2516
    %v2693 = vsub.f32 %v2689, %v2517
    %v2694 = vsub.f32 %v2690, %v2516
    %v2695 = vsub.f32 %v2691, %v2517
    %2698 = vrot.lane.b32.xlu0 %v2585, 32
    %v2699 = vpop.permute.xlu0 %2698
    %2700 = vrot.lane.b32.xlu0 %v2590, 32
    %v2701 = vpop.permute.xlu0 %2700
    %2706 = vrot.lane.b32.xlu0 %v2692, 64
    %v2707 = vpop.permute.xlu0 %2706
    %2708 = vrot.lane.b32.xlu0 %v2693, 64
    %v2709 = vpop.permute.xlu0 %2708
    %2714 = vrot.lane.b32.xlu0 %v2595, 96
    %v2715 = vpop.permute.xlu0 %2714
    %2716 = vrot.lane.b32.xlu0 %v2600, 96
    %v2717 = vpop.permute.xlu0 %2716
    %v2720 = vsel %vm42, %v2516, %v2699
    %v2721 = vsel %vm42, %v2517, %v2701
    %v2722 = vsel %vm255, %v2720, %v2707
    %v2723 = vsel %vm255, %v2721, %v2709
    %v2724 = vsel %vm258, %v2722, %v2715
    %v2725 = vsel %vm258, %v2723, %v2717
    %v2727 = vsel %vm42, %v2694, 0
    %v2730 = vsel %vm42, %v2695, 0
    %2732 = vmatprep.subr.mxu0 0.0
    %2733 = vmatpush1.msra.mxu0 %v1381
    %2734 = vmatprep.subr.mxu0 0.0
    %2735 = vmatpush1.msra.mxu0 %v1380
    %2736 = vmatprep.subr.mxu0 0.0
    %2737 = vmatpush1.msra.mxu0 %v1379
    %2738 = vmatprep.subr.mxu0 0.0
    %2739 = vmatpush1.msra.mxu0 %v1378
    %2740 = vmatprep.subr.mxu0 0.0
    %2741 = vmatpush1.msra.mxu0 %v1377
    %2742 = vmatprep.subr.mxu0 0.0
    %2743 = vmatpush1.msra.mxu0 %v1376
    %2744 = vmatprep.subr.mxu0 0.0
    %2745 = vmatpush1.msra.mxu0 %v1375
    %2746 = vmatprep.subr.mxu0 0.0
    %2747 = vmatpush1.msra.mxu0 %v1374
    %2748 = vmatprep.subr.mxu0 0.0
    %2749 = vmatpush1.msra.mxu0 %v1373
    %2750 = vmatprep.subr.mxu0 0.0
    %2751 = vmatpush1.msra.mxu0 %v1372
    %2752 = vmatprep.subr.mxu0 0.0
    %2753 = vmatpush1.msra.mxu0 %v1371
    %2754 = vmatprep.subr.mxu0 0.0
    %2755 = vmatpush1.msra.mxu0 %v1370
    %2756 = vmatprep.subr.mxu0 0.0
    %2757 = vmatpush1.msra.mxu0 %v1369
    %2758 = vmatprep.subr.mxu0 0.0
    %2759 = vmatpush1.msra.mxu0 %v1368
    %2760 = vmatprep.subr.mxu0 0.0
    %2761 = vmatpush1.msra.mxu0 %v1367
    %2762 = vmatprep.subr.mxu0 0.0
    %2763 = vmatpush1.msra.mxu0 %v1366
    %2764 = vmatprep.subr.mxu0 0.0
    %2765 = vmatpush2.msra.mxu0 0.0
    %2766 = vmatprep.subr.mxu0 0.0
    %2767 = vmatpush2.msra.mxu0 0.0
    %2768 = vmatprep.subr.mxu0 0.0
    %2769 = vmatpush2.msra.mxu0 0.0
    %2770 = vmatprep.subr.mxu0 0.0
    %2771 = vmatpush2.msra.mxu0 0.0
    %2772 = vmatprep.subr.mxu0 0.0
    %2773 = vmatpush2.msra.mxu0 0.0
    %2774 = vmatprep.subr.mxu0 0.0
    %2775 = vmatpush2.msra.mxu0 0.0
    %2776 = vmatprep.subr.mxu0 0.0
    %2777 = vmatpush2.msra.mxu0 0.0
    %2778 = vmatprep.subr.mxu0 0.0
    %2779 = vmatpush2.msra.mxu0 0.0
    %2780 = vmatprep.subr.mxu0 0.0
    %2781 = vmatpush2.msra.mxu0 0.0
    %2782 = vmatprep.subr.mxu0 0.0
    %2783 = vmatpush2.msra.mxu0 0.0
    %2784 = vmatprep.subr.mxu0 0.0
    %2785 = vmatpush2.msra.mxu0 0.0
    %2786 = vmatprep.subr.mxu0 0.0
    %2787 = vmatpush2.msra.mxu0 0.0
    %2788 = vmatprep.subr.mxu0 0.0
    %2789 = vmatpush2.msra.mxu0 %v1385
    %2790 = vmatprep.subr.mxu0 0.0
    %2791 = vmatpush2.msra.mxu0 %v1384
    %2792 = vmatprep.subr.mxu0 0.0
    %2793 = vmatpush2.msra.mxu0 %v1383
    %2794 = vmatprep.subr.mxu0 0.0
    %2795 = vmatpush2.msra.mxu0 %v1382
    %2796 = vmatprep.mubr.f32.mxu0 %v2727
    %2797 = vmatmul.mubr.f32.gmra.mxu0 %v2724
    %v2798 = vpop.f32.mrf.mxu0
    %v2799 = vadd.f32 0.0, %v2798
    %v2800 = vpop.f32.mrf.mxu0
    %2801 = vmatprep.mubr.f32.mxu0 %v2730
    %2802 = vmatmul.mubr.f32.gmra.mxu0 %v2725
    %v2803 = vpop.f32.mrf.mxu0
    %v2804 = vadd.f32 0.0, %v2803
    %v2805 = vpop.f32.mrf.mxu0
    %2806 = vdwg.mxu0
    %2809 = vrot.lane.b32.xlu0 %v2799, 64
    %v2810 = vpop.permute.xlu0 %2809
    %2811 = vrot.lane.b32.xlu0 %v2804, 64
    %v2812 = vpop.permute.xlu0 %2811
    %v2815 = vadd.f32 %v2197, %v2810
    %v2816 = vadd.f32 %v2202, %v2812
    %v2817 = vtanh.pop %v2815
    %v2818 = vtanh.pop %v2816
    %v2819 = vmul.f32 %v2505, %v1493
    %v2820 = vmul.f32 %v2507, %v1494
    %v2821 = vsub.f32 1.0, %v2505
    %v2822 = vsub.f32 1.0, %v2507
    %2825 = vrot.lane.b32.xlu0 %v2817, 64
    %v2826 = vpop.permute.xlu0 %2825
    %2827 = vrot.lane.b32.xlu0 %v2818, 64
    %v2828 = vpop.permute.xlu0 %2827
    %v2831 = vmul.f32 %v2821, %v2826
    %v2832 = vmul.f32 %v2822, %v2828
    %v2833 = vadd.f32 %v2819, %v2831
    %v2834 = vadd.f32 %v2820, %v2832
    %v2835 = vmax.f32 %v2833, 0.0
    %v2836 = vmax.f32 %v2834, 0.0
    %s2837 = scalar_lea.vmem %s0, 32
    %v2838 = vld [vmem:[%s2837] sm:$0xff]
    %v2839 = vld [vmem:[%s2837 + $0x8] sm:$0xff]
    %2840 = vmatprep.subr.mxu0 0.0
    %2841 = vmatpush1.msra.mxu0 %v276
    %2842 = vmatprep.subr.mxu0 0.0
    %2843 = vmatpush1.msra.mxu0 %v275
    %2844 = vmatprep.subr.mxu0 0.0
    %2845 = vmatpush1.msra.mxu0 %v274
    %2846 = vmatprep.subr.mxu0 0.0
    %2847 = vmatpush1.msra.mxu0 %v273
    %2848 = vmatprep.subr.mxu0 0.0
    %2849 = vmatpush1.msra.mxu0 %v272
    %2850 = vmatprep.subr.mxu0 0.0
    %2851 = vmatpush1.msra.mxu0 %v271
    %2852 = vmatprep.subr.mxu0 0.0
    %2853 = vmatpush1.msra.mxu0 %v270
    %2854 = vmatprep.subr.mxu0 0.0
    %2855 = vmatpush1.msra.mxu0 %v269
    %2856 = vmatprep.subr.mxu0 0.0
    %2857 = vmatpush1.msra.mxu0 %v268
    %2858 = vmatprep.subr.mxu0 0.0
    %2859 = vmatpush1.msra.mxu0 %v267
    %2860 = vmatprep.subr.mxu0 0.0
    %2861 = vmatpush1.msra.mxu0 %v266
    %2862 = vmatprep.subr.mxu0 0.0
    %2863 = vmatpush1.msra.mxu0 %v265
    %2864 = vmatprep.subr.mxu0 0.0
    %2865 = vmatpush1.msra.mxu0 %v264
    %2866 = vmatprep.subr.mxu0 0.0
    %2867 = vmatpush1.msra.mxu0 %v263
    %2868 = vmatprep.subr.mxu0 0.0
    %2869 = vmatpush1.msra.mxu0 %v262
    %2870 = vmatprep.subr.mxu0 0.0
    %2871 = vmatpush1.msra.mxu0 %v261
    %2872 = vmatprep.subr.mxu0 0.0
    %2873 = vmatpush2.msra.mxu0 0.0
    %2874 = vmatprep.subr.mxu0 0.0
    %2875 = vmatpush2.msra.mxu0 0.0
    %2876 = vmatprep.subr.mxu0 0.0
    %2877 = vmatpush2.msra.mxu0 0.0
    %2878 = vmatprep.subr.mxu0 0.0
    %2879 = vmatpush2.msra.mxu0 0.0
    %2880 = vmatprep.subr.mxu0 0.0
    %2881 = vmatpush2.msra.mxu0 0.0
    %2882 = vmatprep.subr.mxu0 0.0
    %2883 = vmatpush2.msra.mxu0 0.0
    %2884 = vmatprep.subr.mxu0 0.0
    %2885 = vmatpush2.msra.mxu0 0.0
    %2886 = vmatprep.subr.mxu0 0.0
    %2887 = vmatpush2.msra.mxu0 0.0
    %2888 = vmatprep.subr.mxu0 0.0
    %2889 = vmatpush2.msra.mxu0 0.0
    %2890 = vmatprep.subr.mxu0 0.0
    %2891 = vmatpush2.msra.mxu0 0.0
    %2892 = vmatprep.subr.mxu0 0.0
    %2893 = vmatpush2.msra.mxu0 0.0
    %2894 = vmatprep.subr.mxu0 0.0
    %2895 = vmatpush2.msra.mxu0 0.0
    %2896 = vmatprep.subr.mxu0 0.0
    %2897 = vmatpush2.msra.mxu0 %v280
    %2898 = vmatprep.subr.mxu0 0.0
    %2899 = vmatpush2.msra.mxu0 %v279
    %2900 = vmatprep.subr.mxu0 0.0
    %2901 = vmatpush2.msra.mxu0 %v278
    %2902 = vmatprep.subr.mxu0 0.0
    %2903 = vmatpush2.msra.mxu0 %v277
    %2904 = vmatprep.mubr.f32.mxu0 %v2125
    %2905 = vmatmul.mubr.f32.gmra.mxu0 %v2122
    %v2906 = vpop.f32.mrf.mxu0
    %v2907 = vadd.f32 0.0, %v2906
    %v2908 = vpop.f32.mrf.mxu0
    %2909 = vmatprep.mubr.f32.mxu0 %v2128
    %2910 = vmatmul.mubr.f32.gmra.mxu0 %v2123
    %v2911 = vpop.f32.mrf.mxu0
    %v2912 = vadd.f32 0.0, %v2911
    %v2913 = vpop.f32.mrf.mxu0
    %2914 = vdwg.mxu0
    %v2915 = vadd.f32 %v2838, %v2907
    %v2916 = vadd.f32 %v2839, %v2912
    %v2917 = vxor.u32 %v2915, 2147483648
    %v2918 = vxor.u32 %v2916, 2147483648
    %v2919 = vmul.f32 %v2917, 1.442695
    %v2920 = vpow.pop %v2919
    %v2921 = vmul.f32 %v2918, 1.442695
    %v2922 = vpow.pop %v2921
    %v2923 = vadd.f32 %v2920, 1.0
    %v2924 = vadd.f32 %v2922, 1.0
    %v2925 = vrcp.pop %v2923
    %v2926 = vmul.f32 1.0, %v2925
    %v2927 = vrcp.pop %v2924
    %v2928 = vmul.f32 1.0, %v2927
    %2931 = vrot.lane.b32.xlu0 %v2926, 96
    %v2932 = vpop.permute.xlu0 %2931
    %2933 = vrot.lane.b32.xlu0 %v2928, 96
    %v2934 = vpop.permute.xlu0 %2933
    %v2937 = vmul.f32 %v1914, %v2932
    %v2938 = vmul.f32 %v1915, %v2934
    %2939 = vmatprep.subr.mxu0 0.0
    %2940 = vmatpush1.msra.mxu0 0.0
    %2941 = vmatprep.subr.mxu0 0.0
    %2942 = vmatpush1.msra.mxu0 0.0
    %2943 = vmatprep.subr.mxu0 0.0
    %2944 = vmatpush1.msra.mxu0 0.0
    %2945 = vmatprep.subr.mxu0 0.0
    %2946 = vmatpush1.msra.mxu0 0.0
    %2947 = vmatprep.subr.mxu0 0.0
    %2948 = vmatpush1.msra.mxu0 0.0
    %2949 = vmatprep.subr.mxu0 0.0
    %2950 = vmatpush1.msra.mxu0 0.0
    %2951 = vmatprep.subr.mxu0 0.0
    %2952 = vmatpush1.msra.mxu0 0.0
    %2953 = vmatprep.subr.mxu0 0.0
    %2954 = vmatpush1.msra.mxu0 0.0
    %2955 = vmatprep.subr.mxu0 0.0
    %2956 = vmatpush1.msra.mxu0 0.0
    %2957 = vmatprep.subr.mxu0 0.0
    %2958 = vmatpush1.msra.mxu0 0.0
    %2959 = vmatprep.subr.mxu0 0.0
    %2960 = vmatpush1.msra.mxu0 0.0
    %2961 = vmatprep.subr.mxu0 0.0
    %2962 = vmatpush1.msra.mxu0 0.0
    %2963 = vmatprep.subr.mxu0 0.0
    %2964 = vmatpush1.msra.mxu0 %v2938
    %2965 = vmatprep.subr.mxu0 0.0
    %2966 = vmatpush1.msra.mxu0 %v2937
    %2967 = vmatprep.subr.mxu0 0.0
    %2968 = vmatpush1.msra.mxu0 %v2938
    %2969 = vmatprep.subr.mxu0 0.0
    %2970 = vmatpush1.msra.mxu0 %v2937
    %2971 = vmatprep.subr.mxu0 0.0
    %2972 = vmatpush2.msra.mxu0 0.0
    %2973 = vmatprep.subr.mxu0 0.0
    %2974 = vmatpush2.msra.mxu0 0.0
    %2975 = vmatprep.subr.mxu0 0.0
    %2976 = vmatpush2.msra.mxu0 0.0
    %2977 = vmatprep.subr.mxu0 0.0
    %2978 = vmatpush2.msra.mxu0 0.0
    %2979 = vmatprep.subr.mxu0 0.0
    %2980 = vmatpush2.msra.mxu0 0.0
    %2981 = vmatprep.subr.mxu0 0.0
    %2982 = vmatpush2.msra.mxu0 0.0
    %2983 = vmatprep.subr.mxu0 0.0
    %2984 = vmatpush2.msra.mxu0 0.0
    %2985 = vmatprep.subr.mxu0 0.0
    %2986 = vmatpush2.msra.mxu0 0.0
    %2987 = vmatprep.subr.mxu0 0.0
    %2988 = vmatpush2.msra.mxu0 0.0
    %2989 = vmatprep.subr.mxu0 0.0
    %2990 = vmatpush2.msra.mxu0 0.0
    %2991 = vmatprep.subr.mxu0 0.0
    %2992 = vmatpush2.msra.mxu0 0.0
    %2993 = vmatprep.subr.mxu0 0.0
    %2994 = vmatpush2.msra.mxu0 0.0
    %2995 = vmatprep.subr.mxu0 0.0
    %2996 = vmatpush2.msra.mxu0 0.0
    %2997 = vmatprep.subr.mxu0 0.0
    %2998 = vmatpush2.msra.mxu0 0.0
    %2999 = vmatprep.subr.mxu0 0.0
    %3000 = vmatpush2.msra.mxu0 0.0
    %3001 = vmatprep.subr.mxu0 0.0
    %3002 = vmatpush2.msra.mxu0 0.0
    %3003 = vmatprep.mubr.f32.mxu0 0.0
    %3004 = vmatmul.mubr.f32.gmra.mxu0 %v44
    %v3005 = vpop.f32.mrf.mxu0
    %v3006 = vadd.f32 0.0, %v3005
    %v3007 = vpop.f32.mrf.mxu0
    %3008 = vmatprep.mubr.f32.mxu0 0.0
    %3009 = vmatmul.mubr.f32.gmra.mxu0 %v47
    %v3010 = vpop.f32.mrf.mxu0
    %v3011 = vadd.f32 0.0, %v3010
    %v3012 = vpop.f32.mrf.mxu0
    %3013 = vmatprep.mubr.f32.mxu0 0.0
    %3014 = vmatmul.mubr.f32.gmra.mxu0 %v50
    %v3015 = vpop.f32.mrf.mxu0
    %v3016 = vadd.f32 0.0, %v3015
    %v3017 = vpop.f32.mrf.mxu0
    %3018 = vmatprep.mubr.f32.mxu0 0.0
    %3019 = vmatmul.mubr.f32.gmra.mxu0 %v53
    %v3020 = vpop.f32.mrf.mxu0
    %v3021 = vadd.f32 0.0, %v3020
    %v3022 = vpop.f32.mrf.mxu0
    %3023 = vdwg.mxu0
    %3024 = vmatprep.subr.mxu0 0.0
    %3025 = vmatpush1.msra.mxu0 0.0
    %3026 = vmatprep.subr.mxu0 0.0
    %3027 = vmatpush1.msra.mxu0 0.0
    %3028 = vmatprep.subr.mxu0 0.0
    %3029 = vmatpush1.msra.mxu0 0.0
    %3030 = vmatprep.subr.mxu0 0.0
    %3031 = vmatpush1.msra.mxu0 0.0
    %3032 = vmatprep.subr.mxu0 0.0
    %3033 = vmatpush1.msra.mxu0 0.0
    %3034 = vmatprep.subr.mxu0 0.0
    %3035 = vmatpush1.msra.mxu0 0.0
    %3036 = vmatprep.subr.mxu0 0.0
    %3037 = vmatpush1.msra.mxu0 0.0
    %3038 = vmatprep.subr.mxu0 0.0
    %3039 = vmatpush1.msra.mxu0 0.0
    %3040 = vmatprep.subr.mxu0 0.0
    %3041 = vmatpush1.msra.mxu0 0.0
    %3042 = vmatprep.subr.mxu0 0.0
    %3043 = vmatpush1.msra.mxu0 0.0
    %3044 = vmatprep.subr.mxu0 0.0
    %3045 = vmatpush1.msra.mxu0 0.0
    %3046 = vmatprep.subr.mxu0 0.0
    %3047 = vmatpush1.msra.mxu0 0.0
    %3048 = vmatprep.subr.mxu0 0.0
    %3049 = vmatpush1.msra.mxu0 %v3021
    %3050 = vmatprep.subr.mxu0 0.0
    %3051 = vmatpush1.msra.mxu0 %v3016
    %3052 = vmatprep.subr.mxu0 0.0
    %3053 = vmatpush1.msra.mxu0 %v3011
    %3054 = vmatprep.subr.mxu0 0.0
    %3055 = vmatpush1.msra.mxu0 %v3006
    %3056 = vmatprep.subr.mxu0 0.0
    %3057 = vmatpush2.msra.mxu0 0.0
    %3058 = vmatprep.subr.mxu0 0.0
    %3059 = vmatpush2.msra.mxu0 0.0
    %3060 = vmatprep.subr.mxu0 0.0
    %3061 = vmatpush2.msra.mxu0 0.0
    %3062 = vmatprep.subr.mxu0 0.0
    %3063 = vmatpush2.msra.mxu0 0.0
    %3064 = vmatprep.subr.mxu0 0.0
    %3065 = vmatpush2.msra.mxu0 0.0
    %3066 = vmatprep.subr.mxu0 0.0
    %3067 = vmatpush2.msra.mxu0 0.0
    %3068 = vmatprep.subr.mxu0 0.0
    %3069 = vmatpush2.msra.mxu0 0.0
    %3070 = vmatprep.subr.mxu0 0.0
    %3071 = vmatpush2.msra.mxu0 0.0
    %3072 = vmatprep.subr.mxu0 0.0
    %3073 = vmatpush2.msra.mxu0 0.0
    %3074 = vmatprep.subr.mxu0 0.0
    %3075 = vmatpush2.msra.mxu0 0.0
    %3076 = vmatprep.subr.mxu0 0.0
    %3077 = vmatpush2.msra.mxu0 0.0
    %3078 = vmatprep.subr.mxu0 0.0
    %3079 = vmatpush2.msra.mxu0 0.0
    %3080 = vmatprep.subr.mxu0 0.0
    %3081 = vmatpush2.msra.mxu0 0.0
    %3082 = vmatprep.subr.mxu0 0.0
    %3083 = vmatpush2.msra.mxu0 0.0
    %3084 = vmatprep.subr.mxu0 0.0
    %3085 = vmatpush2.msra.mxu0 0.0
    %3086 = vmatprep.subr.mxu0 0.0
    %3087 = vmatpush2.msra.mxu0 0.0
    %3088 = vmatprep.mubr.f32.mxu0 0.0
    %3089 = vmatmul.mubr.f32.gmra.mxu0 %v44
    %v3090 = vpop.f32.mrf.mxu0
    %v3091 = vadd.f32 0.0, %v3090
    %v3092 = vpop.f32.mrf.mxu0
    %3093 = vmatprep.mubr.f32.mxu0 0.0
    %3094 = vmatmul.mubr.f32.gmra.mxu0 %v47
    %v3095 = vpop.f32.mrf.mxu0
    %v3096 = vadd.f32 0.0, %v3095
    %v3097 = vpop.f32.mrf.mxu0
    %3098 = vmatprep.mubr.f32.mxu0 0.0
    %3099 = vmatmul.mubr.f32.gmra.mxu0 %v50
    %v3100 = vpop.f32.mrf.mxu0
    %v3101 = vadd.f32 0.0, %v3100
    %v3102 = vpop.f32.mrf.mxu0
    %3103 = vmatprep.mubr.f32.mxu0 0.0
    %3104 = vmatmul.mubr.f32.gmra.mxu0 %v53
    %v3105 = vpop.f32.mrf.mxu0
    %v3106 = vadd.f32 0.0, %v3105
    %v3107 = vpop.f32.mrf.mxu0
    %3108 = vdwg.mxu0
    %v3109 = vmul.f32 %v3091, 2.0
    %v3110 = vmul.f32 %v3096, 2.0
    %v3111 = vmul.f32 %v3101, 2.0
    %v3112 = vmul.f32 %v3106, 2.0
    %v3113 = vsub.f32 %v3109, %v2937
    %v3114 = vsub.f32 %v3110, %v2938
    %v3115 = vsub.f32 %v3111, %v2937
    %v3116 = vsub.f32 %v3112, %v2938
    %3119 = vrot.lane.b32.xlu0 %v3006, 32
    %v3120 = vpop.permute.xlu0 %3119
    %3121 = vrot.lane.b32.xlu0 %v3011, 32
    %v3122 = vpop.permute.xlu0 %3121
    %3127 = vrot.lane.b32.xlu0 %v3113, 64
    %v3128 = vpop.permute.xlu0 %3127
    %3129 = vrot.lane.b32.xlu0 %v3114, 64
    %v3130 = vpop.permute.xlu0 %3129
    %3135 = vrot.lane.b32.xlu0 %v3016, 96
    %v3136 = vpop.permute.xlu0 %3135
    %3137 = vrot.lane.b32.xlu0 %v3021, 96
    %v3138 = vpop.permute.xlu0 %3137
    %v3141 = vsel %vm42, %v2937, %v3120
    %v3142 = vsel %vm42, %v2938, %v3122
    %v3143 = vsel %vm255, %v3141, %v3128
    %v3144 = vsel %vm255, %v3142, %v3130
    %v3145 = vsel %vm258, %v3143, %v3136
    %v3146 = vsel %vm258, %v3144, %v3138
    %v3148 = vsel %vm42, %v3115, 0
    %v3151 = vsel %vm42, %v3116, 0
    %3153 = vmatprep.subr.mxu0 0.0
    %3154 = vmatpush1.msra.mxu0 %v609
    %3155 = vmatprep.subr.mxu0 0.0
    %3156 = vmatpush1.msra.mxu0 %v608
    %3157 = vmatprep.subr.mxu0 0.0
    %3158 = vmatpush1.msra.mxu0 %v607
    %3159 = vmatprep.subr.mxu0 0.0
    %3160 = vmatpush1.msra.mxu0 %v606
    %3161 = vmatprep.subr.mxu0 0.0
    %3162 = vmatpush1.msra.mxu0 %v605
    %3163 = vmatprep.subr.mxu0 0.0
    %3164 = vmatpush1.msra.mxu0 %v604
    %3165 = vmatprep.subr.mxu0 0.0
    %3166 = vmatpush1.msra.mxu0 %v603
    %3167 = vmatprep.subr.mxu0 0.0
    %3168 = vmatpush1.msra.mxu0 %v602
    %3169 = vmatprep.subr.mxu0 0.0
    %3170 = vmatpush1.msra.mxu0 %v601
    %3171 = vmatprep.subr.mxu0 0.0
    %3172 = vmatpush1.msra.mxu0 %v600
    %3173 = vmatprep.subr.mxu0 0.0
    %3174 = vmatpush1.msra.mxu0 %v599
    %3175 = vmatprep.subr.mxu0 0.0
    %3176 = vmatpush1.msra.mxu0 %v598
    %3177 = vmatprep.subr.mxu0 0.0
    %3178 = vmatpush1.msra.mxu0 %v597
    %3179 = vmatprep.subr.mxu0 0.0
    %3180 = vmatpush1.msra.mxu0 %v596
    %3181 = vmatprep.subr.mxu0 0.0
    %3182 = vmatpush1.msra.mxu0 %v595
    %3183 = vmatprep.subr.mxu0 0.0
    %3184 = vmatpush1.msra.mxu0 %v594
    %3185 = vmatprep.subr.mxu0 0.0
    %3186 = vmatpush2.msra.mxu0 0.0
    %3187 = vmatprep.subr.mxu0 0.0
    %3188 = vmatpush2.msra.mxu0 0.0
    %3189 = vmatprep.subr.mxu0 0.0
    %3190 = vmatpush2.msra.mxu0 0.0
    %3191 = vmatprep.subr.mxu0 0.0
    %3192 = vmatpush2.msra.mxu0 0.0
    %3193 = vmatprep.subr.mxu0 0.0
    %3194 = vmatpush2.msra.mxu0 0.0
    %3195 = vmatprep.subr.mxu0 0.0
    %3196 = vmatpush2.msra.mxu0 0.0
    %3197 = vmatprep.subr.mxu0 0.0
    %3198 = vmatpush2.msra.mxu0 0.0
    %3199 = vmatprep.subr.mxu0 0.0
    %3200 = vmatpush2.msra.mxu0 0.0
    %3201 = vmatprep.subr.mxu0 0.0
    %3202 = vmatpush2.msra.mxu0 0.0
    %3203 = vmatprep.subr.mxu0 0.0
    %3204 = vmatpush2.msra.mxu0 0.0
    %3205 = vmatprep.subr.mxu0 0.0
    %3206 = vmatpush2.msra.mxu0 0.0
    %3207 = vmatprep.subr.mxu0 0.0
    %3208 = vmatpush2.msra.mxu0 0.0
    %3209 = vmatprep.subr.mxu0 0.0
    %3210 = vmatpush2.msra.mxu0 %v613
    %3211 = vmatprep.subr.mxu0 0.0
    %3212 = vmatpush2.msra.mxu0 %v612
    %3213 = vmatprep.subr.mxu0 0.0
    %3214 = vmatpush2.msra.mxu0 %v611
    %3215 = vmatprep.subr.mxu0 0.0
    %3216 = vmatpush2.msra.mxu0 %v610
    %3217 = vmatprep.mubr.f32.mxu0 %v3148
    %3218 = vmatmul.mubr.f32.gmra.mxu0 %v3145
    %v3219 = vpop.f32.mrf.mxu0
    %v3220 = vadd.f32 0.0, %v3219
    %v3221 = vpop.f32.mrf.mxu0
    %3222 = vmatprep.mubr.f32.mxu0 %v3151
    %3223 = vmatmul.mubr.f32.gmra.mxu0 %v3146
    %v3224 = vpop.f32.mrf.mxu0
    %v3225 = vadd.f32 0.0, %v3224
    %v3226 = vpop.f32.mrf.mxu0
    %3227 = vdwg.mxu0
    %3230 = vrot.lane.b32.xlu0 %v3220, 64
    %v3231 = vpop.permute.xlu0 %3230
    %3232 = vrot.lane.b32.xlu0 %v3225, 64
    %v3233 = vpop.permute.xlu0 %3232
    %v3236 = vadd.f32 %v2838, %v3231
    %v3237 = vadd.f32 %v2839, %v3233
    %v3238 = vtanh.pop %v3236
    %v3239 = vtanh.pop %v3237
    %v3240 = vmul.f32 %v2926, %v1914
    %v3241 = vmul.f32 %v2928, %v1915
    %v3242 = vsub.f32 1.0, %v2926
    %v3243 = vsub.f32 1.0, %v2928
    %3246 = vrot.lane.b32.xlu0 %v3238, 64
    %v3247 = vpop.permute.xlu0 %3246
    %3248 = vrot.lane.b32.xlu0 %v3239, 64
    %v3249 = vpop.permute.xlu0 %3248
    %v3252 = vmul.f32 %v3242, %v3247
    %v3253 = vmul.f32 %v3243, %v3249
    %v3254 = vadd.f32 %v3240, %v3252
    %v3255 = vadd.f32 %v3241, %v3253
    %v3256 = vmax.f32 %v3254, 0.0
    %v3257 = vmax.f32 %v3255, 0.0
    %3258 = vmatprep.subr.mxu0 0.0
    %3259 = vmatpush1.msra.mxu0 0.0
    %3260 = vmatprep.subr.mxu0 0.0
    %3261 = vmatpush1.msra.mxu0 0.0
    %3262 = vmatprep.subr.mxu0 0.0
    %3263 = vmatpush1.msra.mxu0 0.0
    %3264 = vmatprep.subr.mxu0 0.0
    %3265 = vmatpush1.msra.mxu0 0.0
    %3266 = vmatprep.subr.mxu0 0.0
    %3267 = vmatpush1.msra.mxu0 0.0
    %3268 = vmatprep.subr.mxu0 0.0
    %3269 = vmatpush1.msra.mxu0 0.0
    %3270 = vmatprep.subr.mxu0 0.0
    %3271 = vmatpush1.msra.mxu0 0.0
    %3272 = vmatprep.subr.mxu0 0.0
    %3273 = vmatpush1.msra.mxu0 0.0
    %3274 = vmatprep.subr.mxu0 0.0
    %3275 = vmatpush1.msra.mxu0 0.0
    %3276 = vmatprep.subr.mxu0 0.0
    %3277 = vmatpush1.msra.mxu0 0.0
    %3278 = vmatprep.subr.mxu0 0.0
    %3279 = vmatpush1.msra.mxu0 0.0
    %3280 = vmatprep.subr.mxu0 0.0
    %3281 = vmatpush1.msra.mxu0 0.0
    %3282 = vmatprep.subr.mxu0 0.0
    %3283 = vmatpush1.msra.mxu0 %v3257
    %3284 = vmatprep.subr.mxu0 0.0
    %3285 = vmatpush1.msra.mxu0 %v3256
    %3286 = vmatprep.subr.mxu0 0.0
    %3287 = vmatpush1.msra.mxu0 %v3257
    %3288 = vmatprep.subr.mxu0 0.0
    %3289 = vmatpush1.msra.mxu0 %v3256
    %3290 = vmatprep.subr.mxu0 0.0
    %3291 = vmatpush2.msra.mxu0 0.0
    %3292 = vmatprep.subr.mxu0 0.0
    %3293 = vmatpush2.msra.mxu0 0.0
    %3294 = vmatprep.subr.mxu0 0.0
    %3295 = vmatpush2.msra.mxu0 0.0
    %3296 = vmatprep.subr.mxu0 0.0
    %3297 = vmatpush2.msra.mxu0 0.0
    %3298 = vmatprep.subr.mxu0 0.0
    %3299 = vmatpush2.msra.mxu0 0.0
    %3300 = vmatprep.subr.mxu0 0.0
    %3301 = vmatpush2.msra.mxu0 0.0
    %3302 = vmatprep.subr.mxu0 0.0
    %3303 = vmatpush2.msra.mxu0 0.0
    %3304 = vmatprep.subr.mxu0 0.0
    %3305 = vmatpush2.msra.mxu0 0.0
    %3306 = vmatprep.subr.mxu0 0.0
    %3307 = vmatpush2.msra.mxu0 0.0
    %3308 = vmatprep.subr.mxu0 0.0
    %3309 = vmatpush2.msra.mxu0 0.0
    %3310 = vmatprep.subr.mxu0 0.0
    %3311 = vmatpush2.msra.mxu0 0.0
    %3312 = vmatprep.subr.mxu0 0.0
    %3313 = vmatpush2.msra.mxu0 0.0
    %3314 = vmatprep.subr.mxu0 0.0
    %3315 = vmatpush2.msra.mxu0 0.0
    %3316 = vmatprep.subr.mxu0 0.0
    %3317 = vmatpush2.msra.mxu0 0.0
    %3318 = vmatprep.subr.mxu0 0.0
    %3319 = vmatpush2.msra.mxu0 0.0
    %3320 = vmatprep.subr.mxu0 0.0
    %3321 = vmatpush2.msra.mxu0 0.0
    %3322 = vmatprep.mubr.f32.mxu0 0.0
    %3323 = vmatmul.mubr.f32.gmra.mxu0 %v44
    %v3324 = vpop.f32.mrf.mxu0
    %v3325 = vadd.f32 0.0, %v3324
    %v3326 = vpop.f32.mrf.mxu0
    %3327 = vmatprep.mubr.f32.mxu0 0.0
    %3328 = vmatmul.mubr.f32.gmra.mxu0 %v47
    %v3329 = vpop.f32.mrf.mxu0
    %v3330 = vadd.f32 0.0, %v3329
    %v3331 = vpop.f32.mrf.mxu0
    %3332 = vmatprep.mubr.f32.mxu0 0.0
    %3333 = vmatmul.mubr.f32.gmra.mxu0 %v50
    %v3334 = vpop.f32.mrf.mxu0
    %v3335 = vadd.f32 0.0, %v3334
    %v3336 = vpop.f32.mrf.mxu0
    %3337 = vmatprep.mubr.f32.mxu0 0.0
    %3338 = vmatmul.mubr.f32.gmra.mxu0 %v53
    %v3339 = vpop.f32.mrf.mxu0
    %v3340 = vadd.f32 0.0, %v3339
    %v3341 = vpop.f32.mrf.mxu0
    %3342 = vdwg.mxu0
    %3343 = vmatprep.subr.mxu0 0.0
    %3344 = vmatpush1.msra.mxu0 0.0
    %3345 = vmatprep.subr.mxu0 0.0
    %3346 = vmatpush1.msra.mxu0 0.0
    %3347 = vmatprep.subr.mxu0 0.0
    %3348 = vmatpush1.msra.mxu0 0.0
    %3349 = vmatprep.subr.mxu0 0.0
    %3350 = vmatpush1.msra.mxu0 0.0
    %3351 = vmatprep.subr.mxu0 0.0
    %3352 = vmatpush1.msra.mxu0 0.0
    %3353 = vmatprep.subr.mxu0 0.0
    %3354 = vmatpush1.msra.mxu0 0.0
    %3355 = vmatprep.subr.mxu0 0.0
    %3356 = vmatpush1.msra.mxu0 0.0
    %3357 = vmatprep.subr.mxu0 0.0
    %3358 = vmatpush1.msra.mxu0 0.0
    %3359 = vmatprep.subr.mxu0 0.0
    %3360 = vmatpush1.msra.mxu0 0.0
    %3361 = vmatprep.subr.mxu0 0.0
    %3362 = vmatpush1.msra.mxu0 0.0
    %3363 = vmatprep.subr.mxu0 0.0
    %3364 = vmatpush1.msra.mxu0 0.0
    %3365 = vmatprep.subr.mxu0 0.0
    %3366 = vmatpush1.msra.mxu0 0.0
    %3367 = vmatprep.subr.mxu0 0.0
    %3368 = vmatpush1.msra.mxu0 %v3340
    %3369 = vmatprep.subr.mxu0 0.0
    %3370 = vmatpush1.msra.mxu0 %v3335
    %3371 = vmatprep.subr.mxu0 0.0
    %3372 = vmatpush1.msra.mxu0 %v3330
    %3373 = vmatprep.subr.mxu0 0.0
    %3374 = vmatpush1.msra.mxu0 %v3325
    %3375 = vmatprep.subr.mxu0 0.0
    %3376 = vmatpush2.msra.mxu0 0.0
    %3377 = vmatprep.subr.mxu0 0.0
    %3378 = vmatpush2.msra.mxu0 0.0
    %3379 = vmatprep.subr.mxu0 0.0
    %3380 = vmatpush2.msra.mxu0 0.0
    %3381 = vmatprep.subr.mxu0 0.0
    %3382 = vmatpush2.msra.mxu0 0.0
    %3383 = vmatprep.subr.mxu0 0.0
    %3384 = vmatpush2.msra.mxu0 0.0
    %3385 = vmatprep.subr.mxu0 0.0
    %3386 = vmatpush2.msra.mxu0 0.0
    %3387 = vmatprep.subr.mxu0 0.0
    %3388 = vmatpush2.msra.mxu0 0.0
    %3389 = vmatprep.subr.mxu0 0.0
    %3390 = vmatpush2.msra.mxu0 0.0
    %3391 = vmatprep.subr.mxu0 0.0
    %3392 = vmatpush2.msra.mxu0 0.0
    %3393 = vmatprep.subr.mxu0 0.0
    %3394 = vmatpush2.msra.mxu0 0.0
    %3395 = vmatprep.subr.mxu0 0.0
    %3396 = vmatpush2.msra.mxu0 0.0
    %3397 = vmatprep.subr.mxu0 0.0
    %3398 = vmatpush2.msra.mxu0 0.0
    %3399 = vmatprep.subr.mxu0 0.0
    %3400 = vmatpush2.msra.mxu0 0.0
    %3401 = vmatprep.subr.mxu0 0.0
    %3402 = vmatpush2.msra.mxu0 0.0
    %3403 = vmatprep.subr.mxu0 0.0
    %3404 = vmatpush2.msra.mxu0 0.0
    %3405 = vmatprep.subr.mxu0 0.0
    %3406 = vmatpush2.msra.mxu0 0.0
    %3407 = vmatprep.mubr.f32.mxu0 0.0
    %3408 = vmatmul.mubr.f32.gmra.mxu0 %v44
    %v3409 = vpop.f32.mrf.mxu0
    %v3410 = vadd.f32 0.0, %v3409
    %v3411 = vpop.f32.mrf.mxu0
    %3412 = vmatprep.mubr.f32.mxu0 0.0
    %3413 = vmatmul.mubr.f32.gmra.mxu0 %v47
    %v3414 = vpop.f32.mrf.mxu0
    %v3415 = vadd.f32 0.0, %v3414
    %v3416 = vpop.f32.mrf.mxu0
    %3417 = vmatprep.mubr.f32.mxu0 0.0
    %3418 = vmatmul.mubr.f32.gmra.mxu0 %v50
    %v3419 = vpop.f32.mrf.mxu0
    %v3420 = vadd.f32 0.0, %v3419
    %v3421 = vpop.f32.mrf.mxu0
    %3422 = vmatprep.mubr.f32.mxu0 0.0
    %3423 = vmatmul.mubr.f32.gmra.mxu0 %v53
    %v3424 = vpop.f32.mrf.mxu0
    %v3425 = vadd.f32 0.0, %v3424
    %v3426 = vpop.f32.mrf.mxu0
    %3427 = vdwg.mxu0
    %v3428 = vmul.f32 %v3410, 2.0
    %v3429 = vmul.f32 %v3415, 2.0
    %v3430 = vmul.f32 %v3420, 2.0
    %v3431 = vmul.f32 %v3425, 2.0
    %v3432 = vsub.f32 %v3428, %v3256
    %v3433 = vsub.f32 %v3429, %v3257
    %v3434 = vsub.f32 %v3430, %v3256
    %v3435 = vsub.f32 %v3431, %v3257
    %3438 = vrot.lane.b32.xlu0 %v3325, 32
    %v3439 = vpop.permute.xlu0 %3438
    %3440 = vrot.lane.b32.xlu0 %v3330, 32
    %v3441 = vpop.permute.xlu0 %3440
    %3446 = vrot.lane.b32.xlu0 %v3432, 64
    %v3447 = vpop.permute.xlu0 %3446
    %3448 = vrot.lane.b32.xlu0 %v3433, 64
    %v3449 = vpop.permute.xlu0 %3448
    %3454 = vrot.lane.b32.xlu0 %v3335, 96
    %v3455 = vpop.permute.xlu0 %3454
    %3456 = vrot.lane.b32.xlu0 %v3340, 96
    %v3457 = vpop.permute.xlu0 %3456
    %v3460 = vsel %vm42, %v3256, %v3439
    %v3461 = vsel %vm42, %v3257, %v3441
    %v3462 = vsel %vm255, %v3460, %v3447
    %v3463 = vsel %vm255, %v3461, %v3449
    %v3464 = vsel %vm258, %v3462, %v3455
    %v3465 = vsel %vm258, %v3463, %v3457
    %v3467 = vsel %vm42, %v3434, 0
    %v3470 = vsel %vm42, %v3435, 0
    %3472 = vmatprep.subr.mxu0 0.0
    %3473 = vmatpush1.msra.mxu0 %v946
    %3474 = vmatprep.subr.mxu0 0.0
    %3475 = vmatpush1.msra.mxu0 %v945
    %3476 = vmatprep.subr.mxu0 0.0
    %3477 = vmatpush1.msra.mxu0 %v944
    %3478 = vmatprep.subr.mxu0 0.0
    %3479 = vmatpush1.msra.mxu0 %v943
    %3480 = vmatprep.subr.mxu0 0.0
    %3481 = vmatpush1.msra.mxu0 %v942
    %3482 = vmatprep.subr.mxu0 0.0
    %3483 = vmatpush1.msra.mxu0 %v941
    %3484 = vmatprep.subr.mxu0 0.0
    %3485 = vmatpush1.msra.mxu0 %v940
    %3486 = vmatprep.subr.mxu0 0.0
    %3487 = vmatpush1.msra.mxu0 %v939
    %3488 = vmatprep.subr.mxu0 0.0
    %3489 = vmatpush1.msra.mxu0 %v938
    %3490 = vmatprep.subr.mxu0 0.0
    %3491 = vmatpush1.msra.mxu0 %v937
    %3492 = vmatprep.subr.mxu0 0.0
    %3493 = vmatpush1.msra.mxu0 %v936
    %3494 = vmatprep.subr.mxu0 0.0
    %3495 = vmatpush1.msra.mxu0 %v935
    %3496 = vmatprep.subr.mxu0 0.0
    %3497 = vmatpush1.msra.mxu0 %v934
    %3498 = vmatprep.subr.mxu0 0.0
    %3499 = vmatpush1.msra.mxu0 %v933
    %3500 = vmatprep.subr.mxu0 0.0
    %3501 = vmatpush1.msra.mxu0 %v932
    %3502 = vmatprep.subr.mxu0 0.0
    %3503 = vmatpush1.msra.mxu0 %v931
    %3504 = vmatprep.subr.mxu0 0.0
    %3505 = vmatpush2.msra.mxu0 0.0
    %3506 = vmatprep.subr.mxu0 0.0
    %3507 = vmatpush2.msra.mxu0 0.0
    %3508 = vmatprep.subr.mxu0 0.0
    %3509 = vmatpush2.msra.mxu0 0.0
    %3510 = vmatprep.subr.mxu0 0.0
    %3511 = vmatpush2.msra.mxu0 0.0
    %3512 = vmatprep.subr.mxu0 0.0
    %3513 = vmatpush2.msra.mxu0 0.0
    %3514 = vmatprep.subr.mxu0 0.0
    %3515 = vmatpush2.msra.mxu0 0.0
    %3516 = vmatprep.subr.mxu0 0.0
    %3517 = vmatpush2.msra.mxu0 0.0
    %3518 = vmatprep.subr.mxu0 0.0
    %3519 = vmatpush2.msra.mxu0 0.0
    %3520 = vmatprep.subr.mxu0 0.0
    %3521 = vmatpush2.msra.mxu0 0.0
    %3522 = vmatprep.subr.mxu0 0.0
    %3523 = vmatpush2.msra.mxu0 0.0
    %3524 = vmatprep.subr.mxu0 0.0
    %3525 = vmatpush2.msra.mxu0 0.0
    %3526 = vmatprep.subr.mxu0 0.0
    %3527 = vmatpush2.msra.mxu0 0.0
    %3528 = vmatprep.subr.mxu0 0.0
    %3529 = vmatpush2.msra.mxu0 %v950
    %3530 = vmatprep.subr.mxu0 0.0
    %3531 = vmatpush2.msra.mxu0 %v949
    %3532 = vmatprep.subr.mxu0 0.0
    %3533 = vmatpush2.msra.mxu0 %v948
    %3534 = vmatprep.subr.mxu0 0.0
    %3535 = vmatpush2.msra.mxu0 %v947
    %3536 = vmatprep.mubr.f32.mxu0 %v3467
    %3537 = vmatmul.mubr.f32.gmra.mxu0 %v3464
    %v3538 = vpop.f32.mrf.mxu0
    %v3539 = vadd.f32 %v956, %v3538
    %v3540 = vpop.f32.mrf.mxu0
    %3541 = vmatprep.mubr.f32.mxu0 %v3470
    %3542 = vmatmul.mubr.f32.gmra.mxu0 %v3465
    %v3543 = vpop.f32.mrf.mxu0
    %v3544 = vadd.f32 %v956, %v3543
    %v3545 = vpop.f32.mrf.mxu0
    %3546 = vdwg.mxu0
    %3547 = vmatprep.subr.mxu0 0.0
    %3548 = vmatpush1.msra.mxu0 0.0
    %3549 = vmatprep.subr.mxu0 0.0
    %3550 = vmatpush1.msra.mxu0 0.0
    %3551 = vmatprep.subr.mxu0 0.0
    %3552 = vmatpush1.msra.mxu0 0.0
    %3553 = vmatprep.subr.mxu0 0.0
    %3554 = vmatpush1.msra.mxu0 0.0
    %3555 = vmatprep.subr.mxu0 0.0
    %3556 = vmatpush1.msra.mxu0 0.0
    %3557 = vmatprep.subr.mxu0 0.0
    %3558 = vmatpush1.msra.mxu0 0.0
    %3559 = vmatprep.subr.mxu0 0.0
    %3560 = vmatpush1.msra.mxu0 0.0
    %3561 = vmatprep.subr.mxu0 0.0
    %3562 = vmatpush1.msra.mxu0 0.0
    %3563 = vmatprep.subr.mxu0 0.0
    %3564 = vmatpush1.msra.mxu0 0.0
    %3565 = vmatprep.subr.mxu0 0.0
    %3566 = vmatpush1.msra.mxu0 0.0
    %3567 = vmatprep.subr.mxu0 0.0
    %3568 = vmatpush1.msra.mxu0 0.0
    %3569 = vmatprep.subr.mxu0 0.0
    %3570 = vmatpush1.msra.mxu0 0.0
    %3571 = vmatprep.subr.mxu0 0.0
    %3572 = vmatpush1.msra.mxu0 %v2836
    %3573 = vmatprep.subr.mxu0 0.0
    %3574 = vmatpush1.msra.mxu0 %v2835
    %3575 = vmatprep.subr.mxu0 0.0
    %3576 = vmatpush1.msra.mxu0 %v2836
    %3577 = vmatprep.subr.mxu0 0.0
    %3578 = vmatpush1.msra.mxu0 %v2835
    %3579 = vmatprep.subr.mxu0 0.0
    %3580 = vmatpush2.msra.mxu0 0.0
    %3581 = vmatprep.subr.mxu0 0.0
    %3582 = vmatpush2.msra.mxu0 0.0
    %3583 = vmatprep.subr.mxu0 0.0
    %3584 = vmatpush2.msra.mxu0 0.0
    %3585 = vmatprep.subr.mxu0 0.0
    %3586 = vmatpush2.msra.mxu0 0.0
    %3587 = vmatprep.subr.mxu0 0.0
    %3588 = vmatpush2.msra.mxu0 0.0
    %3589 = vmatprep.subr.mxu0 0.0
    %3590 = vmatpush2.msra.mxu0 0.0
    %3591 = vmatprep.subr.mxu0 0.0
    %3592 = vmatpush2.msra.mxu0 0.0
    %3593 = vmatprep.subr.mxu0 0.0
    %3594 = vmatpush2.msra.mxu0 0.0
    %3595 = vmatprep.subr.mxu0 0.0
    %3596 = vmatpush2.msra.mxu0 0.0
    %3597 = vmatprep.subr.mxu0 0.0
    %3598 = vmatpush2.msra.mxu0 0.0
    %3599 = vmatprep.subr.mxu0 0.0
    %3600 = vmatpush2.msra.mxu0 0.0
    %3601 = vmatprep.subr.mxu0 0.0
    %3602 = vmatpush2.msra.mxu0 0.0
    %3603 = vmatprep.subr.mxu0 0.0
    %3604 = vmatpush2.msra.mxu0 0.0
    %3605 = vmatprep.subr.mxu0 0.0
    %3606 = vmatpush2.msra.mxu0 0.0
    %3607 = vmatprep.subr.mxu0 0.0
    %3608 = vmatpush2.msra.mxu0 0.0
    %3609 = vmatprep.subr.mxu0 0.0
    %3610 = vmatpush2.msra.mxu0 0.0
    %3611 = vmatprep.mubr.f32.mxu0 0.0
    %3612 = vmatmul.mubr.f32.gmra.mxu0 %v44
    %v3613 = vpop.f32.mrf.mxu0
    %v3614 = vadd.f32 0.0, %v3613
    %v3615 = vpop.f32.mrf.mxu0
    %3616 = vmatprep.mubr.f32.mxu0 0.0
    %3617 = vmatmul.mubr.f32.gmra.mxu0 %v47
    %v3618 = vpop.f32.mrf.mxu0
    %v3619 = vadd.f32 0.0, %v3618
    %v3620 = vpop.f32.mrf.mxu0
    %3621 = vmatprep.mubr.f32.mxu0 0.0
    %3622 = vmatmul.mubr.f32.gmra.mxu0 %v50
    %v3623 = vpop.f32.mrf.mxu0
    %v3624 = vadd.f32 0.0, %v3623
    %v3625 = vpop.f32.mrf.mxu0
    %3626 = vmatprep.mubr.f32.mxu0 0.0
    %3627 = vmatmul.mubr.f32.gmra.mxu0 %v53
    %v3628 = vpop.f32.mrf.mxu0
    %v3629 = vadd.f32 0.0, %v3628
    %v3630 = vpop.f32.mrf.mxu0
    %3631 = vdwg.mxu0
    %3632 = vmatprep.subr.mxu0 0.0
    %3633 = vmatpush1.msra.mxu0 0.0
    %3634 = vmatprep.subr.mxu0 0.0
    %3635 = vmatpush1.msra.mxu0 0.0
    %3636 = vmatprep.subr.mxu0 0.0
    %3637 = vmatpush1.msra.mxu0 0.0
    %3638 = vmatprep.subr.mxu0 0.0
    %3639 = vmatpush1.msra.mxu0 0.0
    %3640 = vmatprep.subr.mxu0 0.0
    %3641 = vmatpush1.msra.mxu0 0.0
    %3642 = vmatprep.subr.mxu0 0.0
    %3643 = vmatpush1.msra.mxu0 0.0
    %3644 = vmatprep.subr.mxu0 0.0
    %3645 = vmatpush1.msra.mxu0 0.0
    %3646 = vmatprep.subr.mxu0 0.0
    %3647 = vmatpush1.msra.mxu0 0.0
    %3648 = vmatprep.subr.mxu0 0.0
    %3649 = vmatpush1.msra.mxu0 0.0
    %3650 = vmatprep.subr.mxu0 0.0
    %3651 = vmatpush1.msra.mxu0 0.0
    %3652 = vmatprep.subr.mxu0 0.0
    %3653 = vmatpush1.msra.mxu0 0.0
    %3654 = vmatprep.subr.mxu0 0.0
    %3655 = vmatpush1.msra.mxu0 0.0
    %3656 = vmatprep.subr.mxu0 0.0
    %3657 = vmatpush1.msra.mxu0 %v3629
    %3658 = vmatprep.subr.mxu0 0.0
    %3659 = vmatpush1.msra.mxu0 %v3624
    %3660 = vmatprep.subr.mxu0 0.0
    %3661 = vmatpush1.msra.mxu0 %v3619
    %3662 = vmatprep.subr.mxu0 0.0
    %3663 = vmatpush1.msra.mxu0 %v3614
    %3664 = vmatprep.subr.mxu0 0.0
    %3665 = vmatpush2.msra.mxu0 0.0
    %3666 = vmatprep.subr.mxu0 0.0
    %3667 = vmatpush2.msra.mxu0 0.0
    %3668 = vmatprep.subr.mxu0 0.0
    %3669 = vmatpush2.msra.mxu0 0.0
    %3670 = vmatprep.subr.mxu0 0.0
    %3671 = vmatpush2.msra.mxu0 0.0
    %3672 = vmatprep.subr.mxu0 0.0
    %3673 = vmatpush2.msra.mxu0 0.0
    %3674 = vmatprep.subr.mxu0 0.0
    %3675 = vmatpush2.msra.mxu0 0.0
    %3676 = vmatprep.subr.mxu0 0.0
    %3677 = vmatpush2.msra.mxu0 0.0
    %3678 = vmatprep.subr.mxu0 0.0
    %3679 = vmatpush2.msra.mxu0 0.0
    %3680 = vmatprep.subr.mxu0 0.0
    %3681 = vmatpush2.msra.mxu0 0.0
    %3682 = vmatprep.subr.mxu0 0.0
    %3683 = vmatpush2.msra.mxu0 0.0
    %3684 = vmatprep.subr.mxu0 0.0
    %3685 = vmatpush2.msra.mxu0 0.0
    %3686 = vmatprep.subr.mxu0 0.0
    %3687 = vmatpush2.msra.mxu0 0.0
    %3688 = vmatprep.subr.mxu0 0.0
    %3689 = vmatpush2.msra.mxu0 0.0
    %3690 = vmatprep.subr.mxu0 0.0
    %3691 = vmatpush2.msra.mxu0 0.0
    %3692 = vmatprep.subr.mxu0 0.0
    %3693 = vmatpush2.msra.mxu0 0.0
    %3694 = vmatprep.subr.mxu0 0.0
    %3695 = vmatpush2.msra.mxu0 0.0
    %3696 = vmatprep.mubr.f32.mxu0 0.0
    %3697 = vmatmul.mubr.f32.gmra.mxu0 %v44
    %v3698 = vpop.f32.mrf.mxu0
    %v3699 = vadd.f32 0.0, %v3698
    %v3700 = vpop.f32.mrf.mxu0
    %3701 = vmatprep.mubr.f32.mxu0 0.0
    %3702 = vmatmul.mubr.f32.gmra.mxu0 %v47
    %v3703 = vpop.f32.mrf.mxu0
    %v3704 = vadd.f32 0.0, %v3703
    %v3705 = vpop.f32.mrf.mxu0
    %3706 = vmatprep.mubr.f32.mxu0 0.0
    %3707 = vmatmul.mubr.f32.gmra.mxu0 %v50
    %v3708 = vpop.f32.mrf.mxu0
    %v3709 = vadd.f32 0.0, %v3708
    %v3710 = vpop.f32.mrf.mxu0
    %3711 = vmatprep.mubr.f32.mxu0 0.0
    %3712 = vmatmul.mubr.f32.gmra.mxu0 %v53
    %v3713 = vpop.f32.mrf.mxu0
    %v3714 = vadd.f32 0.0, %v3713
    %v3715 = vpop.f32.mrf.mxu0
    %3716 = vdwg.mxu0
    %v3717 = vmul.f32 %v3699, 2.0
    %v3718 = vmul.f32 %v3704, 2.0
    %v3719 = vmul.f32 %v3709, 2.0
    %v3720 = vmul.f32 %v3714, 2.0
    %v3721 = vsub.f32 %v3717, %v2835
    %v3722 = vsub.f32 %v3718, %v2836
    %v3723 = vsub.f32 %v3719, %v2835
    %v3724 = vsub.f32 %v3720, %v2836
    %3727 = vrot.lane.b32.xlu0 %v3614, 32
    %v3728 = vpop.permute.xlu0 %3727
    %3729 = vrot.lane.b32.xlu0 %v3619, 32
    %v3730 = vpop.permute.xlu0 %3729
    %3735 = vrot.lane.b32.xlu0 %v3721, 64
    %v3736 = vpop.permute.xlu0 %3735
    %3737 = vrot.lane.b32.xlu0 %v3722, 64
    %v3738 = vpop.permute.xlu0 %3737
    %3743 = vrot.lane.b32.xlu0 %v3624, 96
    %v3744 = vpop.permute.xlu0 %3743
    %3745 = vrot.lane.b32.xlu0 %v3629, 96
    %v3746 = vpop.permute.xlu0 %3745
    %v3749 = vsel %vm42, %v2835, %v3728
    %v3750 = vsel %vm42, %v2836, %v3730
    %v3751 = vsel %vm255, %v3749, %v3736
    %v3752 = vsel %vm255, %v3750, %v3738
    %v3753 = vsel %vm258, %v3751, %v3744
    %v3754 = vsel %vm258, %v3752, %v3746
    %v3756 = vsel %vm42, %v3723, 0
    %v3759 = vsel %vm42, %v3724, 0
    %3761 = vmatprep.subr.mxu0 0.0
    %3762 = vmatpush1.msra.mxu0 %v1054
    %3763 = vmatprep.subr.mxu0 0.0
    %3764 = vmatpush1.msra.mxu0 %v1053
    %3765 = vmatprep.subr.mxu0 0.0
    %3766 = vmatpush1.msra.mxu0 %v1052
    %3767 = vmatprep.subr.mxu0 0.0
    %3768 = vmatpush1.msra.mxu0 %v1051
    %3769 = vmatprep.subr.mxu0 0.0
    %3770 = vmatpush1.msra.mxu0 %v1050
    %3771 = vmatprep.subr.mxu0 0.0
    %3772 = vmatpush1.msra.mxu0 %v1049
    %3773 = vmatprep.subr.mxu0 0.0
    %3774 = vmatpush1.msra.mxu0 %v1048
    %3775 = vmatprep.subr.mxu0 0.0
    %3776 = vmatpush1.msra.mxu0 %v1047
    %3777 = vmatprep.subr.mxu0 0.0
    %3778 = vmatpush1.msra.mxu0 %v1046
    %3779 = vmatprep.subr.mxu0 0.0
    %3780 = vmatpush1.msra.mxu0 %v1045
    %3781 = vmatprep.subr.mxu0 0.0
    %3782 = vmatpush1.msra.mxu0 %v1044
    %3783 = vmatprep.subr.mxu0 0.0
    %3784 = vmatpush1.msra.mxu0 %v1043
    %3785 = vmatprep.subr.mxu0 0.0
    %3786 = vmatpush1.msra.mxu0 %v1042
    %3787 = vmatprep.subr.mxu0 0.0
    %3788 = vmatpush1.msra.mxu0 %v1041
    %3789 = vmatprep.subr.mxu0 0.0
    %3790 = vmatpush1.msra.mxu0 %v1040
    %3791 = vmatprep.subr.mxu0 0.0
    %3792 = vmatpush1.msra.mxu0 %v1039
    %3793 = vmatprep.subr.mxu0 0.0
    %3794 = vmatpush2.msra.mxu0 0.0
    %3795 = vmatprep.subr.mxu0 0.0
    %3796 = vmatpush2.msra.mxu0 0.0
    %3797 = vmatprep.subr.mxu0 0.0
    %3798 = vmatpush2.msra.mxu0 0.0
    %3799 = vmatprep.subr.mxu0 0.0
    %3800 = vmatpush2.msra.mxu0 0.0
    %3801 = vmatprep.subr.mxu0 0.0
    %3802 = vmatpush2.msra.mxu0 0.0
    %3803 = vmatprep.subr.mxu0 0.0
    %3804 = vmatpush2.msra.mxu0 0.0
    %3805 = vmatprep.subr.mxu0 0.0
    %3806 = vmatpush2.msra.mxu0 0.0
    %3807 = vmatprep.subr.mxu0 0.0
    %3808 = vmatpush2.msra.mxu0 0.0
    %3809 = vmatprep.subr.mxu0 0.0
    %3810 = vmatpush2.msra.mxu0 0.0
    %3811 = vmatprep.subr.mxu0 0.0
    %3812 = vmatpush2.msra.mxu0 0.0
    %3813 = vmatprep.subr.mxu0 0.0
    %3814 = vmatpush2.msra.mxu0 0.0
    %3815 = vmatprep.subr.mxu0 0.0
    %3816 = vmatpush2.msra.mxu0 0.0
    %3817 = vmatprep.subr.mxu0 0.0
    %3818 = vmatpush2.msra.mxu0 %v1058
    %3819 = vmatprep.subr.mxu0 0.0
    %3820 = vmatpush2.msra.mxu0 %v1057
    %3821 = vmatprep.subr.mxu0 0.0
    %3822 = vmatpush2.msra.mxu0 %v1056
    %3823 = vmatprep.subr.mxu0 0.0
    %3824 = vmatpush2.msra.mxu0 %v1055
    %3825 = vmatprep.mubr.f32.mxu0 %v3756
    %3826 = vmatmul.mubr.f32.gmra.mxu0 %v3753
    %v3827 = vpop.f32.mrf.mxu0
    %v3828 = vadd.f32 0.0, %v3827
    %v3829 = vpop.f32.mrf.mxu0
    %3830 = vmatprep.mubr.f32.mxu0 %v3759
    %3831 = vmatmul.mubr.f32.gmra.mxu0 %v3754
    %v3832 = vpop.f32.mrf.mxu0
    %v3833 = vadd.f32 0.0, %v3832
    %v3834 = vpop.f32.mrf.mxu0
    %3835 = vdwg.mxu0
    %v3836 = vadd.f32 %v3539, %v3828
    %v3837 = vadd.f32 %v3544, %v3833
    %v3838 = vxor.u32 %v3836, 2147483648
    %v3839 = vxor.u32 %v3837, 2147483648
    %v3840 = vmul.f32 %v3838, 1.442695
    %v3841 = vpow.pop %v3840
    %v3842 = vmul.f32 %v3839, 1.442695
    %v3843 = vpow.pop %v3842
    %v3844 = vadd.f32 %v3841, 1.0
    %v3845 = vadd.f32 %v3843, 1.0
    %v3846 = vrcp.pop %v3844
    %v3847 = vmul.f32 1.0, %v3846
    %v3848 = vrcp.pop %v3845
    %v3849 = vmul.f32 1.0, %v3848
    %3852 = vrot.lane.b32.xlu0 %v3847, 96
    %v3853 = vpop.permute.xlu0 %3852
    %3854 = vrot.lane.b32.xlu0 %v3849, 96
    %v3855 = vpop.permute.xlu0 %3854
    %v3858 = vmul.f32 %v2835, %v3853
    %v3859 = vmul.f32 %v2836, %v3855
    %3860 = vmatprep.subr.mxu0 0.0
    %3861 = vmatpush1.msra.mxu0 0.0
    %3862 = vmatprep.subr.mxu0 0.0
    %3863 = vmatpush1.msra.mxu0 0.0
    %3864 = vmatprep.subr.mxu0 0.0
    %3865 = vmatpush1.msra.mxu0 0.0
    %3866 = vmatprep.subr.mxu0 0.0
    %3867 = vmatpush1.msra.mxu0 0.0
    %3868 = vmatprep.subr.mxu0 0.0
    %3869 = vmatpush1.msra.mxu0 0.0
    %3870 = vmatprep.subr.mxu0 0.0
    %3871 = vmatpush1.msra.mxu0 0.0
    %3872 = vmatprep.subr.mxu0 0.0
    %3873 = vmatpush1.msra.mxu0 0.0
    %3874 = vmatprep.subr.mxu0 0.0
    %3875 = vmatpush1.msra.mxu0 0.0
    %3876 = vmatprep.subr.mxu0 0.0
    %3877 = vmatpush1.msra.mxu0 0.0
    %3878 = vmatprep.subr.mxu0 0.0
    %3879 = vmatpush1.msra.mxu0 0.0
    %3880 = vmatprep.subr.mxu0 0.0
    %3881 = vmatpush1.msra.mxu0 0.0
    %3882 = vmatprep.subr.mxu0 0.0
    %3883 = vmatpush1.msra.mxu0 0.0
    %3884 = vmatprep.subr.mxu0 0.0
    %3885 = vmatpush1.msra.mxu0 %v3859
    %3886 = vmatprep.subr.mxu0 0.0
    %3887 = vmatpush1.msra.mxu0 %v3858
    %3888 = vmatprep.subr.mxu0 0.0
    %3889 = vmatpush1.msra.mxu0 %v3859
    %3890 = vmatprep.subr.mxu0 0.0
    %3891 = vmatpush1.msra.mxu0 %v3858
    %3892 = vmatprep.subr.mxu0 0.0
    %3893 = vmatpush2.msra.mxu0 0.0
    %3894 = vmatprep.subr.mxu0 0.0
    %3895 = vmatpush2.msra.mxu0 0.0
    %3896 = vmatprep.subr.mxu0 0.0
    %3897 = vmatpush2.msra.mxu0 0.0
    %3898 = vmatprep.subr.mxu0 0.0
    %3899 = vmatpush2.msra.mxu0 0.0
    %3900 = vmatprep.subr.mxu0 0.0
    %3901 = vmatpush2.msra.mxu0 0.0
    %3902 = vmatprep.subr.mxu0 0.0
    %3903 = vmatpush2.msra.mxu0 0.0
    %3904 = vmatprep.subr.mxu0 0.0
    %3905 = vmatpush2.msra.mxu0 0.0
    %3906 = vmatprep.subr.mxu0 0.0
    %3907 = vmatpush2.msra.mxu0 0.0
    %3908 = vmatprep.subr.mxu0 0.0
    %3909 = vmatpush2.msra.mxu0 0.0
    %3910 = vmatprep.subr.mxu0 0.0
    %3911 = vmatpush2.msra.mxu0 0.0
    %3912 = vmatprep.subr.mxu0 0.0
    %3913 = vmatpush2.msra.mxu0 0.0
    %3914 = vmatprep.subr.mxu0 0.0
    %3915 = vmatpush2.msra.mxu0 0.0
    %3916 = vmatprep.subr.mxu0 0.0
    %3917 = vmatpush2.msra.mxu0 0.0
    %3918 = vmatprep.subr.mxu0 0.0
    %3919 = vmatpush2.msra.mxu0 0.0
    %3920 = vmatprep.subr.mxu0 0.0
    %3921 = vmatpush2.msra.mxu0 0.0
    %3922 = vmatprep.subr.mxu0 0.0
    %3923 = vmatpush2.msra.mxu0 0.0
    %3924 = vmatprep.mubr.f32.mxu0 0.0
    %3925 = vmatmul.mubr.f32.gmra.mxu0 %v44
    %v3926 = vpop.f32.mrf.mxu0
    %v3927 = vadd.f32 0.0, %v3926
    %v3928 = vpop.f32.mrf.mxu0
    %3929 = vmatprep.mubr.f32.mxu0 0.0
    %3930 = vmatmul.mubr.f32.gmra.mxu0 %v47
    %v3931 = vpop.f32.mrf.mxu0
    %v3932 = vadd.f32 0.0, %v3931
    %v3933 = vpop.f32.mrf.mxu0
    %3934 = vmatprep.mubr.f32.mxu0 0.0
    %3935 = vmatmul.mubr.f32.gmra.mxu0 %v50
    %v3936 = vpop.f32.mrf.mxu0
    %v3937 = vadd.f32 0.0, %v3936
    %v3938 = vpop.f32.mrf.mxu0
    %3939 = vmatprep.mubr.f32.mxu0 0.0
    %3940 = vmatmul.mubr.f32.gmra.mxu0 %v53
    %v3941 = vpop.f32.mrf.mxu0
    %v3942 = vadd.f32 0.0, %v3941
    %v3943 = vpop.f32.mrf.mxu0
    %3944 = vdwg.mxu0
    %3945 = vmatprep.subr.mxu0 0.0
    %3946 = vmatpush1.msra.mxu0 0.0
    %3947 = vmatprep.subr.mxu0 0.0
    %3948 = vmatpush1.msra.mxu0 0.0
    %3949 = vmatprep.subr.mxu0 0.0
    %3950 = vmatpush1.msra.mxu0 0.0
    %3951 = vmatprep.subr.mxu0 0.0
    %3952 = vmatpush1.msra.mxu0 0.0
    %3953 = vmatprep.subr.mxu0 0.0
    %3954 = vmatpush1.msra.mxu0 0.0
    %3955 = vmatprep.subr.mxu0 0.0
    %3956 = vmatpush1.msra.mxu0 0.0
    %3957 = vmatprep.subr.mxu0 0.0
    %3958 = vmatpush1.msra.mxu0 0.0
    %3959 = vmatprep.subr.mxu0 0.0
    %3960 = vmatpush1.msra.mxu0 0.0
    %3961 = vmatprep.subr.mxu0 0.0
    %3962 = vmatpush1.msra.mxu0 0.0
    %3963 = vmatprep.subr.mxu0 0.0
    %3964 = vmatpush1.msra.mxu0 0.0
    %3965 = vmatprep.subr.mxu0 0.0
    %3966 = vmatpush1.msra.mxu0 0.0
    %3967 = vmatprep.subr.mxu0 0.0
    %3968 = vmatpush1.msra.mxu0 0.0
    %3969 = vmatprep.subr.mxu0 0.0
    %3970 = vmatpush1.msra.mxu0 %v3942
    %3971 = vmatprep.subr.mxu0 0.0
    %3972 = vmatpush1.msra.mxu0 %v3937
    %3973 = vmatprep.subr.mxu0 0.0
    %3974 = vmatpush1.msra.mxu0 %v3932
    %3975 = vmatprep.subr.mxu0 0.0
    %3976 = vmatpush1.msra.mxu0 %v3927
    %3977 = vmatprep.subr.mxu0 0.0
    %3978 = vmatpush2.msra.mxu0 0.0
    %3979 = vmatprep.subr.mxu0 0.0
    %3980 = vmatpush2.msra.mxu0 0.0
    %3981 = vmatprep.subr.mxu0 0.0
    %3982 = vmatpush2.msra.mxu0 0.0
    %3983 = vmatprep.subr.mxu0 0.0
    %3984 = vmatpush2.msra.mxu0 0.0
    %3985 = vmatprep.subr.mxu0 0.0
    %3986 = vmatpush2.msra.mxu0 0.0
    %3987 = vmatprep.subr.mxu0 0.0
    %3988 = vmatpush2.msra.mxu0 0.0
    %3989 = vmatprep.subr.mxu0 0.0
    %3990 = vmatpush2.msra.mxu0 0.0
    %3991 = vmatprep.subr.mxu0 0.0
    %3992 = vmatpush2.msra.mxu0 0.0
    %3993 = vmatprep.subr.mxu0 0.0
    %3994 = vmatpush2.msra.mxu0 0.0
    %3995 = vmatprep.subr.mxu0 0.0
    %3996 = vmatpush2.msra.mxu0 0.0
    %3997 = vmatprep.subr.mxu0 0.0
    %3998 = vmatpush2.msra.mxu0 0.0
    %3999 = vmatprep.subr.mxu0 0.0
    %4000 = vmatpush2.msra.mxu0 0.0
    %4001 = vmatprep.subr.mxu0 0.0
    %4002 = vmatpush2.msra.mxu0 0.0
    %4003 = vmatprep.subr.mxu0 0.0
    %4004 = vmatpush2.msra.mxu0 0.0
    %4005 = vmatprep.subr.mxu0 0.0
    %4006 = vmatpush2.msra.mxu0 0.0
    %4007 = vmatprep.subr.mxu0 0.0
    %4008 = vmatpush2.msra.mxu0 0.0
    %4009 = vmatprep.mubr.f32.mxu0 0.0
    %4010 = vmatmul.mubr.f32.gmra.mxu0 %v44
    %v4011 = vpop.f32.mrf.mxu0
    %v4012 = vadd.f32 0.0, %v4011
    %v4013 = vpop.f32.mrf.mxu0
    %4014 = vmatprep.mubr.f32.mxu0 0.0
    %4015 = vmatmul.mubr.f32.gmra.mxu0 %v47
    %v4016 = vpop.f32.mrf.mxu0
    %v4017 = vadd.f32 0.0, %v4016
    %v4018 = vpop.f32.mrf.mxu0
    %4019 = vmatprep.mubr.f32.mxu0 0.0
    %4020 = vmatmul.mubr.f32.gmra.mxu0 %v50
    %v4021 = vpop.f32.mrf.mxu0
    %v4022 = vadd.f32 0.0, %v4021
    %v4023 = vpop.f32.mrf.mxu0
    %4024 = vmatprep.mubr.f32.mxu0 0.0
    %4025 = vmatmul.mubr.f32.gmra.mxu0 %v53
    %v4026 = vpop.f32.mrf.mxu0
    %v4027 = vadd.f32 0.0, %v4026
    %v4028 = vpop.f32.mrf.mxu0
    %4029 = vdwg.mxu0
    %v4030 = vmul.f32 %v4012, 2.0
    %v4031 = vmul.f32 %v4017, 2.0
    %v4032 = vmul.f32 %v4022, 2.0
    %v4033 = vmul.f32 %v4027, 2.0
    %v4034 = vsub.f32 %v4030, %v3858
    %v4035 = vsub.f32 %v4031, %v3859
    %v4036 = vsub.f32 %v4032, %v3858
    %v4037 = vsub.f32 %v4033, %v3859
    %4040 = vrot.lane.b32.xlu0 %v3927, 32
    %v4041 = vpop.permute.xlu0 %4040
    %4042 = vrot.lane.b32.xlu0 %v3932, 32
    %v4043 = vpop.permute.xlu0 %4042
    %4048 = vrot.lane.b32.xlu0 %v4034, 64
    %v4049 = vpop.permute.xlu0 %4048
    %4050 = vrot.lane.b32.xlu0 %v4035, 64
    %v4051 = vpop.permute.xlu0 %4050
    %4056 = vrot.lane.b32.xlu0 %v3937, 96
    %v4057 = vpop.permute.xlu0 %4056
    %4058 = vrot.lane.b32.xlu0 %v3942, 96
    %v4059 = vpop.permute.xlu0 %4058
    %v4062 = vsel %vm42, %v3858, %v4041
    %v4063 = vsel %vm42, %v3859, %v4043
    %v4064 = vsel %vm255, %v4062, %v4049
    %v4065 = vsel %vm255, %v4063, %v4051
    %v4066 = vsel %vm258, %v4064, %v4057
    %v4067 = vsel %vm258, %v4065, %v4059
    %v4069 = vsel %vm42, %v4036, 0
    %v4072 = vsel %vm42, %v4037, 0
    %4074 = vmatprep.subr.mxu0 0.0
    %4075 = vmatpush1.msra.mxu0 %v1381
    %4076 = vmatprep.subr.mxu0 0.0
    %4077 = vmatpush1.msra.mxu0 %v1380
    %4078 = vmatprep.subr.mxu0 0.0
    %4079 = vmatpush1.msra.mxu0 %v1379
    %4080 = vmatprep.subr.mxu0 0.0
    %4081 = vmatpush1.msra.mxu0 %v1378
    %4082 = vmatprep.subr.mxu0 0.0
    %4083 = vmatpush1.msra.mxu0 %v1377
    %4084 = vmatprep.subr.mxu0 0.0
    %4085 = vmatpush1.msra.mxu0 %v1376
    %4086 = vmatprep.subr.mxu0 0.0
    %4087 = vmatpush1.msra.mxu0 %v1375
    %4088 = vmatprep.subr.mxu0 0.0
    %4089 = vmatpush1.msra.mxu0 %v1374
    %4090 = vmatprep.subr.mxu0 0.0
    %4091 = vmatpush1.msra.mxu0 %v1373
    %4092 = vmatprep.subr.mxu0 0.0
    %4093 = vmatpush1.msra.mxu0 %v1372
    %4094 = vmatprep.subr.mxu0 0.0
    %4095 = vmatpush1.msra.mxu0 %v1371
    %4096 = vmatprep.subr.mxu0 0.0
    %4097 = vmatpush1.msra.mxu0 %v1370
    %4098 = vmatprep.subr.mxu0 0.0
    %4099 = vmatpush1.msra.mxu0 %v1369
    %4100 = vmatprep.subr.mxu0 0.0
    %4101 = vmatpush1.msra.mxu0 %v1368
    %4102 = vmatprep.subr.mxu0 0.0
    %4103 = vmatpush1.msra.mxu0 %v1367
    %4104 = vmatprep.subr.mxu0 0.0
    %4105 = vmatpush1.msra.mxu0 %v1366
    %4106 = vmatprep.subr.mxu0 0.0
    %4107 = vmatpush2.msra.mxu0 0.0
    %4108 = vmatprep.subr.mxu0 0.0
    %4109 = vmatpush2.msra.mxu0 0.0
    %4110 = vmatprep.subr.mxu0 0.0
    %4111 = vmatpush2.msra.mxu0 0.0
    %4112 = vmatprep.subr.mxu0 0.0
    %4113 = vmatpush2.msra.mxu0 0.0
    %4114 = vmatprep.subr.mxu0 0.0
    %4115 = vmatpush2.msra.mxu0 0.0
    %4116 = vmatprep.subr.mxu0 0.0
    %4117 = vmatpush2.msra.mxu0 0.0
    %4118 = vmatprep.subr.mxu0 0.0
    %4119 = vmatpush2.msra.mxu0 0.0
    %4120 = vmatprep.subr.mxu0 0.0
    %4121 = vmatpush2.msra.mxu0 0.0
    %4122 = vmatprep.subr.mxu0 0.0
    %4123 = vmatpush2.msra.mxu0 0.0
    %4124 = vmatprep.subr.mxu0 0.0
    %4125 = vmatpush2.msra.mxu0 0.0
    %4126 = vmatprep.subr.mxu0 0.0
    %4127 = vmatpush2.msra.mxu0 0.0
    %4128 = vmatprep.subr.mxu0 0.0
    %4129 = vmatpush2.msra.mxu0 0.0
    %4130 = vmatprep.subr.mxu0 0.0
    %4131 = vmatpush2.msra.mxu0 %v1385
    %4132 = vmatprep.subr.mxu0 0.0
    %4133 = vmatpush2.msra.mxu0 %v1384
    %4134 = vmatprep.subr.mxu0 0.0
    %4135 = vmatpush2.msra.mxu0 %v1383
    %4136 = vmatprep.subr.mxu0 0.0
    %4137 = vmatpush2.msra.mxu0 %v1382
    %4138 = vmatprep.mubr.f32.mxu0 %v4069
    %4139 = vmatmul.mubr.f32.gmra.mxu0 %v4066
    %v4140 = vpop.f32.mrf.mxu0
    %v4141 = vadd.f32 0.0, %v4140
    %v4142 = vpop.f32.mrf.mxu0
    %4143 = vmatprep.mubr.f32.mxu0 %v4072
    %4144 = vmatmul.mubr.f32.gmra.mxu0 %v4067
    %v4145 = vpop.f32.mrf.mxu0
    %v4146 = vadd.f32 0.0, %v4145
    %v4147 = vpop.f32.mrf.mxu0
    %4148 = vdwg.mxu0
    %4151 = vrot.lane.b32.xlu0 %v4141, 64
    %v4152 = vpop.permute.xlu0 %4151
    %4153 = vrot.lane.b32.xlu0 %v4146, 64
    %v4154 = vpop.permute.xlu0 %4153
    %v4157 = vadd.f32 %v3539, %v4152
    %v4158 = vadd.f32 %v3544, %v4154
    %v4159 = vtanh.pop %v4157
    %v4160 = vtanh.pop %v4158
    %v4161 = vmul.f32 %v3847, %v2835
    %v4162 = vmul.f32 %v3849, %v2836
    %v4163 = vsub.f32 1.0, %v3847
    %v4164 = vsub.f32 1.0, %v3849
    %4167 = vrot.lane.b32.xlu0 %v4159, 64
    %v4168 = vpop.permute.xlu0 %4167
    %4169 = vrot.lane.b32.xlu0 %v4160, 64
    %v4170 = vpop.permute.xlu0 %4169
    %v4173 = vmul.f32 %v4163, %v4168
    %v4174 = vmul.f32 %v4164, %v4170
    %v4175 = vadd.f32 %v4161, %v4173
    %v4176 = vadd.f32 %v4162, %v4174
    %v4177 = vmax.f32 %v4175, 0.0
    %v4178 = vmax.f32 %v4176, 0.0
    %s4179 = scalar_lea.vmem %s0, 48
    %v4180 = vld [vmem:[%s4179] sm:$0xff]
    %v4181 = vld [vmem:[%s4179 + $0x8] sm:$0xff]
    %4182 = vmatprep.subr.mxu0 0.0
    %4183 = vmatpush1.msra.mxu0 %v276
    %4184 = vmatprep.subr.mxu0 0.0
    %4185 = vmatpush1.msra.mxu0 %v275
    %4186 = vmatprep.subr.mxu0 0.0
    %4187 = vmatpush1.msra.mxu0 %v274
    %4188 = vmatprep.subr.mxu0 0.0
    %4189 = vmatpush1.msra.mxu0 %v273
    %4190 = vmatprep.subr.mxu0 0.0
    %4191 = vmatpush1.msra.mxu0 %v272
    %4192 = vmatprep.subr.mxu0 0.0
    %4193 = vmatpush1.msra.mxu0 %v271
    %4194 = vmatprep.subr.mxu0 0.0
    %4195 = vmatpush1.msra.mxu0 %v270
    %4196 = vmatprep.subr.mxu0 0.0
    %4197 = vmatpush1.msra.mxu0 %v269
    %4198 = vmatprep.subr.mxu0 0.0
    %4199 = vmatpush1.msra.mxu0 %v268
    %4200 = vmatprep.subr.mxu0 0.0
    %4201 = vmatpush1.msra.mxu0 %v267
    %4202 = vmatprep.subr.mxu0 0.0
    %4203 = vmatpush1.msra.mxu0 %v266
    %4204 = vmatprep.subr.mxu0 0.0
    %4205 = vmatpush1.msra.mxu0 %v265
    %4206 = vmatprep.subr.mxu0 0.0
    %4207 = vmatpush1.msra.mxu0 %v264
    %4208 = vmatprep.subr.mxu0 0.0
    %4209 = vmatpush1.msra.mxu0 %v263
    %4210 = vmatprep.subr.mxu0 0.0
    %4211 = vmatpush1.msra.mxu0 %v262
    %4212 = vmatprep.subr.mxu0 0.0
    %4213 = vmatpush1.msra.mxu0 %v261
    %4214 = vmatprep.subr.mxu0 0.0
    %4215 = vmatpush2.msra.mxu0 0.0
    %4216 = vmatprep.subr.mxu0 0.0
    %4217 = vmatpush2.msra.mxu0 0.0
    %4218 = vmatprep.subr.mxu0 0.0
    %4219 = vmatpush2.msra.mxu0 0.0
    %4220 = vmatprep.subr.mxu0 0.0
    %4221 = vmatpush2.msra.mxu0 0.0
    %4222 = vmatprep.subr.mxu0 0.0
    %4223 = vmatpush2.msra.mxu0 0.0
    %4224 = vmatprep.subr.mxu0 0.0
    %4225 = vmatpush2.msra.mxu0 0.0
    %4226 = vmatprep.subr.mxu0 0.0
    %4227 = vmatpush2.msra.mxu0 0.0
    %4228 = vmatprep.subr.mxu0 0.0
    %4229 = vmatpush2.msra.mxu0 0.0
    %4230 = vmatprep.subr.mxu0 0.0
    %4231 = vmatpush2.msra.mxu0 0.0
    %4232 = vmatprep.subr.mxu0 0.0
    %4233 = vmatpush2.msra.mxu0 0.0
    %4234 = vmatprep.subr.mxu0 0.0
    %4235 = vmatpush2.msra.mxu0 0.0
    %4236 = vmatprep.subr.mxu0 0.0
    %4237 = vmatpush2.msra.mxu0 0.0
    %4238 = vmatprep.subr.mxu0 0.0
    %4239 = vmatpush2.msra.mxu0 %v280
    %4240 = vmatprep.subr.mxu0 0.0
    %4241 = vmatpush2.msra.mxu0 %v279
    %4242 = vmatprep.subr.mxu0 0.0
    %4243 = vmatpush2.msra.mxu0 %v278
    %4244 = vmatprep.subr.mxu0 0.0
    %4245 = vmatpush2.msra.mxu0 %v277
    %4246 = vmatprep.mubr.f32.mxu0 %v3467
    %4247 = vmatmul.mubr.f32.gmra.mxu0 %v3464
    %v4248 = vpop.f32.mrf.mxu0
    %v4249 = vadd.f32 0.0, %v4248
    %v4250 = vpop.f32.mrf.mxu0
    %4251 = vmatprep.mubr.f32.mxu0 %v3470
    %4252 = vmatmul.mubr.f32.gmra.mxu0 %v3465
    %v4253 = vpop.f32.mrf.mxu0
    %v4254 = vadd.f32 0.0, %v4253
    %v4255 = vpop.f32.mrf.mxu0
    %4256 = vdwg.mxu0
    %v4257 = vadd.f32 %v4180, %v4249
    %v4258 = vadd.f32 %v4181, %v4254
    %v4259 = vxor.u32 %v4257, 2147483648
    %v4260 = vxor.u32 %v4258, 2147483648
    %v4261 = vmul.f32 %v4259, 1.442695
    %v4262 = vpow.pop %v4261
    %v4263 = vmul.f32 %v4260, 1.442695
    %v4264 = vpow.pop %v4263
    %v4265 = vadd.f32 %v4262, 1.0
    %v4266 = vadd.f32 %v4264, 1.0
    %v4267 = vrcp.pop %v4265
    %v4268 = vmul.f32 1.0, %v4267
    %v4269 = vrcp.pop %v4266
    %v4270 = vmul.f32 1.0, %v4269
    %4273 = vrot.lane.b32.xlu0 %v4268, 96
    %v4274 = vpop.permute.xlu0 %4273
    %4275 = vrot.lane.b32.xlu0 %v4270, 96
    %v4276 = vpop.permute.xlu0 %4275
    %v4279 = vmul.f32 %v3256, %v4274
    %v4280 = vmul.f32 %v3257, %v4276
    %4281 = vmatprep.subr.mxu0 0.0
    %4282 = vmatpush1.msra.mxu0 0.0
    %4283 = vmatprep.subr.mxu0 0.0
    %4284 = vmatpush1.msra.mxu0 0.0
    %4285 = vmatprep.subr.mxu0 0.0
    %4286 = vmatpush1.msra.mxu0 0.0
    %4287 = vmatprep.subr.mxu0 0.0
    %4288 = vmatpush1.msra.mxu0 0.0
    %4289 = vmatprep.subr.mxu0 0.0
    %4290 = vmatpush1.msra.mxu0 0.0
    %4291 = vmatprep.subr.mxu0 0.0
    %4292 = vmatpush1.msra.mxu0 0.0
    %4293 = vmatprep.subr.mxu0 0.0
    %4294 = vmatpush1.msra.mxu0 0.0
    %4295 = vmatprep.subr.mxu0 0.0
    %4296 = vmatpush1.msra.mxu0 0.0
    %4297 = vmatprep.subr.mxu0 0.0
    %4298 = vmatpush1.msra.mxu0 0.0
    %4299 = vmatprep.subr.mxu0 0.0
    %4300 = vmatpush1.msra.mxu0 0.0
    %4301 = vmatprep.subr.mxu0 0.0
    %4302 = vmatpush1.msra.mxu0 0.0
    %4303 = vmatprep.subr.mxu0 0.0
    %4304 = vmatpush1.msra.mxu0 0.0
    %4305 = vmatprep.subr.mxu0 0.0
    %4306 = vmatpush1.msra.mxu0 %v4280
    %4307 = vmatprep.subr.mxu0 0.0
    %4308 = vmatpush1.msra.mxu0 %v4279
    %4309 = vmatprep.subr.mxu0 0.0
    %4310 = vmatpush1.msra.mxu0 %v4280
    %4311 = vmatprep.subr.mxu0 0.0
    %4312 = vmatpush1.msra.mxu0 %v4279
    %4313 = vmatprep.subr.mxu0 0.0
    %4314 = vmatpush2.msra.mxu0 0.0
    %4315 = vmatprep.subr.mxu0 0.0
    %4316 = vmatpush2.msra.mxu0 0.0
    %4317 = vmatprep.subr.mxu0 0.0
    %4318 = vmatpush2.msra.mxu0 0.0
    %4319 = vmatprep.subr.mxu0 0.0
    %4320 = vmatpush2.msra.mxu0 0.0
    %4321 = vmatprep.subr.mxu0 0.0
    %4322 = vmatpush2.msra.mxu0 0.0
    %4323 = vmatprep.subr.mxu0 0.0
    %4324 = vmatpush2.msra.mxu0 0.0
    %4325 = vmatprep.subr.mxu0 0.0
    %4326 = vmatpush2.msra.mxu0 0.0
    %4327 = vmatprep.subr.mxu0 0.0
    %4328 = vmatpush2.msra.mxu0 0.0
    %4329 = vmatprep.subr.mxu0 0.0
    %4330 = vmatpush2.msra.mxu0 0.0
    %4331 = vmatprep.subr.mxu0 0.0
    %4332 = vmatpush2.msra.mxu0 0.0
    %4333 = vmatprep.subr.mxu0 0.0
    %4334 = vmatpush2.msra.mxu0 0.0
    %4335 = vmatprep.subr.mxu0 0.0
    %4336 = vmatpush2.msra.mxu0 0.0
    %4337 = vmatprep.subr.mxu0 0.0
    %4338 = vmatpush2.msra.mxu0 0.0
    %4339 = vmatprep.subr.mxu0 0.0
    %4340 = vmatpush2.msra.mxu0 0.0
    %4341 = vmatprep.subr.mxu0 0.0
    %4342 = vmatpush2.msra.mxu0 0.0
    %4343 = vmatprep.subr.mxu0 0.0
    %4344 = vmatpush2.msra.mxu0 0.0
    %4345 = vmatprep.mubr.f32.mxu0 0.0
    %4346 = vmatmul.mubr.f32.gmra.mxu0 %v44
    %v4347 = vpop.f32.mrf.mxu0
    %v4348 = vadd.f32 0.0, %v4347
    %v4349 = vpop.f32.mrf.mxu0
    %4350 = vmatprep.mubr.f32.mxu0 0.0
    %4351 = vmatmul.mubr.f32.gmra.mxu0 %v47
    %v4352 = vpop.f32.mrf.mxu0
    %v4353 = vadd.f32 0.0, %v4352
    %v4354 = vpop.f32.mrf.mxu0
    %4355 = vmatprep.mubr.f32.mxu0 0.0
    %4356 = vmatmul.mubr.f32.gmra.mxu0 %v50
    %v4357 = vpop.f32.mrf.mxu0
    %v4358 = vadd.f32 0.0, %v4357
    %v4359 = vpop.f32.mrf.mxu0
    %4360 = vmatprep.mubr.f32.mxu0 0.0
    %4361 = vmatmul.mubr.f32.gmra.mxu0 %v53
    %v4362 = vpop.f32.mrf.mxu0
    %v4363 = vadd.f32 0.0, %v4362
    %v4364 = vpop.f32.mrf.mxu0
    %4365 = vdwg.mxu0
    %4366 = vmatprep.subr.mxu0 0.0
    %4367 = vmatpush1.msra.mxu0 0.0
    %4368 = vmatprep.subr.mxu0 0.0
    %4369 = vmatpush1.msra.mxu0 0.0
    %4370 = vmatprep.subr.mxu0 0.0
    %4371 = vmatpush1.msra.mxu0 0.0
    %4372 = vmatprep.subr.mxu0 0.0
    %4373 = vmatpush1.msra.mxu0 0.0
    %4374 = vmatprep.subr.mxu0 0.0
    %4375 = vmatpush1.msra.mxu0 0.0
    %4376 = vmatprep.subr.mxu0 0.0
    %4377 = vmatpush1.msra.mxu0 0.0
    %4378 = vmatprep.subr.mxu0 0.0
    %4379 = vmatpush1.msra.mxu0 0.0
    %4380 = vmatprep.subr.mxu0 0.0
    %4381 = vmatpush1.msra.mxu0 0.0
    %4382 = vmatprep.subr.mxu0 0.0
    %4383 = vmatpush1.msra.mxu0 0.0
    %4384 = vmatprep.subr.mxu0 0.0
    %4385 = vmatpush1.msra.mxu0 0.0
    %4386 = vmatprep.subr.mxu0 0.0
    %4387 = vmatpush1.msra.mxu0 0.0
    %4388 = vmatprep.subr.mxu0 0.0
    %4389 = vmatpush1.msra.mxu0 0.0
    %4390 = vmatprep.subr.mxu0 0.0
    %4391 = vmatpush1.msra.mxu0 %v4363
    %4392 = vmatprep.subr.mxu0 0.0
    %4393 = vmatpush1.msra.mxu0 %v4358
    %4394 = vmatprep.subr.mxu0 0.0
    %4395 = vmatpush1.msra.mxu0 %v4353
    %4396 = vmatprep.subr.mxu0 0.0
    %4397 = vmatpush1.msra.mxu0 %v4348
    %4398 = vmatprep.subr.mxu0 0.0
    %4399 = vmatpush2.msra.mxu0 0.0
    %4400 = vmatprep.subr.mxu0 0.0
    %4401 = vmatpush2.msra.mxu0 0.0
    %4402 = vmatprep.subr.mxu0 0.0
    %4403 = vmatpush2.msra.mxu0 0.0
    %4404 = vmatprep.subr.mxu0 0.0
    %4405 = vmatpush2.msra.mxu0 0.0
    %4406 = vmatprep.subr.mxu0 0.0
    %4407 = vmatpush2.msra.mxu0 0.0
    %4408 = vmatprep.subr.mxu0 0.0
    %4409 = vmatpush2.msra.mxu0 0.0
    %4410 = vmatprep.subr.mxu0 0.0
    %4411 = vmatpush2.msra.mxu0 0.0
    %4412 = vmatprep.subr.mxu0 0.0
    %4413 = vmatpush2.msra.mxu0 0.0
    %4414 = vmatprep.subr.mxu0 0.0
    %4415 = vmatpush2.msra.mxu0 0.0
    %4416 = vmatprep.subr.mxu0 0.0
    %4417 = vmatpush2.msra.mxu0 0.0
    %4418 = vmatprep.subr.mxu0 0.0
    %4419 = vmatpush2.msra.mxu0 0.0
    %4420 = vmatprep.subr.mxu0 0.0
    %4421 = vmatpush2.msra.mxu0 0.0
    %4422 = vmatprep.subr.mxu0 0.0
    %4423 = vmatpush2.msra.mxu0 0.0
    %4424 = vmatprep.subr.mxu0 0.0
    %4425 = vmatpush2.msra.mxu0 0.0
    %4426 = vmatprep.subr.mxu0 0.0
    %4427 = vmatpush2.msra.mxu0 0.0
    %4428 = vmatprep.subr.mxu0 0.0
    %4429 = vmatpush2.msra.mxu0 0.0
    %4430 = vmatprep.mubr.f32.mxu0 0.0
    %4431 = vmatmul.mubr.f32.gmra.mxu0 %v44
    %v4432 = vpop.f32.mrf.mxu0
    %v4433 = vadd.f32 0.0, %v4432
    %v4434 = vpop.f32.mrf.mxu0
    %4435 = vmatprep.mubr.f32.mxu0 0.0
    %4436 = vmatmul.mubr.f32.gmra.mxu0 %v47
    %v4437 = vpop.f32.mrf.mxu0
    %v4438 = vadd.f32 0.0, %v4437
    %v4439 = vpop.f32.mrf.mxu0
    %4440 = vmatprep.mubr.f32.mxu0 0.0
    %4441 = vmatmul.mubr.f32.gmra.mxu0 %v50
    %v4442 = vpop.f32.mrf.mxu0
    %v4443 = vadd.f32 0.0, %v4442
    %v4444 = vpop.f32.mrf.mxu0
    %4445 = vmatprep.mubr.f32.mxu0 0.0
    %4446 = vmatmul.mubr.f32.gmra.mxu0 %v53
    %v4447 = vpop.f32.mrf.mxu0
    %v4448 = vadd.f32 0.0, %v4447
    %v4449 = vpop.f32.mrf.mxu0
    %4450 = vdwg.mxu0
    %v4451 = vmul.f32 %v4433, 2.0
    %v4452 = vmul.f32 %v4438, 2.0
    %v4453 = vmul.f32 %v4443, 2.0
    %v4454 = vmul.f32 %v4448, 2.0
    %v4455 = vsub.f32 %v4451, %v4279
    %v4456 = vsub.f32 %v4452, %v4280
    %v4457 = vsub.f32 %v4453, %v4279
    %v4458 = vsub.f32 %v4454, %v4280
    %4461 = vrot.lane.b32.xlu0 %v4348, 32
    %v4462 = vpop.permute.xlu0 %4461
    %4463 = vrot.lane.b32.xlu0 %v4353, 32
    %v4464 = vpop.permute.xlu0 %4463
    %4469 = vrot.lane.b32.xlu0 %v4455, 64
    %v4470 = vpop.permute.xlu0 %4469
    %4471 = vrot.lane.b32.xlu0 %v4456, 64
    %v4472 = vpop.permute.xlu0 %4471
    %4477 = vrot.lane.b32.xlu0 %v4358, 96
    %v4478 = vpop.permute.xlu0 %4477
    %4479 = vrot.lane.b32.xlu0 %v4363, 96
    %v4480 = vpop.permute.xlu0 %4479
    %v4483 = vsel %vm42, %v4279, %v4462
    %v4484 = vsel %vm42, %v4280, %v4464
    %v4485 = vsel %vm255, %v4483, %v4470
    %v4486 = vsel %vm255, %v4484, %v4472
    %v4487 = vsel %vm258, %v4485, %v4478
    %v4488 = vsel %vm258, %v4486, %v4480
    %v4490 = vsel %vm42, %v4457, 0
    %v4493 = vsel %vm42, %v4458, 0
    %4495 = vmatprep.subr.mxu0 0.0
    %4496 = vmatpush1.msra.mxu0 %v609
    %4497 = vmatprep.subr.mxu0 0.0
    %4498 = vmatpush1.msra.mxu0 %v608
    %4499 = vmatprep.subr.mxu0 0.0
    %4500 = vmatpush1.msra.mxu0 %v607
    %4501 = vmatprep.subr.mxu0 0.0
    %4502 = vmatpush1.msra.mxu0 %v606
    %4503 = vmatprep.subr.mxu0 0.0
    %4504 = vmatpush1.msra.mxu0 %v605
    %4505 = vmatprep.subr.mxu0 0.0
    %4506 = vmatpush1.msra.mxu0 %v604
    %4507 = vmatprep.subr.mxu0 0.0
    %4508 = vmatpush1.msra.mxu0 %v603
    %4509 = vmatprep.subr.mxu0 0.0
    %4510 = vmatpush1.msra.mxu0 %v602
    %4511 = vmatprep.subr.mxu0 0.0
    %4512 = vmatpush1.msra.mxu0 %v601
    %4513 = vmatprep.subr.mxu0 0.0
    %4514 = vmatpush1.msra.mxu0 %v600
    %4515 = vmatprep.subr.mxu0 0.0
    %4516 = vmatpush1.msra.mxu0 %v599
    %4517 = vmatprep.subr.mxu0 0.0
    %4518 = vmatpush1.msra.mxu0 %v598
    %4519 = vmatprep.subr.mxu0 0.0
    %4520 = vmatpush1.msra.mxu0 %v597
    %4521 = vmatprep.subr.mxu0 0.0
    %4522 = vmatpush1.msra.mxu0 %v596
    %4523 = vmatprep.subr.mxu0 0.0
    %4524 = vmatpush1.msra.mxu0 %v595
    %4525 = vmatprep.subr.mxu0 0.0
    %4526 = vmatpush1.msra.mxu0 %v594
    %4527 = vmatprep.subr.mxu0 0.0
    %4528 = vmatpush2.msra.mxu0 0.0
    %4529 = vmatprep.subr.mxu0 0.0
    %4530 = vmatpush2.msra.mxu0 0.0
    %4531 = vmatprep.subr.mxu0 0.0
    %4532 = vmatpush2.msra.mxu0 0.0
    %4533 = vmatprep.subr.mxu0 0.0
    %4534 = vmatpush2.msra.mxu0 0.0
    %4535 = vmatprep.subr.mxu0 0.0
    %4536 = vmatpush2.msra.mxu0 0.0
    %4537 = vmatprep.subr.mxu0 0.0
    %4538 = vmatpush2.msra.mxu0 0.0
    %4539 = vmatprep.subr.mxu0 0.0
    %4540 = vmatpush2.msra.mxu0 0.0
    %4541 = vmatprep.subr.mxu0 0.0
    %4542 = vmatpush2.msra.mxu0 0.0
    %4543 = vmatprep.subr.mxu0 0.0
    %4544 = vmatpush2.msra.mxu0 0.0
    %4545 = vmatprep.subr.mxu0 0.0
    %4546 = vmatpush2.msra.mxu0 0.0
    %4547 = vmatprep.subr.mxu0 0.0
    %4548 = vmatpush2.msra.mxu0 0.0
    %4549 = vmatprep.subr.mxu0 0.0
    %4550 = vmatpush2.msra.mxu0 0.0
    %4551 = vmatprep.subr.mxu0 0.0
    %4552 = vmatpush2.msra.mxu0 %v613
    %4553 = vmatprep.subr.mxu0 0.0
    %4554 = vmatpush2.msra.mxu0 %v612
    %4555 = vmatprep.subr.mxu0 0.0
    %4556 = vmatpush2.msra.mxu0 %v611
    %4557 = vmatprep.subr.mxu0 0.0
    %4558 = vmatpush2.msra.mxu0 %v610
    %4559 = vmatprep.mubr.f32.mxu0 %v4490
    %4560 = vmatmul.mubr.f32.gmra.mxu0 %v4487
    %v4561 = vpop.f32.mrf.mxu0
    %v4562 = vadd.f32 0.0, %v4561
    %v4563 = vpop.f32.mrf.mxu0
    %4564 = vmatprep.mubr.f32.mxu0 %v4493
    %4565 = vmatmul.mubr.f32.gmra.mxu0 %v4488
    %v4566 = vpop.f32.mrf.mxu0
    %v4567 = vadd.f32 0.0, %v4566
    %v4568 = vpop.f32.mrf.mxu0
    %4569 = vdwg.mxu0
    %4572 = vrot.lane.b32.xlu0 %v4562, 64
    %v4573 = vpop.permute.xlu0 %4572
    %4574 = vrot.lane.b32.xlu0 %v4567, 64
    %v4575 = vpop.permute.xlu0 %4574
    %v4578 = vadd.f32 %v4180, %v4573
    %v4579 = vadd.f32 %v4181, %v4575
    %v4580 = vtanh.pop %v4578
    %v4581 = vtanh.pop %v4579
    %v4582 = vmul.f32 %v4268, %v3256
    %v4583 = vmul.f32 %v4270, %v3257
    %v4584 = vsub.f32 1.0, %v4268
    %v4585 = vsub.f32 1.0, %v4270
    %4588 = vrot.lane.b32.xlu0 %v4580, 64
    %v4589 = vpop.permute.xlu0 %4588
    %4590 = vrot.lane.b32.xlu0 %v4581, 64
    %v4591 = vpop.permute.xlu0 %4590
    %v4594 = vmul.f32 %v4584, %v4589
    %v4595 = vmul.f32 %v4585, %v4591
    %v4596 = vadd.f32 %v4582, %v4594
    %v4597 = vadd.f32 %v4583, %v4595
    %v4598 = vmax.f32 %v4596, 0.0
    %v4599 = vmax.f32 %v4597, 0.0
    %4600 = vmatprep.subr.mxu0 0.0
    %4601 = vmatpush1.msra.mxu0 0.0
    %4602 = vmatprep.subr.mxu0 0.0
    %4603 = vmatpush1.msra.mxu0 0.0
    %4604 = vmatprep.subr.mxu0 0.0
    %4605 = vmatpush1.msra.mxu0 0.0
    %4606 = vmatprep.subr.mxu0 0.0
    %4607 = vmatpush1.msra.mxu0 0.0
    %4608 = vmatprep.subr.mxu0 0.0
    %4609 = vmatpush1.msra.mxu0 0.0
    %4610 = vmatprep.subr.mxu0 0.0
    %4611 = vmatpush1.msra.mxu0 0.0
    %4612 = vmatprep.subr.mxu0 0.0
    %4613 = vmatpush1.msra.mxu0 0.0
    %4614 = vmatprep.subr.mxu0 0.0
    %4615 = vmatpush1.msra.mxu0 0.0
    %4616 = vmatprep.subr.mxu0 0.0
    %4617 = vmatpush1.msra.mxu0 0.0
    %4618 = vmatprep.subr.mxu0 0.0
    %4619 = vmatpush1.msra.mxu0 0.0
    %4620 = vmatprep.subr.mxu0 0.0
    %4621 = vmatpush1.msra.mxu0 0.0
    %4622 = vmatprep.subr.mxu0 0.0
    %4623 = vmatpush1.msra.mxu0 0.0
    %4624 = vmatprep.subr.mxu0 0.0
    %4625 = vmatpush1.msra.mxu0 %v4599
    %4626 = vmatprep.subr.mxu0 0.0
    %4627 = vmatpush1.msra.mxu0 %v4598
    %4628 = vmatprep.subr.mxu0 0.0
    %4629 = vmatpush1.msra.mxu0 %v4599
    %4630 = vmatprep.subr.mxu0 0.0
    %4631 = vmatpush1.msra.mxu0 %v4598
    %4632 = vmatprep.subr.mxu0 0.0
    %4633 = vmatpush2.msra.mxu0 0.0
    %4634 = vmatprep.subr.mxu0 0.0
    %4635 = vmatpush2.msra.mxu0 0.0
    %4636 = vmatprep.subr.mxu0 0.0
    %4637 = vmatpush2.msra.mxu0 0.0
    %4638 = vmatprep.subr.mxu0 0.0
    %4639 = vmatpush2.msra.mxu0 0.0
    %4640 = vmatprep.subr.mxu0 0.0
    %4641 = vmatpush2.msra.mxu0 0.0
    %4642 = vmatprep.subr.mxu0 0.0
    %4643 = vmatpush2.msra.mxu0 0.0
    %4644 = vmatprep.subr.mxu0 0.0
    %4645 = vmatpush2.msra.mxu0 0.0
    %4646 = vmatprep.subr.mxu0 0.0
    %4647 = vmatpush2.msra.mxu0 0.0
    %4648 = vmatprep.subr.mxu0 0.0
    %4649 = vmatpush2.msra.mxu0 0.0
    %4650 = vmatprep.subr.mxu0 0.0
    %4651 = vmatpush2.msra.mxu0 0.0
    %4652 = vmatprep.subr.mxu0 0.0
    %4653 = vmatpush2.msra.mxu0 0.0
    %4654 = vmatprep.subr.mxu0 0.0
    %4655 = vmatpush2.msra.mxu0 0.0
    %4656 = vmatprep.subr.mxu0 0.0
    %4657 = vmatpush2.msra.mxu0 0.0
    %4658 = vmatprep.subr.mxu0 0.0
    %4659 = vmatpush2.msra.mxu0 0.0
    %4660 = vmatprep.subr.mxu0 0.0
    %4661 = vmatpush2.msra.mxu0 0.0
    %4662 = vmatprep.subr.mxu0 0.0
    %4663 = vmatpush2.msra.mxu0 0.0
    %4664 = vmatprep.mubr.f32.mxu0 0.0
    %4665 = vmatmul.mubr.f32.gmra.mxu0 %v44
    %v4666 = vpop.f32.mrf.mxu0
    %v4667 = vadd.f32 0.0, %v4666
    %v4668 = vpop.f32.mrf.mxu0
    %4669 = vmatprep.mubr.f32.mxu0 0.0
    %4670 = vmatmul.mubr.f32.gmra.mxu0 %v47
    %v4671 = vpop.f32.mrf.mxu0
    %v4672 = vadd.f32 0.0, %v4671
    %v4673 = vpop.f32.mrf.mxu0
    %4674 = vmatprep.mubr.f32.mxu0 0.0
    %4675 = vmatmul.mubr.f32.gmra.mxu0 %v50
    %v4676 = vpop.f32.mrf.mxu0
    %v4677 = vadd.f32 0.0, %v4676
    %v4678 = vpop.f32.mrf.mxu0
    %4679 = vmatprep.mubr.f32.mxu0 0.0
    %4680 = vmatmul.mubr.f32.gmra.mxu0 %v53
    %v4681 = vpop.f32.mrf.mxu0
    %v4682 = vadd.f32 0.0, %v4681
    %v4683 = vpop.f32.mrf.mxu0
    %4684 = vdwg.mxu0
    %4685 = vmatprep.subr.mxu0 0.0
    %4686 = vmatpush1.msra.mxu0 0.0
    %4687 = vmatprep.subr.mxu0 0.0
    %4688 = vmatpush1.msra.mxu0 0.0
    %4689 = vmatprep.subr.mxu0 0.0
    %4690 = vmatpush1.msra.mxu0 0.0
    %4691 = vmatprep.subr.mxu0 0.0
    %4692 = vmatpush1.msra.mxu0 0.0
    %4693 = vmatprep.subr.mxu0 0.0
    %4694 = vmatpush1.msra.mxu0 0.0
    %4695 = vmatprep.subr.mxu0 0.0
    %4696 = vmatpush1.msra.mxu0 0.0
    %4697 = vmatprep.subr.mxu0 0.0
    %4698 = vmatpush1.msra.mxu0 0.0
    %4699 = vmatprep.subr.mxu0 0.0
    %4700 = vmatpush1.msra.mxu0 0.0
    %4701 = vmatprep.subr.mxu0 0.0
    %4702 = vmatpush1.msra.mxu0 0.0
    %4703 = vmatprep.subr.mxu0 0.0
    %4704 = vmatpush1.msra.mxu0 0.0
    %4705 = vmatprep.subr.mxu0 0.0
    %4706 = vmatpush1.msra.mxu0 0.0
    %4707 = vmatprep.subr.mxu0 0.0
    %4708 = vmatpush1.msra.mxu0 0.0
    %4709 = vmatprep.subr.mxu0 0.0
    %4710 = vmatpush1.msra.mxu0 %v4682
    %4711 = vmatprep.subr.mxu0 0.0
    %4712 = vmatpush1.msra.mxu0 %v4677
    %4713 = vmatprep.subr.mxu0 0.0
    %4714 = vmatpush1.msra.mxu0 %v4672
    %4715 = vmatprep.subr.mxu0 0.0
    %4716 = vmatpush1.msra.mxu0 %v4667
    %4717 = vmatprep.subr.mxu0 0.0
    %4718 = vmatpush2.msra.mxu0 0.0
    %4719 = vmatprep.subr.mxu0 0.0
    %4720 = vmatpush2.msra.mxu0 0.0
    %4721 = vmatprep.subr.mxu0 0.0
    %4722 = vmatpush2.msra.mxu0 0.0
    %4723 = vmatprep.subr.mxu0 0.0
    %4724 = vmatpush2.msra.mxu0 0.0
    %4725 = vmatprep.subr.mxu0 0.0
    %4726 = vmatpush2.msra.mxu0 0.0
    %4727 = vmatprep.subr.mxu0 0.0
    %4728 = vmatpush2.msra.mxu0 0.0
    %4729 = vmatprep.subr.mxu0 0.0
    %4730 = vmatpush2.msra.mxu0 0.0
    %4731 = vmatprep.subr.mxu0 0.0
    %4732 = vmatpush2.msra.mxu0 0.0
    %4733 = vmatprep.subr.mxu0 0.0
    %4734 = vmatpush2.msra.mxu0 0.0
    %4735 = vmatprep.subr.mxu0 0.0
    %4736 = vmatpush2.msra.mxu0 0.0
    %4737 = vmatprep.subr.mxu0 0.0
    %4738 = vmatpush2.msra.mxu0 0.0
    %4739 = vmatprep.subr.mxu0 0.0
    %4740 = vmatpush2.msra.mxu0 0.0
    %4741 = vmatprep.subr.mxu0 0.0
    %4742 = vmatpush2.msra.mxu0 0.0
    %4743 = vmatprep.subr.mxu0 0.0
    %4744 = vmatpush2.msra.mxu0 0.0
    %4745 = vmatprep.subr.mxu0 0.0
    %4746 = vmatpush2.msra.mxu0 0.0
    %4747 = vmatprep.subr.mxu0 0.0
    %4748 = vmatpush2.msra.mxu0 0.0
    %4749 = vmatprep.mubr.f32.mxu0 0.0
    %4750 = vmatmul.mubr.f32.gmra.mxu0 %v44
    %v4751 = vpop.f32.mrf.mxu0
    %v4752 = vadd.f32 0.0, %v4751
    %v4753 = vpop.f32.mrf.mxu0
    %4754 = vmatprep.mubr.f32.mxu0 0.0
    %4755 = vmatmul.mubr.f32.gmra.mxu0 %v47
    %v4756 = vpop.f32.mrf.mxu0
    %v4757 = vadd.f32 0.0, %v4756
    %v4758 = vpop.f32.mrf.mxu0
    %4759 = vmatprep.mubr.f32.mxu0 0.0
    %4760 = vmatmul.mubr.f32.gmra.mxu0 %v50
    %v4761 = vpop.f32.mrf.mxu0
    %v4762 = vadd.f32 0.0, %v4761
    %v4763 = vpop.f32.mrf.mxu0
    %4764 = vmatprep.mubr.f32.mxu0 0.0
    %4765 = vmatmul.mubr.f32.gmra.mxu0 %v53
    %v4766 = vpop.f32.mrf.mxu0
    %v4767 = vadd.f32 0.0, %v4766
    %v4768 = vpop.f32.mrf.mxu0
    %4769 = vdwg.mxu0
    %v4770 = vmul.f32 %v4752, 2.0
    %v4771 = vmul.f32 %v4757, 2.0
    %v4772 = vmul.f32 %v4762, 2.0
    %v4773 = vmul.f32 %v4767, 2.0
    %v4774 = vsub.f32 %v4770, %v4598
    %v4775 = vsub.f32 %v4771, %v4599
    %v4776 = vsub.f32 %v4772, %v4598
    %v4777 = vsub.f32 %v4773, %v4599
    %4780 = vrot.lane.b32.xlu0 %v4667, 32
    %v4781 = vpop.permute.xlu0 %4780
    %4782 = vrot.lane.b32.xlu0 %v4672, 32
    %v4783 = vpop.permute.xlu0 %4782
    %4788 = vrot.lane.b32.xlu0 %v4774, 64
    %v4789 = vpop.permute.xlu0 %4788
    %4790 = vrot.lane.b32.xlu0 %v4775, 64
    %v4791 = vpop.permute.xlu0 %4790
    %4796 = vrot.lane.b32.xlu0 %v4677, 96
    %v4797 = vpop.permute.xlu0 %4796
    %4798 = vrot.lane.b32.xlu0 %v4682, 96
    %v4799 = vpop.permute.xlu0 %4798
    %v4802 = vsel %vm42, %v4598, %v4781
    %v4803 = vsel %vm42, %v4599, %v4783
    %v4804 = vsel %vm255, %v4802, %v4789
    %v4805 = vsel %vm255, %v4803, %v4791
    %v4806 = vsel %vm258, %v4804, %v4797
    %v4807 = vsel %vm258, %v4805, %v4799
    %v4809 = vsel %vm42, %v4776, 0
    %v4812 = vsel %vm42, %v4777, 0
    %4814 = vmatprep.subr.mxu0 0.0
    %4815 = vmatpush1.msra.mxu0 %v946
    %4816 = vmatprep.subr.mxu0 0.0
    %4817 = vmatpush1.msra.mxu0 %v945
    %4818 = vmatprep.subr.mxu0 0.0
    %4819 = vmatpush1.msra.mxu0 %v944
    %4820 = vmatprep.subr.mxu0 0.0
    %4821 = vmatpush1.msra.mxu0 %v943
    %4822 = vmatprep.subr.mxu0 0.0
    %4823 = vmatpush1.msra.mxu0 %v942
    %4824 = vmatprep.subr.mxu0 0.0
    %4825 = vmatpush1.msra.mxu0 %v941
    %4826 = vmatprep.subr.mxu0 0.0
    %4827 = vmatpush1.msra.mxu0 %v940
    %4828 = vmatprep.subr.mxu0 0.0
    %4829 = vmatpush1.msra.mxu0 %v939
    %4830 = vmatprep.subr.mxu0 0.0
    %4831 = vmatpush1.msra.mxu0 %v938
    %4832 = vmatprep.subr.mxu0 0.0
    %4833 = vmatpush1.msra.mxu0 %v937
    %4834 = vmatprep.subr.mxu0 0.0
    %4835 = vmatpush1.msra.mxu0 %v936
    %4836 = vmatprep.subr.mxu0 0.0
    %4837 = vmatpush1.msra.mxu0 %v935
    %4838 = vmatprep.subr.mxu0 0.0
    %4839 = vmatpush1.msra.mxu0 %v934
    %4840 = vmatprep.subr.mxu0 0.0
    %4841 = vmatpush1.msra.mxu0 %v933
    %4842 = vmatprep.subr.mxu0 0.0
    %4843 = vmatpush1.msra.mxu0 %v932
    %4844 = vmatprep.subr.mxu0 0.0
    %4845 = vmatpush1.msra.mxu0 %v931
    %4846 = vmatprep.subr.mxu0 0.0
    %4847 = vmatpush2.msra.mxu0 0.0
    %4848 = vmatprep.subr.mxu0 0.0
    %4849 = vmatpush2.msra.mxu0 0.0
    %4850 = vmatprep.subr.mxu0 0.0
    %4851 = vmatpush2.msra.mxu0 0.0
    %4852 = vmatprep.subr.mxu0 0.0
    %4853 = vmatpush2.msra.mxu0 0.0
    %4854 = vmatprep.subr.mxu0 0.0
    %4855 = vmatpush2.msra.mxu0 0.0
    %4856 = vmatprep.subr.mxu0 0.0
    %4857 = vmatpush2.msra.mxu0 0.0
    %4858 = vmatprep.subr.mxu0 0.0
    %4859 = vmatpush2.msra.mxu0 0.0
    %4860 = vmatprep.subr.mxu0 0.0
    %4861 = vmatpush2.msra.mxu0 0.0
    %4862 = vmatprep.subr.mxu0 0.0
    %4863 = vmatpush2.msra.mxu0 0.0
    %4864 = vmatprep.subr.mxu0 0.0
    %4865 = vmatpush2.msra.mxu0 0.0
    %4866 = vmatprep.subr.mxu0 0.0
    %4867 = vmatpush2.msra.mxu0 0.0
    %4868 = vmatprep.subr.mxu0 0.0
    %4869 = vmatpush2.msra.mxu0 0.0
    %4870 = vmatprep.subr.mxu0 0.0
    %4871 = vmatpush2.msra.mxu0 %v950
    %4872 = vmatprep.subr.mxu0 0.0
    %4873 = vmatpush2.msra.mxu0 %v949
    %4874 = vmatprep.subr.mxu0 0.0
    %4875 = vmatpush2.msra.mxu0 %v948
    %4876 = vmatprep.subr.mxu0 0.0
    %4877 = vmatpush2.msra.mxu0 %v947
    %4878 = vmatprep.mubr.f32.mxu0 %v4809
    %4879 = vmatmul.mubr.f32.gmra.mxu0 %v4806
    %v4880 = vpop.f32.mrf.mxu0
    %v4881 = vadd.f32 %v956, %v4880
    %v4882 = vpop.f32.mrf.mxu0
    %4883 = vmatprep.mubr.f32.mxu0 %v4812
    %4884 = vmatmul.mubr.f32.gmra.mxu0 %v4807
    %v4885 = vpop.f32.mrf.mxu0
    %v4886 = vadd.f32 %v956, %v4885
    %v4887 = vpop.f32.mrf.mxu0
    %4888 = vdwg.mxu0
    %4889 = vmatprep.subr.mxu0 0.0
    %4890 = vmatpush1.msra.mxu0 0.0
    %4891 = vmatprep.subr.mxu0 0.0
    %4892 = vmatpush1.msra.mxu0 0.0
    %4893 = vmatprep.subr.mxu0 0.0
    %4894 = vmatpush1.msra.mxu0 0.0
    %4895 = vmatprep.subr.mxu0 0.0
    %4896 = vmatpush1.msra.mxu0 0.0
    %4897 = vmatprep.subr.mxu0 0.0
    %4898 = vmatpush1.msra.mxu0 0.0
    %4899 = vmatprep.subr.mxu0 0.0
    %4900 = vmatpush1.msra.mxu0 0.0
    %4901 = vmatprep.subr.mxu0 0.0
    %4902 = vmatpush1.msra.mxu0 0.0
    %4903 = vmatprep.subr.mxu0 0.0
    %4904 = vmatpush1.msra.mxu0 0.0
    %4905 = vmatprep.subr.mxu0 0.0
    %4906 = vmatpush1.msra.mxu0 0.0
    %4907 = vmatprep.subr.mxu0 0.0
    %4908 = vmatpush1.msra.mxu0 0.0
    %4909 = vmatprep.subr.mxu0 0.0
    %4910 = vmatpush1.msra.mxu0 0.0
    %4911 = vmatprep.subr.mxu0 0.0
    %4912 = vmatpush1.msra.mxu0 0.0
    %4913 = vmatprep.subr.mxu0 0.0
    %4914 = vmatpush1.msra.mxu0 %v4178
    %4915 = vmatprep.subr.mxu0 0.0
    %4916 = vmatpush1.msra.mxu0 %v4177
    %4917 = vmatprep.subr.mxu0 0.0
    %4918 = vmatpush1.msra.mxu0 %v4178
    %4919 = vmatprep.subr.mxu0 0.0
    %4920 = vmatpush1.msra.mxu0 %v4177
    %4921 = vmatprep.subr.mxu0 0.0
    %4922 = vmatpush2.msra.mxu0 0.0
    %4923 = vmatprep.subr.mxu0 0.0
    %4924 = vmatpush2.msra.mxu0 0.0
    %4925 = vmatprep.subr.mxu0 0.0
    %4926 = vmatpush2.msra.mxu0 0.0
    %4927 = vmatprep.subr.mxu0 0.0
    %4928 = vmatpush2.msra.mxu0 0.0
    %4929 = vmatprep.subr.mxu0 0.0
    %4930 = vmatpush2.msra.mxu0 0.0
    %4931 = vmatprep.subr.mxu0 0.0
    %4932 = vmatpush2.msra.mxu0 0.0
    %4933 = vmatprep.subr.mxu0 0.0
    %4934 = vmatpush2.msra.mxu0 0.0
    %4935 = vmatprep.subr.mxu0 0.0
    %4936 = vmatpush2.msra.mxu0 0.0
    %4937 = vmatprep.subr.mxu0 0.0
    %4938 = vmatpush2.msra.mxu0 0.0
    %4939 = vmatprep.subr.mxu0 0.0
    %4940 = vmatpush2.msra.mxu0 0.0
    %4941 = vmatprep.subr.mxu0 0.0
    %4942 = vmatpush2.msra.mxu0 0.0
    %4943 = vmatprep.subr.mxu0 0.0
    %4944 = vmatpush2.msra.mxu0 0.0
    %4945 = vmatprep.subr.mxu0 0.0
    %4946 = vmatpush2.msra.mxu0 0.0
    %4947 = vmatprep.subr.mxu0 0.0
    %4948 = vmatpush2.msra.mxu0 0.0
    %4949 = vmatprep.subr.mxu0 0.0
    %4950 = vmatpush2.msra.mxu0 0.0
    %4951 = vmatprep.subr.mxu0 0.0
    %4952 = vmatpush2.msra.mxu0 0.0
    %4953 = vmatprep.mubr.f32.mxu0 0.0
    %4954 = vmatmul.mubr.f32.gmra.mxu0 %v44
    %v4955 = vpop.f32.mrf.mxu0
    %v4956 = vadd.f32 0.0, %v4955
    %v4957 = vpop.f32.mrf.mxu0
    %4958 = vmatprep.mubr.f32.mxu0 0.0
    %4959 = vmatmul.mubr.f32.gmra.mxu0 %v47
    %v4960 = vpop.f32.mrf.mxu0
    %v4961 = vadd.f32 0.0, %v4960
    %v4962 = vpop.f32.mrf.mxu0
    %4963 = vmatprep.mubr.f32.mxu0 0.0
    %4964 = vmatmul.mubr.f32.gmra.mxu0 %v50
    %v4965 = vpop.f32.mrf.mxu0
    %v4966 = vadd.f32 0.0, %v4965
    %v4967 = vpop.f32.mrf.mxu0
    %4968 = vmatprep.mubr.f32.mxu0 0.0
    %4969 = vmatmul.mubr.f32.gmra.mxu0 %v53
    %v4970 = vpop.f32.mrf.mxu0
    %v4971 = vadd.f32 0.0, %v4970
    %v4972 = vpop.f32.mrf.mxu0
    %4973 = vdwg.mxu0
    %4974 = vmatprep.subr.mxu0 0.0
    %4975 = vmatpush1.msra.mxu0 0.0
    %4976 = vmatprep.subr.mxu0 0.0
    %4977 = vmatpush1.msra.mxu0 0.0
    %4978 = vmatprep.subr.mxu0 0.0
    %4979 = vmatpush1.msra.mxu0 0.0
    %4980 = vmatprep.subr.mxu0 0.0
    %4981 = vmatpush1.msra.mxu0 0.0
    %4982 = vmatprep.subr.mxu0 0.0
    %4983 = vmatpush1.msra.mxu0 0.0
    %4984 = vmatprep.subr.mxu0 0.0
    %4985 = vmatpush1.msra.mxu0 0.0
    %4986 = vmatprep.subr.mxu0 0.0
    %4987 = vmatpush1.msra.mxu0 0.0
    %4988 = vmatprep.subr.mxu0 0.0
    %4989 = vmatpush1.msra.mxu0 0.0
    %4990 = vmatprep.subr.mxu0 0.0
    %4991 = vmatpush1.msra.mxu0 0.0
    %4992 = vmatprep.subr.mxu0 0.0
    %4993 = vmatpush1.msra.mxu0 0.0
    %4994 = vmatprep.subr.mxu0 0.0
    %4995 = vmatpush1.msra.mxu0 0.0
    %4996 = vmatprep.subr.mxu0 0.0
    %4997 = vmatpush1.msra.mxu0 0.0
    %4998 = vmatprep.subr.mxu0 0.0
    %4999 = vmatpush1.msra.mxu0 %v4971
    %5000 = vmatprep.subr.mxu0 0.0
    %5001 = vmatpush1.msra.mxu0 %v4966
    %5002 = vmatprep.subr.mxu0 0.0
    %5003 = vmatpush1.msra.mxu0 %v4961
    %5004 = vmatprep.subr.mxu0 0.0
    %5005 = vmatpush1.msra.mxu0 %v4956
    %5006 = vmatprep.subr.mxu0 0.0
    %5007 = vmatpush2.msra.mxu0 0.0
    %5008 = vmatprep.subr.mxu0 0.0
    %5009 = vmatpush2.msra.mxu0 0.0
    %5010 = vmatprep.subr.mxu0 0.0
    %5011 = vmatpush2.msra.mxu0 0.0
    %5012 = vmatprep.subr.mxu0 0.0
    %5013 = vmatpush2.msra.mxu0 0.0
    %5014 = vmatprep.subr.mxu0 0.0
    %5015 = vmatpush2.msra.mxu0 0.0
    %5016 = vmatprep.subr.mxu0 0.0
    %5017 = vmatpush2.msra.mxu0 0.0
    %5018 = vmatprep.subr.mxu0 0.0
    %5019 = vmatpush2.msra.mxu0 0.0
    %5020 = vmatprep.subr.mxu0 0.0
    %5021 = vmatpush2.msra.mxu0 0.0
    %5022 = vmatprep.subr.mxu0 0.0
    %5023 = vmatpush2.msra.mxu0 0.0
    %5024 = vmatprep.subr.mxu0 0.0
    %5025 = vmatpush2.msra.mxu0 0.0
    %5026 = vmatprep.subr.mxu0 0.0
    %5027 = vmatpush2.msra.mxu0 0.0
    %5028 = vmatprep.subr.mxu0 0.0
    %5029 = vmatpush2.msra.mxu0 0.0
    %5030 = vmatprep.subr.mxu0 0.0
    %5031 = vmatpush2.msra.mxu0 0.0
    %5032 = vmatprep.subr.mxu0 0.0
    %5033 = vmatpush2.msra.mxu0 0.0
    %5034 = vmatprep.subr.mxu0 0.0
    %5035 = vmatpush2.msra.mxu0 0.0
    %5036 = vmatprep.subr.mxu0 0.0
    %5037 = vmatpush2.msra.mxu0 0.0
    %5038 = vmatprep.mubr.f32.mxu0 0.0
    %5039 = vmatmul.mubr.f32.gmra.mxu0 %v44
    %v5040 = vpop.f32.mrf.mxu0
    %v5041 = vadd.f32 0.0, %v5040
    %v5042 = vpop.f32.mrf.mxu0
    %5043 = vmatprep.mubr.f32.mxu0 0.0
    %5044 = vmatmul.mubr.f32.gmra.mxu0 %v47
    %v5045 = vpop.f32.mrf.mxu0
    %v5046 = vadd.f32 0.0, %v5045
    %v5047 = vpop.f32.mrf.mxu0
    %5048 = vmatprep.mubr.f32.mxu0 0.0
    %5049 = vmatmul.mubr.f32.gmra.mxu0 %v50
    %v5050 = vpop.f32.mrf.mxu0
    %v5051 = vadd.f32 0.0, %v5050
    %v5052 = vpop.f32.mrf.mxu0
    %5053 = vmatprep.mubr.f32.mxu0 0.0
    %5054 = vmatmul.mubr.f32.gmra.mxu0 %v53
    %v5055 = vpop.f32.mrf.mxu0
    %v5056 = vadd.f32 0.0, %v5055
    %v5057 = vpop.f32.mrf.mxu0
    %5058 = vdwg.mxu0
    %v5059 = vmul.f32 %v5041, 2.0
    %v5060 = vmul.f32 %v5046, 2.0
    %v5061 = vmul.f32 %v5051, 2.0
    %v5062 = vmul.f32 %v5056, 2.0
    %v5063 = vsub.f32 %v5059, %v4177
    %v5064 = vsub.f32 %v5060, %v4178
    %v5065 = vsub.f32 %v5061, %v4177
    %v5066 = vsub.f32 %v5062, %v4178
    %5069 = vrot.lane.b32.xlu0 %v4956, 32
    %v5070 = vpop.permute.xlu0 %5069
    %5071 = vrot.lane.b32.xlu0 %v4961, 32
    %v5072 = vpop.permute.xlu0 %5071
    %5077 = vrot.lane.b32.xlu0 %v5063, 64
    %v5078 = vpop.permute.xlu0 %5077
    %5079 = vrot.lane.b32.xlu0 %v5064, 64
    %v5080 = vpop.permute.xlu0 %5079
    %5085 = vrot.lane.b32.xlu0 %v4966, 96
    %v5086 = vpop.permute.xlu0 %5085
    %5087 = vrot.lane.b32.xlu0 %v4971, 96
    %v5088 = vpop.permute.xlu0 %5087
    %v5091 = vsel %vm42, %v4177, %v5070
    %v5092 = vsel %vm42, %v4178, %v5072
    %v5093 = vsel %vm255, %v5091, %v5078
    %v5094 = vsel %vm255, %v5092, %v5080
    %v5095 = vsel %vm258, %v5093, %v5086
    %v5096 = vsel %vm258, %v5094, %v5088
    %v5098 = vsel %vm42, %v5065, 0
    %v5101 = vsel %vm42, %v5066, 0
    %5103 = vmatprep.subr.mxu0 0.0
    %5104 = vmatpush1.msra.mxu0 %v1054
    %5105 = vmatprep.subr.mxu0 0.0
    %5106 = vmatpush1.msra.mxu0 %v1053
    %5107 = vmatprep.subr.mxu0 0.0
    %5108 = vmatpush1.msra.mxu0 %v1052
    %5109 = vmatprep.subr.mxu0 0.0
    %5110 = vmatpush1.msra.mxu0 %v1051
    %5111 = vmatprep.subr.mxu0 0.0
    %5112 = vmatpush1.msra.mxu0 %v1050
    %5113 = vmatprep.subr.mxu0 0.0
    %5114 = vmatpush1.msra.mxu0 %v1049
    %5115 = vmatprep.subr.mxu0 0.0
    %5116 = vmatpush1.msra.mxu0 %v1048
    %5117 = vmatprep.subr.mxu0 0.0
    %5118 = vmatpush1.msra.mxu0 %v1047
    %5119 = vmatprep.subr.mxu0 0.0
    %5120 = vmatpush1.msra.mxu0 %v1046
    %5121 = vmatprep.subr.mxu0 0.0
    %5122 = vmatpush1.msra.mxu0 %v1045
    %5123 = vmatprep.subr.mxu0 0.0
    %5124 = vmatpush1.msra.mxu0 %v1044
    %5125 = vmatprep.subr.mxu0 0.0
    %5126 = vmatpush1.msra.mxu0 %v1043
    %5127 = vmatprep.subr.mxu0 0.0
    %5128 = vmatpush1.msra.mxu0 %v1042
    %5129 = vmatprep.subr.mxu0 0.0
    %5130 = vmatpush1.msra.mxu0 %v1041
    %5131 = vmatprep.subr.mxu0 0.0
    %5132 = vmatpush1.msra.mxu0 %v1040
    %5133 = vmatprep.subr.mxu0 0.0
    %5134 = vmatpush1.msra.mxu0 %v1039
    %5135 = vmatprep.subr.mxu0 0.0
    %5136 = vmatpush2.msra.mxu0 0.0
    %5137 = vmatprep.subr.mxu0 0.0
    %5138 = vmatpush2.msra.mxu0 0.0
    %5139 = vmatprep.subr.mxu0 0.0
    %5140 = vmatpush2.msra.mxu0 0.0
    %5141 = vmatprep.subr.mxu0 0.0
    %5142 = vmatpush2.msra.mxu0 0.0
    %5143 = vmatprep.subr.mxu0 0.0
    %5144 = vmatpush2.msra.mxu0 0.0
    %5145 = vmatprep.subr.mxu0 0.0
    %5146 = vmatpush2.msra.mxu0 0.0
    %5147 = vmatprep.subr.mxu0 0.0
    %5148 = vmatpush2.msra.mxu0 0.0
    %5149 = vmatprep.subr.mxu0 0.0
    %5150 = vmatpush2.msra.mxu0 0.0
    %5151 = vmatprep.subr.mxu0 0.0
    %5152 = vmatpush2.msra.mxu0 0.0
    %5153 = vmatprep.subr.mxu0 0.0
    %5154 = vmatpush2.msra.mxu0 0.0
    %5155 = vmatprep.subr.mxu0 0.0
    %5156 = vmatpush2.msra.mxu0 0.0
    %5157 = vmatprep.subr.mxu0 0.0
    %5158 = vmatpush2.msra.mxu0 0.0
    %5159 = vmatprep.subr.mxu0 0.0
    %5160 = vmatpush2.msra.mxu0 %v1058
    %5161 = vmatprep.subr.mxu0 0.0
    %5162 = vmatpush2.msra.mxu0 %v1057
    %5163 = vmatprep.subr.mxu0 0.0
    %5164 = vmatpush2.msra.mxu0 %v1056
    %5165 = vmatprep.subr.mxu0 0.0
    %5166 = vmatpush2.msra.mxu0 %v1055
    %5167 = vmatprep.mubr.f32.mxu0 %v5098
    %5168 = vmatmul.mubr.f32.gmra.mxu0 %v5095
    %v5169 = vpop.f32.mrf.mxu0
    %v5170 = vadd.f32 0.0, %v5169
    %v5171 = vpop.f32.mrf.mxu0
    %5172 = vmatprep.mubr.f32.mxu0 %v5101
    %5173 = vmatmul.mubr.f32.gmra.mxu0 %v5096
    %v5174 = vpop.f32.mrf.mxu0
    %v5175 = vadd.f32 0.0, %v5174
    %v5176 = vpop.f32.mrf.mxu0
    %5177 = vdwg.mxu0
    %v5178 = vadd.f32 %v4881, %v5170
    %v5179 = vadd.f32 %v4886, %v5175
    %v5180 = vxor.u32 %v5178, 2147483648
    %v5181 = vxor.u32 %v5179, 2147483648
    %v5182 = vmul.f32 %v5180, 1.442695
    %v5183 = vpow.pop %v5182
    %v5184 = vmul.f32 %v5181, 1.442695
    %v5185 = vpow.pop %v5184
    %v5186 = vadd.f32 %v5183, 1.0
    %v5187 = vadd.f32 %v5185, 1.0
    %v5188 = vrcp.pop %v5186
    %v5189 = vmul.f32 1.0, %v5188
    %v5190 = vrcp.pop %v5187
    %v5191 = vmul.f32 1.0, %v5190
    %5194 = vrot.lane.b32.xlu0 %v5189, 96
    %v5195 = vpop.permute.xlu0 %5194
    %5196 = vrot.lane.b32.xlu0 %v5191, 96
    %v5197 = vpop.permute.xlu0 %5196
    %v5200 = vmul.f32 %v4177, %v5195
    %v5201 = vmul.f32 %v4178, %v5197
    %5202 = vmatprep.subr.mxu0 0.0
    %5203 = vmatpush1.msra.mxu0 0.0
    %5204 = vmatprep.subr.mxu0 0.0
    %5205 = vmatpush1.msra.mxu0 0.0
    %5206 = vmatprep.subr.mxu0 0.0
    %5207 = vmatpush1.msra.mxu0 0.0
    %5208 = vmatprep.subr.mxu0 0.0
    %5209 = vmatpush1.msra.mxu0 0.0
    %5210 = vmatprep.subr.mxu0 0.0
    %5211 = vmatpush1.msra.mxu0 0.0
    %5212 = vmatprep.subr.mxu0 0.0
    %5213 = vmatpush1.msra.mxu0 0.0
    %5214 = vmatprep.subr.mxu0 0.0
    %5215 = vmatpush1.msra.mxu0 0.0
    %5216 = vmatprep.subr.mxu0 0.0
    %5217 = vmatpush1.msra.mxu0 0.0
    %5218 = vmatprep.subr.mxu0 0.0
    %5219 = vmatpush1.msra.mxu0 0.0
    %5220 = vmatprep.subr.mxu0 0.0
    %5221 = vmatpush1.msra.mxu0 0.0
    %5222 = vmatprep.subr.mxu0 0.0
    %5223 = vmatpush1.msra.mxu0 0.0
    %5224 = vmatprep.subr.mxu0 0.0
    %5225 = vmatpush1.msra.mxu0 0.0
    %5226 = vmatprep.subr.mxu0 0.0
    %5227 = vmatpush1.msra.mxu0 %v5201
    %5228 = vmatprep.subr.mxu0 0.0
    %5229 = vmatpush1.msra.mxu0 %v5200
    %5230 = vmatprep.subr.mxu0 0.0
    %5231 = vmatpush1.msra.mxu0 %v5201
    %5232 = vmatprep.subr.mxu0 0.0
    %5233 = vmatpush1.msra.mxu0 %v5200
    %5234 = vmatprep.subr.mxu0 0.0
    %5235 = vmatpush2.msra.mxu0 0.0
    %5236 = vmatprep.subr.mxu0 0.0
    %5237 = vmatpush2.msra.mxu0 0.0
    %5238 = vmatprep.subr.mxu0 0.0
    %5239 = vmatpush2.msra.mxu0 0.0
    %5240 = vmatprep.subr.mxu0 0.0
    %5241 = vmatpush2.msra.mxu0 0.0
    %5242 = vmatprep.subr.mxu0 0.0
    %5243 = vmatpush2.msra.mxu0 0.0
    %5244 = vmatprep.subr.mxu0 0.0
    %5245 = vmatpush2.msra.mxu0 0.0
    %5246 = vmatprep.subr.mxu0 0.0
    %5247 = vmatpush2.msra.mxu0 0.0
    %5248 = vmatprep.subr.mxu0 0.0
    %5249 = vmatpush2.msra.mxu0 0.0
    %5250 = vmatprep.subr.mxu0 0.0
    %5251 = vmatpush2.msra.mxu0 0.0
    %5252 = vmatprep.subr.mxu0 0.0
    %5253 = vmatpush2.msra.mxu0 0.0
    %5254 = vmatprep.subr.mxu0 0.0
    %5255 = vmatpush2.msra.mxu0 0.0
    %5256 = vmatprep.subr.mxu0 0.0
    %5257 = vmatpush2.msra.mxu0 0.0
    %5258 = vmatprep.subr.mxu0 0.0
    %5259 = vmatpush2.msra.mxu0 0.0
    %5260 = vmatprep.subr.mxu0 0.0
    %5261 = vmatpush2.msra.mxu0 0.0
    %5262 = vmatprep.subr.mxu0 0.0
    %5263 = vmatpush2.msra.mxu0 0.0
    %5264 = vmatprep.subr.mxu0 0.0
    %5265 = vmatpush2.msra.mxu0 0.0
    %5266 = vmatprep.mubr.f32.mxu0 0.0
    %5267 = vmatmul.mubr.f32.gmra.mxu0 %v44
    %v5268 = vpop.f32.mrf.mxu0
    %v5269 = vadd.f32 0.0, %v5268
    %v5270 = vpop.f32.mrf.mxu0
    %5271 = vmatprep.mubr.f32.mxu0 0.0
    %5272 = vmatmul.mubr.f32.gmra.mxu0 %v47
    %v5273 = vpop.f32.mrf.mxu0
    %v5274 = vadd.f32 0.0, %v5273
    %v5275 = vpop.f32.mrf.mxu0
    %5276 = vmatprep.mubr.f32.mxu0 0.0
    %5277 = vmatmul.mubr.f32.gmra.mxu0 %v50
    %v5278 = vpop.f32.mrf.mxu0
    %v5279 = vadd.f32 0.0, %v5278
    %v5280 = vpop.f32.mrf.mxu0
    %5281 = vmatprep.mubr.f32.mxu0 0.0
    %5282 = vmatmul.mubr.f32.gmra.mxu0 %v53
    %v5283 = vpop.f32.mrf.mxu0
    %v5284 = vadd.f32 0.0, %v5283
    %v5285 = vpop.f32.mrf.mxu0
    %5286 = vdwg.mxu0
    %5287 = vmatprep.subr.mxu0 0.0
    %5288 = vmatpush1.msra.mxu0 0.0
    %5289 = vmatprep.subr.mxu0 0.0
    %5290 = vmatpush1.msra.mxu0 0.0
    %5291 = vmatprep.subr.mxu0 0.0
    %5292 = vmatpush1.msra.mxu0 0.0
    %5293 = vmatprep.subr.mxu0 0.0
    %5294 = vmatpush1.msra.mxu0 0.0
    %5295 = vmatprep.subr.mxu0 0.0
    %5296 = vmatpush1.msra.mxu0 0.0
    %5297 = vmatprep.subr.mxu0 0.0
    %5298 = vmatpush1.msra.mxu0 0.0
    %5299 = vmatprep.subr.mxu0 0.0
    %5300 = vmatpush1.msra.mxu0 0.0
    %5301 = vmatprep.subr.mxu0 0.0
    %5302 = vmatpush1.msra.mxu0 0.0
    %5303 = vmatprep.subr.mxu0 0.0
    %5304 = vmatpush1.msra.mxu0 0.0
    %5305 = vmatprep.subr.mxu0 0.0
    %5306 = vmatpush1.msra.mxu0 0.0
    %5307 = vmatprep.subr.mxu0 0.0
    %5308 = vmatpush1.msra.mxu0 0.0
    %5309 = vmatprep.subr.mxu0 0.0
    %5310 = vmatpush1.msra.mxu0 0.0
    %5311 = vmatprep.subr.mxu0 0.0
    %5312 = vmatpush1.msra.mxu0 %v5284
    %5313 = vmatprep.subr.mxu0 0.0
    %5314 = vmatpush1.msra.mxu0 %v5279
    %5315 = vmatprep.subr.mxu0 0.0
    %5316 = vmatpush1.msra.mxu0 %v5274
    %5317 = vmatprep.subr.mxu0 0.0
    %5318 = vmatpush1.msra.mxu0 %v5269
    %5319 = vmatprep.subr.mxu0 0.0
    %5320 = vmatpush2.msra.mxu0 0.0
    %5321 = vmatprep.subr.mxu0 0.0
    %5322 = vmatpush2.msra.mxu0 0.0
    %5323 = vmatprep.subr.mxu0 0.0
    %5324 = vmatpush2.msra.mxu0 0.0
    %5325 = vmatprep.subr.mxu0 0.0
    %5326 = vmatpush2.msra.mxu0 0.0
    %5327 = vmatprep.subr.mxu0 0.0
    %5328 = vmatpush2.msra.mxu0 0.0
    %5329 = vmatprep.subr.mxu0 0.0
    %5330 = vmatpush2.msra.mxu0 0.0
    %5331 = vmatprep.subr.mxu0 0.0
    %5332 = vmatpush2.msra.mxu0 0.0
    %5333 = vmatprep.subr.mxu0 0.0
    %5334 = vmatpush2.msra.mxu0 0.0
    %5335 = vmatprep.subr.mxu0 0.0
    %5336 = vmatpush2.msra.mxu0 0.0
    %5337 = vmatprep.subr.mxu0 0.0
    %5338 = vmatpush2.msra.mxu0 0.0
    %5339 = vmatprep.subr.mxu0 0.0
    %5340 = vmatpush2.msra.mxu0 0.0
    %5341 = vmatprep.subr.mxu0 0.0
    %5342 = vmatpush2.msra.mxu0 0.0
    %5343 = vmatprep.subr.mxu0 0.0
    %5344 = vmatpush2.msra.mxu0 0.0
    %5345 = vmatprep.subr.mxu0 0.0
    %5346 = vmatpush2.msra.mxu0 0.0
    %5347 = vmatprep.subr.mxu0 0.0
    %5348 = vmatpush2.msra.mxu0 0.0
    %5349 = vmatprep.subr.mxu0 0.0
    %5350 = vmatpush2.msra.mxu0 0.0
    %5351 = vmatprep.mubr.f32.mxu0 0.0
    %5352 = vmatmul.mubr.f32.gmra.mxu0 %v44
    %v5353 = vpop.f32.mrf.mxu0
    %v5354 = vadd.f32 0.0, %v5353
    %v5355 = vpop.f32.mrf.mxu0
    %5356 = vmatprep.mubr.f32.mxu0 0.0
    %5357 = vmatmul.mubr.f32.gmra.mxu0 %v47
    %v5358 = vpop.f32.mrf.mxu0
    %v5359 = vadd.f32 0.0, %v5358
    %v5360 = vpop.f32.mrf.mxu0
    %5361 = vmatprep.mubr.f32.mxu0 0.0
    %5362 = vmatmul.mubr.f32.gmra.mxu0 %v50
    %v5363 = vpop.f32.mrf.mxu0
    %v5364 = vadd.f32 0.0, %v5363
    %v5365 = vpop.f32.mrf.mxu0
    %5366 = vmatprep.mubr.f32.mxu0 0.0
    %5367 = vmatmul.mubr.f32.gmra.mxu0 %v53
    %v5368 = vpop.f32.mrf.mxu0
    %v5369 = vadd.f32 0.0, %v5368
    %v5370 = vpop.f32.mrf.mxu0
    %5371 = vdwg.mxu0
    %v5372 = vmul.f32 %v5354, 2.0
    %v5373 = vmul.f32 %v5359, 2.0
    %v5374 = vmul.f32 %v5364, 2.0
    %v5375 = vmul.f32 %v5369, 2.0
    %v5376 = vsub.f32 %v5372, %v5200
    %v5377 = vsub.f32 %v5373, %v5201
    %v5378 = vsub.f32 %v5374, %v5200
    %v5379 = vsub.f32 %v5375, %v5201
    %5382 = vrot.lane.b32.xlu0 %v5269, 32
    %v5383 = vpop.permute.xlu0 %5382
    %5384 = vrot.lane.b32.xlu0 %v5274, 32
    %v5385 = vpop.permute.xlu0 %5384
    %5390 = vrot.lane.b32.xlu0 %v5376, 64
    %v5391 = vpop.permute.xlu0 %5390
    %5392 = vrot.lane.b32.xlu0 %v5377, 64
    %v5393 = vpop.permute.xlu0 %5392
    %5398 = vrot.lane.b32.xlu0 %v5279, 96
    %v5399 = vpop.permute.xlu0 %5398
    %5400 = vrot.lane.b32.xlu0 %v5284, 96
    %v5401 = vpop.permute.xlu0 %5400
    %v5404 = vsel %vm42, %v5200, %v5383
    %v5405 = vsel %vm42, %v5201, %v5385
    %v5406 = vsel %vm255, %v5404, %v5391
    %v5407 = vsel %vm255, %v5405, %v5393
    %v5408 = vsel %vm258, %v5406, %v5399
    %v5409 = vsel %vm258, %v5407, %v5401
    %v5411 = vsel %vm42, %v5378, 0
    %v5414 = vsel %vm42, %v5379, 0
    %5416 = vmatprep.subr.mxu0 0.0
    %5417 = vmatpush1.msra.mxu0 %v1381
    %5418 = vmatprep.subr.mxu0 0.0
    %5419 = vmatpush1.msra.mxu0 %v1380
    %5420 = vmatprep.subr.mxu0 0.0
    %5421 = vmatpush1.msra.mxu0 %v1379
    %5422 = vmatprep.subr.mxu0 0.0
    %5423 = vmatpush1.msra.mxu0 %v1378
    %5424 = vmatprep.subr.mxu0 0.0
    %5425 = vmatpush1.msra.mxu0 %v1377
    %5426 = vmatprep.subr.mxu0 0.0
    %5427 = vmatpush1.msra.mxu0 %v1376
    %5428 = vmatprep.subr.mxu0 0.0
    %5429 = vmatpush1.msra.mxu0 %v1375
    %5430 = vmatprep.subr.mxu0 0.0
    %5431 = vmatpush1.msra.mxu0 %v1374
    %5432 = vmatprep.subr.mxu0 0.0
    %5433 = vmatpush1.msra.mxu0 %v1373
    %5434 = vmatprep.subr.mxu0 0.0
    %5435 = vmatpush1.msra.mxu0 %v1372
    %5436 = vmatprep.subr.mxu0 0.0
    %5437 = vmatpush1.msra.mxu0 %v1371
    %5438 = vmatprep.subr.mxu0 0.0
    %5439 = vmatpush1.msra.mxu0 %v1370
    %5440 = vmatprep.subr.mxu0 0.0
    %5441 = vmatpush1.msra.mxu0 %v1369
    %5442 = vmatprep.subr.mxu0 0.0
    %5443 = vmatpush1.msra.mxu0 %v1368
    %5444 = vmatprep.subr.mxu0 0.0
    %5445 = vmatpush1.msra.mxu0 %v1367
    %5446 = vmatprep.subr.mxu0 0.0
    %5447 = vmatpush1.msra.mxu0 %v1366
    %5448 = vmatprep.subr.mxu0 0.0
    %5449 = vmatpush2.msra.mxu0 0.0
    %5450 = vmatprep.subr.mxu0 0.0
    %5451 = vmatpush2.msra.mxu0 0.0
    %5452 = vmatprep.subr.mxu0 0.0
    %5453 = vmatpush2.msra.mxu0 0.0
    %5454 = vmatprep.subr.mxu0 0.0
    %5455 = vmatpush2.msra.mxu0 0.0
    %5456 = vmatprep.subr.mxu0 0.0
    %5457 = vmatpush2.msra.mxu0 0.0
    %5458 = vmatprep.subr.mxu0 0.0
    %5459 = vmatpush2.msra.mxu0 0.0
    %5460 = vmatprep.subr.mxu0 0.0
    %5461 = vmatpush2.msra.mxu0 0.0
    %5462 = vmatprep.subr.mxu0 0.0
    %5463 = vmatpush2.msra.mxu0 0.0
    %5464 = vmatprep.subr.mxu0 0.0
    %5465 = vmatpush2.msra.mxu0 0.0
    %5466 = vmatprep.subr.mxu0 0.0
    %5467 = vmatpush2.msra.mxu0 0.0
    %5468 = vmatprep.subr.mxu0 0.0
    %5469 = vmatpush2.msra.mxu0 0.0
    %5470 = vmatprep.subr.mxu0 0.0
    %5471 = vmatpush2.msra.mxu0 0.0
    %5472 = vmatprep.subr.mxu0 0.0
    %5473 = vmatpush2.msra.mxu0 %v1385
    %5474 = vmatprep.subr.mxu0 0.0
    %5475 = vmatpush2.msra.mxu0 %v1384
    %5476 = vmatprep.subr.mxu0 0.0
    %5477 = vmatpush2.msra.mxu0 %v1383
    %5478 = vmatprep.subr.mxu0 0.0
    %5479 = vmatpush2.msra.mxu0 %v1382
    %5480 = vmatprep.mubr.f32.mxu0 %v5411
    %5481 = vmatmul.mubr.f32.gmra.mxu0 %v5408
    %v5482 = vpop.f32.mrf.mxu0
    %v5483 = vadd.f32 0.0, %v5482
    %v5484 = vpop.f32.mrf.mxu0
    %5485 = vmatprep.mubr.f32.mxu0 %v5414
    %5486 = vmatmul.mubr.f32.gmra.mxu0 %v5409
    %v5487 = vpop.f32.mrf.mxu0
    %v5488 = vadd.f32 0.0, %v5487
    %v5489 = vpop.f32.mrf.mxu0
    %5490 = vdwg.mxu0
    %5493 = vrot.lane.b32.xlu0 %v5483, 64
    %v5494 = vpop.permute.xlu0 %5493
    %5495 = vrot.lane.b32.xlu0 %v5488, 64
    %v5496 = vpop.permute.xlu0 %5495
    %v5499 = vadd.f32 %v4881, %v5494
    %v5500 = vadd.f32 %v4886, %v5496
    %v5501 = vtanh.pop %v5499
    %v5502 = vtanh.pop %v5500
    %v5503 = vmul.f32 %v5189, %v4177
    %v5504 = vmul.f32 %v5191, %v4178
    %v5505 = vsub.f32 1.0, %v5189
    %v5506 = vsub.f32 1.0, %v5191
    %5509 = vrot.lane.b32.xlu0 %v5501, 64
    %v5510 = vpop.permute.xlu0 %5509
    %5511 = vrot.lane.b32.xlu0 %v5502, 64
    %v5512 = vpop.permute.xlu0 %5511
    %v5515 = vmul.f32 %v5505, %v5510
    %v5516 = vmul.f32 %v5506, %v5512
    %v5517 = vadd.f32 %v5503, %v5515
    %v5518 = vadd.f32 %v5504, %v5516
    %v5519 = vmax.f32 %v5517, 0.0
    %v5520 = vmax.f32 %v5518, 0.0
    %s5521 = scalar_lea.vmem %s0, 64
    %v5522 = vld [vmem:[%s5521] sm:$0xff]
    %v5523 = vld [vmem:[%s5521 + $0x8] sm:$0xff]
    %5524 = vmatprep.subr.mxu0 0.0
    %5525 = vmatpush1.msra.mxu0 %v276
    %5526 = vmatprep.subr.mxu0 0.0
    %5527 = vmatpush1.msra.mxu0 %v275
    %5528 = vmatprep.subr.mxu0 0.0
    %5529 = vmatpush1.msra.mxu0 %v274
    %5530 = vmatprep.subr.mxu0 0.0
    %5531 = vmatpush1.msra.mxu0 %v273
    %5532 = vmatprep.subr.mxu0 0.0
    %5533 = vmatpush1.msra.mxu0 %v272
    %5534 = vmatprep.subr.mxu0 0.0
    %5535 = vmatpush1.msra.mxu0 %v271
    %5536 = vmatprep.subr.mxu0 0.0
    %5537 = vmatpush1.msra.mxu0 %v270
    %5538 = vmatprep.subr.mxu0 0.0
    %5539 = vmatpush1.msra.mxu0 %v269
    %5540 = vmatprep.subr.mxu0 0.0
    %5541 = vmatpush1.msra.mxu0 %v268
    %5542 = vmatprep.subr.mxu0 0.0
    %5543 = vmatpush1.msra.mxu0 %v267
    %5544 = vmatprep.subr.mxu0 0.0
    %5545 = vmatpush1.msra.mxu0 %v266
    %5546 = vmatprep.subr.mxu0 0.0
    %5547 = vmatpush1.msra.mxu0 %v265
    %5548 = vmatprep.subr.mxu0 0.0
    %5549 = vmatpush1.msra.mxu0 %v264
    %5550 = vmatprep.subr.mxu0 0.0
    %5551 = vmatpush1.msra.mxu0 %v263
    %5552 = vmatprep.subr.mxu0 0.0
    %5553 = vmatpush1.msra.mxu0 %v262
    %5554 = vmatprep.subr.mxu0 0.0
    %5555 = vmatpush1.msra.mxu0 %v261
    %5556 = vmatprep.subr.mxu0 0.0
    %5557 = vmatpush2.msra.mxu0 0.0
    %5558 = vmatprep.subr.mxu0 0.0
    %5559 = vmatpush2.msra.mxu0 0.0
    %5560 = vmatprep.subr.mxu0 0.0
    %5561 = vmatpush2.msra.mxu0 0.0
    %5562 = vmatprep.subr.mxu0 0.0
    %5563 = vmatpush2.msra.mxu0 0.0
    %5564 = vmatprep.subr.mxu0 0.0
    %5565 = vmatpush2.msra.mxu0 0.0
    %5566 = vmatprep.subr.mxu0 0.0
    %5567 = vmatpush2.msra.mxu0 0.0
    %5568 = vmatprep.subr.mxu0 0.0
    %5569 = vmatpush2.msra.mxu0 0.0
    %5570 = vmatprep.subr.mxu0 0.0
    %5571 = vmatpush2.msra.mxu0 0.0
    %5572 = vmatprep.subr.mxu0 0.0
    %5573 = vmatpush2.msra.mxu0 0.0
    %5574 = vmatprep.subr.mxu0 0.0
    %5575 = vmatpush2.msra.mxu0 0.0
    %5576 = vmatprep.subr.mxu0 0.0
    %5577 = vmatpush2.msra.mxu0 0.0
    %5578 = vmatprep.subr.mxu0 0.0
    %5579 = vmatpush2.msra.mxu0 0.0
    %5580 = vmatprep.subr.mxu0 0.0
    %5581 = vmatpush2.msra.mxu0 %v280
    %5582 = vmatprep.subr.mxu0 0.0
    %5583 = vmatpush2.msra.mxu0 %v279
    %5584 = vmatprep.subr.mxu0 0.0
    %5585 = vmatpush2.msra.mxu0 %v278
    %5586 = vmatprep.subr.mxu0 0.0
    %5587 = vmatpush2.msra.mxu0 %v277
    %5588 = vmatprep.mubr.f32.mxu0 %v4809
    %5589 = vmatmul.mubr.f32.gmra.mxu0 %v4806
    %v5590 = vpop.f32.mrf.mxu0
    %v5591 = vadd.f32 0.0, %v5590
    %v5592 = vpop.f32.mrf.mxu0
    %5593 = vmatprep.mubr.f32.mxu0 %v4812
    %5594 = vmatmul.mubr.f32.gmra.mxu0 %v4807
    %v5595 = vpop.f32.mrf.mxu0
    %v5596 = vadd.f32 0.0, %v5595
    %v5597 = vpop.f32.mrf.mxu0
    %5598 = vdwg.mxu0
    %v5599 = vadd.f32 %v5522, %v5591
    %v5600 = vadd.f32 %v5523, %v5596
    %v5601 = vxor.u32 %v5599, 2147483648
    %v5602 = vxor.u32 %v5600, 2147483648
    %v5603 = vmul.f32 %v5601, 1.442695
    %v5604 = vpow.pop %v5603
    %v5605 = vmul.f32 %v5602, 1.442695
    %v5606 = vpow.pop %v5605
    %v5607 = vadd.f32 %v5604, 1.0
    %v5608 = vadd.f32 %v5606, 1.0
    %v5609 = vrcp.pop %v5607
    %v5610 = vmul.f32 1.0, %v5609
    %v5611 = vrcp.pop %v5608
    %v5612 = vmul.f32 1.0, %v5611
    %5615 = vrot.lane.b32.xlu0 %v5610, 96
    %v5616 = vpop.permute.xlu0 %5615
    %5617 = vrot.lane.b32.xlu0 %v5612, 96
    %v5618 = vpop.permute.xlu0 %5617
    %v5621 = vmul.f32 %v4598, %v5616
    %v5622 = vmul.f32 %v4599, %v5618
    %5623 = vmatprep.subr.mxu0 0.0
    %5624 = vmatpush1.msra.mxu0 0.0
    %5625 = vmatprep.subr.mxu0 0.0
    %5626 = vmatpush1.msra.mxu0 0.0
    %5627 = vmatprep.subr.mxu0 0.0
    %5628 = vmatpush1.msra.mxu0 0.0
    %5629 = vmatprep.subr.mxu0 0.0
    %5630 = vmatpush1.msra.mxu0 0.0
    %5631 = vmatprep.subr.mxu0 0.0
    %5632 = vmatpush1.msra.mxu0 0.0
    %5633 = vmatprep.subr.mxu0 0.0
    %5634 = vmatpush1.msra.mxu0 0.0
    %5635 = vmatprep.subr.mxu0 0.0
    %5636 = vmatpush1.msra.mxu0 0.0
    %5637 = vmatprep.subr.mxu0 0.0
    %5638 = vmatpush1.msra.mxu0 0.0
    %5639 = vmatprep.subr.mxu0 0.0
    %5640 = vmatpush1.msra.mxu0 0.0
    %5641 = vmatprep.subr.mxu0 0.0
    %5642 = vmatpush1.msra.mxu0 0.0
    %5643 = vmatprep.subr.mxu0 0.0
    %5644 = vmatpush1.msra.mxu0 0.0
    %5645 = vmatprep.subr.mxu0 0.0
    %5646 = vmatpush1.msra.mxu0 0.0
    %5647 = vmatprep.subr.mxu0 0.0
    %5648 = vmatpush1.msra.mxu0 %v5622
    %5649 = vmatprep.subr.mxu0 0.0
    %5650 = vmatpush1.msra.mxu0 %v5621
    %5651 = vmatprep.subr.mxu0 0.0
    %5652 = vmatpush1.msra.mxu0 %v5622
    %5653 = vmatprep.subr.mxu0 0.0
    %5654 = vmatpush1.msra.mxu0 %v5621
    %5655 = vmatprep.subr.mxu0 0.0
    %5656 = vmatpush2.msra.mxu0 0.0
    %5657 = vmatprep.subr.mxu0 0.0
    %5658 = vmatpush2.msra.mxu0 0.0
    %5659 = vmatprep.subr.mxu0 0.0
    %5660 = vmatpush2.msra.mxu0 0.0
    %5661 = vmatprep.subr.mxu0 0.0
    %5662 = vmatpush2.msra.mxu0 0.0
    %5663 = vmatprep.subr.mxu0 0.0
    %5664 = vmatpush2.msra.mxu0 0.0
    %5665 = vmatprep.subr.mxu0 0.0
    %5666 = vmatpush2.msra.mxu0 0.0
    %5667 = vmatprep.subr.mxu0 0.0
    %5668 = vmatpush2.msra.mxu0 0.0
    %5669 = vmatprep.subr.mxu0 0.0
    %5670 = vmatpush2.msra.mxu0 0.0
    %5671 = vmatprep.subr.mxu0 0.0
    %5672 = vmatpush2.msra.mxu0 0.0
    %5673 = vmatprep.subr.mxu0 0.0
    %5674 = vmatpush2.msra.mxu0 0.0
    %5675 = vmatprep.subr.mxu0 0.0
    %5676 = vmatpush2.msra.mxu0 0.0
    %5677 = vmatprep.subr.mxu0 0.0
    %5678 = vmatpush2.msra.mxu0 0.0
    %5679 = vmatprep.subr.mxu0 0.0
    %5680 = vmatpush2.msra.mxu0 0.0
    %5681 = vmatprep.subr.mxu0 0.0
    %5682 = vmatpush2.msra.mxu0 0.0
    %5683 = vmatprep.subr.mxu0 0.0
    %5684 = vmatpush2.msra.mxu0 0.0
    %5685 = vmatprep.subr.mxu0 0.0
    %5686 = vmatpush2.msra.mxu0 0.0
    %5687 = vmatprep.mubr.f32.mxu0 0.0
    %5688 = vmatmul.mubr.f32.gmra.mxu0 %v44
    %v5689 = vpop.f32.mrf.mxu0
    %v5690 = vadd.f32 0.0, %v5689
    %v5691 = vpop.f32.mrf.mxu0
    %5692 = vmatprep.mubr.f32.mxu0 0.0
    %5693 = vmatmul.mubr.f32.gmra.mxu0 %v47
    %v5694 = vpop.f32.mrf.mxu0
    %v5695 = vadd.f32 0.0, %v5694
    %v5696 = vpop.f32.mrf.mxu0
    %5697 = vmatprep.mubr.f32.mxu0 0.0
    %5698 = vmatmul.mubr.f32.gmra.mxu0 %v50
    %v5699 = vpop.f32.mrf.mxu0
    %v5700 = vadd.f32 0.0, %v5699
    %v5701 = vpop.f32.mrf.mxu0
    %5702 = vmatprep.mubr.f32.mxu0 0.0
    %5703 = vmatmul.mubr.f32.gmra.mxu0 %v53
    %v5704 = vpop.f32.mrf.mxu0
    %v5705 = vadd.f32 0.0, %v5704
    %v5706 = vpop.f32.mrf.mxu0
    %5707 = vdwg.mxu0
    %5708 = vmatprep.subr.mxu0 0.0
    %5709 = vmatpush1.msra.mxu0 0.0
    %5710 = vmatprep.subr.mxu0 0.0
    %5711 = vmatpush1.msra.mxu0 0.0
    %5712 = vmatprep.subr.mxu0 0.0
    %5713 = vmatpush1.msra.mxu0 0.0
    %5714 = vmatprep.subr.mxu0 0.0
    %5715 = vmatpush1.msra.mxu0 0.0
    %5716 = vmatprep.subr.mxu0 0.0
    %5717 = vmatpush1.msra.mxu0 0.0
    %5718 = vmatprep.subr.mxu0 0.0
    %5719 = vmatpush1.msra.mxu0 0.0
    %5720 = vmatprep.subr.mxu0 0.0
    %5721 = vmatpush1.msra.mxu0 0.0
    %5722 = vmatprep.subr.mxu0 0.0
    %5723 = vmatpush1.msra.mxu0 0.0
    %5724 = vmatprep.subr.mxu0 0.0
    %5725 = vmatpush1.msra.mxu0 0.0
    %5726 = vmatprep.subr.mxu0 0.0
    %5727 = vmatpush1.msra.mxu0 0.0
    %5728 = vmatprep.subr.mxu0 0.0
    %5729 = vmatpush1.msra.mxu0 0.0
    %5730 = vmatprep.subr.mxu0 0.0
    %5731 = vmatpush1.msra.mxu0 0.0
    %5732 = vmatprep.subr.mxu0 0.0
    %5733 = vmatpush1.msra.mxu0 %v5705
    %5734 = vmatprep.subr.mxu0 0.0
    %5735 = vmatpush1.msra.mxu0 %v5700
    %5736 = vmatprep.subr.mxu0 0.0
    %5737 = vmatpush1.msra.mxu0 %v5695
    %5738 = vmatprep.subr.mxu0 0.0
    %5739 = vmatpush1.msra.mxu0 %v5690
    %5740 = vmatprep.subr.mxu0 0.0
    %5741 = vmatpush2.msra.mxu0 0.0
    %5742 = vmatprep.subr.mxu0 0.0
    %5743 = vmatpush2.msra.mxu0 0.0
    %5744 = vmatprep.subr.mxu0 0.0
    %5745 = vmatpush2.msra.mxu0 0.0
    %5746 = vmatprep.subr.mxu0 0.0
    %5747 = vmatpush2.msra.mxu0 0.0
    %5748 = vmatprep.subr.mxu0 0.0
    %5749 = vmatpush2.msra.mxu0 0.0
    %5750 = vmatprep.subr.mxu0 0.0
    %5751 = vmatpush2.msra.mxu0 0.0
    %5752 = vmatprep.subr.mxu0 0.0
    %5753 = vmatpush2.msra.mxu0 0.0
    %5754 = vmatprep.subr.mxu0 0.0
    %5755 = vmatpush2.msra.mxu0 0.0
    %5756 = vmatprep.subr.mxu0 0.0
    %5757 = vmatpush2.msra.mxu0 0.0
    %5758 = vmatprep.subr.mxu0 0.0
    %5759 = vmatpush2.msra.mxu0 0.0
    %5760 = vmatprep.subr.mxu0 0.0
    %5761 = vmatpush2.msra.mxu0 0.0
    %5762 = vmatprep.subr.mxu0 0.0
    %5763 = vmatpush2.msra.mxu0 0.0
    %5764 = vmatprep.subr.mxu0 0.0
    %5765 = vmatpush2.msra.mxu0 0.0
    %5766 = vmatprep.subr.mxu0 0.0
    %5767 = vmatpush2.msra.mxu0 0.0
    %5768 = vmatprep.subr.mxu0 0.0
    %5769 = vmatpush2.msra.mxu0 0.0
    %5770 = vmatprep.subr.mxu0 0.0
    %5771 = vmatpush2.msra.mxu0 0.0
    %5772 = vmatprep.mubr.f32.mxu0 0.0
    %5773 = vmatmul.mubr.f32.gmra.mxu0 %v44
    %v5774 = vpop.f32.mrf.mxu0
    %v5775 = vadd.f32 0.0, %v5774
    %v5776 = vpop.f32.mrf.mxu0
    %5777 = vmatprep.mubr.f32.mxu0 0.0
    %5778 = vmatmul.mubr.f32.gmra.mxu0 %v47
    %v5779 = vpop.f32.mrf.mxu0
    %v5780 = vadd.f32 0.0, %v5779
    %v5781 = vpop.f32.mrf.mxu0
    %5782 = vmatprep.mubr.f32.mxu0 0.0
    %5783 = vmatmul.mubr.f32.gmra.mxu0 %v50
    %v5784 = vpop.f32.mrf.mxu0
    %v5785 = vadd.f32 0.0, %v5784
    %v5786 = vpop.f32.mrf.mxu0
    %5787 = vmatprep.mubr.f32.mxu0 0.0
    %5788 = vmatmul.mubr.f32.gmra.mxu0 %v53
    %v5789 = vpop.f32.mrf.mxu0
    %v5790 = vadd.f32 0.0, %v5789
    %v5791 = vpop.f32.mrf.mxu0
    %5792 = vdwg.mxu0
    %v5793 = vmul.f32 %v5775, 2.0
    %v5794 = vmul.f32 %v5780, 2.0
    %v5795 = vmul.f32 %v5785, 2.0
    %v5796 = vmul.f32 %v5790, 2.0
    %v5797 = vsub.f32 %v5793, %v5621
    %v5798 = vsub.f32 %v5794, %v5622
    %v5799 = vsub.f32 %v5795, %v5621
    %v5800 = vsub.f32 %v5796, %v5622
    %5803 = vrot.lane.b32.xlu0 %v5690, 32
    %v5804 = vpop.permute.xlu0 %5803
    %5805 = vrot.lane.b32.xlu0 %v5695, 32
    %v5806 = vpop.permute.xlu0 %5805
    %5811 = vrot.lane.b32.xlu0 %v5797, 64
    %v5812 = vpop.permute.xlu0 %5811
    %5813 = vrot.lane.b32.xlu0 %v5798, 64
    %v5814 = vpop.permute.xlu0 %5813
    %5819 = vrot.lane.b32.xlu0 %v5700, 96
    %v5820 = vpop.permute.xlu0 %5819
    %5821 = vrot.lane.b32.xlu0 %v5705, 96
    %v5822 = vpop.permute.xlu0 %5821
    %v5825 = vsel %vm42, %v5621, %v5804
    %v5826 = vsel %vm42, %v5622, %v5806
    %v5827 = vsel %vm255, %v5825, %v5812
    %v5828 = vsel %vm255, %v5826, %v5814
    %v5829 = vsel %vm258, %v5827, %v5820
    %v5830 = vsel %vm258, %v5828, %v5822
    %v5832 = vsel %vm42, %v5799, 0
    %v5835 = vsel %vm42, %v5800, 0
    %5837 = vmatprep.subr.mxu0 0.0
    %5838 = vmatpush1.msra.mxu0 %v609
    %5839 = vmatprep.subr.mxu0 0.0
    %5840 = vmatpush1.msra.mxu0 %v608
    %5841 = vmatprep.subr.mxu0 0.0
    %5842 = vmatpush1.msra.mxu0 %v607
    %5843 = vmatprep.subr.mxu0 0.0
    %5844 = vmatpush1.msra.mxu0 %v606
    %5845 = vmatprep.subr.mxu0 0.0
    %5846 = vmatpush1.msra.mxu0 %v605
    %5847 = vmatprep.subr.mxu0 0.0
    %5848 = vmatpush1.msra.mxu0 %v604
    %5849 = vmatprep.subr.mxu0 0.0
    %5850 = vmatpush1.msra.mxu0 %v603
    %5851 = vmatprep.subr.mxu0 0.0
    %5852 = vmatpush1.msra.mxu0 %v602
    %5853 = vmatprep.subr.mxu0 0.0
    %5854 = vmatpush1.msra.mxu0 %v601
    %5855 = vmatprep.subr.mxu0 0.0
    %5856 = vmatpush1.msra.mxu0 %v600
    %5857 = vmatprep.subr.mxu0 0.0
    %5858 = vmatpush1.msra.mxu0 %v599
    %5859 = vmatprep.subr.mxu0 0.0
    %5860 = vmatpush1.msra.mxu0 %v598
    %5861 = vmatprep.subr.mxu0 0.0
    %5862 = vmatpush1.msra.mxu0 %v597
    %5863 = vmatprep.subr.mxu0 0.0
    %5864 = vmatpush1.msra.mxu0 %v596
    %5865 = vmatprep.subr.mxu0 0.0
    %5866 = vmatpush1.msra.mxu0 %v595
    %5867 = vmatprep.subr.mxu0 0.0
    %5868 = vmatpush1.msra.mxu0 %v594
    %5869 = vmatprep.subr.mxu0 0.0
    %5870 = vmatpush2.msra.mxu0 0.0
    %5871 = vmatprep.subr.mxu0 0.0
    %5872 = vmatpush2.msra.mxu0 0.0
    %5873 = vmatprep.subr.mxu0 0.0
    %5874 = vmatpush2.msra.mxu0 0.0
    %5875 = vmatprep.subr.mxu0 0.0
    %5876 = vmatpush2.msra.mxu0 0.0
    %5877 = vmatprep.subr.mxu0 0.0
    %5878 = vmatpush2.msra.mxu0 0.0
    %5879 = vmatprep.subr.mxu0 0.0
    %5880 = vmatpush2.msra.mxu0 0.0
    %5881 = vmatprep.subr.mxu0 0.0
    %5882 = vmatpush2.msra.mxu0 0.0
    %5883 = vmatprep.subr.mxu0 0.0
    %5884 = vmatpush2.msra.mxu0 0.0
    %5885 = vmatprep.subr.mxu0 0.0
    %5886 = vmatpush2.msra.mxu0 0.0
    %5887 = vmatprep.subr.mxu0 0.0
    %5888 = vmatpush2.msra.mxu0 0.0
    %5889 = vmatprep.subr.mxu0 0.0
    %5890 = vmatpush2.msra.mxu0 0.0
    %5891 = vmatprep.subr.mxu0 0.0
    %5892 = vmatpush2.msra.mxu0 0.0
    %5893 = vmatprep.subr.mxu0 0.0
    %5894 = vmatpush2.msra.mxu0 %v613
    %5895 = vmatprep.subr.mxu0 0.0
    %5896 = vmatpush2.msra.mxu0 %v612
    %5897 = vmatprep.subr.mxu0 0.0
    %5898 = vmatpush2.msra.mxu0 %v611
    %5899 = vmatprep.subr.mxu0 0.0
    %5900 = vmatpush2.msra.mxu0 %v610
    %5901 = vmatprep.mubr.f32.mxu0 %v5832
    %5902 = vmatmul.mubr.f32.gmra.mxu0 %v5829
    %v5903 = vpop.f32.mrf.mxu0
    %v5904 = vadd.f32 0.0, %v5903
    %v5905 = vpop.f32.mrf.mxu0
    %5906 = vmatprep.mubr.f32.mxu0 %v5835
    %5907 = vmatmul.mubr.f32.gmra.mxu0 %v5830
    %v5908 = vpop.f32.mrf.mxu0
    %v5909 = vadd.f32 0.0, %v5908
    %v5910 = vpop.f32.mrf.mxu0
    %5911 = vdwg.mxu0
    %5914 = vrot.lane.b32.xlu0 %v5904, 64
    %v5915 = vpop.permute.xlu0 %5914
    %5916 = vrot.lane.b32.xlu0 %v5909, 64
    %v5917 = vpop.permute.xlu0 %5916
    %v5920 = vadd.f32 %v5522, %v5915
    %v5921 = vadd.f32 %v5523, %v5917
    %v5922 = vtanh.pop %v5920
    %v5923 = vtanh.pop %v5921
    %v5924 = vmul.f32 %v5610, %v4598
    %v5925 = vmul.f32 %v5612, %v4599
    %v5926 = vsub.f32 1.0, %v5610
    %v5927 = vsub.f32 1.0, %v5612
    %5930 = vrot.lane.b32.xlu0 %v5922, 64
    %v5931 = vpop.permute.xlu0 %5930
    %5932 = vrot.lane.b32.xlu0 %v5923, 64
    %v5933 = vpop.permute.xlu0 %5932
    %v5936 = vmul.f32 %v5926, %v5931
    %v5937 = vmul.f32 %v5927, %v5933
    %v5938 = vadd.f32 %v5924, %v5936
    %v5939 = vadd.f32 %v5925, %v5937
    %v5940 = vmax.f32 %v5938, 0.0
    %v5941 = vmax.f32 %v5939, 0.0
    %5942 = vmatprep.subr.mxu0 0.0
    %5943 = vmatpush1.msra.mxu0 0.0
    %5944 = vmatprep.subr.mxu0 0.0
    %5945 = vmatpush1.msra.mxu0 0.0
    %5946 = vmatprep.subr.mxu0 0.0
    %5947 = vmatpush1.msra.mxu0 0.0
    %5948 = vmatprep.subr.mxu0 0.0
    %5949 = vmatpush1.msra.mxu0 0.0
    %5950 = vmatprep.subr.mxu0 0.0
    %5951 = vmatpush1.msra.mxu0 0.0
    %5952 = vmatprep.subr.mxu0 0.0
    %5953 = vmatpush1.msra.mxu0 0.0
    %5954 = vmatprep.subr.mxu0 0.0
    %5955 = vmatpush1.msra.mxu0 0.0
    %5956 = vmatprep.subr.mxu0 0.0
    %5957 = vmatpush1.msra.mxu0 0.0
    %5958 = vmatprep.subr.mxu0 0.0
    %5959 = vmatpush1.msra.mxu0 0.0
    %5960 = vmatprep.subr.mxu0 0.0
    %5961 = vmatpush1.msra.mxu0 0.0
    %5962 = vmatprep.subr.mxu0 0.0
    %5963 = vmatpush1.msra.mxu0 0.0
    %5964 = vmatprep.subr.mxu0 0.0
    %5965 = vmatpush1.msra.mxu0 0.0
    %5966 = vmatprep.subr.mxu0 0.0
    %5967 = vmatpush1.msra.mxu0 %v5941
    %5968 = vmatprep.subr.mxu0 0.0
    %5969 = vmatpush1.msra.mxu0 %v5940
    %5970 = vmatprep.subr.mxu0 0.0
    %5971 = vmatpush1.msra.mxu0 %v5941
    %5972 = vmatprep.subr.mxu0 0.0
    %5973 = vmatpush1.msra.mxu0 %v5940
    %5974 = vmatprep.subr.mxu0 0.0
    %5975 = vmatpush2.msra.mxu0 0.0
    %5976 = vmatprep.subr.mxu0 0.0
    %5977 = vmatpush2.msra.mxu0 0.0
    %5978 = vmatprep.subr.mxu0 0.0
    %5979 = vmatpush2.msra.mxu0 0.0
    %5980 = vmatprep.subr.mxu0 0.0
    %5981 = vmatpush2.msra.mxu0 0.0
    %5982 = vmatprep.subr.mxu0 0.0
    %5983 = vmatpush2.msra.mxu0 0.0
    %5984 = vmatprep.subr.mxu0 0.0
    %5985 = vmatpush2.msra.mxu0 0.0
    %5986 = vmatprep.subr.mxu0 0.0
    %5987 = vmatpush2.msra.mxu0 0.0
    %5988 = vmatprep.subr.mxu0 0.0
    %5989 = vmatpush2.msra.mxu0 0.0
    %5990 = vmatprep.subr.mxu0 0.0
    %5991 = vmatpush2.msra.mxu0 0.0
    %5992 = vmatprep.subr.mxu0 0.0
    %5993 = vmatpush2.msra.mxu0 0.0
    %5994 = vmatprep.subr.mxu0 0.0
    %5995 = vmatpush2.msra.mxu0 0.0
    %5996 = vmatprep.subr.mxu0 0.0
    %5997 = vmatpush2.msra.mxu0 0.0
    %5998 = vmatprep.subr.mxu0 0.0
    %5999 = vmatpush2.msra.mxu0 0.0
    %6000 = vmatprep.subr.mxu0 0.0
    %6001 = vmatpush2.msra.mxu0 0.0
    %6002 = vmatprep.subr.mxu0 0.0
    %6003 = vmatpush2.msra.mxu0 0.0
    %6004 = vmatprep.subr.mxu0 0.0
    %6005 = vmatpush2.msra.mxu0 0.0
    %6006 = vmatprep.mubr.f32.mxu0 0.0
    %6007 = vmatmul.mubr.f32.gmra.mxu0 %v44
    %v6008 = vpop.f32.mrf.mxu0
    %v6009 = vadd.f32 0.0, %v6008
    %v6010 = vpop.f32.mrf.mxu0
    %6011 = vmatprep.mubr.f32.mxu0 0.0
    %6012 = vmatmul.mubr.f32.gmra.mxu0 %v47
    %v6013 = vpop.f32.mrf.mxu0
    %v6014 = vadd.f32 0.0, %v6013
    %v6015 = vpop.f32.mrf.mxu0
    %6016 = vmatprep.mubr.f32.mxu0 0.0
    %6017 = vmatmul.mubr.f32.gmra.mxu0 %v50
    %v6018 = vpop.f32.mrf.mxu0
    %v6019 = vadd.f32 0.0, %v6018
    %v6020 = vpop.f32.mrf.mxu0
    %6021 = vmatprep.mubr.f32.mxu0 0.0
    %6022 = vmatmul.mubr.f32.gmra.mxu0 %v53
    %v6023 = vpop.f32.mrf.mxu0
    %v6024 = vadd.f32 0.0, %v6023
    %v6025 = vpop.f32.mrf.mxu0
    %6026 = vdwg.mxu0
    %6027 = vmatprep.subr.mxu0 0.0
    %6028 = vmatpush1.msra.mxu0 0.0
    %6029 = vmatprep.subr.mxu0 0.0
    %6030 = vmatpush1.msra.mxu0 0.0
    %6031 = vmatprep.subr.mxu0 0.0
    %6032 = vmatpush1.msra.mxu0 0.0
    %6033 = vmatprep.subr.mxu0 0.0
    %6034 = vmatpush1.msra.mxu0 0.0
    %6035 = vmatprep.subr.mxu0 0.0
    %6036 = vmatpush1.msra.mxu0 0.0
    %6037 = vmatprep.subr.mxu0 0.0
    %6038 = vmatpush1.msra.mxu0 0.0
    %6039 = vmatprep.subr.mxu0 0.0
    %6040 = vmatpush1.msra.mxu0 0.0
    %6041 = vmatprep.subr.mxu0 0.0
    %6042 = vmatpush1.msra.mxu0 0.0
    %6043 = vmatprep.subr.mxu0 0.0
    %6044 = vmatpush1.msra.mxu0 0.0
    %6045 = vmatprep.subr.mxu0 0.0
    %6046 = vmatpush1.msra.mxu0 0.0
    %6047 = vmatprep.subr.mxu0 0.0
    %6048 = vmatpush1.msra.mxu0 0.0
    %6049 = vmatprep.subr.mxu0 0.0
    %6050 = vmatpush1.msra.mxu0 0.0
    %6051 = vmatprep.subr.mxu0 0.0
    %6052 = vmatpush1.msra.mxu0 %v6024
    %6053 = vmatprep.subr.mxu0 0.0
    %6054 = vmatpush1.msra.mxu0 %v6019
    %6055 = vmatprep.subr.mxu0 0.0
    %6056 = vmatpush1.msra.mxu0 %v6014
    %6057 = vmatprep.subr.mxu0 0.0
    %6058 = vmatpush1.msra.mxu0 %v6009
    %6059 = vmatprep.subr.mxu0 0.0
    %6060 = vmatpush2.msra.mxu0 0.0
    %6061 = vmatprep.subr.mxu0 0.0
    %6062 = vmatpush2.msra.mxu0 0.0
    %6063 = vmatprep.subr.mxu0 0.0
    %6064 = vmatpush2.msra.mxu0 0.0
    %6065 = vmatprep.subr.mxu0 0.0
    %6066 = vmatpush2.msra.mxu0 0.0
    %6067 = vmatprep.subr.mxu0 0.0
    %6068 = vmatpush2.msra.mxu0 0.0
    %6069 = vmatprep.subr.mxu0 0.0
    %6070 = vmatpush2.msra.mxu0 0.0
    %6071 = vmatprep.subr.mxu0 0.0
    %6072 = vmatpush2.msra.mxu0 0.0
    %6073 = vmatprep.subr.mxu0 0.0
    %6074 = vmatpush2.msra.mxu0 0.0
    %6075 = vmatprep.subr.mxu0 0.0
    %6076 = vmatpush2.msra.mxu0 0.0
    %6077 = vmatprep.subr.mxu0 0.0
    %6078 = vmatpush2.msra.mxu0 0.0
    %6079 = vmatprep.subr.mxu0 0.0
    %6080 = vmatpush2.msra.mxu0 0.0
    %6081 = vmatprep.subr.mxu0 0.0
    %6082 = vmatpush2.msra.mxu0 0.0
    %6083 = vmatprep.subr.mxu0 0.0
    %6084 = vmatpush2.msra.mxu0 0.0
    %6085 = vmatprep.subr.mxu0 0.0
    %6086 = vmatpush2.msra.mxu0 0.0
    %6087 = vmatprep.subr.mxu0 0.0
    %6088 = vmatpush2.msra.mxu0 0.0
    %6089 = vmatprep.subr.mxu0 0.0
    %6090 = vmatpush2.msra.mxu0 0.0
    %6091 = vmatprep.mubr.f32.mxu0 0.0
    %6092 = vmatmul.mubr.f32.gmra.mxu0 %v44
    %v6093 = vpop.f32.mrf.mxu0
    %v6094 = vadd.f32 0.0, %v6093
    %v6095 = vpop.f32.mrf.mxu0
    %6096 = vmatprep.mubr.f32.mxu0 0.0
    %6097 = vmatmul.mubr.f32.gmra.mxu0 %v47
    %v6098 = vpop.f32.mrf.mxu0
    %v6099 = vadd.f32 0.0, %v6098
    %v6100 = vpop.f32.mrf.mxu0
    %6101 = vmatprep.mubr.f32.mxu0 0.0
    %6102 = vmatmul.mubr.f32.gmra.mxu0 %v50
    %v6103 = vpop.f32.mrf.mxu0
    %v6104 = vadd.f32 0.0, %v6103
    %v6105 = vpop.f32.mrf.mxu0
    %6106 = vmatprep.mubr.f32.mxu0 0.0
    %6107 = vmatmul.mubr.f32.gmra.mxu0 %v53
    %v6108 = vpop.f32.mrf.mxu0
    %v6109 = vadd.f32 0.0, %v6108
    %v6110 = vpop.f32.mrf.mxu0
    %6111 = vdwg.mxu0
    %v6112 = vmul.f32 %v6094, 2.0
    %v6113 = vmul.f32 %v6099, 2.0
    %v6114 = vmul.f32 %v6104, 2.0
    %v6115 = vmul.f32 %v6109, 2.0
    %v6116 = vsub.f32 %v6112, %v5940
    %v6117 = vsub.f32 %v6113, %v5941
    %v6118 = vsub.f32 %v6114, %v5940
    %v6119 = vsub.f32 %v6115, %v5941
    %6122 = vrot.lane.b32.xlu0 %v6009, 32
    %v6123 = vpop.permute.xlu0 %6122
    %6124 = vrot.lane.b32.xlu0 %v6014, 32
    %v6125 = vpop.permute.xlu0 %6124
    %6130 = vrot.lane.b32.xlu0 %v6116, 64
    %v6131 = vpop.permute.xlu0 %6130
    %6132 = vrot.lane.b32.xlu0 %v6117, 64
    %v6133 = vpop.permute.xlu0 %6132
    %6138 = vrot.lane.b32.xlu0 %v6019, 96
    %v6139 = vpop.permute.xlu0 %6138
    %6140 = vrot.lane.b32.xlu0 %v6024, 96
    %v6141 = vpop.permute.xlu0 %6140
    %v6144 = vsel %vm42, %v5940, %v6123
    %v6145 = vsel %vm42, %v5941, %v6125
    %v6146 = vsel %vm255, %v6144, %v6131
    %v6147 = vsel %vm255, %v6145, %v6133
    %v6148 = vsel %vm258, %v6146, %v6139
    %v6149 = vsel %vm258, %v6147, %v6141
    %v6151 = vsel %vm42, %v6118, 0
    %v6154 = vsel %vm42, %v6119, 0
    %6156 = vmatprep.subr.mxu0 0.0
    %6157 = vmatpush1.msra.mxu0 %v946
    %6158 = vmatprep.subr.mxu0 0.0
    %6159 = vmatpush1.msra.mxu0 %v945
    %6160 = vmatprep.subr.mxu0 0.0
    %6161 = vmatpush1.msra.mxu0 %v944
    %6162 = vmatprep.subr.mxu0 0.0
    %6163 = vmatpush1.msra.mxu0 %v943
    %6164 = vmatprep.subr.mxu0 0.0
    %6165 = vmatpush1.msra.mxu0 %v942
    %6166 = vmatprep.subr.mxu0 0.0
    %6167 = vmatpush1.msra.mxu0 %v941
    %6168 = vmatprep.subr.mxu0 0.0
    %6169 = vmatpush1.msra.mxu0 %v940
    %6170 = vmatprep.subr.mxu0 0.0
    %6171 = vmatpush1.msra.mxu0 %v939
    %6172 = vmatprep.subr.mxu0 0.0
    %6173 = vmatpush1.msra.mxu0 %v938
    %6174 = vmatprep.subr.mxu0 0.0
    %6175 = vmatpush1.msra.mxu0 %v937
    %6176 = vmatprep.subr.mxu0 0.0
    %6177 = vmatpush1.msra.mxu0 %v936
    %6178 = vmatprep.subr.mxu0 0.0
    %6179 = vmatpush1.msra.mxu0 %v935
    %6180 = vmatprep.subr.mxu0 0.0
    %6181 = vmatpush1.msra.mxu0 %v934
    %6182 = vmatprep.subr.mxu0 0.0
    %6183 = vmatpush1.msra.mxu0 %v933
    %6184 = vmatprep.subr.mxu0 0.0
    %6185 = vmatpush1.msra.mxu0 %v932
    %6186 = vmatprep.subr.mxu0 0.0
    %6187 = vmatpush1.msra.mxu0 %v931
    %6188 = vmatprep.subr.mxu0 0.0
    %6189 = vmatpush2.msra.mxu0 0.0
    %6190 = vmatprep.subr.mxu0 0.0
    %6191 = vmatpush2.msra.mxu0 0.0
    %6192 = vmatprep.subr.mxu0 0.0
    %6193 = vmatpush2.msra.mxu0 0.0
    %6194 = vmatprep.subr.mxu0 0.0
    %6195 = vmatpush2.msra.mxu0 0.0
    %6196 = vmatprep.subr.mxu0 0.0
    %6197 = vmatpush2.msra.mxu0 0.0
    %6198 = vmatprep.subr.mxu0 0.0
    %6199 = vmatpush2.msra.mxu0 0.0
    %6200 = vmatprep.subr.mxu0 0.0
    %6201 = vmatpush2.msra.mxu0 0.0
    %6202 = vmatprep.subr.mxu0 0.0
    %6203 = vmatpush2.msra.mxu0 0.0
    %6204 = vmatprep.subr.mxu0 0.0
    %6205 = vmatpush2.msra.mxu0 0.0
    %6206 = vmatprep.subr.mxu0 0.0
    %6207 = vmatpush2.msra.mxu0 0.0
    %6208 = vmatprep.subr.mxu0 0.0
    %6209 = vmatpush2.msra.mxu0 0.0
    %6210 = vmatprep.subr.mxu0 0.0
    %6211 = vmatpush2.msra.mxu0 0.0
    %6212 = vmatprep.subr.mxu0 0.0
    %6213 = vmatpush2.msra.mxu0 %v950
    %6214 = vmatprep.subr.mxu0 0.0
    %6215 = vmatpush2.msra.mxu0 %v949
    %6216 = vmatprep.subr.mxu0 0.0
    %6217 = vmatpush2.msra.mxu0 %v948
    %6218 = vmatprep.subr.mxu0 0.0
    %6219 = vmatpush2.msra.mxu0 %v947
    %6220 = vmatprep.mubr.f32.mxu0 %v6151
    %6221 = vmatmul.mubr.f32.gmra.mxu0 %v6148
    %v6222 = vpop.f32.mrf.mxu0
    %v6223 = vadd.f32 %v956, %v6222
    %v6224 = vpop.f32.mrf.mxu0
    %6225 = vmatprep.mubr.f32.mxu0 %v6154
    %6226 = vmatmul.mubr.f32.gmra.mxu0 %v6149
    %v6227 = vpop.f32.mrf.mxu0
    %v6228 = vadd.f32 %v956, %v6227
    %v6229 = vpop.f32.mrf.mxu0
    %6230 = vdwg.mxu0
    %6231 = vmatprep.subr.mxu0 0.0
    %6232 = vmatpush1.msra.mxu0 0.0
    %6233 = vmatprep.subr.mxu0 0.0
    %6234 = vmatpush1.msra.mxu0 0.0
    %6235 = vmatprep.subr.mxu0 0.0
    %6236 = vmatpush1.msra.mxu0 0.0
    %6237 = vmatprep.subr.mxu0 0.0
    %6238 = vmatpush1.msra.mxu0 0.0
    %6239 = vmatprep.subr.mxu0 0.0
    %6240 = vmatpush1.msra.mxu0 0.0
    %6241 = vmatprep.subr.mxu0 0.0
    %6242 = vmatpush1.msra.mxu0 0.0
    %6243 = vmatprep.subr.mxu0 0.0
    %6244 = vmatpush1.msra.mxu0 0.0
    %6245 = vmatprep.subr.mxu0 0.0
    %6246 = vmatpush1.msra.mxu0 0.0
    %6247 = vmatprep.subr.mxu0 0.0
    %6248 = vmatpush1.msra.mxu0 0.0
    %6249 = vmatprep.subr.mxu0 0.0
    %6250 = vmatpush1.msra.mxu0 0.0
    %6251 = vmatprep.subr.mxu0 0.0
    %6252 = vmatpush1.msra.mxu0 0.0
    %6253 = vmatprep.subr.mxu0 0.0
    %6254 = vmatpush1.msra.mxu0 0.0
    %6255 = vmatprep.subr.mxu0 0.0
    %6256 = vmatpush1.msra.mxu0 %v5520
    %6257 = vmatprep.subr.mxu0 0.0
    %6258 = vmatpush1.msra.mxu0 %v5519
    %6259 = vmatprep.subr.mxu0 0.0
    %6260 = vmatpush1.msra.mxu0 %v5520
    %6261 = vmatprep.subr.mxu0 0.0
    %6262 = vmatpush1.msra.mxu0 %v5519
    %6263 = vmatprep.subr.mxu0 0.0
    %6264 = vmatpush2.msra.mxu0 0.0
    %6265 = vmatprep.subr.mxu0 0.0
    %6266 = vmatpush2.msra.mxu0 0.0
    %6267 = vmatprep.subr.mxu0 0.0
    %6268 = vmatpush2.msra.mxu0 0.0
    %6269 = vmatprep.subr.mxu0 0.0
    %6270 = vmatpush2.msra.mxu0 0.0
    %6271 = vmatprep.subr.mxu0 0.0
    %6272 = vmatpush2.msra.mxu0 0.0
    %6273 = vmatprep.subr.mxu0 0.0
    %6274 = vmatpush2.msra.mxu0 0.0
    %6275 = vmatprep.subr.mxu0 0.0
    %6276 = vmatpush2.msra.mxu0 0.0
    %6277 = vmatprep.subr.mxu0 0.0
    %6278 = vmatpush2.msra.mxu0 0.0
    %6279 = vmatprep.subr.mxu0 0.0
    %6280 = vmatpush2.msra.mxu0 0.0
    %6281 = vmatprep.subr.mxu0 0.0
    %6282 = vmatpush2.msra.mxu0 0.0
    %6283 = vmatprep.subr.mxu0 0.0
    %6284 = vmatpush2.msra.mxu0 0.0
    %6285 = vmatprep.subr.mxu0 0.0
    %6286 = vmatpush2.msra.mxu0 0.0
    %6287 = vmatprep.subr.mxu0 0.0
    %6288 = vmatpush2.msra.mxu0 0.0
    %6289 = vmatprep.subr.mxu0 0.0
    %6290 = vmatpush2.msra.mxu0 0.0
    %6291 = vmatprep.subr.mxu0 0.0
    %6292 = vmatpush2.msra.mxu0 0.0
    %6293 = vmatprep.subr.mxu0 0.0
    %6294 = vmatpush2.msra.mxu0 0.0
    %6295 = vmatprep.mubr.f32.mxu0 0.0
    %6296 = vmatmul.mubr.f32.gmra.mxu0 %v44
    %v6297 = vpop.f32.mrf.mxu0
    %v6298 = vadd.f32 0.0, %v6297
    %v6299 = vpop.f32.mrf.mxu0
    %6300 = vmatprep.mubr.f32.mxu0 0.0
    %6301 = vmatmul.mubr.f32.gmra.mxu0 %v47
    %v6302 = vpop.f32.mrf.mxu0
    %v6303 = vadd.f32 0.0, %v6302
    %v6304 = vpop.f32.mrf.mxu0
    %6305 = vmatprep.mubr.f32.mxu0 0.0
    %6306 = vmatmul.mubr.f32.gmra.mxu0 %v50
    %v6307 = vpop.f32.mrf.mxu0
    %v6308 = vadd.f32 0.0, %v6307
    %v6309 = vpop.f32.mrf.mxu0
    %6310 = vmatprep.mubr.f32.mxu0 0.0
    %6311 = vmatmul.mubr.f32.gmra.mxu0 %v53
    %v6312 = vpop.f32.mrf.mxu0
    %v6313 = vadd.f32 0.0, %v6312
    %v6314 = vpop.f32.mrf.mxu0
    %6315 = vdwg.mxu0
    %6316 = vmatprep.subr.mxu0 0.0
    %6317 = vmatpush1.msra.mxu0 0.0
    %6318 = vmatprep.subr.mxu0 0.0
    %6319 = vmatpush1.msra.mxu0 0.0
    %6320 = vmatprep.subr.mxu0 0.0
    %6321 = vmatpush1.msra.mxu0 0.0
    %6322 = vmatprep.subr.mxu0 0.0
    %6323 = vmatpush1.msra.mxu0 0.0
    %6324 = vmatprep.subr.mxu0 0.0
    %6325 = vmatpush1.msra.mxu0 0.0
    %6326 = vmatprep.subr.mxu0 0.0
    %6327 = vmatpush1.msra.mxu0 0.0
    %6328 = vmatprep.subr.mxu0 0.0
    %6329 = vmatpush1.msra.mxu0 0.0
    %6330 = vmatprep.subr.mxu0 0.0
    %6331 = vmatpush1.msra.mxu0 0.0
    %6332 = vmatprep.subr.mxu0 0.0
    %6333 = vmatpush1.msra.mxu0 0.0
    %6334 = vmatprep.subr.mxu0 0.0
    %6335 = vmatpush1.msra.mxu0 0.0
    %6336 = vmatprep.subr.mxu0 0.0
    %6337 = vmatpush1.msra.mxu0 0.0
    %6338 = vmatprep.subr.mxu0 0.0
    %6339 = vmatpush1.msra.mxu0 0.0
    %6340 = vmatprep.subr.mxu0 0.0
    %6341 = vmatpush1.msra.mxu0 %v6313
    %6342 = vmatprep.subr.mxu0 0.0
    %6343 = vmatpush1.msra.mxu0 %v6308
    %6344 = vmatprep.subr.mxu0 0.0
    %6345 = vmatpush1.msra.mxu0 %v6303
    %6346 = vmatprep.subr.mxu0 0.0
    %6347 = vmatpush1.msra.mxu0 %v6298
    %6348 = vmatprep.subr.mxu0 0.0
    %6349 = vmatpush2.msra.mxu0 0.0
    %6350 = vmatprep.subr.mxu0 0.0
    %6351 = vmatpush2.msra.mxu0 0.0
    %6352 = vmatprep.subr.mxu0 0.0
    %6353 = vmatpush2.msra.mxu0 0.0
    %6354 = vmatprep.subr.mxu0 0.0
    %6355 = vmatpush2.msra.mxu0 0.0
    %6356 = vmatprep.subr.mxu0 0.0
    %6357 = vmatpush2.msra.mxu0 0.0
    %6358 = vmatprep.subr.mxu0 0.0
    %6359 = vmatpush2.msra.mxu0 0.0
    %6360 = vmatprep.subr.mxu0 0.0
    %6361 = vmatpush2.msra.mxu0 0.0
    %6362 = vmatprep.subr.mxu0 0.0
    %6363 = vmatpush2.msra.mxu0 0.0
    %6364 = vmatprep.subr.mxu0 0.0
    %6365 = vmatpush2.msra.mxu0 0.0
    %6366 = vmatprep.subr.mxu0 0.0
    %6367 = vmatpush2.msra.mxu0 0.0
    %6368 = vmatprep.subr.mxu0 0.0
    %6369 = vmatpush2.msra.mxu0 0.0
    %6370 = vmatprep.subr.mxu0 0.0
    %6371 = vmatpush2.msra.mxu0 0.0
    %6372 = vmatprep.subr.mxu0 0.0
    %6373 = vmatpush2.msra.mxu0 0.0
    %6374 = vmatprep.subr.mxu0 0.0
    %6375 = vmatpush2.msra.mxu0 0.0
    %6376 = vmatprep.subr.mxu0 0.0
    %6377 = vmatpush2.msra.mxu0 0.0
    %6378 = vmatprep.subr.mxu0 0.0
    %6379 = vmatpush2.msra.mxu0 0.0
    %6380 = vmatprep.mubr.f32.mxu0 0.0
    %6381 = vmatmul.mubr.f32.gmra.mxu0 %v44
    %v6382 = vpop.f32.mrf.mxu0
    %v6383 = vadd.f32 0.0, %v6382
    %v6384 = vpop.f32.mrf.mxu0
    %6385 = vmatprep.mubr.f32.mxu0 0.0
    %6386 = vmatmul.mubr.f32.gmra.mxu0 %v47
    %v6387 = vpop.f32.mrf.mxu0
    %v6388 = vadd.f32 0.0, %v6387
    %v6389 = vpop.f32.mrf.mxu0
    %6390 = vmatprep.mubr.f32.mxu0 0.0
    %6391 = vmatmul.mubr.f32.gmra.mxu0 %v50
    %v6392 = vpop.f32.mrf.mxu0
    %v6393 = vadd.f32 0.0, %v6392
    %v6394 = vpop.f32.mrf.mxu0
    %6395 = vmatprep.mubr.f32.mxu0 0.0
    %6396 = vmatmul.mubr.f32.gmra.mxu0 %v53
    %v6397 = vpop.f32.mrf.mxu0
    %v6398 = vadd.f32 0.0, %v6397
    %v6399 = vpop.f32.mrf.mxu0
    %6400 = vdwg.mxu0
    %v6401 = vmul.f32 %v6383, 2.0
    %v6402 = vmul.f32 %v6388, 2.0
    %v6403 = vmul.f32 %v6393, 2.0
    %v6404 = vmul.f32 %v6398, 2.0
    %v6405 = vsub.f32 %v6401, %v5519
    %v6406 = vsub.f32 %v6402, %v5520
    %v6407 = vsub.f32 %v6403, %v5519
    %v6408 = vsub.f32 %v6404, %v5520
    %6411 = vrot.lane.b32.xlu0 %v6298, 32
    %v6412 = vpop.permute.xlu0 %6411
    %6413 = vrot.lane.b32.xlu0 %v6303, 32
    %v6414 = vpop.permute.xlu0 %6413
    %6419 = vrot.lane.b32.xlu0 %v6405, 64
    %v6420 = vpop.permute.xlu0 %6419
    %6421 = vrot.lane.b32.xlu0 %v6406, 64
    %v6422 = vpop.permute.xlu0 %6421
    %6427 = vrot.lane.b32.xlu0 %v6308, 96
    %v6428 = vpop.permute.xlu0 %6427
    %6429 = vrot.lane.b32.xlu0 %v6313, 96
    %v6430 = vpop.permute.xlu0 %6429
    %v6433 = vsel %vm42, %v5519, %v6412
    %v6434 = vsel %vm42, %v5520, %v6414
    %v6435 = vsel %vm255, %v6433, %v6420
    %v6436 = vsel %vm255, %v6434, %v6422
    %v6437 = vsel %vm258, %v6435, %v6428
    %v6438 = vsel %vm258, %v6436, %v6430
    %v6440 = vsel %vm42, %v6407, 0
    %v6443 = vsel %vm42, %v6408, 0
    %6445 = vmatprep.subr.mxu0 0.0
    %6446 = vmatpush1.msra.mxu0 %v1054
    %6447 = vmatprep.subr.mxu0 0.0
    %6448 = vmatpush1.msra.mxu0 %v1053
    %6449 = vmatprep.subr.mxu0 0.0
    %6450 = vmatpush1.msra.mxu0 %v1052
    %6451 = vmatprep.subr.mxu0 0.0
    %6452 = vmatpush1.msra.mxu0 %v1051
    %6453 = vmatprep.subr.mxu0 0.0
    %6454 = vmatpush1.msra.mxu0 %v1050
    %6455 = vmatprep.subr.mxu0 0.0
    %6456 = vmatpush1.msra.mxu0 %v1049
    %6457 = vmatprep.subr.mxu0 0.0
    %6458 = vmatpush1.msra.mxu0 %v1048
    %6459 = vmatprep.subr.mxu0 0.0
    %6460 = vmatpush1.msra.mxu0 %v1047
    %6461 = vmatprep.subr.mxu0 0.0
    %6462 = vmatpush1.msra.mxu0 %v1046
    %6463 = vmatprep.subr.mxu0 0.0
    %6464 = vmatpush1.msra.mxu0 %v1045
    %6465 = vmatprep.subr.mxu0 0.0
    %6466 = vmatpush1.msra.mxu0 %v1044
    %6467 = vmatprep.subr.mxu0 0.0
    %6468 = vmatpush1.msra.mxu0 %v1043
    %6469 = vmatprep.subr.mxu0 0.0
    %6470 = vmatpush1.msra.mxu0 %v1042
    %6471 = vmatprep.subr.mxu0 0.0
    %6472 = vmatpush1.msra.mxu0 %v1041
    %6473 = vmatprep.subr.mxu0 0.0
    %6474 = vmatpush1.msra.mxu0 %v1040
    %6475 = vmatprep.subr.mxu0 0.0
    %6476 = vmatpush1.msra.mxu0 %v1039
    %6477 = vmatprep.subr.mxu0 0.0
    %6478 = vmatpush2.msra.mxu0 0.0
    %6479 = vmatprep.subr.mxu0 0.0
    %6480 = vmatpush2.msra.mxu0 0.0
    %6481 = vmatprep.subr.mxu0 0.0
    %6482 = vmatpush2.msra.mxu0 0.0
    %6483 = vmatprep.subr.mxu0 0.0
    %6484 = vmatpush2.msra.mxu0 0.0
    %6485 = vmatprep.subr.mxu0 0.0
    %6486 = vmatpush2.msra.mxu0 0.0
    %6487 = vmatprep.subr.mxu0 0.0
    %6488 = vmatpush2.msra.mxu0 0.0
    %6489 = vmatprep.subr.mxu0 0.0
    %6490 = vmatpush2.msra.mxu0 0.0
    %6491 = vmatprep.subr.mxu0 0.0
    %6492 = vmatpush2.msra.mxu0 0.0
    %6493 = vmatprep.subr.mxu0 0.0
    %6494 = vmatpush2.msra.mxu0 0.0
    %6495 = vmatprep.subr.mxu0 0.0
    %6496 = vmatpush2.msra.mxu0 0.0
    %6497 = vmatprep.subr.mxu0 0.0
    %6498 = vmatpush2.msra.mxu0 0.0
    %6499 = vmatprep.subr.mxu0 0.0
    %6500 = vmatpush2.msra.mxu0 0.0
    %6501 = vmatprep.subr.mxu0 0.0
    %6502 = vmatpush2.msra.mxu0 %v1058
    %6503 = vmatprep.subr.mxu0 0.0
    %6504 = vmatpush2.msra.mxu0 %v1057
    %6505 = vmatprep.subr.mxu0 0.0
    %6506 = vmatpush2.msra.mxu0 %v1056
    %6507 = vmatprep.subr.mxu0 0.0
    %6508 = vmatpush2.msra.mxu0 %v1055
    %6509 = vmatprep.mubr.f32.mxu0 %v6440
    %6510 = vmatmul.mubr.f32.gmra.mxu0 %v6437
    %v6511 = vpop.f32.mrf.mxu0
    %v6512 = vadd.f32 0.0, %v6511
    %v6513 = vpop.f32.mrf.mxu0
    %6514 = vmatprep.mubr.f32.mxu0 %v6443
    %6515 = vmatmul.mubr.f32.gmra.mxu0 %v6438
    %v6516 = vpop.f32.mrf.mxu0
    %v6517 = vadd.f32 0.0, %v6516
    %v6518 = vpop.f32.mrf.mxu0
    %6519 = vdwg.mxu0
    %v6520 = vadd.f32 %v6223, %v6512
    %v6521 = vadd.f32 %v6228, %v6517
    %v6522 = vxor.u32 %v6520, 2147483648
    %v6523 = vxor.u32 %v6521, 2147483648
    %v6524 = vmul.f32 %v6522, 1.442695
    %v6525 = vpow.pop %v6524
    %v6526 = vmul.f32 %v6523, 1.442695
    %v6527 = vpow.pop %v6526
    %v6528 = vadd.f32 %v6525, 1.0
    %v6529 = vadd.f32 %v6527, 1.0
    %v6530 = vrcp.pop %v6528
    %v6531 = vmul.f32 1.0, %v6530
    %v6532 = vrcp.pop %v6529
    %v6533 = vmul.f32 1.0, %v6532
    %6536 = vrot.lane.b32.xlu0 %v6531, 96
    %v6537 = vpop.permute.xlu0 %6536
    %6538 = vrot.lane.b32.xlu0 %v6533, 96
    %v6539 = vpop.permute.xlu0 %6538
    %v6542 = vmul.f32 %v5519, %v6537
    %v6543 = vmul.f32 %v5520, %v6539
    %6544 = vmatprep.subr.mxu0 0.0
    %6545 = vmatpush1.msra.mxu0 0.0
    %6546 = vmatprep.subr.mxu0 0.0
    %6547 = vmatpush1.msra.mxu0 0.0
    %6548 = vmatprep.subr.mxu0 0.0
    %6549 = vmatpush1.msra.mxu0 0.0
    %6550 = vmatprep.subr.mxu0 0.0
    %6551 = vmatpush1.msra.mxu0 0.0
    %6552 = vmatprep.subr.mxu0 0.0
    %6553 = vmatpush1.msra.mxu0 0.0
    %6554 = vmatprep.subr.mxu0 0.0
    %6555 = vmatpush1.msra.mxu0 0.0
    %6556 = vmatprep.subr.mxu0 0.0
    %6557 = vmatpush1.msra.mxu0 0.0
    %6558 = vmatprep.subr.mxu0 0.0
    %6559 = vmatpush1.msra.mxu0 0.0
    %6560 = vmatprep.subr.mxu0 0.0
    %6561 = vmatpush1.msra.mxu0 0.0
    %6562 = vmatprep.subr.mxu0 0.0
    %6563 = vmatpush1.msra.mxu0 0.0
    %6564 = vmatprep.subr.mxu0 0.0
    %6565 = vmatpush1.msra.mxu0 0.0
    %6566 = vmatprep.subr.mxu0 0.0
    %6567 = vmatpush1.msra.mxu0 0.0
    %6568 = vmatprep.subr.mxu0 0.0
    %6569 = vmatpush1.msra.mxu0 %v6543
    %6570 = vmatprep.subr.mxu0 0.0
    %6571 = vmatpush1.msra.mxu0 %v6542
    %6572 = vmatprep.subr.mxu0 0.0
    %6573 = vmatpush1.msra.mxu0 %v6543
    %6574 = vmatprep.subr.mxu0 0.0
    %6575 = vmatpush1.msra.mxu0 %v6542
    %6576 = vmatprep.subr.mxu0 0.0
    %6577 = vmatpush2.msra.mxu0 0.0
    %6578 = vmatprep.subr.mxu0 0.0
    %6579 = vmatpush2.msra.mxu0 0.0
    %6580 = vmatprep.subr.mxu0 0.0
    %6581 = vmatpush2.msra.mxu0 0.0
    %6582 = vmatprep.subr.mxu0 0.0
    %6583 = vmatpush2.msra.mxu0 0.0
    %6584 = vmatprep.subr.mxu0 0.0
    %6585 = vmatpush2.msra.mxu0 0.0
    %6586 = vmatprep.subr.mxu0 0.0
    %6587 = vmatpush2.msra.mxu0 0.0
    %6588 = vmatprep.subr.mxu0 0.0
    %6589 = vmatpush2.msra.mxu0 0.0
    %6590 = vmatprep.subr.mxu0 0.0
    %6591 = vmatpush2.msra.mxu0 0.0
    %6592 = vmatprep.subr.mxu0 0.0
    %6593 = vmatpush2.msra.mxu0 0.0
    %6594 = vmatprep.subr.mxu0 0.0
    %6595 = vmatpush2.msra.mxu0 0.0
    %6596 = vmatprep.subr.mxu0 0.0
    %6597 = vmatpush2.msra.mxu0 0.0
    %6598 = vmatprep.subr.mxu0 0.0
    %6599 = vmatpush2.msra.mxu0 0.0
    %6600 = vmatprep.subr.mxu0 0.0
    %6601 = vmatpush2.msra.mxu0 0.0
    %6602 = vmatprep.subr.mxu0 0.0
    %6603 = vmatpush2.msra.mxu0 0.0
    %6604 = vmatprep.subr.mxu0 0.0
    %6605 = vmatpush2.msra.mxu0 0.0
    %6606 = vmatprep.subr.mxu0 0.0
    %6607 = vmatpush2.msra.mxu0 0.0
    %6608 = vmatprep.mubr.f32.mxu0 0.0
    %6609 = vmatmul.mubr.f32.gmra.mxu0 %v44
    %v6610 = vpop.f32.mrf.mxu0
    %v6611 = vadd.f32 0.0, %v6610
    %v6612 = vpop.f32.mrf.mxu0
    %6613 = vmatprep.mubr.f32.mxu0 0.0
    %6614 = vmatmul.mubr.f32.gmra.mxu0 %v47
    %v6615 = vpop.f32.mrf.mxu0
    %v6616 = vadd.f32 0.0, %v6615
    %v6617 = vpop.f32.mrf.mxu0
    %6618 = vmatprep.mubr.f32.mxu0 0.0
    %6619 = vmatmul.mubr.f32.gmra.mxu0 %v50
    %v6620 = vpop.f32.mrf.mxu0
    %v6621 = vadd.f32 0.0, %v6620
    %v6622 = vpop.f32.mrf.mxu0
    %6623 = vmatprep.mubr.f32.mxu0 0.0
    %6624 = vmatmul.mubr.f32.gmra.mxu0 %v53
    %v6625 = vpop.f32.mrf.mxu0
    %v6626 = vadd.f32 0.0, %v6625
    %v6627 = vpop.f32.mrf.mxu0
    %6628 = vdwg.mxu0
    %6629 = vmatprep.subr.mxu0 0.0
    %6630 = vmatpush1.msra.mxu0 0.0
    %6631 = vmatprep.subr.mxu0 0.0
    %6632 = vmatpush1.msra.mxu0 0.0
    %6633 = vmatprep.subr.mxu0 0.0
    %6634 = vmatpush1.msra.mxu0 0.0
    %6635 = vmatprep.subr.mxu0 0.0
    %6636 = vmatpush1.msra.mxu0 0.0
    %6637 = vmatprep.subr.mxu0 0.0
    %6638 = vmatpush1.msra.mxu0 0.0
    %6639 = vmatprep.subr.mxu0 0.0
    %6640 = vmatpush1.msra.mxu0 0.0
    %6641 = vmatprep.subr.mxu0 0.0
    %6642 = vmatpush1.msra.mxu0 0.0
    %6643 = vmatprep.subr.mxu0 0.0
    %6644 = vmatpush1.msra.mxu0 0.0
    %6645 = vmatprep.subr.mxu0 0.0
    %6646 = vmatpush1.msra.mxu0 0.0
    %6647 = vmatprep.subr.mxu0 0.0
    %6648 = vmatpush1.msra.mxu0 0.0
    %6649 = vmatprep.subr.mxu0 0.0
    %6650 = vmatpush1.msra.mxu0 0.0
    %6651 = vmatprep.subr.mxu0 0.0
    %6652 = vmatpush1.msra.mxu0 0.0
    %6653 = vmatprep.subr.mxu0 0.0
    %6654 = vmatpush1.msra.mxu0 %v6626
    %6655 = vmatprep.subr.mxu0 0.0
    %6656 = vmatpush1.msra.mxu0 %v6621
    %6657 = vmatprep.subr.mxu0 0.0
    %6658 = vmatpush1.msra.mxu0 %v6616
    %6659 = vmatprep.subr.mxu0 0.0
    %6660 = vmatpush1.msra.mxu0 %v6611
    %6661 = vmatprep.subr.mxu0 0.0
    %6662 = vmatpush2.msra.mxu0 0.0
    %6663 = vmatprep.subr.mxu0 0.0
    %6664 = vmatpush2.msra.mxu0 0.0
    %6665 = vmatprep.subr.mxu0 0.0
    %6666 = vmatpush2.msra.mxu0 0.0
    %6667 = vmatprep.subr.mxu0 0.0
    %6668 = vmatpush2.msra.mxu0 0.0
    %6669 = vmatprep.subr.mxu0 0.0
    %6670 = vmatpush2.msra.mxu0 0.0
    %6671 = vmatprep.subr.mxu0 0.0
    %6672 = vmatpush2.msra.mxu0 0.0
    %6673 = vmatprep.subr.mxu0 0.0
    %6674 = vmatpush2.msra.mxu0 0.0
    %6675 = vmatprep.subr.mxu0 0.0
    %6676 = vmatpush2.msra.mxu0 0.0
    %6677 = vmatprep.subr.mxu0 0.0
    %6678 = vmatpush2.msra.mxu0 0.0
    %6679 = vmatprep.subr.mxu0 0.0
    %6680 = vmatpush2.msra.mxu0 0.0
    %6681 = vmatprep.subr.mxu0 0.0
    %6682 = vmatpush2.msra.mxu0 0.0
    %6683 = vmatprep.subr.mxu0 0.0
    %6684 = vmatpush2.msra.mxu0 0.0
    %6685 = vmatprep.subr.mxu0 0.0
    %6686 = vmatpush2.msra.mxu0 0.0
    %6687 = vmatprep.subr.mxu0 0.0
    %6688 = vmatpush2.msra.mxu0 0.0
    %6689 = vmatprep.subr.mxu0 0.0
    %6690 = vmatpush2.msra.mxu0 0.0
    %6691 = vmatprep.subr.mxu0 0.0
    %6692 = vmatpush2.msra.mxu0 0.0
    %6693 = vmatprep.mubr.f32.mxu0 0.0
    %6694 = vmatmul.mubr.f32.gmra.mxu0 %v44
    %v6695 = vpop.f32.mrf.mxu0
    %v6696 = vadd.f32 0.0, %v6695
    %v6697 = vpop.f32.mrf.mxu0
    %6698 = vmatprep.mubr.f32.mxu0 0.0
    %6699 = vmatmul.mubr.f32.gmra.mxu0 %v47
    %v6700 = vpop.f32.mrf.mxu0
    %v6701 = vadd.f32 0.0, %v6700
    %v6702 = vpop.f32.mrf.mxu0
    %6703 = vmatprep.mubr.f32.mxu0 0.0
    %6704 = vmatmul.mubr.f32.gmra.mxu0 %v50
    %v6705 = vpop.f32.mrf.mxu0
    %v6706 = vadd.f32 0.0, %v6705
    %v6707 = vpop.f32.mrf.mxu0
    %6708 = vmatprep.mubr.f32.mxu0 0.0
    %6709 = vmatmul.mubr.f32.gmra.mxu0 %v53
    %v6710 = vpop.f32.mrf.mxu0
    %v6711 = vadd.f32 0.0, %v6710
    %v6712 = vpop.f32.mrf.mxu0
    %6713 = vdwg.mxu0
    %v6714 = vmul.f32 %v6696, 2.0
    %v6715 = vmul.f32 %v6701, 2.0
    %v6716 = vmul.f32 %v6706, 2.0
    %v6717 = vmul.f32 %v6711, 2.0
    %v6718 = vsub.f32 %v6714, %v6542
    %v6719 = vsub.f32 %v6715, %v6543
    %v6720 = vsub.f32 %v6716, %v6542
    %v6721 = vsub.f32 %v6717, %v6543
    %6724 = vrot.lane.b32.xlu0 %v6611, 32
    %v6725 = vpop.permute.xlu0 %6724
    %6726 = vrot.lane.b32.xlu0 %v6616, 32
    %v6727 = vpop.permute.xlu0 %6726
    %6732 = vrot.lane.b32.xlu0 %v6718, 64
    %v6733 = vpop.permute.xlu0 %6732
    %6734 = vrot.lane.b32.xlu0 %v6719, 64
    %v6735 = vpop.permute.xlu0 %6734
    %6740 = vrot.lane.b32.xlu0 %v6621, 96
    %v6741 = vpop.permute.xlu0 %6740
    %6742 = vrot.lane.b32.xlu0 %v6626, 96
    %v6743 = vpop.permute.xlu0 %6742
    %v6746 = vsel %vm42, %v6542, %v6725
    %v6747 = vsel %vm42, %v6543, %v6727
    %v6748 = vsel %vm255, %v6746, %v6733
    %v6749 = vsel %vm255, %v6747, %v6735
    %v6750 = vsel %vm258, %v6748, %v6741
    %v6751 = vsel %vm258, %v6749, %v6743
    %v6753 = vsel %vm42, %v6720, 0
    %v6756 = vsel %vm42, %v6721, 0
    %6758 = vmatprep.subr.mxu0 0.0
    %6759 = vmatpush1.msra.mxu0 %v1381
    %6760 = vmatprep.subr.mxu0 0.0
    %6761 = vmatpush1.msra.mxu0 %v1380
    %6762 = vmatprep.subr.mxu0 0.0
    %6763 = vmatpush1.msra.mxu0 %v1379
    %6764 = vmatprep.subr.mxu0 0.0
    %6765 = vmatpush1.msra.mxu0 %v1378
    %6766 = vmatprep.subr.mxu0 0.0
    %6767 = vmatpush1.msra.mxu0 %v1377
    %6768 = vmatprep.subr.mxu0 0.0
    %6769 = vmatpush1.msra.mxu0 %v1376
    %6770 = vmatprep.subr.mxu0 0.0
    %6771 = vmatpush1.msra.mxu0 %v1375
    %6772 = vmatprep.subr.mxu0 0.0
    %6773 = vmatpush1.msra.mxu0 %v1374
    %6774 = vmatprep.subr.mxu0 0.0
    %6775 = vmatpush1.msra.mxu0 %v1373
    %6776 = vmatprep.subr.mxu0 0.0
    %6777 = vmatpush1.msra.mxu0 %v1372
    %6778 = vmatprep.subr.mxu0 0.0
    %6779 = vmatpush1.msra.mxu0 %v1371
    %6780 = vmatprep.subr.mxu0 0.0
    %6781 = vmatpush1.msra.mxu0 %v1370
    %6782 = vmatprep.subr.mxu0 0.0
    %6783 = vmatpush1.msra.mxu0 %v1369
    %6784 = vmatprep.subr.mxu0 0.0
    %6785 = vmatpush1.msra.mxu0 %v1368
    %6786 = vmatprep.subr.mxu0 0.0
    %6787 = vmatpush1.msra.mxu0 %v1367
    %6788 = vmatprep.subr.mxu0 0.0
    %6789 = vmatpush1.msra.mxu0 %v1366
    %6790 = vmatprep.subr.mxu0 0.0
    %6791 = vmatpush2.msra.mxu0 0.0
    %6792 = vmatprep.subr.mxu0 0.0
    %6793 = vmatpush2.msra.mxu0 0.0
    %6794 = vmatprep.subr.mxu0 0.0
    %6795 = vmatpush2.msra.mxu0 0.0
    %6796 = vmatprep.subr.mxu0 0.0
    %6797 = vmatpush2.msra.mxu0 0.0
    %6798 = vmatprep.subr.mxu0 0.0
    %6799 = vmatpush2.msra.mxu0 0.0
    %6800 = vmatprep.subr.mxu0 0.0
    %6801 = vmatpush2.msra.mxu0 0.0
    %6802 = vmatprep.subr.mxu0 0.0
    %6803 = vmatpush2.msra.mxu0 0.0
    %6804 = vmatprep.subr.mxu0 0.0
    %6805 = vmatpush2.msra.mxu0 0.0
    %6806 = vmatprep.subr.mxu0 0.0
    %6807 = vmatpush2.msra.mxu0 0.0
    %6808 = vmatprep.subr.mxu0 0.0
    %6809 = vmatpush2.msra.mxu0 0.0
    %6810 = vmatprep.subr.mxu0 0.0
    %6811 = vmatpush2.msra.mxu0 0.0
    %6812 = vmatprep.subr.mxu0 0.0
    %6813 = vmatpush2.msra.mxu0 0.0
    %6814 = vmatprep.subr.mxu0 0.0
    %6815 = vmatpush2.msra.mxu0 %v1385
    %6816 = vmatprep.subr.mxu0 0.0
    %6817 = vmatpush2.msra.mxu0 %v1384
    %6818 = vmatprep.subr.mxu0 0.0
    %6819 = vmatpush2.msra.mxu0 %v1383
    %6820 = vmatprep.subr.mxu0 0.0
    %6821 = vmatpush2.msra.mxu0 %v1382
    %6822 = vmatprep.mubr.f32.mxu0 %v6753
    %6823 = vmatmul.mubr.f32.gmra.mxu0 %v6750
    %v6824 = vpop.f32.mrf.mxu0
    %v6825 = vadd.f32 0.0, %v6824
    %v6826 = vpop.f32.mrf.mxu0
    %6827 = vmatprep.mubr.f32.mxu0 %v6756
    %6828 = vmatmul.mubr.f32.gmra.mxu0 %v6751
    %v6829 = vpop.f32.mrf.mxu0
    %v6830 = vadd.f32 0.0, %v6829
    %v6831 = vpop.f32.mrf.mxu0
    %6832 = vdwg.mxu0
    %6835 = vrot.lane.b32.xlu0 %v6825, 64
    %v6836 = vpop.permute.xlu0 %6835
    %6837 = vrot.lane.b32.xlu0 %v6830, 64
    %v6838 = vpop.permute.xlu0 %6837
    %v6841 = vadd.f32 %v6223, %v6836
    %v6842 = vadd.f32 %v6228, %v6838
    %v6843 = vtanh.pop %v6841
    %v6844 = vtanh.pop %v6842
    %v6845 = vmul.f32 %v6531, %v5519
    %v6846 = vmul.f32 %v6533, %v5520
    %v6847 = vsub.f32 1.0, %v6531
    %v6848 = vsub.f32 1.0, %v6533
    %6851 = vrot.lane.b32.xlu0 %v6843, 64
    %v6852 = vpop.permute.xlu0 %6851
    %6853 = vrot.lane.b32.xlu0 %v6844, 64
    %v6854 = vpop.permute.xlu0 %6853
    %v6857 = vmul.f32 %v6847, %v6852
    %v6858 = vmul.f32 %v6848, %v6854
    %v6859 = vadd.f32 %v6845, %v6857
    %v6860 = vadd.f32 %v6846, %v6858
    %v6861 = vmax.f32 %v6859, 0.0
    %v6862 = vmax.f32 %v6860, 0.0
    %s6863 = scalar_lea.vmem %s0, 80
    %v6864 = vld [vmem:[%s6863] sm:$0xff]
    %v6865 = vld [vmem:[%s6863 + $0x8] sm:$0xff]
    %6866 = vmatprep.subr.mxu0 0.0
    %6867 = vmatpush1.msra.mxu0 %v276
    %6868 = vmatprep.subr.mxu0 0.0
    %6869 = vmatpush1.msra.mxu0 %v275
    %6870 = vmatprep.subr.mxu0 0.0
    %6871 = vmatpush1.msra.mxu0 %v274
    %6872 = vmatprep.subr.mxu0 0.0
    %6873 = vmatpush1.msra.mxu0 %v273
    %6874 = vmatprep.subr.mxu0 0.0
    %6875 = vmatpush1.msra.mxu0 %v272
    %6876 = vmatprep.subr.mxu0 0.0
    %6877 = vmatpush1.msra.mxu0 %v271
    %6878 = vmatprep.subr.mxu0 0.0
    %6879 = vmatpush1.msra.mxu0 %v270
    %6880 = vmatprep.subr.mxu0 0.0
    %6881 = vmatpush1.msra.mxu0 %v269
    %6882 = vmatprep.subr.mxu0 0.0
    %6883 = vmatpush1.msra.mxu0 %v268
    %6884 = vmatprep.subr.mxu0 0.0
    %6885 = vmatpush1.msra.mxu0 %v267
    %6886 = vmatprep.subr.mxu0 0.0
    %6887 = vmatpush1.msra.mxu0 %v266
    %6888 = vmatprep.subr.mxu0 0.0
    %6889 = vmatpush1.msra.mxu0 %v265
    %6890 = vmatprep.subr.mxu0 0.0
    %6891 = vmatpush1.msra.mxu0 %v264
    %6892 = vmatprep.subr.mxu0 0.0
    %6893 = vmatpush1.msra.mxu0 %v263
    %6894 = vmatprep.subr.mxu0 0.0
    %6895 = vmatpush1.msra.mxu0 %v262
    %6896 = vmatprep.subr.mxu0 0.0
    %6897 = vmatpush1.msra.mxu0 %v261
    %6898 = vmatprep.subr.mxu0 0.0
    %6899 = vmatpush2.msra.mxu0 0.0
    %6900 = vmatprep.subr.mxu0 0.0
    %6901 = vmatpush2.msra.mxu0 0.0
    %6902 = vmatprep.subr.mxu0 0.0
    %6903 = vmatpush2.msra.mxu0 0.0
    %6904 = vmatprep.subr.mxu0 0.0
    %6905 = vmatpush2.msra.mxu0 0.0
    %6906 = vmatprep.subr.mxu0 0.0
    %6907 = vmatpush2.msra.mxu0 0.0
    %6908 = vmatprep.subr.mxu0 0.0
    %6909 = vmatpush2.msra.mxu0 0.0
    %6910 = vmatprep.subr.mxu0 0.0
    %6911 = vmatpush2.msra.mxu0 0.0
    %6912 = vmatprep.subr.mxu0 0.0
    %6913 = vmatpush2.msra.mxu0 0.0
    %6914 = vmatprep.subr.mxu0 0.0
    %6915 = vmatpush2.msra.mxu0 0.0
    %6916 = vmatprep.subr.mxu0 0.0
    %6917 = vmatpush2.msra.mxu0 0.0
    %6918 = vmatprep.subr.mxu0 0.0
    %6919 = vmatpush2.msra.mxu0 0.0
    %6920 = vmatprep.subr.mxu0 0.0
    %6921 = vmatpush2.msra.mxu0 0.0
    %6922 = vmatprep.subr.mxu0 0.0
    %6923 = vmatpush2.msra.mxu0 %v280
    %6924 = vmatprep.subr.mxu0 0.0
    %6925 = vmatpush2.msra.mxu0 %v279
    %6926 = vmatprep.subr.mxu0 0.0
    %6927 = vmatpush2.msra.mxu0 %v278
    %6928 = vmatprep.subr.mxu0 0.0
    %6929 = vmatpush2.msra.mxu0 %v277
    %6930 = vmatprep.mubr.f32.mxu0 %v6151
    %6931 = vmatmul.mubr.f32.gmra.mxu0 %v6148
    %v6932 = vpop.f32.mrf.mxu0
    %v6933 = vadd.f32 0.0, %v6932
    %v6934 = vpop.f32.mrf.mxu0
    %6935 = vmatprep.mubr.f32.mxu0 %v6154
    %6936 = vmatmul.mubr.f32.gmra.mxu0 %v6149
    %v6937 = vpop.f32.mrf.mxu0
    %v6938 = vadd.f32 0.0, %v6937
    %v6939 = vpop.f32.mrf.mxu0
    %6940 = vdwg.mxu0
    %v6941 = vadd.f32 %v6864, %v6933
    %v6942 = vadd.f32 %v6865, %v6938
    %v6943 = vxor.u32 %v6941, 2147483648
    %v6944 = vxor.u32 %v6942, 2147483648
    %v6945 = vmul.f32 %v6943, 1.442695
    %v6946 = vpow.pop %v6945
    %v6947 = vmul.f32 %v6944, 1.442695
    %v6948 = vpow.pop %v6947
    %v6949 = vadd.f32 %v6946, 1.0
    %v6950 = vadd.f32 %v6948, 1.0
    %v6951 = vrcp.pop %v6949
    %v6952 = vmul.f32 1.0, %v6951
    %v6953 = vrcp.pop %v6950
    %v6954 = vmul.f32 1.0, %v6953
    %6957 = vrot.lane.b32.xlu0 %v6952, 96
    %v6958 = vpop.permute.xlu0 %6957
    %6959 = vrot.lane.b32.xlu0 %v6954, 96
    %v6960 = vpop.permute.xlu0 %6959
    %v6963 = vmul.f32 %v5940, %v6958
    %v6964 = vmul.f32 %v5941, %v6960
    %6965 = vmatprep.subr.mxu0 0.0
    %6966 = vmatpush1.msra.mxu0 0.0
    %6967 = vmatprep.subr.mxu0 0.0
    %6968 = vmatpush1.msra.mxu0 0.0
    %6969 = vmatprep.subr.mxu0 0.0
    %6970 = vmatpush1.msra.mxu0 0.0
    %6971 = vmatprep.subr.mxu0 0.0
    %6972 = vmatpush1.msra.mxu0 0.0
    %6973 = vmatprep.subr.mxu0 0.0
    %6974 = vmatpush1.msra.mxu0 0.0
    %6975 = vmatprep.subr.mxu0 0.0
    %6976 = vmatpush1.msra.mxu0 0.0
    %6977 = vmatprep.subr.mxu0 0.0
    %6978 = vmatpush1.msra.mxu0 0.0
    %6979 = vmatprep.subr.mxu0 0.0
    %6980 = vmatpush1.msra.mxu0 0.0
    %6981 = vmatprep.subr.mxu0 0.0
    %6982 = vmatpush1.msra.mxu0 0.0
    %6983 = vmatprep.subr.mxu0 0.0
    %6984 = vmatpush1.msra.mxu0 0.0
    %6985 = vmatprep.subr.mxu0 0.0
    %6986 = vmatpush1.msra.mxu0 0.0
    %6987 = vmatprep.subr.mxu0 0.0
    %6988 = vmatpush1.msra.mxu0 0.0
    %6989 = vmatprep.subr.mxu0 0.0
    %6990 = vmatpush1.msra.mxu0 %v6964
    %6991 = vmatprep.subr.mxu0 0.0
    %6992 = vmatpush1.msra.mxu0 %v6963
    %6993 = vmatprep.subr.mxu0 0.0
    %6994 = vmatpush1.msra.mxu0 %v6964
    %6995 = vmatprep.subr.mxu0 0.0
    %6996 = vmatpush1.msra.mxu0 %v6963
    %6997 = vmatprep.subr.mxu0 0.0
    %6998 = vmatpush2.msra.mxu0 0.0
    %6999 = vmatprep.subr.mxu0 0.0
    %7000 = vmatpush2.msra.mxu0 0.0
    %7001 = vmatprep.subr.mxu0 0.0
    %7002 = vmatpush2.msra.mxu0 0.0
    %7003 = vmatprep.subr.mxu0 0.0
    %7004 = vmatpush2.msra.mxu0 0.0
    %7005 = vmatprep.subr.mxu0 0.0
    %7006 = vmatpush2.msra.mxu0 0.0
    %7007 = vmatprep.subr.mxu0 0.0
    %7008 = vmatpush2.msra.mxu0 0.0
    %7009 = vmatprep.subr.mxu0 0.0
    %7010 = vmatpush2.msra.mxu0 0.0
    %7011 = vmatprep.subr.mxu0 0.0
    %7012 = vmatpush2.msra.mxu0 0.0
    %7013 = vmatprep.subr.mxu0 0.0
    %7014 = vmatpush2.msra.mxu0 0.0
    %7015 = vmatprep.subr.mxu0 0.0
    %7016 = vmatpush2.msra.mxu0 0.0
    %7017 = vmatprep.subr.mxu0 0.0
    %7018 = vmatpush2.msra.mxu0 0.0
    %7019 = vmatprep.subr.mxu0 0.0
    %7020 = vmatpush2.msra.mxu0 0.0
    %7021 = vmatprep.subr.mxu0 0.0
    %7022 = vmatpush2.msra.mxu0 0.0
    %7023 = vmatprep.subr.mxu0 0.0
    %7024 = vmatpush2.msra.mxu0 0.0
    %7025 = vmatprep.subr.mxu0 0.0
    %7026 = vmatpush2.msra.mxu0 0.0
    %7027 = vmatprep.subr.mxu0 0.0
    %7028 = vmatpush2.msra.mxu0 0.0
    %7029 = vmatprep.mubr.f32.mxu0 0.0
    %7030 = vmatmul.mubr.f32.gmra.mxu0 %v44
    %v7031 = vpop.f32.mrf.mxu0
    %v7032 = vadd.f32 0.0, %v7031
    %v7033 = vpop.f32.mrf.mxu0
    %7034 = vmatprep.mubr.f32.mxu0 0.0
    %7035 = vmatmul.mubr.f32.gmra.mxu0 %v47
    %v7036 = vpop.f32.mrf.mxu0
    %v7037 = vadd.f32 0.0, %v7036
    %v7038 = vpop.f32.mrf.mxu0
    %7039 = vmatprep.mubr.f32.mxu0 0.0
    %7040 = vmatmul.mubr.f32.gmra.mxu0 %v50
    %v7041 = vpop.f32.mrf.mxu0
    %v7042 = vadd.f32 0.0, %v7041
    %v7043 = vpop.f32.mrf.mxu0
    %7044 = vmatprep.mubr.f32.mxu0 0.0
    %7045 = vmatmul.mubr.f32.gmra.mxu0 %v53
    %v7046 = vpop.f32.mrf.mxu0
    %v7047 = vadd.f32 0.0, %v7046
    %v7048 = vpop.f32.mrf.mxu0
    %7049 = vdwg.mxu0
    %7050 = vmatprep.subr.mxu0 0.0
    %7051 = vmatpush1.msra.mxu0 0.0
    %7052 = vmatprep.subr.mxu0 0.0
    %7053 = vmatpush1.msra.mxu0 0.0
    %7054 = vmatprep.subr.mxu0 0.0
    %7055 = vmatpush1.msra.mxu0 0.0
    %7056 = vmatprep.subr.mxu0 0.0
    %7057 = vmatpush1.msra.mxu0 0.0
    %7058 = vmatprep.subr.mxu0 0.0
    %7059 = vmatpush1.msra.mxu0 0.0
    %7060 = vmatprep.subr.mxu0 0.0
    %7061 = vmatpush1.msra.mxu0 0.0
    %7062 = vmatprep.subr.mxu0 0.0
    %7063 = vmatpush1.msra.mxu0 0.0
    %7064 = vmatprep.subr.mxu0 0.0
    %7065 = vmatpush1.msra.mxu0 0.0
    %7066 = vmatprep.subr.mxu0 0.0
    %7067 = vmatpush1.msra.mxu0 0.0
    %7068 = vmatprep.subr.mxu0 0.0
    %7069 = vmatpush1.msra.mxu0 0.0
    %7070 = vmatprep.subr.mxu0 0.0
    %7071 = vmatpush1.msra.mxu0 0.0
    %7072 = vmatprep.subr.mxu0 0.0
    %7073 = vmatpush1.msra.mxu0 0.0
    %7074 = vmatprep.subr.mxu0 0.0
    %7075 = vmatpush1.msra.mxu0 %v7047
    %7076 = vmatprep.subr.mxu0 0.0
    %7077 = vmatpush1.msra.mxu0 %v7042
    %7078 = vmatprep.subr.mxu0 0.0
    %7079 = vmatpush1.msra.mxu0 %v7037
    %7080 = vmatprep.subr.mxu0 0.0
    %7081 = vmatpush1.msra.mxu0 %v7032
    %7082 = vmatprep.subr.mxu0 0.0
    %7083 = vmatpush2.msra.mxu0 0.0
    %7084 = vmatprep.subr.mxu0 0.0
    %7085 = vmatpush2.msra.mxu0 0.0
    %7086 = vmatprep.subr.mxu0 0.0
    %7087 = vmatpush2.msra.mxu0 0.0
    %7088 = vmatprep.subr.mxu0 0.0
    %7089 = vmatpush2.msra.mxu0 0.0
    %7090 = vmatprep.subr.mxu0 0.0
    %7091 = vmatpush2.msra.mxu0 0.0
    %7092 = vmatprep.subr.mxu0 0.0
    %7093 = vmatpush2.msra.mxu0 0.0
    %7094 = vmatprep.subr.mxu0 0.0
    %7095 = vmatpush2.msra.mxu0 0.0
    %7096 = vmatprep.subr.mxu0 0.0
    %7097 = vmatpush2.msra.mxu0 0.0
    %7098 = vmatprep.subr.mxu0 0.0
    %7099 = vmatpush2.msra.mxu0 0.0
    %7100 = vmatprep.subr.mxu0 0.0
    %7101 = vmatpush2.msra.mxu0 0.0
    %7102 = vmatprep.subr.mxu0 0.0
    %7103 = vmatpush2.msra.mxu0 0.0
    %7104 = vmatprep.subr.mxu0 0.0
    %7105 = vmatpush2.msra.mxu0 0.0
    %7106 = vmatprep.subr.mxu0 0.0
    %7107 = vmatpush2.msra.mxu0 0.0
    %7108 = vmatprep.subr.mxu0 0.0
    %7109 = vmatpush2.msra.mxu0 0.0
    %7110 = vmatprep.subr.mxu0 0.0
    %7111 = vmatpush2.msra.mxu0 0.0
    %7112 = vmatprep.subr.mxu0 0.0
    %7113 = vmatpush2.msra.mxu0 0.0
    %7114 = vmatprep.mubr.f32.mxu0 0.0
    %7115 = vmatmul.mubr.f32.gmra.mxu0 %v44
    %v7116 = vpop.f32.mrf.mxu0
    %v7117 = vadd.f32 0.0, %v7116
    %v7118 = vpop.f32.mrf.mxu0
    %7119 = vmatprep.mubr.f32.mxu0 0.0
    %7120 = vmatmul.mubr.f32.gmra.mxu0 %v47
    %v7121 = vpop.f32.mrf.mxu0
    %v7122 = vadd.f32 0.0, %v7121
    %v7123 = vpop.f32.mrf.mxu0
    %7124 = vmatprep.mubr.f32.mxu0 0.0
    %7125 = vmatmul.mubr.f32.gmra.mxu0 %v50
    %v7126 = vpop.f32.mrf.mxu0
    %v7127 = vadd.f32 0.0, %v7126
    %v7128 = vpop.f32.mrf.mxu0
    %7129 = vmatprep.mubr.f32.mxu0 0.0
    %7130 = vmatmul.mubr.f32.gmra.mxu0 %v53
    %v7131 = vpop.f32.mrf.mxu0
    %v7132 = vadd.f32 0.0, %v7131
    %v7133 = vpop.f32.mrf.mxu0
    %7134 = vdwg.mxu0
    %v7135 = vmul.f32 %v7117, 2.0
    %v7136 = vmul.f32 %v7122, 2.0
    %v7137 = vmul.f32 %v7127, 2.0
    %v7138 = vmul.f32 %v7132, 2.0
    %v7139 = vsub.f32 %v7135, %v6963
    %v7140 = vsub.f32 %v7136, %v6964
    %v7141 = vsub.f32 %v7137, %v6963
    %v7142 = vsub.f32 %v7138, %v6964
    %7145 = vrot.lane.b32.xlu0 %v7032, 32
    %v7146 = vpop.permute.xlu0 %7145
    %7147 = vrot.lane.b32.xlu0 %v7037, 32
    %v7148 = vpop.permute.xlu0 %7147
    %7153 = vrot.lane.b32.xlu0 %v7139, 64
    %v7154 = vpop.permute.xlu0 %7153
    %7155 = vrot.lane.b32.xlu0 %v7140, 64
    %v7156 = vpop.permute.xlu0 %7155
    %7161 = vrot.lane.b32.xlu0 %v7042, 96
    %v7162 = vpop.permute.xlu0 %7161
    %7163 = vrot.lane.b32.xlu0 %v7047, 96
    %v7164 = vpop.permute.xlu0 %7163
    %v7167 = vsel %vm42, %v6963, %v7146
    %v7168 = vsel %vm42, %v6964, %v7148
    %v7169 = vsel %vm255, %v7167, %v7154
    %v7170 = vsel %vm255, %v7168, %v7156
    %v7171 = vsel %vm258, %v7169, %v7162
    %v7172 = vsel %vm258, %v7170, %v7164
    %v7174 = vsel %vm42, %v7141, 0
    %v7177 = vsel %vm42, %v7142, 0
    %7179 = vmatprep.subr.mxu0 0.0
    %7180 = vmatpush1.msra.mxu0 %v609
    %7181 = vmatprep.subr.mxu0 0.0
    %7182 = vmatpush1.msra.mxu0 %v608
    %7183 = vmatprep.subr.mxu0 0.0
    %7184 = vmatpush1.msra.mxu0 %v607
    %7185 = vmatprep.subr.mxu0 0.0
    %7186 = vmatpush1.msra.mxu0 %v606
    %7187 = vmatprep.subr.mxu0 0.0
    %7188 = vmatpush1.msra.mxu0 %v605
    %7189 = vmatprep.subr.mxu0 0.0
    %7190 = vmatpush1.msra.mxu0 %v604
    %7191 = vmatprep.subr.mxu0 0.0
    %7192 = vmatpush1.msra.mxu0 %v603
    %7193 = vmatprep.subr.mxu0 0.0
    %7194 = vmatpush1.msra.mxu0 %v602
    %7195 = vmatprep.subr.mxu0 0.0
    %7196 = vmatpush1.msra.mxu0 %v601
    %7197 = vmatprep.subr.mxu0 0.0
    %7198 = vmatpush1.msra.mxu0 %v600
    %7199 = vmatprep.subr.mxu0 0.0
    %7200 = vmatpush1.msra.mxu0 %v599
    %7201 = vmatprep.subr.mxu0 0.0
    %7202 = vmatpush1.msra.mxu0 %v598
    %7203 = vmatprep.subr.mxu0 0.0
    %7204 = vmatpush1.msra.mxu0 %v597
    %7205 = vmatprep.subr.mxu0 0.0
    %7206 = vmatpush1.msra.mxu0 %v596
    %7207 = vmatprep.subr.mxu0 0.0
    %7208 = vmatpush1.msra.mxu0 %v595
    %7209 = vmatprep.subr.mxu0 0.0
    %7210 = vmatpush1.msra.mxu0 %v594
    %7211 = vmatprep.subr.mxu0 0.0
    %7212 = vmatpush2.msra.mxu0 0.0
    %7213 = vmatprep.subr.mxu0 0.0
    %7214 = vmatpush2.msra.mxu0 0.0
    %7215 = vmatprep.subr.mxu0 0.0
    %7216 = vmatpush2.msra.mxu0 0.0
    %7217 = vmatprep.subr.mxu0 0.0
    %7218 = vmatpush2.msra.mxu0 0.0
    %7219 = vmatprep.subr.mxu0 0.0
    %7220 = vmatpush2.msra.mxu0 0.0
    %7221 = vmatprep.subr.mxu0 0.0
    %7222 = vmatpush2.msra.mxu0 0.0
    %7223 = vmatprep.subr.mxu0 0.0
    %7224 = vmatpush2.msra.mxu0 0.0
    %7225 = vmatprep.subr.mxu0 0.0
    %7226 = vmatpush2.msra.mxu0 0.0
    %7227 = vmatprep.subr.mxu0 0.0
    %7228 = vmatpush2.msra.mxu0 0.0
    %7229 = vmatprep.subr.mxu0 0.0
    %7230 = vmatpush2.msra.mxu0 0.0
    %7231 = vmatprep.subr.mxu0 0.0
    %7232 = vmatpush2.msra.mxu0 0.0
    %7233 = vmatprep.subr.mxu0 0.0
    %7234 = vmatpush2.msra.mxu0 0.0
    %7235 = vmatprep.subr.mxu0 0.0
    %7236 = vmatpush2.msra.mxu0 %v613
    %7237 = vmatprep.subr.mxu0 0.0
    %7238 = vmatpush2.msra.mxu0 %v612
    %7239 = vmatprep.subr.mxu0 0.0
    %7240 = vmatpush2.msra.mxu0 %v611
    %7241 = vmatprep.subr.mxu0 0.0
    %7242 = vmatpush2.msra.mxu0 %v610
    %7243 = vmatprep.mubr.f32.mxu0 %v7174
    %7244 = vmatmul.mubr.f32.gmra.mxu0 %v7171
    %v7245 = vpop.f32.mrf.mxu0
    %v7246 = vadd.f32 0.0, %v7245
    %v7247 = vpop.f32.mrf.mxu0
    %7248 = vmatprep.mubr.f32.mxu0 %v7177
    %7249 = vmatmul.mubr.f32.gmra.mxu0 %v7172
    %v7250 = vpop.f32.mrf.mxu0
    %v7251 = vadd.f32 0.0, %v7250
    %v7252 = vpop.f32.mrf.mxu0
    %7253 = vdwg.mxu0
    %7256 = vrot.lane.b32.xlu0 %v7246, 64
    %v7257 = vpop.permute.xlu0 %7256
    %7258 = vrot.lane.b32.xlu0 %v7251, 64
    %v7259 = vpop.permute.xlu0 %7258
    %v7262 = vadd.f32 %v6864, %v7257
    %v7263 = vadd.f32 %v6865, %v7259
    %v7264 = vtanh.pop %v7262
    %v7265 = vtanh.pop %v7263
    %v7266 = vmul.f32 %v6952, %v5940
    %v7267 = vmul.f32 %v6954, %v5941
    %v7268 = vsub.f32 1.0, %v6952
    %v7269 = vsub.f32 1.0, %v6954
    %7272 = vrot.lane.b32.xlu0 %v7264, 64
    %v7273 = vpop.permute.xlu0 %7272
    %7274 = vrot.lane.b32.xlu0 %v7265, 64
    %v7275 = vpop.permute.xlu0 %7274
    %v7278 = vmul.f32 %v7268, %v7273
    %v7279 = vmul.f32 %v7269, %v7275
    %v7280 = vadd.f32 %v7266, %v7278
    %v7281 = vadd.f32 %v7267, %v7279
    %v7282 = vmax.f32 %v7280, 0.0
    %v7283 = vmax.f32 %v7281, 0.0
    %7284 = vmatprep.subr.mxu0 0.0
    %7285 = vmatpush1.msra.mxu0 0.0
    %7286 = vmatprep.subr.mxu0 0.0
    %7287 = vmatpush1.msra.mxu0 0.0
    %7288 = vmatprep.subr.mxu0 0.0
    %7289 = vmatpush1.msra.mxu0 0.0
    %7290 = vmatprep.subr.mxu0 0.0
    %7291 = vmatpush1.msra.mxu0 0.0
    %7292 = vmatprep.subr.mxu0 0.0
    %7293 = vmatpush1.msra.mxu0 0.0
    %7294 = vmatprep.subr.mxu0 0.0
    %7295 = vmatpush1.msra.mxu0 0.0
    %7296 = vmatprep.subr.mxu0 0.0
    %7297 = vmatpush1.msra.mxu0 0.0
    %7298 = vmatprep.subr.mxu0 0.0
    %7299 = vmatpush1.msra.mxu0 0.0
    %7300 = vmatprep.subr.mxu0 0.0
    %7301 = vmatpush1.msra.mxu0 0.0
    %7302 = vmatprep.subr.mxu0 0.0
    %7303 = vmatpush1.msra.mxu0 0.0
    %7304 = vmatprep.subr.mxu0 0.0
    %7305 = vmatpush1.msra.mxu0 0.0
    %7306 = vmatprep.subr.mxu0 0.0
    %7307 = vmatpush1.msra.mxu0 0.0
    %7308 = vmatprep.subr.mxu0 0.0
    %7309 = vmatpush1.msra.mxu0 %v7283
    %7310 = vmatprep.subr.mxu0 0.0
    %7311 = vmatpush1.msra.mxu0 %v7282
    %7312 = vmatprep.subr.mxu0 0.0
    %7313 = vmatpush1.msra.mxu0 %v7283
    %7314 = vmatprep.subr.mxu0 0.0
    %7315 = vmatpush1.msra.mxu0 %v7282
    %7316 = vmatprep.subr.mxu0 0.0
    %7317 = vmatpush2.msra.mxu0 0.0
    %7318 = vmatprep.subr.mxu0 0.0
    %7319 = vmatpush2.msra.mxu0 0.0
    %7320 = vmatprep.subr.mxu0 0.0
    %7321 = vmatpush2.msra.mxu0 0.0
    %7322 = vmatprep.subr.mxu0 0.0
    %7323 = vmatpush2.msra.mxu0 0.0
    %7324 = vmatprep.subr.mxu0 0.0
    %7325 = vmatpush2.msra.mxu0 0.0
    %7326 = vmatprep.subr.mxu0 0.0
    %7327 = vmatpush2.msra.mxu0 0.0
    %7328 = vmatprep.subr.mxu0 0.0
    %7329 = vmatpush2.msra.mxu0 0.0
    %7330 = vmatprep.subr.mxu0 0.0
    %7331 = vmatpush2.msra.mxu0 0.0
    %7332 = vmatprep.subr.mxu0 0.0
    %7333 = vmatpush2.msra.mxu0 0.0
    %7334 = vmatprep.subr.mxu0 0.0
    %7335 = vmatpush2.msra.mxu0 0.0
    %7336 = vmatprep.subr.mxu0 0.0
    %7337 = vmatpush2.msra.mxu0 0.0
    %7338 = vmatprep.subr.mxu0 0.0
    %7339 = vmatpush2.msra.mxu0 0.0
    %7340 = vmatprep.subr.mxu0 0.0
    %7341 = vmatpush2.msra.mxu0 0.0
    %7342 = vmatprep.subr.mxu0 0.0
    %7343 = vmatpush2.msra.mxu0 0.0
    %7344 = vmatprep.subr.mxu0 0.0
    %7345 = vmatpush2.msra.mxu0 0.0
    %7346 = vmatprep.subr.mxu0 0.0
    %7347 = vmatpush2.msra.mxu0 0.0
    %7348 = vmatprep.mubr.f32.mxu0 0.0
    %7349 = vmatmul.mubr.f32.gmra.mxu0 %v44
    %v7350 = vpop.f32.mrf.mxu0
    %v7351 = vadd.f32 0.0, %v7350
    %v7352 = vpop.f32.mrf.mxu0
    %7353 = vmatprep.mubr.f32.mxu0 0.0
    %7354 = vmatmul.mubr.f32.gmra.mxu0 %v47
    %v7355 = vpop.f32.mrf.mxu0
    %v7356 = vadd.f32 0.0, %v7355
    %v7357 = vpop.f32.mrf.mxu0
    %7358 = vmatprep.mubr.f32.mxu0 0.0
    %7359 = vmatmul.mubr.f32.gmra.mxu0 %v50
    %v7360 = vpop.f32.mrf.mxu0
    %v7361 = vadd.f32 0.0, %v7360
    %v7362 = vpop.f32.mrf.mxu0
    %7363 = vmatprep.mubr.f32.mxu0 0.0
    %7364 = vmatmul.mubr.f32.gmra.mxu0 %v53
    %v7365 = vpop.f32.mrf.mxu0
    %v7366 = vadd.f32 0.0, %v7365
    %v7367 = vpop.f32.mrf.mxu0
    %7368 = vdwg.mxu0
    %7369 = vmatprep.subr.mxu0 0.0
    %7370 = vmatpush1.msra.mxu0 0.0
    %7371 = vmatprep.subr.mxu0 0.0
    %7372 = vmatpush1.msra.mxu0 0.0
    %7373 = vmatprep.subr.mxu0 0.0
    %7374 = vmatpush1.msra.mxu0 0.0
    %7375 = vmatprep.subr.mxu0 0.0
    %7376 = vmatpush1.msra.mxu0 0.0
    %7377 = vmatprep.subr.mxu0 0.0
    %7378 = vmatpush1.msra.mxu0 0.0
    %7379 = vmatprep.subr.mxu0 0.0
    %7380 = vmatpush1.msra.mxu0 0.0
    %7381 = vmatprep.subr.mxu0 0.0
    %7382 = vmatpush1.msra.mxu0 0.0
    %7383 = vmatprep.subr.mxu0 0.0
    %7384 = vmatpush1.msra.mxu0 0.0
    %7385 = vmatprep.subr.mxu0 0.0
    %7386 = vmatpush1.msra.mxu0 0.0
    %7387 = vmatprep.subr.mxu0 0.0
    %7388 = vmatpush1.msra.mxu0 0.0
    %7389 = vmatprep.subr.mxu0 0.0
    %7390 = vmatpush1.msra.mxu0 0.0
    %7391 = vmatprep.subr.mxu0 0.0
    %7392 = vmatpush1.msra.mxu0 0.0
    %7393 = vmatprep.subr.mxu0 0.0
    %7394 = vmatpush1.msra.mxu0 %v7366
    %7395 = vmatprep.subr.mxu0 0.0
    %7396 = vmatpush1.msra.mxu0 %v7361
    %7397 = vmatprep.subr.mxu0 0.0
    %7398 = vmatpush1.msra.mxu0 %v7356
    %7399 = vmatprep.subr.mxu0 0.0
    %7400 = vmatpush1.msra.mxu0 %v7351
    %7401 = vmatprep.subr.mxu0 0.0
    %7402 = vmatpush2.msra.mxu0 0.0
    %7403 = vmatprep.subr.mxu0 0.0
    %7404 = vmatpush2.msra.mxu0 0.0
    %7405 = vmatprep.subr.mxu0 0.0
    %7406 = vmatpush2.msra.mxu0 0.0
    %7407 = vmatprep.subr.mxu0 0.0
    %7408 = vmatpush2.msra.mxu0 0.0
    %7409 = vmatprep.subr.mxu0 0.0
    %7410 = vmatpush2.msra.mxu0 0.0
    %7411 = vmatprep.subr.mxu0 0.0
    %7412 = vmatpush2.msra.mxu0 0.0
    %7413 = vmatprep.subr.mxu0 0.0
    %7414 = vmatpush2.msra.mxu0 0.0
    %7415 = vmatprep.subr.mxu0 0.0
    %7416 = vmatpush2.msra.mxu0 0.0
    %7417 = vmatprep.subr.mxu0 0.0
    %7418 = vmatpush2.msra.mxu0 0.0
    %7419 = vmatprep.subr.mxu0 0.0
    %7420 = vmatpush2.msra.mxu0 0.0
    %7421 = vmatprep.subr.mxu0 0.0
    %7422 = vmatpush2.msra.mxu0 0.0
    %7423 = vmatprep.subr.mxu0 0.0
    %7424 = vmatpush2.msra.mxu0 0.0
    %7425 = vmatprep.subr.mxu0 0.0
    %7426 = vmatpush2.msra.mxu0 0.0
    %7427 = vmatprep.subr.mxu0 0.0
    %7428 = vmatpush2.msra.mxu0 0.0
    %7429 = vmatprep.subr.mxu0 0.0
    %7430 = vmatpush2.msra.mxu0 0.0
    %7431 = vmatprep.subr.mxu0 0.0
    %7432 = vmatpush2.msra.mxu0 0.0
    %7433 = vmatprep.mubr.f32.mxu0 0.0
    %7434 = vmatmul.mubr.f32.gmra.mxu0 %v44
    %v7435 = vpop.f32.mrf.mxu0
    %v7436 = vadd.f32 0.0, %v7435
    %v7437 = vpop.f32.mrf.mxu0
    %7438 = vmatprep.mubr.f32.mxu0 0.0
    %7439 = vmatmul.mubr.f32.gmra.mxu0 %v47
    %v7440 = vpop.f32.mrf.mxu0
    %v7441 = vadd.f32 0.0, %v7440
    %v7442 = vpop.f32.mrf.mxu0
    %7443 = vmatprep.mubr.f32.mxu0 0.0
    %7444 = vmatmul.mubr.f32.gmra.mxu0 %v50
    %v7445 = vpop.f32.mrf.mxu0
    %v7446 = vadd.f32 0.0, %v7445
    %v7447 = vpop.f32.mrf.mxu0
    %7448 = vmatprep.mubr.f32.mxu0 0.0
    %7449 = vmatmul.mubr.f32.gmra.mxu0 %v53
    %v7450 = vpop.f32.mrf.mxu0
    %v7451 = vadd.f32 0.0, %v7450
    %v7452 = vpop.f32.mrf.mxu0
    %7453 = vdwg.mxu0
    %v7454 = vmul.f32 %v7436, 2.0
    %v7455 = vmul.f32 %v7441, 2.0
    %v7456 = vmul.f32 %v7446, 2.0
    %v7457 = vmul.f32 %v7451, 2.0
    %v7458 = vsub.f32 %v7454, %v7282
    %v7459 = vsub.f32 %v7455, %v7283
    %v7460 = vsub.f32 %v7456, %v7282
    %v7461 = vsub.f32 %v7457, %v7283
    %7464 = vrot.lane.b32.xlu0 %v7351, 32
    %v7465 = vpop.permute.xlu0 %7464
    %7466 = vrot.lane.b32.xlu0 %v7356, 32
    %v7467 = vpop.permute.xlu0 %7466
    %7472 = vrot.lane.b32.xlu0 %v7458, 64
    %v7473 = vpop.permute.xlu0 %7472
    %7474 = vrot.lane.b32.xlu0 %v7459, 64
    %v7475 = vpop.permute.xlu0 %7474
    %7480 = vrot.lane.b32.xlu0 %v7361, 96
    %v7481 = vpop.permute.xlu0 %7480
    %7482 = vrot.lane.b32.xlu0 %v7366, 96
    %v7483 = vpop.permute.xlu0 %7482
    %v7486 = vsel %vm42, %v7282, %v7465
    %v7487 = vsel %vm42, %v7283, %v7467
    %v7488 = vsel %vm255, %v7486, %v7473
    %v7489 = vsel %vm255, %v7487, %v7475
    %v7490 = vsel %vm258, %v7488, %v7481
    %v7491 = vsel %vm258, %v7489, %v7483
    %v7493 = vsel %vm42, %v7460, 0
    %v7496 = vsel %vm42, %v7461, 0
    %7498 = vmatprep.subr.mxu0 0.0
    %7499 = vmatpush1.msra.mxu0 %v946
    %7500 = vmatprep.subr.mxu0 0.0
    %7501 = vmatpush1.msra.mxu0 %v945
    %7502 = vmatprep.subr.mxu0 0.0
    %7503 = vmatpush1.msra.mxu0 %v944
    %7504 = vmatprep.subr.mxu0 0.0
    %7505 = vmatpush1.msra.mxu0 %v943
    %7506 = vmatprep.subr.mxu0 0.0
    %7507 = vmatpush1.msra.mxu0 %v942
    %7508 = vmatprep.subr.mxu0 0.0
    %7509 = vmatpush1.msra.mxu0 %v941
    %7510 = vmatprep.subr.mxu0 0.0
    %7511 = vmatpush1.msra.mxu0 %v940
    %7512 = vmatprep.subr.mxu0 0.0
    %7513 = vmatpush1.msra.mxu0 %v939
    %7514 = vmatprep.subr.mxu0 0.0
    %7515 = vmatpush1.msra.mxu0 %v938
    %7516 = vmatprep.subr.mxu0 0.0
    %7517 = vmatpush1.msra.mxu0 %v937
    %7518 = vmatprep.subr.mxu0 0.0
    %7519 = vmatpush1.msra.mxu0 %v936
    %7520 = vmatprep.subr.mxu0 0.0
    %7521 = vmatpush1.msra.mxu0 %v935
    %7522 = vmatprep.subr.mxu0 0.0
    %7523 = vmatpush1.msra.mxu0 %v934
    %7524 = vmatprep.subr.mxu0 0.0
    %7525 = vmatpush1.msra.mxu0 %v933
    %7526 = vmatprep.subr.mxu0 0.0
    %7527 = vmatpush1.msra.mxu0 %v932
    %7528 = vmatprep.subr.mxu0 0.0
    %7529 = vmatpush1.msra.mxu0 %v931
    %7530 = vmatprep.subr.mxu0 0.0
    %7531 = vmatpush2.msra.mxu0 0.0
    %7532 = vmatprep.subr.mxu0 0.0
    %7533 = vmatpush2.msra.mxu0 0.0
    %7534 = vmatprep.subr.mxu0 0.0
    %7535 = vmatpush2.msra.mxu0 0.0
    %7536 = vmatprep.subr.mxu0 0.0
    %7537 = vmatpush2.msra.mxu0 0.0
    %7538 = vmatprep.subr.mxu0 0.0
    %7539 = vmatpush2.msra.mxu0 0.0
    %7540 = vmatprep.subr.mxu0 0.0
    %7541 = vmatpush2.msra.mxu0 0.0
    %7542 = vmatprep.subr.mxu0 0.0
    %7543 = vmatpush2.msra.mxu0 0.0
    %7544 = vmatprep.subr.mxu0 0.0
    %7545 = vmatpush2.msra.mxu0 0.0
    %7546 = vmatprep.subr.mxu0 0.0
    %7547 = vmatpush2.msra.mxu0 0.0
    %7548 = vmatprep.subr.mxu0 0.0
    %7549 = vmatpush2.msra.mxu0 0.0
    %7550 = vmatprep.subr.mxu0 0.0
    %7551 = vmatpush2.msra.mxu0 0.0
    %7552 = vmatprep.subr.mxu0 0.0
    %7553 = vmatpush2.msra.mxu0 0.0
    %7554 = vmatprep.subr.mxu0 0.0
    %7555 = vmatpush2.msra.mxu0 %v950
    %7556 = vmatprep.subr.mxu0 0.0
    %7557 = vmatpush2.msra.mxu0 %v949
    %7558 = vmatprep.subr.mxu0 0.0
    %7559 = vmatpush2.msra.mxu0 %v948
    %7560 = vmatprep.subr.mxu0 0.0
    %7561 = vmatpush2.msra.mxu0 %v947
    %7562 = vmatprep.mubr.f32.mxu0 %v7493
    %7563 = vmatmul.mubr.f32.gmra.mxu0 %v7490
    %v7564 = vpop.f32.mrf.mxu0
    %v7565 = vadd.f32 %v956, %v7564
    %v7566 = vpop.f32.mrf.mxu0
    %7567 = vmatprep.mubr.f32.mxu0 %v7496
    %7568 = vmatmul.mubr.f32.gmra.mxu0 %v7491
    %v7569 = vpop.f32.mrf.mxu0
    %v7570 = vadd.f32 %v956, %v7569
    %v7571 = vpop.f32.mrf.mxu0
    %7572 = vdwg.mxu0
    %7573 = vmatprep.subr.mxu0 0.0
    %7574 = vmatpush1.msra.mxu0 0.0
    %7575 = vmatprep.subr.mxu0 0.0
    %7576 = vmatpush1.msra.mxu0 0.0
    %7577 = vmatprep.subr.mxu0 0.0
    %7578 = vmatpush1.msra.mxu0 0.0
    %7579 = vmatprep.subr.mxu0 0.0
    %7580 = vmatpush1.msra.mxu0 0.0
    %7581 = vmatprep.subr.mxu0 0.0
    %7582 = vmatpush1.msra.mxu0 0.0
    %7583 = vmatprep.subr.mxu0 0.0
    %7584 = vmatpush1.msra.mxu0 0.0
    %7585 = vmatprep.subr.mxu0 0.0
    %7586 = vmatpush1.msra.mxu0 0.0
    %7587 = vmatprep.subr.mxu0 0.0
    %7588 = vmatpush1.msra.mxu0 0.0
    %7589 = vmatprep.subr.mxu0 0.0
    %7590 = vmatpush1.msra.mxu0 0.0
    %7591 = vmatprep.subr.mxu0 0.0
    %7592 = vmatpush1.msra.mxu0 0.0
    %7593 = vmatprep.subr.mxu0 0.0
    %7594 = vmatpush1.msra.mxu0 0.0
    %7595 = vmatprep.subr.mxu0 0.0
    %7596 = vmatpush1.msra.mxu0 0.0
    %7597 = vmatprep.subr.mxu0 0.0
    %7598 = vmatpush1.msra.mxu0 %v6862
    %7599 = vmatprep.subr.mxu0 0.0
    %7600 = vmatpush1.msra.mxu0 %v6861
    %7601 = vmatprep.subr.mxu0 0.0
    %7602 = vmatpush1.msra.mxu0 %v6862
    %7603 = vmatprep.subr.mxu0 0.0
    %7604 = vmatpush1.msra.mxu0 %v6861
    %7605 = vmatprep.subr.mxu0 0.0
    %7606 = vmatpush2.msra.mxu0 0.0
    %7607 = vmatprep.subr.mxu0 0.0
    %7608 = vmatpush2.msra.mxu0 0.0
    %7609 = vmatprep.subr.mxu0 0.0
    %7610 = vmatpush2.msra.mxu0 0.0
    %7611 = vmatprep.subr.mxu0 0.0
    %7612 = vmatpush2.msra.mxu0 0.0
    %7613 = vmatprep.subr.mxu0 0.0
    %7614 = vmatpush2.msra.mxu0 0.0
    %7615 = vmatprep.subr.mxu0 0.0
    %7616 = vmatpush2.msra.mxu0 0.0
    %7617 = vmatprep.subr.mxu0 0.0
    %7618 = vmatpush2.msra.mxu0 0.0
    %7619 = vmatprep.subr.mxu0 0.0
    %7620 = vmatpush2.msra.mxu0 0.0
    %7621 = vmatprep.subr.mxu0 0.0
    %7622 = vmatpush2.msra.mxu0 0.0
    %7623 = vmatprep.subr.mxu0 0.0
    %7624 = vmatpush2.msra.mxu0 0.0
    %7625 = vmatprep.subr.mxu0 0.0
    %7626 = vmatpush2.msra.mxu0 0.0
    %7627 = vmatprep.subr.mxu0 0.0
    %7628 = vmatpush2.msra.mxu0 0.0
    %7629 = vmatprep.subr.mxu0 0.0
    %7630 = vmatpush2.msra.mxu0 0.0
    %7631 = vmatprep.subr.mxu0 0.0
    %7632 = vmatpush2.msra.mxu0 0.0
    %7633 = vmatprep.subr.mxu0 0.0
    %7634 = vmatpush2.msra.mxu0 0.0
    %7635 = vmatprep.subr.mxu0 0.0
    %7636 = vmatpush2.msra.mxu0 0.0
    %7637 = vmatprep.mubr.f32.mxu0 0.0
    %7638 = vmatmul.mubr.f32.gmra.mxu0 %v44
    %v7639 = vpop.f32.mrf.mxu0
    %v7640 = vadd.f32 0.0, %v7639
    %v7641 = vpop.f32.mrf.mxu0
    %7642 = vmatprep.mubr.f32.mxu0 0.0
    %7643 = vmatmul.mubr.f32.gmra.mxu0 %v47
    %v7644 = vpop.f32.mrf.mxu0
    %v7645 = vadd.f32 0.0, %v7644
    %v7646 = vpop.f32.mrf.mxu0
    %7647 = vmatprep.mubr.f32.mxu0 0.0
    %7648 = vmatmul.mubr.f32.gmra.mxu0 %v50
    %v7649 = vpop.f32.mrf.mxu0
    %v7650 = vadd.f32 0.0, %v7649
    %v7651 = vpop.f32.mrf.mxu0
    %7652 = vmatprep.mubr.f32.mxu0 0.0
    %7653 = vmatmul.mubr.f32.gmra.mxu0 %v53
    %v7654 = vpop.f32.mrf.mxu0
    %v7655 = vadd.f32 0.0, %v7654
    %v7656 = vpop.f32.mrf.mxu0
    %7657 = vdwg.mxu0
    %7658 = vmatprep.subr.mxu0 0.0
    %7659 = vmatpush1.msra.mxu0 0.0
    %7660 = vmatprep.subr.mxu0 0.0
    %7661 = vmatpush1.msra.mxu0 0.0
    %7662 = vmatprep.subr.mxu0 0.0
    %7663 = vmatpush1.msra.mxu0 0.0
    %7664 = vmatprep.subr.mxu0 0.0
    %7665 = vmatpush1.msra.mxu0 0.0
    %7666 = vmatprep.subr.mxu0 0.0
    %7667 = vmatpush1.msra.mxu0 0.0
    %7668 = vmatprep.subr.mxu0 0.0
    %7669 = vmatpush1.msra.mxu0 0.0
    %7670 = vmatprep.subr.mxu0 0.0
    %7671 = vmatpush1.msra.mxu0 0.0
    %7672 = vmatprep.subr.mxu0 0.0
    %7673 = vmatpush1.msra.mxu0 0.0
    %7674 = vmatprep.subr.mxu0 0.0
    %7675 = vmatpush1.msra.mxu0 0.0
    %7676 = vmatprep.subr.mxu0 0.0
    %7677 = vmatpush1.msra.mxu0 0.0
    %7678 = vmatprep.subr.mxu0 0.0
    %7679 = vmatpush1.msra.mxu0 0.0
    %7680 = vmatprep.subr.mxu0 0.0
    %7681 = vmatpush1.msra.mxu0 0.0
    %7682 = vmatprep.subr.mxu0 0.0
    %7683 = vmatpush1.msra.mxu0 %v7655
    %7684 = vmatprep.subr.mxu0 0.0
    %7685 = vmatpush1.msra.mxu0 %v7650
    %7686 = vmatprep.subr.mxu0 0.0
    %7687 = vmatpush1.msra.mxu0 %v7645
    %7688 = vmatprep.subr.mxu0 0.0
    %7689 = vmatpush1.msra.mxu0 %v7640
    %7690 = vmatprep.subr.mxu0 0.0
    %7691 = vmatpush2.msra.mxu0 0.0
    %7692 = vmatprep.subr.mxu0 0.0
    %7693 = vmatpush2.msra.mxu0 0.0
    %7694 = vmatprep.subr.mxu0 0.0
    %7695 = vmatpush2.msra.mxu0 0.0
    %7696 = vmatprep.subr.mxu0 0.0
    %7697 = vmatpush2.msra.mxu0 0.0
    %7698 = vmatprep.subr.mxu0 0.0
    %7699 = vmatpush2.msra.mxu0 0.0
    %7700 = vmatprep.subr.mxu0 0.0
    %7701 = vmatpush2.msra.mxu0 0.0
    %7702 = vmatprep.subr.mxu0 0.0
    %7703 = vmatpush2.msra.mxu0 0.0
    %7704 = vmatprep.subr.mxu0 0.0
    %7705 = vmatpush2.msra.mxu0 0.0
    %7706 = vmatprep.subr.mxu0 0.0
    %7707 = vmatpush2.msra.mxu0 0.0
    %7708 = vmatprep.subr.mxu0 0.0
    %7709 = vmatpush2.msra.mxu0 0.0
    %7710 = vmatprep.subr.mxu0 0.0
    %7711 = vmatpush2.msra.mxu0 0.0
    %7712 = vmatprep.subr.mxu0 0.0
    %7713 = vmatpush2.msra.mxu0 0.0
    %7714 = vmatprep.subr.mxu0 0.0
    %7715 = vmatpush2.msra.mxu0 0.0
    %7716 = vmatprep.subr.mxu0 0.0
    %7717 = vmatpush2.msra.mxu0 0.0
    %7718 = vmatprep.subr.mxu0 0.0
    %7719 = vmatpush2.msra.mxu0 0.0
    %7720 = vmatprep.subr.mxu0 0.0
    %7721 = vmatpush2.msra.mxu0 0.0
    %7722 = vmatprep.mubr.f32.mxu0 0.0
    %7723 = vmatmul.mubr.f32.gmra.mxu0 %v44
    %v7724 = vpop.f32.mrf.mxu0
    %v7725 = vadd.f32 0.0, %v7724
    %v7726 = vpop.f32.mrf.mxu0
    %7727 = vmatprep.mubr.f32.mxu0 0.0
    %7728 = vmatmul.mubr.f32.gmra.mxu0 %v47
    %v7729 = vpop.f32.mrf.mxu0
    %v7730 = vadd.f32 0.0, %v7729
    %v7731 = vpop.f32.mrf.mxu0
    %7732 = vmatprep.mubr.f32.mxu0 0.0
    %7733 = vmatmul.mubr.f32.gmra.mxu0 %v50
    %v7734 = vpop.f32.mrf.mxu0
    %v7735 = vadd.f32 0.0, %v7734
    %v7736 = vpop.f32.mrf.mxu0
    %7737 = vmatprep.mubr.f32.mxu0 0.0
    %7738 = vmatmul.mubr.f32.gmra.mxu0 %v53
    %v7739 = vpop.f32.mrf.mxu0
    %v7740 = vadd.f32 0.0, %v7739
    %v7741 = vpop.f32.mrf.mxu0
    %7742 = vdwg.mxu0
    %v7743 = vmul.f32 %v7725, 2.0
    %v7744 = vmul.f32 %v7730, 2.0
    %v7745 = vmul.f32 %v7735, 2.0
    %v7746 = vmul.f32 %v7740, 2.0
    %v7747 = vsub.f32 %v7743, %v6861
    %v7748 = vsub.f32 %v7744, %v6862
    %v7749 = vsub.f32 %v7745, %v6861
    %v7750 = vsub.f32 %v7746, %v6862
    %7753 = vrot.lane.b32.xlu0 %v7640, 32
    %v7754 = vpop.permute.xlu0 %7753
    %7755 = vrot.lane.b32.xlu0 %v7645, 32
    %v7756 = vpop.permute.xlu0 %7755
    %7761 = vrot.lane.b32.xlu0 %v7747, 64
    %v7762 = vpop.permute.xlu0 %7761
    %7763 = vrot.lane.b32.xlu0 %v7748, 64
    %v7764 = vpop.permute.xlu0 %7763
    %7769 = vrot.lane.b32.xlu0 %v7650, 96
    %v7770 = vpop.permute.xlu0 %7769
    %7771 = vrot.lane.b32.xlu0 %v7655, 96
    %v7772 = vpop.permute.xlu0 %7771
    %v7775 = vsel %vm42, %v6861, %v7754
    %v7776 = vsel %vm42, %v6862, %v7756
    %v7777 = vsel %vm255, %v7775, %v7762
    %v7778 = vsel %vm255, %v7776, %v7764
    %v7779 = vsel %vm258, %v7777, %v7770
    %v7780 = vsel %vm258, %v7778, %v7772
    %v7782 = vsel %vm42, %v7749, 0
    %v7785 = vsel %vm42, %v7750, 0
    %7787 = vmatprep.subr.mxu0 0.0
    %7788 = vmatpush1.msra.mxu0 %v1054
    %7789 = vmatprep.subr.mxu0 0.0
    %7790 = vmatpush1.msra.mxu0 %v1053
    %7791 = vmatprep.subr.mxu0 0.0
    %7792 = vmatpush1.msra.mxu0 %v1052
    %7793 = vmatprep.subr.mxu0 0.0
    %7794 = vmatpush1.msra.mxu0 %v1051
    %7795 = vmatprep.subr.mxu0 0.0
    %7796 = vmatpush1.msra.mxu0 %v1050
    %7797 = vmatprep.subr.mxu0 0.0
    %7798 = vmatpush1.msra.mxu0 %v1049
    %7799 = vmatprep.subr.mxu0 0.0
    %7800 = vmatpush1.msra.mxu0 %v1048
    %7801 = vmatprep.subr.mxu0 0.0
    %7802 = vmatpush1.msra.mxu0 %v1047
    %7803 = vmatprep.subr.mxu0 0.0
    %7804 = vmatpush1.msra.mxu0 %v1046
    %7805 = vmatprep.subr.mxu0 0.0
    %7806 = vmatpush1.msra.mxu0 %v1045
    %7807 = vmatprep.subr.mxu0 0.0
    %7808 = vmatpush1.msra.mxu0 %v1044
    %7809 = vmatprep.subr.mxu0 0.0
    %7810 = vmatpush1.msra.mxu0 %v1043
    %7811 = vmatprep.subr.mxu0 0.0
    %7812 = vmatpush1.msra.mxu0 %v1042
    %7813 = vmatprep.subr.mxu0 0.0
    %7814 = vmatpush1.msra.mxu0 %v1041
    %7815 = vmatprep.subr.mxu0 0.0
    %7816 = vmatpush1.msra.mxu0 %v1040
    %7817 = vmatprep.subr.mxu0 0.0
    %7818 = vmatpush1.msra.mxu0 %v1039
    %7819 = vmatprep.subr.mxu0 0.0
    %7820 = vmatpush2.msra.mxu0 0.0
    %7821 = vmatprep.subr.mxu0 0.0
    %7822 = vmatpush2.msra.mxu0 0.0
    %7823 = vmatprep.subr.mxu0 0.0
    %7824 = vmatpush2.msra.mxu0 0.0
    %7825 = vmatprep.subr.mxu0 0.0
    %7826 = vmatpush2.msra.mxu0 0.0
    %7827 = vmatprep.subr.mxu0 0.0
    %7828 = vmatpush2.msra.mxu0 0.0
    %7829 = vmatprep.subr.mxu0 0.0
    %7830 = vmatpush2.msra.mxu0 0.0
    %7831 = vmatprep.subr.mxu0 0.0
    %7832 = vmatpush2.msra.mxu0 0.0
    %7833 = vmatprep.subr.mxu0 0.0
    %7834 = vmatpush2.msra.mxu0 0.0
    %7835 = vmatprep.subr.mxu0 0.0
    %7836 = vmatpush2.msra.mxu0 0.0
    %7837 = vmatprep.subr.mxu0 0.0
    %7838 = vmatpush2.msra.mxu0 0.0
    %7839 = vmatprep.subr.mxu0 0.0
    %7840 = vmatpush2.msra.mxu0 0.0
    %7841 = vmatprep.subr.mxu0 0.0
    %7842 = vmatpush2.msra.mxu0 0.0
    %7843 = vmatprep.subr.mxu0 0.0
    %7844 = vmatpush2.msra.mxu0 %v1058
    %7845 = vmatprep.subr.mxu0 0.0
    %7846 = vmatpush2.msra.mxu0 %v1057
    %7847 = vmatprep.subr.mxu0 0.0
    %7848 = vmatpush2.msra.mxu0 %v1056
    %7849 = vmatprep.subr.mxu0 0.0
    %7850 = vmatpush2.msra.mxu0 %v1055
    %7851 = vmatprep.mubr.f32.mxu0 %v7782
    %7852 = vmatmul.mubr.f32.gmra.mxu0 %v7779
    %v7853 = vpop.f32.mrf.mxu0
    %v7854 = vadd.f32 0.0, %v7853
    %v7855 = vpop.f32.mrf.mxu0
    %7856 = vmatprep.mubr.f32.mxu0 %v7785
    %7857 = vmatmul.mubr.f32.gmra.mxu0 %v7780
    %v7858 = vpop.f32.mrf.mxu0
    %v7859 = vadd.f32 0.0, %v7858
    %v7860 = vpop.f32.mrf.mxu0
    %7861 = vdwg.mxu0
    %v7862 = vadd.f32 %v7565, %v7854
    %v7863 = vadd.f32 %v7570, %v7859
    %v7864 = vxor.u32 %v7862, 2147483648
    %v7865 = vxor.u32 %v7863, 2147483648
    %v7866 = vmul.f32 %v7864, 1.442695
    %v7867 = vpow.pop %v7866
    %v7868 = vmul.f32 %v7865, 1.442695
    %v7869 = vpow.pop %v7868
    %v7870 = vadd.f32 %v7867, 1.0
    %v7871 = vadd.f32 %v7869, 1.0
    %v7872 = vrcp.pop %v7870
    %v7873 = vmul.f32 1.0, %v7872
    %v7874 = vrcp.pop %v7871
    %v7875 = vmul.f32 1.0, %v7874
    %7878 = vrot.lane.b32.xlu0 %v7873, 96
    %v7879 = vpop.permute.xlu0 %7878
    %7880 = vrot.lane.b32.xlu0 %v7875, 96
    %v7881 = vpop.permute.xlu0 %7880
    %v7884 = vmul.f32 %v6861, %v7879
    %v7885 = vmul.f32 %v6862, %v7881
    %7886 = vmatprep.subr.mxu0 0.0
    %7887 = vmatpush1.msra.mxu0 0.0
    %7888 = vmatprep.subr.mxu0 0.0
    %7889 = vmatpush1.msra.mxu0 0.0
    %7890 = vmatprep.subr.mxu0 0.0
    %7891 = vmatpush1.msra.mxu0 0.0
    %7892 = vmatprep.subr.mxu0 0.0
    %7893 = vmatpush1.msra.mxu0 0.0
    %7894 = vmatprep.subr.mxu0 0.0
    %7895 = vmatpush1.msra.mxu0 0.0
    %7896 = vmatprep.subr.mxu0 0.0
    %7897 = vmatpush1.msra.mxu0 0.0
    %7898 = vmatprep.subr.mxu0 0.0
    %7899 = vmatpush1.msra.mxu0 0.0
    %7900 = vmatprep.subr.mxu0 0.0
    %7901 = vmatpush1.msra.mxu0 0.0
    %7902 = vmatprep.subr.mxu0 0.0
    %7903 = vmatpush1.msra.mxu0 0.0
    %7904 = vmatprep.subr.mxu0 0.0
    %7905 = vmatpush1.msra.mxu0 0.0
    %7906 = vmatprep.subr.mxu0 0.0
    %7907 = vmatpush1.msra.mxu0 0.0
    %7908 = vmatprep.subr.mxu0 0.0
    %7909 = vmatpush1.msra.mxu0 0.0
    %7910 = vmatprep.subr.mxu0 0.0
    %7911 = vmatpush1.msra.mxu0 %v7885
    %7912 = vmatprep.subr.mxu0 0.0
    %7913 = vmatpush1.msra.mxu0 %v7884
    %7914 = vmatprep.subr.mxu0 0.0
    %7915 = vmatpush1.msra.mxu0 %v7885
    %7916 = vmatprep.subr.mxu0 0.0
    %7917 = vmatpush1.msra.mxu0 %v7884
    %7918 = vmatprep.subr.mxu0 0.0
    %7919 = vmatpush2.msra.mxu0 0.0
    %7920 = vmatprep.subr.mxu0 0.0
    %7921 = vmatpush2.msra.mxu0 0.0
    %7922 = vmatprep.subr.mxu0 0.0
    %7923 = vmatpush2.msra.mxu0 0.0
    %7924 = vmatprep.subr.mxu0 0.0
    %7925 = vmatpush2.msra.mxu0 0.0
    %7926 = vmatprep.subr.mxu0 0.0
    %7927 = vmatpush2.msra.mxu0 0.0
    %7928 = vmatprep.subr.mxu0 0.0
    %7929 = vmatpush2.msra.mxu0 0.0
    %7930 = vmatprep.subr.mxu0 0.0
    %7931 = vmatpush2.msra.mxu0 0.0
    %7932 = vmatprep.subr.mxu0 0.0
    %7933 = vmatpush2.msra.mxu0 0.0
    %7934 = vmatprep.subr.mxu0 0.0
    %7935 = vmatpush2.msra.mxu0 0.0
    %7936 = vmatprep.subr.mxu0 0.0
    %7937 = vmatpush2.msra.mxu0 0.0
    %7938 = vmatprep.subr.mxu0 0.0
    %7939 = vmatpush2.msra.mxu0 0.0
    %7940 = vmatprep.subr.mxu0 0.0
    %7941 = vmatpush2.msra.mxu0 0.0
    %7942 = vmatprep.subr.mxu0 0.0
    %7943 = vmatpush2.msra.mxu0 0.0
    %7944 = vmatprep.subr.mxu0 0.0
    %7945 = vmatpush2.msra.mxu0 0.0
    %7946 = vmatprep.subr.mxu0 0.0
    %7947 = vmatpush2.msra.mxu0 0.0
    %7948 = vmatprep.subr.mxu0 0.0
    %7949 = vmatpush2.msra.mxu0 0.0
    %7950 = vmatprep.mubr.f32.mxu0 0.0
    %7951 = vmatmul.mubr.f32.gmra.mxu0 %v44
    %v7952 = vpop.f32.mrf.mxu0
    %v7953 = vadd.f32 0.0, %v7952
    %v7954 = vpop.f32.mrf.mxu0
    %7955 = vmatprep.mubr.f32.mxu0 0.0
    %7956 = vmatmul.mubr.f32.gmra.mxu0 %v47
    %v7957 = vpop.f32.mrf.mxu0
    %v7958 = vadd.f32 0.0, %v7957
    %v7959 = vpop.f32.mrf.mxu0
    %7960 = vmatprep.mubr.f32.mxu0 0.0
    %7961 = vmatmul.mubr.f32.gmra.mxu0 %v50
    %v7962 = vpop.f32.mrf.mxu0
    %v7963 = vadd.f32 0.0, %v7962
    %v7964 = vpop.f32.mrf.mxu0
    %7965 = vmatprep.mubr.f32.mxu0 0.0
    %7966 = vmatmul.mubr.f32.gmra.mxu0 %v53
    %v7967 = vpop.f32.mrf.mxu0
    %v7968 = vadd.f32 0.0, %v7967
    %v7969 = vpop.f32.mrf.mxu0
    %7970 = vdwg.mxu0
    %7971 = vmatprep.subr.mxu0 0.0
    %7972 = vmatpush1.msra.mxu0 0.0
    %7973 = vmatprep.subr.mxu0 0.0
    %7974 = vmatpush1.msra.mxu0 0.0
    %7975 = vmatprep.subr.mxu0 0.0
    %7976 = vmatpush1.msra.mxu0 0.0
    %7977 = vmatprep.subr.mxu0 0.0
    %7978 = vmatpush1.msra.mxu0 0.0
    %7979 = vmatprep.subr.mxu0 0.0
    %7980 = vmatpush1.msra.mxu0 0.0
    %7981 = vmatprep.subr.mxu0 0.0
    %7982 = vmatpush1.msra.mxu0 0.0
    %7983 = vmatprep.subr.mxu0 0.0
    %7984 = vmatpush1.msra.mxu0 0.0
    %7985 = vmatprep.subr.mxu0 0.0
    %7986 = vmatpush1.msra.mxu0 0.0
    %7987 = vmatprep.subr.mxu0 0.0
    %7988 = vmatpush1.msra.mxu0 0.0
    %7989 = vmatprep.subr.mxu0 0.0
    %7990 = vmatpush1.msra.mxu0 0.0
    %7991 = vmatprep.subr.mxu0 0.0
    %7992 = vmatpush1.msra.mxu0 0.0
    %7993 = vmatprep.subr.mxu0 0.0
    %7994 = vmatpush1.msra.mxu0 0.0
    %7995 = vmatprep.subr.mxu0 0.0
    %7996 = vmatpush1.msra.mxu0 %v7968
    %7997 = vmatprep.subr.mxu0 0.0
    %7998 = vmatpush1.msra.mxu0 %v7963
    %7999 = vmatprep.subr.mxu0 0.0
    %8000 = vmatpush1.msra.mxu0 %v7958
    %8001 = vmatprep.subr.mxu0 0.0
    %8002 = vmatpush1.msra.mxu0 %v7953
    %8003 = vmatprep.subr.mxu0 0.0
    %8004 = vmatpush2.msra.mxu0 0.0
    %8005 = vmatprep.subr.mxu0 0.0
    %8006 = vmatpush2.msra.mxu0 0.0
    %8007 = vmatprep.subr.mxu0 0.0
    %8008 = vmatpush2.msra.mxu0 0.0
    %8009 = vmatprep.subr.mxu0 0.0
    %8010 = vmatpush2.msra.mxu0 0.0
    %8011 = vmatprep.subr.mxu0 0.0
    %8012 = vmatpush2.msra.mxu0 0.0
    %8013 = vmatprep.subr.mxu0 0.0
    %8014 = vmatpush2.msra.mxu0 0.0
    %8015 = vmatprep.subr.mxu0 0.0
    %8016 = vmatpush2.msra.mxu0 0.0
    %8017 = vmatprep.subr.mxu0 0.0
    %8018 = vmatpush2.msra.mxu0 0.0
    %8019 = vmatprep.subr.mxu0 0.0
    %8020 = vmatpush2.msra.mxu0 0.0
    %8021 = vmatprep.subr.mxu0 0.0
    %8022 = vmatpush2.msra.mxu0 0.0
    %8023 = vmatprep.subr.mxu0 0.0
    %8024 = vmatpush2.msra.mxu0 0.0
    %8025 = vmatprep.subr.mxu0 0.0
    %8026 = vmatpush2.msra.mxu0 0.0
    %8027 = vmatprep.subr.mxu0 0.0
    %8028 = vmatpush2.msra.mxu0 0.0
    %8029 = vmatprep.subr.mxu0 0.0
    %8030 = vmatpush2.msra.mxu0 0.0
    %8031 = vmatprep.subr.mxu0 0.0
    %8032 = vmatpush2.msra.mxu0 0.0
    %8033 = vmatprep.subr.mxu0 0.0
    %8034 = vmatpush2.msra.mxu0 0.0
    %8035 = vmatprep.mubr.f32.mxu0 0.0
    %8036 = vmatmul.mubr.f32.gmra.mxu0 %v44
    %v8037 = vpop.f32.mrf.mxu0
    %v8038 = vadd.f32 0.0, %v8037
    %v8039 = vpop.f32.mrf.mxu0
    %8040 = vmatprep.mubr.f32.mxu0 0.0
    %8041 = vmatmul.mubr.f32.gmra.mxu0 %v47
    %v8042 = vpop.f32.mrf.mxu0
    %v8043 = vadd.f32 0.0, %v8042
    %v8044 = vpop.f32.mrf.mxu0
    %8045 = vmatprep.mubr.f32.mxu0 0.0
    %8046 = vmatmul.mubr.f32.gmra.mxu0 %v50
    %v8047 = vpop.f32.mrf.mxu0
    %v8048 = vadd.f32 0.0, %v8047
    %v8049 = vpop.f32.mrf.mxu0
    %8050 = vmatprep.mubr.f32.mxu0 0.0
    %8051 = vmatmul.mubr.f32.gmra.mxu0 %v53
    %v8052 = vpop.f32.mrf.mxu0
    %v8053 = vadd.f32 0.0, %v8052
    %v8054 = vpop.f32.mrf.mxu0
    %8055 = vdwg.mxu0
    %v8056 = vmul.f32 %v8038, 2.0
    %v8057 = vmul.f32 %v8043, 2.0
    %v8058 = vmul.f32 %v8048, 2.0
    %v8059 = vmul.f32 %v8053, 2.0
    %v8060 = vsub.f32 %v8056, %v7884
    %v8061 = vsub.f32 %v8057, %v7885
    %v8062 = vsub.f32 %v8058, %v7884
    %v8063 = vsub.f32 %v8059, %v7885
    %8066 = vrot.lane.b32.xlu0 %v7953, 32
    %v8067 = vpop.permute.xlu0 %8066
    %8068 = vrot.lane.b32.xlu0 %v7958, 32
    %v8069 = vpop.permute.xlu0 %8068
    %8074 = vrot.lane.b32.xlu0 %v8060, 64
    %v8075 = vpop.permute.xlu0 %8074
    %8076 = vrot.lane.b32.xlu0 %v8061, 64
    %v8077 = vpop.permute.xlu0 %8076
    %8082 = vrot.lane.b32.xlu0 %v7963, 96
    %v8083 = vpop.permute.xlu0 %8082
    %8084 = vrot.lane.b32.xlu0 %v7968, 96
    %v8085 = vpop.permute.xlu0 %8084
    %v8088 = vsel %vm42, %v7884, %v8067
    %v8089 = vsel %vm42, %v7885, %v8069
    %v8090 = vsel %vm255, %v8088, %v8075
    %v8091 = vsel %vm255, %v8089, %v8077
    %v8092 = vsel %vm258, %v8090, %v8083
    %v8093 = vsel %vm258, %v8091, %v8085
    %v8095 = vsel %vm42, %v8062, 0
    %v8098 = vsel %vm42, %v8063, 0
    %8100 = vmatprep.subr.mxu0 0.0
    %8101 = vmatpush1.msra.mxu0 %v1381
    %8102 = vmatprep.subr.mxu0 0.0
    %8103 = vmatpush1.msra.mxu0 %v1380
    %8104 = vmatprep.subr.mxu0 0.0
    %8105 = vmatpush1.msra.mxu0 %v1379
    %8106 = vmatprep.subr.mxu0 0.0
    %8107 = vmatpush1.msra.mxu0 %v1378
    %8108 = vmatprep.subr.mxu0 0.0
    %8109 = vmatpush1.msra.mxu0 %v1377
    %8110 = vmatprep.subr.mxu0 0.0
    %8111 = vmatpush1.msra.mxu0 %v1376
    %8112 = vmatprep.subr.mxu0 0.0
    %8113 = vmatpush1.msra.mxu0 %v1375
    %8114 = vmatprep.subr.mxu0 0.0
    %8115 = vmatpush1.msra.mxu0 %v1374
    %8116 = vmatprep.subr.mxu0 0.0
    %8117 = vmatpush1.msra.mxu0 %v1373
    %8118 = vmatprep.subr.mxu0 0.0
    %8119 = vmatpush1.msra.mxu0 %v1372
    %8120 = vmatprep.subr.mxu0 0.0
    %8121 = vmatpush1.msra.mxu0 %v1371
    %8122 = vmatprep.subr.mxu0 0.0
    %8123 = vmatpush1.msra.mxu0 %v1370
    %8124 = vmatprep.subr.mxu0 0.0
    %8125 = vmatpush1.msra.mxu0 %v1369
    %8126 = vmatprep.subr.mxu0 0.0
    %8127 = vmatpush1.msra.mxu0 %v1368
    %8128 = vmatprep.subr.mxu0 0.0
    %8129 = vmatpush1.msra.mxu0 %v1367
    %8130 = vmatprep.subr.mxu0 0.0
    %8131 = vmatpush1.msra.mxu0 %v1366
    %8132 = vmatprep.subr.mxu0 0.0
    %8133 = vmatpush2.msra.mxu0 0.0
    %8134 = vmatprep.subr.mxu0 0.0
    %8135 = vmatpush2.msra.mxu0 0.0
    %8136 = vmatprep.subr.mxu0 0.0
    %8137 = vmatpush2.msra.mxu0 0.0
    %8138 = vmatprep.subr.mxu0 0.0
    %8139 = vmatpush2.msra.mxu0 0.0
    %8140 = vmatprep.subr.mxu0 0.0
    %8141 = vmatpush2.msra.mxu0 0.0
    %8142 = vmatprep.subr.mxu0 0.0
    %8143 = vmatpush2.msra.mxu0 0.0
    %8144 = vmatprep.subr.mxu0 0.0
    %8145 = vmatpush2.msra.mxu0 0.0
    %8146 = vmatprep.subr.mxu0 0.0
    %8147 = vmatpush2.msra.mxu0 0.0
    %8148 = vmatprep.subr.mxu0 0.0
    %8149 = vmatpush2.msra.mxu0 0.0
    %8150 = vmatprep.subr.mxu0 0.0
    %8151 = vmatpush2.msra.mxu0 0.0
    %8152 = vmatprep.subr.mxu0 0.0
    %8153 = vmatpush2.msra.mxu0 0.0
    %8154 = vmatprep.subr.mxu0 0.0
    %8155 = vmatpush2.msra.mxu0 0.0
    %8156 = vmatprep.subr.mxu0 0.0
    %8157 = vmatpush2.msra.mxu0 %v1385
    %8158 = vmatprep.subr.mxu0 0.0
    %8159 = vmatpush2.msra.mxu0 %v1384
    %8160 = vmatprep.subr.mxu0 0.0
    %8161 = vmatpush2.msra.mxu0 %v1383
    %8162 = vmatprep.subr.mxu0 0.0
    %8163 = vmatpush2.msra.mxu0 %v1382
    %8164 = vmatprep.mubr.f32.mxu0 %v8095
    %8165 = vmatmul.mubr.f32.gmra.mxu0 %v8092
    %v8166 = vpop.f32.mrf.mxu0
    %v8167 = vadd.f32 0.0, %v8166
    %v8168 = vpop.f32.mrf.mxu0
    %8169 = vmatprep.mubr.f32.mxu0 %v8098
    %8170 = vmatmul.mubr.f32.gmra.mxu0 %v8093
    %v8171 = vpop.f32.mrf.mxu0
    %v8172 = vadd.f32 0.0, %v8171
    %v8173 = vpop.f32.mrf.mxu0
    %8174 = vdwg.mxu0
    %8177 = vrot.lane.b32.xlu0 %v8167, 64
    %v8178 = vpop.permute.xlu0 %8177
    %8179 = vrot.lane.b32.xlu0 %v8172, 64
    %v8180 = vpop.permute.xlu0 %8179
    %v8183 = vadd.f32 %v7565, %v8178
    %v8184 = vadd.f32 %v7570, %v8180
    %v8185 = vtanh.pop %v8183
    %v8186 = vtanh.pop %v8184
    %v8187 = vmul.f32 %v7873, %v6861
    %v8188 = vmul.f32 %v7875, %v6862
    %v8189 = vsub.f32 1.0, %v7873
    %v8190 = vsub.f32 1.0, %v7875
    %8193 = vrot.lane.b32.xlu0 %v8185, 64
    %v8194 = vpop.permute.xlu0 %8193
    %8195 = vrot.lane.b32.xlu0 %v8186, 64
    %v8196 = vpop.permute.xlu0 %8195
    %v8199 = vmul.f32 %v8189, %v8194
    %v8200 = vmul.f32 %v8190, %v8196
    %v8201 = vadd.f32 %v8187, %v8199
    %v8202 = vadd.f32 %v8188, %v8200
    %v8203 = vmax.f32 %v8201, 0.0
    %v8204 = vmax.f32 %v8202, 0.0
    %v8205 = vld [vmem:[%s8] sm:$0xff]
    %v8206 = vld [vmem:[%s8 + $0x8] sm:$0xff]
    %v8207 = vld [vmem:[%s8 + $0x10] sm:$0xff]
    %v8208 = vld [vmem:[%s8 + $0x18] sm:$0xff]
    %v8209 = vld [vmem:[%s9] sm:$0x1]
    %v8211 = vlaneseq
    %v8212 = vshrl.u32 %v8211, 7
    %v8213 = vsub.s32 0, %v8212
    %v8214 = vrot.slane %v8209, %v8213
    %v8217 = vsel %vm42, %v8203, 0
    %v8220 = vsel %vm42, %v8204, 0
    %8222 = vmatprep.subr.mxu0 0.0
    %8223 = vmatpush1.msra.mxu0 0.0
    %8224 = vmatprep.subr.mxu0 0.0
    %8225 = vmatpush1.msra.mxu0 0.0
    %8226 = vmatprep.subr.mxu0 0.0
    %8227 = vmatpush1.msra.mxu0 0.0
    %8228 = vmatprep.subr.mxu0 0.0
    %8229 = vmatpush1.msra.mxu0 0.0
    %8230 = vmatprep.subr.mxu0 0.0
    %8231 = vmatpush1.msra.mxu0 0.0
    %8232 = vmatprep.subr.mxu0 0.0
    %8233 = vmatpush1.msra.mxu0 0.0
    %8234 = vmatprep.subr.mxu0 0.0
    %8235 = vmatpush1.msra.mxu0 0.0
    %8236 = vmatprep.subr.mxu0 0.0
    %8237 = vmatpush1.msra.mxu0 0.0
    %8238 = vmatprep.subr.mxu0 0.0
    %8239 = vmatpush1.msra.mxu0 0.0
    %8240 = vmatprep.subr.mxu0 0.0
    %8241 = vmatpush1.msra.mxu0 0.0
    %8242 = vmatprep.subr.mxu0 0.0
    %8243 = vmatpush1.msra.mxu0 0.0
    %8244 = vmatprep.subr.mxu0 0.0
    %8245 = vmatpush1.msra.mxu0 0.0
    %8246 = vmatprep.subr.mxu0 0.0
    %8247 = vmatpush1.msra.mxu0 %v8208
    %8248 = vmatprep.subr.mxu0 0.0
    %8249 = vmatpush1.msra.mxu0 %v8207
    %8250 = vmatprep.subr.mxu0 0.0
    %8251 = vmatpush1.msra.mxu0 %v8206
    %8252 = vmatprep.subr.mxu0 0.0
    %8253 = vmatpush1.msra.mxu0 %v8205
    %8254 = vmatprep.subr.mxu0 0.0
    %8255 = vmatpush2.msra.mxu0 0.0
    %8256 = vmatprep.subr.mxu0 0.0
    %8257 = vmatpush2.msra.mxu0 0.0
    %8258 = vmatprep.subr.mxu0 0.0
    %8259 = vmatpush2.msra.mxu0 0.0
    %8260 = vmatprep.subr.mxu0 0.0
    %8261 = vmatpush2.msra.mxu0 0.0
    %8262 = vmatprep.subr.mxu0 0.0
    %8263 = vmatpush2.msra.mxu0 0.0
    %8264 = vmatprep.subr.mxu0 0.0
    %8265 = vmatpush2.msra.mxu0 0.0
    %8266 = vmatprep.subr.mxu0 0.0
    %8267 = vmatpush2.msra.mxu0 0.0
    %8268 = vmatprep.subr.mxu0 0.0
    %8269 = vmatpush2.msra.mxu0 0.0
    %8270 = vmatprep.subr.mxu0 0.0
    %8271 = vmatpush2.msra.mxu0 0.0
    %8272 = vmatprep.subr.mxu0 0.0
    %8273 = vmatpush2.msra.mxu0 0.0
    %8274 = vmatprep.subr.mxu0 0.0
    %8275 = vmatpush2.msra.mxu0 0.0
    %8276 = vmatprep.subr.mxu0 0.0
    %8277 = vmatpush2.msra.mxu0 0.0
    %8278 = vmatprep.subr.mxu0 0.0
    %8279 = vmatpush2.msra.mxu0 0.0
    %8280 = vmatprep.subr.mxu0 0.0
    %8281 = vmatpush2.msra.mxu0 0.0
    %8282 = vmatprep.subr.mxu0 0.0
    %8283 = vmatpush2.msra.mxu0 0.0
    %8284 = vmatprep.subr.mxu0 0.0
    %8285 = vmatpush2.msra.mxu0 0.0
    %8286 = vmatprep.mubr.f32.mxu0 0.0
    %8287 = vmatmul.mubr.f32.gmra.mxu0 %v8217
    %v8288 = vpop.f32.mrf.mxu0
    %v8289 = vadd.f32 %v8214, %v8288
    %v8290 = vpop.f32.mrf.mxu0
    %8291 = vmatprep.mubr.f32.mxu0 0.0
    %8292 = vmatmul.mubr.f32.gmra.mxu0 %v8220
    %v8293 = vpop.f32.mrf.mxu0
    %v8294 = vadd.f32 %v8214, %v8293
    %v8295 = vpop.f32.mrf.mxu0
    %8296 = vdwg.mxu0
    %vm8297 = vcmask 97280
    %8298 = vst.msk [vmem:[#allocation2] sm:$0xff] %vm8297, %v8289
    %8299 = vst.msk [vmem:[#allocation2 + $0x8] sm:$0xff] %vm8297, %v8294
    // Predicated region
    $region42: #{dcrnn_forward.3} parent=1 // pred_check
      _
    $region43: #{dcrnn_forward.3} parent=1 // pred_check_branch
      %8301 = sbr.rel (0) target = $region45
    $region44: #{dcrnn_forward.3} parent=1 // pred_region
      %s8303 = ssub.s32 256, 256
      %8304 = vsyncadd [#allocation3], %s8303
      %s8305 = sshll.u32 [#allocation2], 4
      %s8306 = int_to_ptr.vmem [resolvable:$true] %s8305
      %8311 = dma.vmem_to_hbm [thread:$0]  %s8306, 256, %s10, [#allocation3], 128, 128, 8
    $region45: #{dcrnn_forward.3} parent=1 // pred_fallthru
      _
    // Predicated region
    $region46: #{dcrnn_forward.3} parent=1 // pred_check
      _
    $region47: #{dcrnn_forward.3} parent=1 // pred_check_branch
      %8313 = sbr.rel (0) target = $region49
    $region48: #{dcrnn_forward.3} parent=1 // pred_region
      %8314 = dma.done [#allocation3], 256
    $region49: #{dcrnn_forward.3} parent=1 // pred_fallthru
      _
    %8315 = vsyncpa [#allocation3], 1

</llo_original>
